<compile_context>
chip_gen: v7x
topology: tpu7x:2x2x1
jax: 0.10.0
libtpu: 0.0.40
codegen_flags: <defaults>
</compile_context>

<pallas_src>
import functools

import jax
import jax.numpy as jnp
from jax.experimental import pallas as pl
from jax.experimental.pallas import tpu as pltpu

# MXU operand / intermediate-activation dtype (f32 accumulation everywhere).
MXU_INPUT_DTYPE = jnp.bfloat16

_VMEM_SPEC = pl.BlockSpec(memory_space=pltpu.MemorySpace.VMEM)


def _round_up(x, m):
    return ((x + m - 1) // m) * m


@functools.lru_cache(maxsize=None)
def _vmem_limit_bytes():
    """Half of physical VMEM, clamped to [16, 64] MiB (32 MiB on v7x)."""
    cap = 64 * 1024 * 1024  # conservative fallback (v7x-sized)
    try:
        info = pltpu.get_tpu_info()
        cap = int(getattr(info, "vmem_capacity_bytes", cap))
    except Exception:
        pass
    return int(min(64 * 1024 * 1024, max(16 * 1024 * 1024, cap // 2)))


# -----------------------------------------------------------------------------
# Pallas kernels
# -----------------------------------------------------------------------------
def _gemm_bias_relu_kernel(x_ref, w_ref, b_ref, o_ref, *, apply_relu):
    """One output tile: full-K matmul (f32 accum) with fused bias + ReLU."""
    acc = jnp.dot(x_ref[...], w_ref[...], preferred_element_type=jnp.float32)
    acc = acc + b_ref[...]                      # b_ref: (1, tn) f32, broadcasts
    if apply_relu:
        acc = jnp.maximum(acc, 0.0)
    o_ref[...] = acc.astype(o_ref.dtype)


def _pose_head_kernel(x_ref, w_ref, b_ref, o_ref, *, inv_spatial):
    """Fused global mean pool + 1x1 pose conv + bias + 0.01 scale.

    Exact because pose_conv has no ReLU: mean(W.x + b) == W.mean(x) + b.
    x_ref: [N, S, C]; w_ref: [C, OCp]; b_ref: [1, OCp]; o_ref: [N, OCp].
    Pooling and the (tiny) matmul stay in f32 for accuracy.
    """
    pooled = jnp.sum(x_ref[...].astype(jnp.float32), axis=1) * inv_spatial
    res = jnp.dot(pooled, w_ref[...].astype(jnp.float32),
                  preferred_element_type=jnp.float32)
    o_ref[...] = (0.01 * (res + b_ref[...])).astype(o_ref.dtype)


# -----------------------------------------------------------------------------
# GEMM wrapper: grid over (M tiles, OC tiles); K is a single full-width block
# -----------------------------------------------------------------------------
def _pallas_gemm_bias_relu(patches, w_packed, b_packed, *, apply_relu, out_dtype):
    M, Kp = patches.shape
    _, OCp = w_packed.shape

    # M tiling: full dim when small (always a legal block), else 512 with
    # Pallas boundary masking on the tail block.
    tm = M if M <= 512 else 512
    m_blocks = -(-M // tm)
    # OC tiling: 128-lane blocks; give v7x megacore >=2 parallel blocks when
    # there is only one M block, otherwise use 256-wide tiles where possible.
    if OCp >= 256 and m_blocks >= 2:
        tn = 256
    else:
        tn = 128
    grid = (m_blocks, OCp // tn)

    return pl.pallas_call(
        functools.partial(_gemm_bias_relu_kernel, apply_relu=apply_relu),
        out_shape=jax.ShapeDtypeStruct((M, OCp), out_dtype),
        grid_spec=pltpu.PrefetchScalarGridSpec(
            num_scalar_prefetch=0,
            grid=grid,
            in_specs=[
                pl.BlockSpec((tm, Kp), lambda i, j: (i, 0)),
                pl.BlockSpec((Kp, tn), lambda i, j: (0, j)),
                pl.BlockSpec((1, tn), lambda i, j: (0, j)),
            ],
            out_specs=pl.BlockSpec((tm, tn), lambda i, j: (i, j)),
        ),
        compiler_params=pltpu.CompilerParams(
            dimension_semantics=("parallel", "parallel"),
            vmem_limit_bytes=_vmem_limit_bytes(),
        ),
    )(patches, w_packed, b_packed)


# -----------------------------------------------------------------------------
# Conv2d (NHWC) = im2col glue + one Pallas GEMM; output stays NHWC (lane-padded)
# -----------------------------------------------------------------------------
def conv2d_nhwc_pallas(x, w_packed, b_packed, *, in_ch, ksize, stride, pad):
    """x: [N, H, W, C_avail] (NHWC, possibly lane-padded channels);
    w_packed: [Kp, OCp] (K ordered (kh,kw,c), zero-padded, MXU dtype);
    b_packed: [1, OCp] f32.  Returns [N, OH, OW, OCp] in MXU dtype."""
    N, H, W, c_avail = x.shape
    Kp, OCp = w_packed.shape

    # Drop carried lane padding from the previous layer; this slice is fused
    # into the pad / im2col gather copies that happen anyway.
    xs = x[..., :in_ch] if c_avail > in_ch else x
    xp = jnp.pad(xs, ((0, 0), (pad, pad), (pad, pad), (0, 0)))
    OH = (H + 2 * pad - ksize) // stride + 1
    OW = (W + 2 * pad - ksize) // stride + 1

    # im2col: slicing / concat only, patch index ordered (kh, kw, c).
    cols = [xp[:, i:i + stride * OH:stride, j:j + stride * OW:stride, :]
            for i in range(ksize) for j in range(ksize)]
    K = ksize * ksize * in_ch
    if Kp > K:  # fold the (<=127 col) lane padding into the same concat pass
        cols.append(jnp.zeros((N, OH, OW, Kp - K), xs.dtype))
    patches = jnp.concatenate(cols, axis=-1).reshape(N * OH * OW, Kp)

    out = _pallas_gemm_bias_relu(patches, w_packed, b_packed,
                                 apply_relu=True, out_dtype=MXU_INPUT_DTYPE)
    return out.reshape(N, OH, OW, OCp)


# -----------------------------------------------------------------------------
# Fused pose head: mean over spatial + 1x1 conv + bias + 0.01 scale
# -----------------------------------------------------------------------------
def pose_head_pallas(feat_nhwc, w_packed, b_packed, *, out_ch):
    """feat_nhwc: [N, OH, OW, 256]; w_packed: [256, OCp]; b_packed: [1, OCp]."""
    N, OH, OW, C = feat_nhwc.shape
    S = OH * OW
    OCp = w_packed.shape[1]
    x3 = feat_nhwc.reshape(N, S, C)

    out = pl.pallas_call(
        functools.partial(_pose_head_kernel, inv_spatial=1.0 / S),
        out_shape=jax.ShapeDtypeStruct((N, OCp), jnp.float32),
        in_specs=[_VMEM_SPEC, _VMEM_SPEC, _VMEM_SPEC],
        out_specs=_VMEM_SPEC,
        compiler_params=pltpu.CompilerParams(vmem_limit_bytes=_vmem_limit_bytes()),
    )(x3, w_packed, b_packed)
    return out[:, :out_ch]


# -----------------------------------------------------------------------------
# PoseCNN config (static Python), weight pre-packing, params init, forward
# -----------------------------------------------------------------------------
def pose_cnn_cfg(num_input_frames):
    # (out_ch, in_ch, kernel, stride, pad) for convs[0..6] — static ints.
    return [
        (16, 3 * num_input_frames, 7, 2, 3),
        (32, 16, 5, 2, 2),
        (64, 32, 3, 2, 1),
        (128, 64, 3, 2, 1),
        (256, 128, 3, 2, 1),
        (256, 256, 3, 2, 1),
        (256, 256, 3, 2, 1),
    ]


def _pack_conv_weights(w, b):
    """PyTorch-layout conv weight [OC, C, KH, KW] -> ([Kp, OCp] bf16, [1, OCp] f32)."""
    oc, ic, kh, kw = w.shape
    K = kh * kw * ic
    Kp = _round_up(K, 128)
    OCp = _round_up(oc, 128)
    w_mat = jnp.transpose(w, (2, 3, 1, 0)).reshape(K, oc)      # (kh, kw, c) ordering
    w_mat = jnp.pad(w_mat, ((0, Kp - K), (0, OCp - oc))).astype(MXU_INPUT_DTYPE)
    b_mat = jnp.pad(b, (0, OCp - oc)).reshape(1, OCp).astype(jnp.float32)
    return (w_mat, b_mat)


def _pack_pose_weights(pw, pb):
    """1x1 pose conv weight [OC, 256, 1, 1] -> ([256, OCp] f32, [1, OCp] f32)."""
    oc, ic = pw.shape[0], pw.shape[1]
    OCp = _round_up(oc, 128)
    w_mat = jnp.pad(pw.reshape(oc, ic).T, ((0, 0), (0, OCp - oc))).astype(jnp.float32)
    b_mat = jnp.pad(pb, (0, OCp - oc)).reshape(1, OCp).astype(jnp.float32)
    return (w_mat, b_mat)


def init_pose_cnn_params(key, num_input_frames):
    cfg = pose_cnn_cfg(num_input_frames)
    convs = []
    keys = jax.random.split(key, len(cfg) + 1)
    for idx, (oc, ic, k, _, _) in enumerate(cfg):
        kw_key, kb_key = jax.random.split(keys[idx])
        fan_in = ic * k * k
        w = jax.random.normal(kw_key, (oc, ic, k, k), jnp.float32) * (1.0 / fan_in) ** 0.5
        b = jax.random.normal(kb_key, (oc,), jnp.float32) * 0.01
        convs.append(_pack_conv_weights(w, b))           # pre-packed once
    oc = 6 * (num_input_frames - 1)
    pw_key, pb_key = jax.random.split(keys[-1])
    pw = jax.random.normal(pw_key, (oc, 256, 1, 1), jnp.float32) * (1.0 / 256.0) ** 0.5
    pb = jax.random.normal(pb_key, (oc,), jnp.float32) * 0.01
    return {"convs": convs, "pose_conv": _pack_pose_weights(pw, pb)}


def pose_cnn_forward(x_nchw, params, num_input_frames):
    cfg = pose_cnn_cfg(num_input_frames)                    # static (not traced)
    out = jnp.transpose(x_nchw, (0, 2, 3, 1)).astype(MXU_INPUT_DTYPE)  # NCHW->NHWC once
    for (w_packed, b_packed), (_, ic, k, stride, pad) in zip(params["convs"], cfg):
        out = conv2d_nhwc_pallas(out, w_packed, b_packed,
                                 in_ch=ic, ksize=k, stride=stride, pad=pad)
    pw, pb = params["pose_conv"]
    pose = pose_head_pallas(out, pw, pb, out_ch=6 * (num_input_frames - 1))
    return pose.reshape(-1, num_input_frames - 1, 1, 6)


# -----------------------------------------------------------------------------
# Main
# -----------------------------------------------------------------------------
if __name__ == "__main__":
    num_input_frames = 2
    N, H, W = 2, 16, 16
    C = 3 * num_input_frames

    root = jax.random.PRNGKey(0)
    k_params, k_x = jax.random.split(root)
    params = init_pose_cnn_params(k_params, num_input_frames)
    x = jax.random.normal(k_x, (N, C, H, W), jnp.float32)

    fwd = jax.jit(functools.partial(pose_cnn_forward,
                                    num_input_frames=num_input_frames))
    out = jax.block_until_ready(fwd(x, params))

    assert out.shape == (N, num_input_frames - 1, 1, 6), out.shape
    assert out.dtype == jnp.float32
    assert bool(jnp.all(jnp.isfinite(out)))
    print("KERNEL_OK")
</pallas_src>

<mosaic_0001>
module attributes {stable_mosaic.version = 11 : i64} {
  func.func @_gemm_bias_relu_kernel(%arg0: i32, %arg1: i32, %arg2: memref<128x384xbf16, #tpu.memory_space<vmem>>, %arg3: memref<384x128xbf16, #tpu.memory_space<vmem>>, %arg4: memref<1x128xf32, #tpu.memory_space<vmem>>, %arg5: memref<128x128xbf16, #tpu.memory_space<vmem>>) attributes {dimension_semantics = [#tpu.dimension_semantics<parallel>, #tpu.dimension_semantics<parallel>], iteration_bounds = array<i64: 1, 1>, scalar_prefetch = 0 : i64, scratch_operands = 0 : i64, tpu.core_type = #tpu.core_type<tc>, window_params = [{transform_indices = @transform_0, window_bounds = array<i64: 128, 384>}, {transform_indices = @transform_1, window_bounds = array<i64: 384, 128>}, {transform_indices = @transform_2, window_bounds = array<i64: 1, 128>}, {transform_indices = @transform_3, window_bounds = array<i64: 128, 128>}]} {
    %c0 = arith.constant 0 : index
    %c0_0 = arith.constant 0 : index
    %0 = vector.load %arg2[%c0, %c0_0] : memref<128x384xbf16, #tpu.memory_space<vmem>>, vector<128x384xbf16>
    %c0_1 = arith.constant 0 : index
    %c0_2 = arith.constant 0 : index
    %1 = vector.load %arg3[%c0_1, %c0_2] : memref<384x128xbf16, #tpu.memory_space<vmem>>, vector<384x128xbf16>
    %cst = arith.constant dense<0.000000e+00> : vector<128x128xf32>
    %2 = tpu.matmul %0, %1, %cst {dimension_numbers = #tpu.dot_dimension_numbers<[1], [0], [0], [1], [0, 0, 1, 1], [], []>} : vector<128x384xbf16>, vector<384x128xbf16>, vector<128x128xf32> -> vector<128x128xf32>
    %c0_3 = arith.constant 0 : index
    %c0_4 = arith.constant 0 : index
    %3 = vector.load %arg4[%c0_3, %c0_4] : memref<1x128xf32, #tpu.memory_space<vmem>>, vector<1x128xf32>
    %4 = vector.broadcast %3 : vector<1x128xf32> to vector<128x128xf32>
    %5 = arith.addf %2, %4 : vector<128x128xf32>
    %cst_5 = arith.constant 0.000000e+00 : f32
    %6 = vector.broadcast %cst_5 : f32 to vector<128x128xf32>
    %7 = arith.maximumf %5, %6 : vector<128x128xf32>
    %8 = arith.truncf %7 : vector<128x128xf32> to vector<128x128xbf16>
    %c0_6 = arith.constant 0 : index
    %c0_7 = arith.constant 0 : index
    %9 = vector.load %arg5[%c0_6, %c0_7] : memref<128x128xbf16, #tpu.memory_space<vmem>>, vector<128x128xbf16>
    tpu.vector_store %arg5[%c0_6, %c0_7], %8 {strides = array<i32>} : memref<128x128xbf16, #tpu.memory_space<vmem>>, vector<128x128xbf16>,
    return
  }
  func.func @transform_0(%arg0: i32, %arg1: i32) -> (i32, i32) {
    %c0_i32 = arith.constant 0 : i32
    %c0_i32_0 = arith.constant 0 : i32
    return %arg0, %c0_i32 : i32, i32
  }
  func.func @transform_1(%arg0: i32, %arg1: i32) -> (i32, i32) {
    %c0_i32 = arith.constant 0 : i32
    %c0_i32_0 = arith.constant 0 : i32
    return %c0_i32, %arg1 : i32, i32
  }
  func.func @transform_2(%arg0: i32, %arg1: i32) -> (i32, i32) {
    %c0_i32 = arith.constant 0 : i32
    %c0_i32_0 = arith.constant 0 : i32
    return %c0_i32, %arg1 : i32, i32
  }
  func.func @transform_3(%arg0: i32, %arg1: i32) -> (i32, i32) {
    %c0_i32 = arith.constant 0 : i32
    return %arg0, %arg1 : i32, i32
  }
}

module attributes {stable_mosaic.version = 11 : i64} {
  func.func @_gemm_bias_relu_kernel(%arg0: i32, %arg1: i32, %arg2: memref<32x512xbf16, #tpu.memory_space<vmem>>, %arg3: memref<512x128xbf16, #tpu.memory_space<vmem>>, %arg4: memref<1x128xf32, #tpu.memory_space<vmem>>, %arg5: memref<32x128xbf16, #tpu.memory_space<vmem>>) attributes {dimension_semantics = [#tpu.dimension_semantics<parallel>, #tpu.dimension_semantics<parallel>], iteration_bounds = array<i64: 1, 1>, scalar_prefetch = 0 : i64, scratch_operands = 0 : i64, tpu.core_type = #tpu.core_type<tc>, window_params = [{transform_indices = @transform_0, window_bounds = array<i64: 32, 512>}, {transform_indices = @transform_1, window_bounds = array<i64: 512, 128>}, {transform_indices = @transform_2, window_bounds = array<i64: 1, 128>}, {transform_indices = @transform_3, window_bounds = array<i64: 32, 128>}]} {
    %c0 = arith.constant 0 : index
    %c0_0 = arith.constant 0 : index
    %0 = vector.load %arg2[%c0, %c0_0] : memref<32x512xbf16, #tpu.memory_space<vmem>>, vector<32x512xbf16>
    %c0_1 = arith.constant 0 : index
    %c0_2 = arith.constant 0 : index
    %1 = vector.load %arg3[%c0_1, %c0_2] : memref<512x128xbf16, #tpu.memory_space<vmem>>, vector<512x128xbf16>
    %cst = arith.constant dense<0.000000e+00> : vector<32x128xf32>
    %2 = tpu.matmul %0, %1, %cst {dimension_numbers = #tpu.dot_dimension_numbers<[1], [0], [0], [1], [0, 0, 1, 1], [], []>} : vector<32x512xbf16>, vector<512x128xbf16>, vector<32x128xf32> -> vector<32x128xf32>
    %c0_3 = arith.constant 0 : index
    %c0_4 = arith.constant 0 : index
    %3 = vector.load %arg4[%c0_3, %c0_4] : memref<1x128xf32, #tpu.memory_space<vmem>>, vector<1x128xf32>
    %4 = vector.broadcast %3 : vector<1x128xf32> to vector<32x128xf32>
    %5 = arith.addf %2, %4 : vector<32x128xf32>
    %cst_5 = arith.constant 0.000000e+00 : f32
    %6 = vector.broadcast %cst_5 : f32 to vector<32x128xf32>
    %7 = arith.maximumf %5, %6 : vector<32x128xf32>
    %8 = arith.truncf %7 : vector<32x128xf32> to vector<32x128xbf16>
    %c0_6 = arith.constant 0 : index
    %c0_7 = arith.constant 0 : index
    %9 = vector.load %arg5[%c0_6, %c0_7] : memref<32x128xbf16, #tpu.memory_space<vmem>>, vector<32x128xbf16>
    tpu.vector_store %arg5[%c0_6, %c0_7], %8 {strides = array<i32>} : memref<32x128xbf16, #tpu.memory_space<vmem>>, vector<32x128xbf16>,
    return
  }
  func.func @transform_0(%arg0: i32, %arg1: i32) -> (i32, i32) {
    %c0_i32 = arith.constant 0 : i32
    %c0_i32_0 = arith.constant 0 : i32
    return %arg0, %c0_i32 : i32, i32
  }
  func.func @transform_1(%arg0: i32, %arg1: i32) -> (i32, i32) {
    %c0_i32 = arith.constant 0 : i32
    %c0_i32_0 = arith.constant 0 : i32
    return %c0_i32, %arg1 : i32, i32
  }
  func.func @transform_2(%arg0: i32, %arg1: i32) -> (i32, i32) {
    %c0_i32 = arith.constant 0 : i32
    %c0_i32_0 = arith.constant 0 : i32
    return %c0_i32, %arg1 : i32, i32
  }
  func.func @transform_3(%arg0: i32, %arg1: i32) -> (i32, i32) {
    %c0_i32 = arith.constant 0 : i32
    return %arg0, %arg1 : i32, i32
  }
}

module attributes {stable_mosaic.version = 11 : i64} {
  func.func @_gemm_bias_relu_kernel(%arg0: i32, %arg1: i32, %arg2: memref<8x384xbf16, #tpu.memory_space<vmem>>, %arg3: memref<384x128xbf16, #tpu.memory_space<vmem>>, %arg4: memref<1x128xf32, #tpu.memory_space<vmem>>, %arg5: memref<8x128xbf16, #tpu.memory_space<vmem>>) attributes {dimension_semantics = [#tpu.dimension_semantics<parallel>, #tpu.dimension_semantics<parallel>], iteration_bounds = array<i64: 1, 1>, scalar_prefetch = 0 : i64, scratch_operands = 0 : i64, tpu.core_type = #tpu.core_type<tc>, window_params = [{transform_indices = @transform_0, window_bounds = array<i64: 8, 384>}, {transform_indices = @transform_1, window_bounds = array<i64: 384, 128>}, {transform_indices = @transform_2, window_bounds = array<i64: 1, 128>}, {transform_indices = @transform_3, window_bounds = array<i64: 8, 128>}]} {
    %c0 = arith.constant 0 : index
    %c0_0 = arith.constant 0 : index
    %0 = vector.load %arg2[%c0, %c0_0] : memref<8x384xbf16, #tpu.memory_space<vmem>>, vector<8x384xbf16>
    %c0_1 = arith.constant 0 : index
    %c0_2 = arith.constant 0 : index
    %1 = vector.load %arg3[%c0_1, %c0_2] : memref<384x128xbf16, #tpu.memory_space<vmem>>, vector<384x128xbf16>
    %cst = arith.constant dense<0.000000e+00> : vector<8x128xf32>
    %2 = tpu.matmul %0, %1, %cst {dimension_numbers = #tpu.dot_dimension_numbers<[1], [0], [0], [1], [0, 0, 1, 1], [], []>} : vector<8x384xbf16>, vector<384x128xbf16>, vector<8x128xf32> -> vector<8x128xf32>
    %c0_3 = arith.constant 0 : index
    %c0_4 = arith.constant 0 : index
    %3 = vector.load %arg4[%c0_3, %c0_4] : memref<1x128xf32, #tpu.memory_space<vmem>>, vector<1x128xf32>
    %4 = vector.broadcast %3 : vector<1x128xf32> to vector<8x128xf32>
    %5 = arith.addf %2, %4 : vector<8x128xf32>
    %cst_5 = arith.constant 0.000000e+00 : f32
    %6 = vector.broadcast %cst_5 : f32 to vector<8x128xf32>
    %7 = arith.maximumf %5, %6 : vector<8x128xf32>
    %8 = arith.truncf %7 : vector<8x128xf32> to vector<8x128xbf16>
    %c0_6 = arith.constant 0 : index
    %c0_7 = arith.constant 0 : index
    %9 = vector.load %arg5[%c0_6, %c0_7] : memref<8x128xbf16, #tpu.memory_space<vmem>>, vector<8x128xbf16>
    tpu.vector_store %arg5[%c0_6, %c0_7], %8 {strides = array<i32>} : memref<8x128xbf16, #tpu.memory_space<vmem>>, vector<8x128xbf16>,
    return
  }
  func.func @transform_0(%arg0: i32, %arg1: i32) -> (i32, i32) {
    %c0_i32 = arith.constant 0 : i32
    %c0_i32_0 = arith.constant 0 : i32
    return %arg0, %c0_i32 : i32, i32
  }
  func.func @transform_1(%arg0: i32, %arg1: i32) -> (i32, i32) {
    %c0_i32 = arith.constant 0 : i32
    %c0_i32_0 = arith.constant 0 : i32
    return %c0_i32, %arg1 : i32, i32
  }
  func.func @transform_2(%arg0: i32, %arg1: i32) -> (i32, i32) {
    %c0_i32 = arith.constant 0 : i32
    %c0_i32_0 = arith.constant 0 : i32
    return %c0_i32, %arg1 : i32, i32
  }
  func.func @transform_3(%arg0: i32, %arg1: i32) -> (i32, i32) {
    %c0_i32 = arith.constant 0 : i32
    return %arg0, %arg1 : i32, i32
  }
}

module attributes {stable_mosaic.version = 11 : i64} {
  func.func @_gemm_bias_relu_kernel(%arg0: i32, %arg1: i32, %arg2: memref<2x640xbf16, #tpu.memory_space<vmem>>, %arg3: memref<640x128xbf16, #tpu.memory_space<vmem>>, %arg4: memref<1x128xf32, #tpu.memory_space<vmem>>, %arg5: memref<2x128xbf16, #tpu.memory_space<vmem>>) attributes {dimension_semantics = [#tpu.dimension_semantics<parallel>, #tpu.dimension_semantics<parallel>], iteration_bounds = array<i64: 1, 1>, scalar_prefetch = 0 : i64, scratch_operands = 0 : i64, tpu.core_type = #tpu.core_type<tc>, window_params = [{transform_indices = @transform_0, window_bounds = array<i64: 2, 640>}, {transform_indices = @transform_1, window_bounds = array<i64: 640, 128>}, {transform_indices = @transform_2, window_bounds = array<i64: 1, 128>}, {transform_indices = @transform_3, window_bounds = array<i64: 2, 128>}]} {
    %c0 = arith.constant 0 : index
    %c0_0 = arith.constant 0 : index
    %0 = vector.load %arg2[%c0, %c0_0] : memref<2x640xbf16, #tpu.memory_space<vmem>>, vector<2x640xbf16>
    %c0_1 = arith.constant 0 : index
    %c0_2 = arith.constant 0 : index
    %1 = vector.load %arg3[%c0_1, %c0_2] : memref<640x128xbf16, #tpu.memory_space<vmem>>, vector<640x128xbf16>
    %cst = arith.constant dense<0.000000e+00> : vector<2x128xf32>
    %2 = tpu.matmul %0, %1, %cst {dimension_numbers = #tpu.dot_dimension_numbers<[1], [0], [0], [1], [0, 0, 1, 1], [], []>} : vector<2x640xbf16>, vector<640x128xbf16>, vector<2x128xf32> -> vector<2x128xf32>
    %c0_3 = arith.constant 0 : index
    %c0_4 = arith.constant 0 : index
    %3 = vector.load %arg4[%c0_3, %c0_4] : memref<1x128xf32, #tpu.memory_space<vmem>>, vector<1x128xf32>
    %4 = vector.broadcast %3 : vector<1x128xf32> to vector<2x128xf32>
    %5 = arith.addf %2, %4 : vector<2x128xf32>
    %cst_5 = arith.constant 0.000000e+00 : f32
    %6 = vector.broadcast %cst_5 : f32 to vector<2x128xf32>
    %7 = arith.maximumf %5, %6 : vector<2x128xf32>
    %8 = arith.truncf %7 : vector<2x128xf32> to vector<2x128xbf16>
    %c0_6 = arith.constant 0 : index
    %c0_7 = arith.constant 0 : index
    %9 = vector.load %arg5[%c0_6, %c0_7] : memref<2x128xbf16, #tpu.memory_space<vmem>>, vector<2x128xbf16>
    tpu.vector_store %arg5[%c0_6, %c0_7], %8 {strides = array<i32>} : memref<2x128xbf16, #tpu.memory_space<vmem>>, vector<2x128xbf16>,
    return
  }
  func.func @transform_0(%arg0: i32, %arg1: i32) -> (i32, i32) {
    %c0_i32 = arith.constant 0 : i32
    %c0_i32_0 = arith.constant 0 : i32
    return %arg0, %c0_i32 : i32, i32
  }
  func.func @transform_1(%arg0: i32, %arg1: i32) -> (i32, i32) {
    %c0_i32 = arith.constant 0 : i32
    %c0_i32_0 = arith.constant 0 : i32
    return %c0_i32, %arg1 : i32, i32
  }
  func.func @transform_2(%arg0: i32, %arg1: i32) -> (i32, i32) {
    %c0_i32 = arith.constant 0 : i32
    %c0_i32_0 = arith.constant 0 : i32
    return %c0_i32, %arg1 : i32, i32
  }
  func.func @transform_3(%arg0: i32, %arg1: i32) -> (i32, i32) {
    %c0_i32 = arith.constant 0 : i32
    return %arg0, %arg1 : i32, i32
  }
}

module attributes {stable_mosaic.version = 11 : i64} {
  func.func @_gemm_bias_relu_kernel(%arg0: i32, %arg1: i32, %arg2: memref<2x1152xbf16, #tpu.memory_space<vmem>>, %arg3: memref<1152x128xbf16, #tpu.memory_space<vmem>>, %arg4: memref<1x128xf32, #tpu.memory_space<vmem>>, %arg5: memref<2x128xbf16, #tpu.memory_space<vmem>>) attributes {dimension_semantics = [#tpu.dimension_semantics<parallel>, #tpu.dimension_semantics<parallel>], iteration_bounds = array<i64: 1, 2>, scalar_prefetch = 0 : i64, scratch_operands = 0 : i64, tpu.core_type = #tpu.core_type<tc>, window_params = [{transform_indices = @transform_0, window_bounds = array<i64: 2, 1152>}, {transform_indices = @transform_1, window_bounds = array<i64: 1152, 128>}, {transform_indices = @transform_2, window_bounds = array<i64: 1, 128>}, {transform_indices = @transform_3, window_bounds = array<i64: 2, 128>}]} {
    %c0 = arith.constant 0 : index
    %c0_0 = arith.constant 0 : index
    %0 = vector.load %arg2[%c0, %c0_0] : memref<2x1152xbf16, #tpu.memory_space<vmem>>, vector<2x1152xbf16>
    %c0_1 = arith.constant 0 : index
    %c0_2 = arith.constant 0 : index
    %1 = vector.load %arg3[%c0_1, %c0_2] : memref<1152x128xbf16, #tpu.memory_space<vmem>>, vector<1152x128xbf16>
    %cst = arith.constant dense<0.000000e+00> : vector<2x128xf32>
    %2 = tpu.matmul %0, %1, %cst {dimension_numbers = #tpu.dot_dimension_numbers<[1], [0], [0], [1], [0, 0, 1, 1], [], []>} : vector<2x1152xbf16>, vector<1152x128xbf16>, vector<2x128xf32> -> vector<2x128xf32>
    %c0_3 = arith.constant 0 : index
    %c0_4 = arith.constant 0 : index
    %3 = vector.load %arg4[%c0_3, %c0_4] : memref<1x128xf32, #tpu.memory_space<vmem>>, vector<1x128xf32>
    %4 = vector.broadcast %3 : vector<1x128xf32> to vector<2x128xf32>
    %5 = arith.addf %2, %4 : vector<2x128xf32>
    %cst_5 = arith.constant 0.000000e+00 : f32
    %6 = vector.broadcast %cst_5 : f32 to vector<2x128xf32>
    %7 = arith.maximumf %5, %6 : vector<2x128xf32>
    %8 = arith.truncf %7 : vector<2x128xf32> to vector<2x128xbf16>
    %c0_6 = arith.constant 0 : index
    %c0_7 = arith.constant 0 : index
    %9 = vector.load %arg5[%c0_6, %c0_7] : memref<2x128xbf16, #tpu.memory_space<vmem>>, vector<2x128xbf16>
    tpu.vector_store %arg5[%c0_6, %c0_7], %8 {strides = array<i32>} : memref<2x128xbf16, #tpu.memory_space<vmem>>, vector<2x128xbf16>,
    return
  }
  func.func @transform_0(%arg0: i32, %arg1: i32) -> (i32, i32) {
    %c0_i32 = arith.constant 0 : i32
    %c0_i32_0 = arith.constant 0 : i32
    return %arg0, %c0_i32 : i32, i32
  }
  func.func @transform_1(%arg0: i32, %arg1: i32) -> (i32, i32) {
    %c0_i32 = arith.constant 0 : i32
    %c0_i32_0 = arith.constant 0 : i32
    return %c0_i32, %arg1 : i32, i32
  }
  func.func @transform_2(%arg0: i32, %arg1: i32) -> (i32, i32) {
    %c0_i32 = arith.constant 0 : i32
    %c0_i32_0 = arith.constant 0 : i32
    return %c0_i32, %arg1 : i32, i32
  }
  func.func @transform_3(%arg0: i32, %arg1: i32) -> (i32, i32) {
    %c0_i32 = arith.constant 0 : i32
    return %arg0, %arg1 : i32, i32
  }
}

module attributes {stable_mosaic.version = 11 : i64} {
  func.func @_pose_head_kernel(%arg0: memref<2x1x256xbf16, #tpu.memory_space<vmem>>, %arg1: memref<256x128xf32, #tpu.memory_space<vmem>>, %arg2: memref<1x128xf32, #tpu.memory_space<vmem>>, %arg3: memref<2x128xf32, #tpu.memory_space<vmem>>) attributes {dimension_semantics = [], scalar_prefetch = 0 : i64, scratch_operands = 0 : i64, tpu.core_type = #tpu.core_type<tc>} {
    %c0 = arith.constant 0 : index
    %c0_0 = arith.constant 0 : index
    %c0_1 = arith.constant 0 : index
    %0 = vector.load %arg0[%c0, %c0_0, %c0_1] : memref<2x1x256xbf16, #tpu.memory_space<vmem>>, vector<2x1x256xbf16>
    %1 = arith.extf %0 : vector<2x1x256xbf16> to vector<2x1x256xf32>
    %cst = arith.constant dense<0.000000e+00> : vector<2x256xf32>
    %2 = vector.multi_reduction <add>, %1, %cst [1] : vector<2x1x256xf32> to vector<2x256xf32>
    %cst_2 = arith.constant 1.000000e+00 : f32
    %3 = vector.broadcast %cst_2 : f32 to vector<2x256xf32>
    %4 = arith.mulf %2, %3 : vector<2x256xf32>
    %c0_3 = arith.constant 0 : index
    %c0_4 = arith.constant 0 : index
    %5 = vector.load %arg1[%c0_3, %c0_4] : memref<256x128xf32, #tpu.memory_space<vmem>>, vector<256x128xf32>
    %cst_5 = arith.constant dense<0.000000e+00> : vector<2x128xf32>
    %6 = tpu.matmul %4, %5, %cst_5 {dimension_numbers = #tpu.dot_dimension_numbers<[1], [0], [0], [1], [0, 0, 1, 1], [], []>} : vector<2x256xf32>, vector<256x128xf32>, vector<2x128xf32> -> vector<2x128xf32>
    %c0_6 = arith.constant 0 : index
    %c0_7 = arith.constant 0 : index
    %7 = vector.load %arg2[%c0_6, %c0_7] : memref<1x128xf32, #tpu.memory_space<vmem>>, vector<1x128xf32>
    %8 = vector.broadcast %7 : vector<1x128xf32> to vector<2x128xf32>
    %9 = arith.addf %6, %8 : vector<2x128xf32>
    %cst_8 = arith.constant 0.00999999977 : f32
    %10 = vector.broadcast %cst_8 : f32 to vector<2x128xf32>
    %11 = arith.mulf %10, %9 : vector<2x128xf32>
    %c0_9 = arith.constant 0 : index
    %c0_10 = arith.constant 0 : index
    %12 = vector.load %arg3[%c0_9, %c0_10] : memref<2x128xf32, #tpu.memory_space<vmem>>, vector<2x128xf32>
    tpu.vector_store %arg3[%c0_9, %c0_10], %11 {strides = array<i32>} : memref<2x128xf32, #tpu.memory_space<vmem>>, vector<2x128xf32>,
    return
  }
}

module attributes {stable_mosaic.version = 11 : i64} {
  func.func @_gemm_bias_relu_kernel(%arg0: i32, %arg1: i32, %arg2: memref<2x2304xbf16, #tpu.memory_space<vmem>>, %arg3: memref<2304x128xbf16, #tpu.memory_space<vmem>>, %arg4: memref<1x128xf32, #tpu.memory_space<vmem>>, %arg5: memref<2x128xbf16, #tpu.memory_space<vmem>>) attributes {dimension_semantics = [#tpu.dimension_semantics<parallel>, #tpu.dimension_semantics<parallel>], iteration_bounds = array<i64: 1, 2>, scalar_prefetch = 0 : i64, scratch_operands = 0 : i64, tpu.core_type = #tpu.core_type<tc>, window_params = [{transform_indices = @transform_0, window_bounds = array<i64: 2, 2304>}, {transform_indices = @transform_1, window_bounds = array<i64: 2304, 128>}, {transform_indices = @transform_2, window_bounds = array<i64: 1, 128>}, {transform_indices = @transform_3, window_bounds = array<i64: 2, 128>}]} {
    %c0 = arith.constant 0 : index
    %c0_0 = arith.constant 0 : index
    %0 = vector.load %arg2[%c0, %c0_0] : memref<2x2304xbf16, #tpu.memory_space<vmem>>, vector<2x2304xbf16>
    %c0_1 = arith.constant 0 : index
    %c0_2 = arith.constant 0 : index
    %1 = vector.load %arg3[%c0_1, %c0_2] : memref<2304x128xbf16, #tpu.memory_space<vmem>>, vector<2304x128xbf16>
    %cst = arith.constant dense<0.000000e+00> : vector<2x128xf32>
    %2 = tpu.matmul %0, %1, %cst {dimension_numbers = #tpu.dot_dimension_numbers<[1], [0], [0], [1], [0, 0, 1, 1], [], []>} : vector<2x2304xbf16>, vector<2304x128xbf16>, vector<2x128xf32> -> vector<2x128xf32>
    %c0_3 = arith.constant 0 : index
    %c0_4 = arith.constant 0 : index
    %3 = vector.load %arg4[%c0_3, %c0_4] : memref<1x128xf32, #tpu.memory_space<vmem>>, vector<1x128xf32>
    %4 = vector.broadcast %3 : vector<1x128xf32> to vector<2x128xf32>
    %5 = arith.addf %2, %4 : vector<2x128xf32>
    %cst_5 = arith.constant 0.000000e+00 : f32
    %6 = vector.broadcast %cst_5 : f32 to vector<2x128xf32>
    %7 = arith.maximumf %5, %6 : vector<2x128xf32>
    %8 = arith.truncf %7 : vector<2x128xf32> to vector<2x128xbf16>
    %c0_6 = arith.constant 0 : index
    %c0_7 = arith.constant 0 : index
    %9 = vector.load %arg5[%c0_6, %c0_7] : memref<2x128xbf16, #tpu.memory_space<vmem>>, vector<2x128xbf16>
    tpu.vector_store %arg5[%c0_6, %c0_7], %8 {strides = array<i32>} : memref<2x128xbf16, #tpu.memory_space<vmem>>, vector<2x128xbf16>,
    return
  }
  func.func @transform_0(%arg0: i32, %arg1: i32) -> (i32, i32) {
    %c0_i32 = arith.constant 0 : i32
    %c0_i32_0 = arith.constant 0 : i32
    return %arg0, %c0_i32 : i32, i32
  }
  func.func @transform_1(%arg0: i32, %arg1: i32) -> (i32, i32) {
    %c0_i32 = arith.constant 0 : i32
    %c0_i32_0 = arith.constant 0 : i32
    return %c0_i32, %arg1 : i32, i32
  }
  func.func @transform_2(%arg0: i32, %arg1: i32) -> (i32, i32) {
    %c0_i32 = arith.constant 0 : i32
    %c0_i32_0 = arith.constant 0 : i32
    return %c0_i32, %arg1 : i32, i32
  }
  func.func @transform_3(%arg0: i32, %arg1: i32) -> (i32, i32) {
    %c0_i32 = arith.constant 0 : i32
    return %arg0, %arg1 : i32, i32
  }
}

</mosaic_0001>

<llo_original>
// kernel: pose_cnn_forward.8
$region0: #{pose_cnn_forward.8}
  #allocation0 [shape = 'u32[]', space=smem, size = 0x4, offset = 0x4, fixed_abs, tag = 'smem constant byte address 0x4 - core index']
  #allocation1 [shape = 'u32[144,128]{1,0:T(1,128)}', space=vmem, size = 0x12000, scoped, tag = 'internal scratch']
  %s0 = inlined_call_operand.vmem [shape: bf16[128,384], index: 0, kind: input, shape index: {}]
  %s1 = inlined_call_operand.vmem [shape: bf16[384,128], index: 1, kind: input, shape index: {}]
  %s2 = inlined_call_operand.vmem [shape: f32[1,128], index: 2, kind: input, shape index: {}]
  %s3 = inlined_call_operand.vmem [shape: bf16[128,128], index: 3, kind: output, shape index: {}]
  %s4 = sld [smem:[#allocation0]]
  $region22: #{pose_cnn_forward.8} parent=0
    _
  %s6 = ssub.s32 1, %s4
  %s7 = scalar_select 0, %s6, %s4
  // Predicated region
  $region2: #{pose_cnn_forward.8} parent=0 // pred_check
    _
  $region3: #{pose_cnn_forward.8} parent=0 // pred_check_branch
    %9 = sbr.rel (0) target = $region5
  $region4: #{pose_cnn_forward.8} parent=0 // pred_region
    _
  $region5: #{pose_cnn_forward.8} parent=0 // pred_fallthru
    _
  // Predicated region
  $region6: #{pose_cnn_forward.8} parent=0 // pred_check
    _
  $region7: #{pose_cnn_forward.8} parent=0 // pred_check_branch
    %11 = sbr.rel (0) target = $region9
  $region8: #{pose_cnn_forward.8} parent=0 // pred_region
    _
  $region9: #{pose_cnn_forward.8} parent=0 // pred_fallthru
    _
  // Predicated region
  $region10: #{pose_cnn_forward.8} parent=0 // pred_check
    _
  $region11: #{pose_cnn_forward.8} parent=0 // pred_check_branch
    %13 = sbr.rel (0) target = $region13
  $region12: #{pose_cnn_forward.8} parent=0 // pred_region
    _
  $region13: #{pose_cnn_forward.8} parent=0 // pred_fallthru
    _
  %v15 = vld [vmem:[%s0] sm:$0xff]
  %v16 = vld [vmem:[%s0 + $0x8] sm:$0xf]
  %v17 = vld [vmem:[%s0 + $0xc] sm:$0xff]
  %v18 = vld [vmem:[%s0 + $0x14] sm:$0xf]
  %v19 = vld [vmem:[%s0 + $0x18] sm:$0xff]
  %v20 = vld [vmem:[%s0 + $0x20] sm:$0xf]
  %v21 = vld [vmem:[%s0 + $0x24] sm:$0xff]
  %v22 = vld [vmem:[%s0 + $0x2c] sm:$0xf]
  %v23 = vld [vmem:[%s0 + $0x30] sm:$0xff]
  %v24 = vld [vmem:[%s0 + $0x38] sm:$0xf]
  %v25 = vld [vmem:[%s0 + $0x3c] sm:$0xff]
  %v26 = vld [vmem:[%s0 + $0x44] sm:$0xf]
  %v27 = vld [vmem:[%s0 + $0x48] sm:$0xff]
  %v28 = vld [vmem:[%s0 + $0x50] sm:$0xf]
  %v29 = vld [vmem:[%s0 + $0x54] sm:$0xff]
  %v30 = vld [vmem:[%s0 + $0x5c] sm:$0xf]
  %v31 = vld [vmem:[%s0 + $0x60] sm:$0xff]
  %v32 = vld [vmem:[%s0 + $0x68] sm:$0xf]
  %v33 = vld [vmem:[%s0 + $0x6c] sm:$0xff]
  %v34 = vld [vmem:[%s0 + $0x74] sm:$0xf]
  %v35 = vld [vmem:[%s0 + $0x78] sm:$0xff]
  %v36 = vld [vmem:[%s0 + $0x80] sm:$0xf]
  %v37 = vld [vmem:[%s0 + $0x84] sm:$0xff]
  %v38 = vld [vmem:[%s0 + $0x8c] sm:$0xf]
  %v39 = vld [vmem:[%s0 + $0x90] sm:$0xff]
  %v40 = vld [vmem:[%s0 + $0x98] sm:$0xf]
  %v41 = vld [vmem:[%s0 + $0x9c] sm:$0xff]
  %v42 = vld [vmem:[%s0 + $0xa4] sm:$0xf]
  %v43 = vld [vmem:[%s0 + $0xa8] sm:$0xff]
  %v44 = vld [vmem:[%s0 + $0xb0] sm:$0xf]
  %v45 = vld [vmem:[%s0 + $0xb4] sm:$0xff]
  %v46 = vld [vmem:[%s0 + $0xbc] sm:$0xf]
  %v47 = vld [vmem:[%s1] sm:$0xf]
  %v48 = vld [vmem:[%s1 + $0x4] sm:$0xf]
  %v49 = vld [vmem:[%s1 + $0x8] sm:$0xf]
  %v50 = vld [vmem:[%s1 + $0xc] sm:$0xf]
  %v51 = vld [vmem:[%s1 + $0x10] sm:$0xf]
  %v52 = vld [vmem:[%s1 + $0x14] sm:$0xf]
  %v53 = vld [vmem:[%s1 + $0x18] sm:$0xf]
  %v54 = vld [vmem:[%s1 + $0x1c] sm:$0xf]
  %v55 = vld [vmem:[%s1 + $0x20] sm:$0xf]
  %v56 = vld [vmem:[%s1 + $0x24] sm:$0xf]
  %v57 = vld [vmem:[%s1 + $0x28] sm:$0xf]
  %v58 = vld [vmem:[%s1 + $0x2c] sm:$0xf]
  %v59 = vld [vmem:[%s1 + $0x30] sm:$0xf]
  %v60 = vld [vmem:[%s1 + $0x34] sm:$0xf]
  %v61 = vld [vmem:[%s1 + $0x38] sm:$0xf]
  %v62 = vld [vmem:[%s1 + $0x3c] sm:$0xf]
  %v63 = vld [vmem:[%s1 + $0x40] sm:$0xf]
  %v64 = vld [vmem:[%s1 + $0x44] sm:$0xf]
  %v65 = vld [vmem:[%s1 + $0x48] sm:$0xf]
  %v66 = vld [vmem:[%s1 + $0x4c] sm:$0xf]
  %v67 = vld [vmem:[%s1 + $0x50] sm:$0xf]
  %v68 = vld [vmem:[%s1 + $0x54] sm:$0xf]
  %v69 = vld [vmem:[%s1 + $0x58] sm:$0xf]
  %v70 = vld [vmem:[%s1 + $0x5c] sm:$0xf]
  %v71 = vld [vmem:[%s1 + $0x60] sm:$0xf]
  %v72 = vld [vmem:[%s1 + $0x64] sm:$0xf]
  %v73 = vld [vmem:[%s1 + $0x68] sm:$0xf]
  %v74 = vld [vmem:[%s1 + $0x6c] sm:$0xf]
  %v75 = vld [vmem:[%s1 + $0x70] sm:$0xf]
  %v76 = vld [vmem:[%s1 + $0x74] sm:$0xf]
  %v77 = vld [vmem:[%s1 + $0x78] sm:$0xf]
  %v78 = vld [vmem:[%s1 + $0x7c] sm:$0xf]
  %v79 = vld [vmem:[%s1 + $0x80] sm:$0xf]
  %v80 = vld [vmem:[%s1 + $0x84] sm:$0xf]
  %v81 = vld [vmem:[%s1 + $0x88] sm:$0xf]
  %v82 = vld [vmem:[%s1 + $0x8c] sm:$0xf]
  %v83 = vld [vmem:[%s1 + $0x90] sm:$0xf]
  %v84 = vld [vmem:[%s1 + $0x94] sm:$0xf]
  %v85 = vld [vmem:[%s1 + $0x98] sm:$0xf]
  %v86 = vld [vmem:[%s1 + $0x9c] sm:$0xf]
  %v87 = vld [vmem:[%s1 + $0xa0] sm:$0xf]
  %v88 = vld [vmem:[%s1 + $0xa4] sm:$0xf]
  %v89 = vld [vmem:[%s1 + $0xa8] sm:$0xf]
  %v90 = vld [vmem:[%s1 + $0xac] sm:$0xf]
  %v91 = vld [vmem:[%s1 + $0xb0] sm:$0xf]
  %v92 = vld [vmem:[%s1 + $0xb4] sm:$0xf]
  %v93 = vld [vmem:[%s1 + $0xb8] sm:$0xf]
  %v94 = vld [vmem:[%s1 + $0xbc] sm:$0xf]
  %v95 = vld [vmem:[%s2] sm:$0x1]
  %v97 = vlaneseq
  %v98 = vshrl.u32 %v97, 7
  %v99 = vsub.s32 0, %v98
  %v100 = vrot.slane %v95, %v99
  %v134 = vunpack.c.l.b16 %v15
  %v135 = vunpack.c.h.b16 %v15
  %v136 = vunpack.c.l.b16 %v16
  %v137 = vunpack.c.l.b16 %v17
  %v138 = vunpack.c.h.b16 %v17
  %v139 = vunpack.c.l.b16 %v18
  %v140 = vunpack.c.l.b16 %v19
  %v141 = vunpack.c.h.b16 %v19
  %v142 = vunpack.c.l.b16 %v20
  %v143 = vunpack.c.l.b16 %v21
  %v144 = vunpack.c.h.b16 %v21
  %v145 = vunpack.c.l.b16 %v22
  %v146 = vunpack.c.l.b16 %v23
  %v147 = vunpack.c.h.b16 %v23
  %v148 = vunpack.c.l.b16 %v24
  %v149 = vunpack.c.l.b16 %v25
  %v150 = vunpack.c.h.b16 %v25
  %v151 = vunpack.c.l.b16 %v26
  %v152 = vunpack.c.l.b16 %v27
  %v153 = vunpack.c.h.b16 %v27
  %v154 = vunpack.c.l.b16 %v28
  %v155 = vunpack.c.l.b16 %v29
  %v156 = vunpack.c.h.b16 %v29
  %v157 = vunpack.c.l.b16 %v30
  %v158 = vunpack.c.l.b16 %v31
  %v159 = vunpack.c.h.b16 %v31
  %v160 = vunpack.c.l.b16 %v32
  %v161 = vunpack.c.l.b16 %v33
  %v162 = vunpack.c.h.b16 %v33
  %v163 = vunpack.c.l.b16 %v34
  %v164 = vunpack.c.l.b16 %v35
  %v165 = vunpack.c.h.b16 %v35
  %v166 = vunpack.c.l.b16 %v36
  %v167 = vunpack.c.l.b16 %v37
  %v168 = vunpack.c.h.b16 %v37
  %v169 = vunpack.c.l.b16 %v38
  %v170 = vunpack.c.l.b16 %v39
  %v171 = vunpack.c.h.b16 %v39
  %v172 = vunpack.c.l.b16 %v40
  %v173 = vunpack.c.l.b16 %v41
  %v174 = vunpack.c.h.b16 %v41
  %v175 = vunpack.c.l.b16 %v42
  %v176 = vunpack.c.l.b16 %v43
  %v177 = vunpack.c.h.b16 %v43
  %v178 = vunpack.c.l.b16 %v44
  %v179 = vunpack.c.l.b16 %v45
  %v180 = vunpack.c.h.b16 %v45
  %v181 = vunpack.c.l.b16 %v46
  %v182 = vpack.c.b16 %v137, %v134
  %v183 = vpack.c.b16 %v138, %v135
  %v184 = vpack.c.b16 %v139, %v136
  %v185 = vpack.c.b16 %v143, %v140
  %v186 = vpack.c.b16 %v144, %v141
  %v187 = vpack.c.b16 %v145, %v142
  %v188 = vpack.c.b16 %v149, %v146
  %v189 = vpack.c.b16 %v150, %v147
  %v190 = vpack.c.b16 %v151, %v148
  %v191 = vpack.c.b16 %v155, %v152
  %v192 = vpack.c.b16 %v156, %v153
  %v193 = vpack.c.b16 %v157, %v154
  %v194 = vpack.c.b16 %v161, %v158
  %v195 = vpack.c.b16 %v162, %v159
  %v196 = vpack.c.b16 %v163, %v160
  %v197 = vpack.c.b16 %v167, %v164
  %v198 = vpack.c.b16 %v168, %v165
  %v199 = vpack.c.b16 %v169, %v166
  %v200 = vpack.c.b16 %v173, %v170
  %v201 = vpack.c.b16 %v174, %v171
  %v202 = vpack.c.b16 %v175, %v172
  %v203 = vpack.c.b16 %v179, %v176
  %v204 = vpack.c.b16 %v180, %v177
  %v205 = vpack.c.b16 %v181, %v178
  %v278 = vunpack.c.l.b16 %v47
  %v279 = vunpack.c.l.b16 %v48
  %v280 = vunpack.c.l.b16 %v49
  %v281 = vunpack.c.l.b16 %v50
  %v282 = vunpack.c.l.b16 %v51
  %v283 = vunpack.c.l.b16 %v52
  %v284 = vunpack.c.l.b16 %v53
  %v285 = vunpack.c.l.b16 %v54
  %v286 = vunpack.c.l.b16 %v55
  %v287 = vunpack.c.l.b16 %v56
  %v288 = vunpack.c.l.b16 %v57
  %v289 = vunpack.c.l.b16 %v58
  %v290 = vunpack.c.l.b16 %v59
  %v291 = vunpack.c.l.b16 %v60
  %v292 = vunpack.c.l.b16 %v61
  %v293 = vunpack.c.l.b16 %v62
  %v294 = vunpack.c.l.b16 %v63
  %v295 = vunpack.c.l.b16 %v64
  %v296 = vunpack.c.l.b16 %v65
  %v297 = vunpack.c.l.b16 %v66
  %v298 = vunpack.c.l.b16 %v67
  %v299 = vunpack.c.l.b16 %v68
  %v300 = vunpack.c.l.b16 %v69
  %v301 = vunpack.c.l.b16 %v70
  %v302 = vunpack.c.l.b16 %v71
  %v303 = vunpack.c.l.b16 %v72
  %v304 = vunpack.c.l.b16 %v73
  %v305 = vunpack.c.l.b16 %v74
  %v306 = vunpack.c.l.b16 %v75
  %v307 = vunpack.c.l.b16 %v76
  %v308 = vunpack.c.l.b16 %v77
  %v309 = vunpack.c.l.b16 %v78
  %v310 = vunpack.c.l.b16 %v79
  %v311 = vunpack.c.l.b16 %v80
  %v312 = vunpack.c.l.b16 %v81
  %v313 = vunpack.c.l.b16 %v82
  %v314 = vunpack.c.l.b16 %v83
  %v315 = vunpack.c.l.b16 %v84
  %v316 = vunpack.c.l.b16 %v85
  %v317 = vunpack.c.l.b16 %v86
  %v318 = vunpack.c.l.b16 %v87
  %v319 = vunpack.c.l.b16 %v88
  %v320 = vunpack.c.l.b16 %v89
  %v321 = vunpack.c.l.b16 %v90
  %v322 = vunpack.c.l.b16 %v91
  %v323 = vunpack.c.l.b16 %v92
  %v324 = vunpack.c.l.b16 %v93
  %v325 = vunpack.c.l.b16 %v94
  %v326 = vpack.c.b16 %v279, %v278
  %v327 = vpack.c.b16 %v281, %v280
  %v328 = vpack.c.b16 %v283, %v282
  %v329 = vpack.c.b16 %v285, %v284
  %v330 = vpack.c.b16 %v287, %v286
  %v331 = vpack.c.b16 %v289, %v288
  %v332 = vpack.c.b16 %v291, %v290
  %v333 = vpack.c.b16 %v293, %v292
  %v334 = vpack.c.b16 %v295, %v294
  %v335 = vpack.c.b16 %v297, %v296
  %v336 = vpack.c.b16 %v299, %v298
  %v337 = vpack.c.b16 %v301, %v300
  %v338 = vpack.c.b16 %v303, %v302
  %v339 = vpack.c.b16 %v305, %v304
  %v340 = vpack.c.b16 %v307, %v306
  %v341 = vpack.c.b16 %v309, %v308
  %v342 = vpack.c.b16 %v311, %v310
  %v343 = vpack.c.b16 %v313, %v312
  %v344 = vpack.c.b16 %v315, %v314
  %v345 = vpack.c.b16 %v317, %v316
  %v346 = vpack.c.b16 %v319, %v318
  %v347 = vpack.c.b16 %v321, %v320
  %v348 = vpack.c.b16 %v323, %v322
  %v349 = vpack.c.b16 %v325, %v324
  %374 = vmatprep.subr.bf16.mxu0 0
  %375 = vmatpush1.bf16.msra.mxu0 %v326
  %376 = vmatprep.subr.bf16.mxu0 0
  %377 = vmatpush1.bf16.msra.mxu0 %v327
  %378 = vmatprep.subr.bf16.mxu0 0
  %379 = vmatpush1.bf16.msra.mxu0 %v328
  %380 = vmatprep.subr.bf16.mxu0 0
  %381 = vmatpush1.bf16.msra.mxu0 %v329
  %382 = vmatprep.subr.bf16.mxu0 0
  %383 = vmatpush1.bf16.msra.mxu0 %v330
  %384 = vmatprep.subr.bf16.mxu0 0
  %385 = vmatpush1.bf16.msra.mxu0 %v331
  %386 = vmatprep.subr.bf16.mxu0 0
  %387 = vmatpush1.bf16.msra.mxu0 %v332
  %388 = vmatprep.subr.bf16.mxu0 0
  %389 = vmatpush1.bf16.msra.mxu0 %v333
  %390 = vmatprep.subr.bf16.mxu0 0
  %391 = vmatpush1.bf16.msra.mxu0 %v334
  %392 = vmatprep.subr.bf16.mxu0 0
  %393 = vmatpush1.bf16.msra.mxu0 %v335
  %394 = vmatprep.subr.bf16.mxu0 0
  %395 = vmatpush1.bf16.msra.mxu0 %v336
  %396 = vmatprep.subr.bf16.mxu0 0
  %397 = vmatpush1.bf16.msra.mxu0 %v337
  %398 = vmatprep.subr.bf16.mxu0 0
  %399 = vmatpush1.bf16.msra.mxu0 %v338
  %400 = vmatprep.subr.bf16.mxu0 0
  %401 = vmatpush1.bf16.msra.mxu0 %v339
  %402 = vmatprep.subr.bf16.mxu0 0
  %403 = vmatpush1.bf16.msra.mxu0 %v340
  %404 = vmatprep.subr.bf16.mxu0 0
  %405 = vmatpush1.bf16.msra.mxu0 %v341
  %406 = vmatprep.mubr.bf16.mxu0 %v183
  %407 = vmatmul.mubr.bf16.gmra.mrb[0].mxu0 %v182
  %v408 = vpop.f32.mrb[0].mxu0
  %v409 = vadd.f32 %v100, %v408
  %v410 = vpop.f32.mrb[0].mxu0
  %v411 = vpop.f32.mrb[0].mxu0
  %v412 = vadd.f32 %v100, %v411
  %v413 = vpop.f32.mrb[0].mxu0
  %414 = vmatprep.mubr.bf16.mxu0 %v186
  %415 = vmatmul.mubr.bf16.gmra.mrb[0].mxu0 %v185
  %v416 = vpop.f32.mrb[0].mxu0
  %v417 = vadd.f32 %v100, %v416
  %v418 = vpop.f32.mrb[0].mxu0
  %v419 = vpop.f32.mrb[0].mxu0
  %v420 = vadd.f32 %v100, %v419
  %v421 = vpop.f32.mrb[0].mxu0
  %422 = vmatprep.mubr.bf16.mxu0 %v189
  %423 = vmatmul.mubr.bf16.gmra.mrb[0].mxu0 %v188
  %v424 = vpop.f32.mrb[0].mxu0
  %v425 = vadd.f32 %v100, %v424
  %v426 = vpop.f32.mrb[0].mxu0
  %v427 = vpop.f32.mrb[0].mxu0
  %v428 = vadd.f32 %v100, %v427
  %v429 = vpop.f32.mrb[0].mxu0
  %430 = vmatprep.mubr.bf16.mxu0 %v192
  %431 = vmatmul.mubr.bf16.gmra.mrb[0].mxu0 %v191
  %v432 = vpop.f32.mrb[0].mxu0
  %v433 = vadd.f32 %v100, %v432
  %v434 = vpop.f32.mrb[0].mxu0
  %v435 = vpop.f32.mrb[0].mxu0
  %v436 = vadd.f32 %v100, %v435
  %v437 = vpop.f32.mrb[0].mxu0
  %438 = vmatprep.mubr.bf16.mxu0 %v195
  %439 = vmatmul.mubr.bf16.gmra.mrb[0].mxu0 %v194
  %v440 = vpop.f32.mrb[0].mxu0
  %v441 = vadd.f32 %v100, %v440
  %v442 = vpop.f32.mrb[0].mxu0
  %v443 = vpop.f32.mrb[0].mxu0
  %v444 = vadd.f32 %v100, %v443
  %v445 = vpop.f32.mrb[0].mxu0
  %446 = vmatprep.mubr.bf16.mxu0 %v198
  %447 = vmatmul.mubr.bf16.gmra.mrb[0].mxu0 %v197
  %v448 = vpop.f32.mrb[0].mxu0
  %v449 = vadd.f32 %v100, %v448
  %v450 = vpop.f32.mrb[0].mxu0
  %v451 = vpop.f32.mrb[0].mxu0
  %v452 = vadd.f32 %v100, %v451
  %v453 = vpop.f32.mrb[0].mxu0
  %454 = vmatprep.mubr.bf16.mxu0 %v201
  %455 = vmatmul.mubr.bf16.gmra.mrb[0].mxu0 %v200
  %v456 = vpop.f32.mrb[0].mxu0
  %v457 = vadd.f32 %v100, %v456
  %v458 = vpop.f32.mrb[0].mxu0
  %v459 = vpop.f32.mrb[0].mxu0
  %v460 = vadd.f32 %v100, %v459
  %v461 = vpop.f32.mrb[0].mxu0
  %462 = vmatprep.mubr.bf16.mxu0 %v204
  %463 = vmatmul.mubr.bf16.gmra.mrb[0].mxu0 %v203
  %v464 = vpop.f32.mrb[0].mxu0
  %v465 = vadd.f32 %v100, %v464
  %v466 = vpop.f32.mrb[0].mxu0
  %v467 = vpop.f32.mrb[0].mxu0
  %v468 = vadd.f32 %v100, %v467
  %v469 = vpop.f32.mrb[0].mxu0
  %470 = vdwg.mxu0
  %471 = vmatprep.subr.bf16.mxu0 0
  %472 = vmatpush1.bf16.msra.mxu0 %v342
  %473 = vmatprep.subr.bf16.mxu0 0
  %474 = vmatpush1.bf16.msra.mxu0 %v343
  %475 = vmatprep.subr.bf16.mxu0 0
  %476 = vmatpush1.bf16.msra.mxu0 %v344
  %477 = vmatprep.subr.bf16.mxu0 0
  %478 = vmatpush1.bf16.msra.mxu0 %v345
  %479 = vmatprep.subr.bf16.mxu0 0
  %480 = vmatpush1.bf16.msra.mxu0 %v346
  %481 = vmatprep.subr.bf16.mxu0 0
  %482 = vmatpush1.bf16.msra.mxu0 %v347
  %483 = vmatprep.subr.bf16.mxu0 0
  %484 = vmatpush1.bf16.msra.mxu0 %v348
  %485 = vmatprep.subr.bf16.mxu0 0
  %486 = vmatpush1.bf16.msra.mxu0 %v349
  %487 = vmatprep.subr.bf16.mxu0 0
  %488 = vmatpush1.bf16.msra.mxu0 0
  %489 = vmatprep.subr.bf16.mxu0 0
  %490 = vmatpush1.bf16.msra.mxu0 0
  %491 = vmatprep.subr.bf16.mxu0 0
  %492 = vmatpush1.bf16.msra.mxu0 0
  %493 = vmatprep.subr.bf16.mxu0 0
  %494 = vmatpush1.bf16.msra.mxu0 0
  %495 = vmatprep.subr.bf16.mxu0 0
  %496 = vmatpush1.bf16.msra.mxu0 0
  %497 = vmatprep.subr.bf16.mxu0 0
  %498 = vmatpush1.bf16.msra.mxu0 0
  %499 = vmatprep.subr.bf16.mxu0 0
  %500 = vmatpush1.bf16.msra.mxu0 0
  %501 = vmatprep.subr.bf16.mxu0 0
  %502 = vmatpush1.bf16.msra.mxu0 0
  %503 = vmatprep.mubr.bf16.mxu0 0
  %504 = vmatmul.mubr.bf16.gmra.mrb[0].mxu0 %v184
  %v505 = vpop.f32.mrb[0].mxu0
  %v506 = vadd.f32 %v409, %v505
  %v507 = vpop.f32.mrb[0].mxu0
  %v508 = vpop.f32.mrb[0].mxu0
  %v509 = vadd.f32 %v412, %v508
  %v510 = vpop.f32.mrb[0].mxu0
  %511 = vmatprep.mubr.bf16.mxu0 0
  %512 = vmatmul.mubr.bf16.gmra.mrb[0].mxu0 %v187
  %v513 = vpop.f32.mrb[0].mxu0
  %v514 = vadd.f32 %v417, %v513
  %v515 = vpop.f32.mrb[0].mxu0
  %v516 = vpop.f32.mrb[0].mxu0
  %v517 = vadd.f32 %v420, %v516
  %v518 = vpop.f32.mrb[0].mxu0
  %519 = vmatprep.mubr.bf16.mxu0 0
  %520 = vmatmul.mubr.bf16.gmra.mrb[0].mxu0 %v190
  %v521 = vpop.f32.mrb[0].mxu0
  %v522 = vadd.f32 %v425, %v521
  %v523 = vpop.f32.mrb[0].mxu0
  %v524 = vpop.f32.mrb[0].mxu0
  %v525 = vadd.f32 %v428, %v524
  %v526 = vpop.f32.mrb[0].mxu0
  %527 = vmatprep.mubr.bf16.mxu0 0
  %528 = vmatmul.mubr.bf16.gmra.mrb[0].mxu0 %v193
  %v529 = vpop.f32.mrb[0].mxu0
  %v530 = vadd.f32 %v433, %v529
  %v531 = vpop.f32.mrb[0].mxu0
  %v532 = vpop.f32.mrb[0].mxu0
  %v533 = vadd.f32 %v436, %v532
  %v534 = vpop.f32.mrb[0].mxu0
  %535 = vmatprep.mubr.bf16.mxu0 0
  %536 = vmatmul.mubr.bf16.gmra.mrb[0].mxu0 %v196
  %v537 = vpop.f32.mrb[0].mxu0
  %v538 = vadd.f32 %v441, %v537
  %v539 = vpop.f32.mrb[0].mxu0
  %v540 = vpop.f32.mrb[0].mxu0
  %v541 = vadd.f32 %v444, %v540
  %v542 = vpop.f32.mrb[0].mxu0
  %543 = vmatprep.mubr.bf16.mxu0 0
  %544 = vmatmul.mubr.bf16.gmra.mrb[0].mxu0 %v199
  %v545 = vpop.f32.mrb[0].mxu0
  %v546 = vadd.f32 %v449, %v545
  %v547 = vpop.f32.mrb[0].mxu0
  %v548 = vpop.f32.mrb[0].mxu0
  %v549 = vadd.f32 %v452, %v548
  %v550 = vpop.f32.mrb[0].mxu0
  %551 = vmatprep.mubr.bf16.mxu0 0
  %552 = vmatmul.mubr.bf16.gmra.mrb[0].mxu0 %v202
  %v553 = vpop.f32.mrb[0].mxu0
  %v554 = vadd.f32 %v457, %v553
  %v555 = vpop.f32.mrb[0].mxu0
  %v556 = vpop.f32.mrb[0].mxu0
  %v557 = vadd.f32 %v460, %v556
  %v558 = vpop.f32.mrb[0].mxu0
  %559 = vmatprep.mubr.bf16.mxu0 0
  %560 = vmatmul.mubr.bf16.gmra.mrb[0].mxu0 %v205
  %v561 = vpop.f32.mrb[0].mxu0
  %v562 = vadd.f32 %v465, %v561
  %v563 = vpop.f32.mrb[0].mxu0
  %v564 = vpop.f32.mrb[0].mxu0
  %v565 = vadd.f32 %v468, %v564
  %v566 = vpop.f32.mrb[0].mxu0
  %567 = vdwg.mxu0
  %v568 = vmax.f32 %v506, 0.0
  %v569 = vmax.f32 %v509, 0.0
  %v570 = vmax.f32 %v514, 0.0
  %v571 = vmax.f32 %v517, 0.0
  %v572 = vmax.f32 %v522, 0.0
  %v573 = vmax.f32 %v525, 0.0
  %v574 = vmax.f32 %v530, 0.0
  %v575 = vmax.f32 %v533, 0.0
  %v576 = vmax.f32 %v538, 0.0
  %v577 = vmax.f32 %v541, 0.0
  %v578 = vmax.f32 %v546, 0.0
  %v579 = vmax.f32 %v549, 0.0
  %v580 = vmax.f32 %v554, 0.0
  %v581 = vmax.f32 %v557, 0.0
  %v582 = vmax.f32 %v562, 0.0
  %v583 = vmax.f32 %v565, 0.0
  %v584 = vpack.c.bf16 %v569, %v568
  %v585 = vpack.c.bf16 %v571, %v570
  %v586 = vpack.c.bf16 %v573, %v572
  %v587 = vpack.c.bf16 %v575, %v574
  %v588 = vpack.c.bf16 %v577, %v576
  %v589 = vpack.c.bf16 %v579, %v578
  %v590 = vpack.c.bf16 %v581, %v580
  %v591 = vpack.c.bf16 %v583, %v582
  %v600 = vunpack.c.l.b16 %v584
  %v601 = vunpack.c.h.b16 %v584
  %v602 = vunpack.c.l.b16 %v585
  %v603 = vunpack.c.h.b16 %v585
  %v604 = vunpack.c.l.b16 %v586
  %v605 = vunpack.c.h.b16 %v586
  %v606 = vunpack.c.l.b16 %v587
  %v607 = vunpack.c.h.b16 %v587
  %v608 = vunpack.c.l.b16 %v588
  %v609 = vunpack.c.h.b16 %v588
  %v610 = vunpack.c.l.b16 %v589
  %v611 = vunpack.c.h.b16 %v589
  %v612 = vunpack.c.l.b16 %v590
  %v613 = vunpack.c.h.b16 %v590
  %v614 = vunpack.c.l.b16 %v591
  %v615 = vunpack.c.h.b16 %v591
  %v616 = vpack.c.b16 %v600, %v600
  %v617 = vpack.c.b16 %v601, %v601
  %v618 = vpack.c.b16 %v602, %v602
  %v619 = vpack.c.b16 %v603, %v603
  %v620 = vpack.c.b16 %v604, %v604
  %v621 = vpack.c.b16 %v605, %v605
  %v622 = vpack.c.b16 %v606, %v606
  %v623 = vpack.c.b16 %v607, %v607
  %v624 = vpack.c.b16 %v608, %v608
  %v625 = vpack.c.b16 %v609, %v609
  %v626 = vpack.c.b16 %v610, %v610
  %v627 = vpack.c.b16 %v611, %v611
  %v628 = vpack.c.b16 %v612, %v612
  %v629 = vpack.c.b16 %v613, %v613
  %v630 = vpack.c.b16 %v614, %v614
  %v631 = vpack.c.b16 %v615, %v615
  %648 = vst [vmem:[%s3] sm:$0xf] %v616
  %649 = vst [vmem:[%s3 + $0x4] sm:$0xf] %v617
  %650 = vst [vmem:[%s3 + $0x8] sm:$0xf] %v618
  %651 = vst [vmem:[%s3 + $0xc] sm:$0xf] %v619
  %652 = vst [vmem:[%s3 + $0x10] sm:$0xf] %v620
  %653 = vst [vmem:[%s3 + $0x14] sm:$0xf] %v621
  %654 = vst [vmem:[%s3 + $0x18] sm:$0xf] %v622
  %655 = vst [vmem:[%s3 + $0x1c] sm:$0xf] %v623
  %656 = vst [vmem:[%s3 + $0x20] sm:$0xf] %v624
  %657 = vst [vmem:[%s3 + $0x24] sm:$0xf] %v625
  %658 = vst [vmem:[%s3 + $0x28] sm:$0xf] %v626
  %659 = vst [vmem:[%s3 + $0x2c] sm:$0xf] %v627
  %660 = vst [vmem:[%s3 + $0x30] sm:$0xf] %v628
  %661 = vst [vmem:[%s3 + $0x34] sm:$0xf] %v629
  %662 = vst [vmem:[%s3 + $0x38] sm:$0xf] %v630
  %663 = vst [vmem:[%s3 + $0x3c] sm:$0xf] %v631
  // Predicated region
  $region14: #{pose_cnn_forward.8} parent=0 // pred_check
    _
  $region15: #{pose_cnn_forward.8} parent=0 // pred_check_branch
    %665 = sbr.rel (0) target = $region17
  $region16: #{pose_cnn_forward.8} parent=0 // pred_region
    _
  $region17: #{pose_cnn_forward.8} parent=0 // pred_fallthru
    _
  // Predicated region
  $region18: #{pose_cnn_forward.8} parent=0 // pred_check
    _
  $region19: #{pose_cnn_forward.8} parent=0 // pred_check_branch
    %667 = sbr.rel (0) target = $region21
  $region20: #{pose_cnn_forward.8} parent=0 // pred_region
    _
  $region21: #{pose_cnn_forward.8} parent=0 // pred_fallthru
    _

// kernel: pose_cnn_forward.9
$region0: #{pose_cnn_forward.9}
  #allocation0 [shape = 'u32[]', space=smem, size = 0x4, offset = 0x4, fixed_abs, tag = 'smem constant byte address 0x4 - core index']
  #allocation1 [shape = 'u32[144,128]{1,0:T(1,128)}', space=vmem, size = 0x12000, scoped, tag = 'internal scratch']
  %s0 = inlined_call_operand.vmem [shape: bf16[32,512], index: 0, kind: input, shape index: {}]
  %s1 = inlined_call_operand.vmem [shape: bf16[512,128], index: 1, kind: input, shape index: {}]
  %s2 = inlined_call_operand.vmem [shape: f32[1,128], index: 2, kind: input, shape index: {}]
  %s3 = inlined_call_operand.vmem [shape: bf16[32,128], index: 3, kind: output, shape index: {}]
  %s4 = sld [smem:[#allocation0]]
  $region22: #{pose_cnn_forward.9} parent=0
    _
  %s6 = ssub.s32 1, %s4
  %s7 = scalar_select 0, %s6, %s4
  // Predicated region
  $region2: #{pose_cnn_forward.9} parent=0 // pred_check
    _
  $region3: #{pose_cnn_forward.9} parent=0 // pred_check_branch
    %9 = sbr.rel (0) target = $region5
  $region4: #{pose_cnn_forward.9} parent=0 // pred_region
    _
  $region5: #{pose_cnn_forward.9} parent=0 // pred_fallthru
    _
  // Predicated region
  $region6: #{pose_cnn_forward.9} parent=0 // pred_check
    _
  $region7: #{pose_cnn_forward.9} parent=0 // pred_check_branch
    %11 = sbr.rel (0) target = $region9
  $region8: #{pose_cnn_forward.9} parent=0 // pred_region
    _
  $region9: #{pose_cnn_forward.9} parent=0 // pred_fallthru
    _
  // Predicated region
  $region10: #{pose_cnn_forward.9} parent=0 // pred_check
    _
  $region11: #{pose_cnn_forward.9} parent=0 // pred_check_branch
    %13 = sbr.rel (0) target = $region13
  $region12: #{pose_cnn_forward.9} parent=0 // pred_region
    _
  $region13: #{pose_cnn_forward.9} parent=0 // pred_fallthru
    _
  %v15 = vld [vmem:[%s0] sm:$0xff]
  %v16 = vld [vmem:[%s0 + $0x8] sm:$0xff]
  %v17 = vld [vmem:[%s0 + $0x10] sm:$0xff]
  %v18 = vld [vmem:[%s0 + $0x18] sm:$0xff]
  %v19 = vld [vmem:[%s0 + $0x20] sm:$0xff]
  %v20 = vld [vmem:[%s0 + $0x28] sm:$0xff]
  %v21 = vld [vmem:[%s0 + $0x30] sm:$0xff]
  %v22 = vld [vmem:[%s0 + $0x38] sm:$0xff]
  %v23 = vld [vmem:[%s1] sm:$0xf]
  %v24 = vld [vmem:[%s1 + $0x4] sm:$0xf]
  %v25 = vld [vmem:[%s1 + $0x8] sm:$0xf]
  %v26 = vld [vmem:[%s1 + $0xc] sm:$0xf]
  %v27 = vld [vmem:[%s1 + $0x10] sm:$0xf]
  %v28 = vld [vmem:[%s1 + $0x14] sm:$0xf]
  %v29 = vld [vmem:[%s1 + $0x18] sm:$0xf]
  %v30 = vld [vmem:[%s1 + $0x1c] sm:$0xf]
  %v31 = vld [vmem:[%s1 + $0x20] sm:$0xf]
  %v32 = vld [vmem:[%s1 + $0x24] sm:$0xf]
  %v33 = vld [vmem:[%s1 + $0x28] sm:$0xf]
  %v34 = vld [vmem:[%s1 + $0x2c] sm:$0xf]
  %v35 = vld [vmem:[%s1 + $0x30] sm:$0xf]
  %v36 = vld [vmem:[%s1 + $0x34] sm:$0xf]
  %v37 = vld [vmem:[%s1 + $0x38] sm:$0xf]
  %v38 = vld [vmem:[%s1 + $0x3c] sm:$0xf]
  %v39 = vld [vmem:[%s1 + $0x40] sm:$0xf]
  %v40 = vld [vmem:[%s1 + $0x44] sm:$0xf]
  %v41 = vld [vmem:[%s1 + $0x48] sm:$0xf]
  %v42 = vld [vmem:[%s1 + $0x4c] sm:$0xf]
  %v43 = vld [vmem:[%s1 + $0x50] sm:$0xf]
  %v44 = vld [vmem:[%s1 + $0x54] sm:$0xf]
  %v45 = vld [vmem:[%s1 + $0x58] sm:$0xf]
  %v46 = vld [vmem:[%s1 + $0x5c] sm:$0xf]
  %v47 = vld [vmem:[%s1 + $0x60] sm:$0xf]
  %v48 = vld [vmem:[%s1 + $0x64] sm:$0xf]
  %v49 = vld [vmem:[%s1 + $0x68] sm:$0xf]
  %v50 = vld [vmem:[%s1 + $0x6c] sm:$0xf]
  %v51 = vld [vmem:[%s1 + $0x70] sm:$0xf]
  %v52 = vld [vmem:[%s1 + $0x74] sm:$0xf]
  %v53 = vld [vmem:[%s1 + $0x78] sm:$0xf]
  %v54 = vld [vmem:[%s1 + $0x7c] sm:$0xf]
  %v55 = vld [vmem:[%s1 + $0x80] sm:$0xf]
  %v56 = vld [vmem:[%s1 + $0x84] sm:$0xf]
  %v57 = vld [vmem:[%s1 + $0x88] sm:$0xf]
  %v58 = vld [vmem:[%s1 + $0x8c] sm:$0xf]
  %v59 = vld [vmem:[%s1 + $0x90] sm:$0xf]
  %v60 = vld [vmem:[%s1 + $0x94] sm:$0xf]
  %v61 = vld [vmem:[%s1 + $0x98] sm:$0xf]
  %v62 = vld [vmem:[%s1 + $0x9c] sm:$0xf]
  %v63 = vld [vmem:[%s1 + $0xa0] sm:$0xf]
  %v64 = vld [vmem:[%s1 + $0xa4] sm:$0xf]
  %v65 = vld [vmem:[%s1 + $0xa8] sm:$0xf]
  %v66 = vld [vmem:[%s1 + $0xac] sm:$0xf]
  %v67 = vld [vmem:[%s1 + $0xb0] sm:$0xf]
  %v68 = vld [vmem:[%s1 + $0xb4] sm:$0xf]
  %v69 = vld [vmem:[%s1 + $0xb8] sm:$0xf]
  %v70 = vld [vmem:[%s1 + $0xbc] sm:$0xf]
  %v71 = vld [vmem:[%s1 + $0xc0] sm:$0xf]
  %v72 = vld [vmem:[%s1 + $0xc4] sm:$0xf]
  %v73 = vld [vmem:[%s1 + $0xc8] sm:$0xf]
  %v74 = vld [vmem:[%s1 + $0xcc] sm:$0xf]
  %v75 = vld [vmem:[%s1 + $0xd0] sm:$0xf]
  %v76 = vld [vmem:[%s1 + $0xd4] sm:$0xf]
  %v77 = vld [vmem:[%s1 + $0xd8] sm:$0xf]
  %v78 = vld [vmem:[%s1 + $0xdc] sm:$0xf]
  %v79 = vld [vmem:[%s1 + $0xe0] sm:$0xf]
  %v80 = vld [vmem:[%s1 + $0xe4] sm:$0xf]
  %v81 = vld [vmem:[%s1 + $0xe8] sm:$0xf]
  %v82 = vld [vmem:[%s1 + $0xec] sm:$0xf]
  %v83 = vld [vmem:[%s1 + $0xf0] sm:$0xf]
  %v84 = vld [vmem:[%s1 + $0xf4] sm:$0xf]
  %v85 = vld [vmem:[%s1 + $0xf8] sm:$0xf]
  %v86 = vld [vmem:[%s1 + $0xfc] sm:$0xf]
  %v87 = vld [vmem:[%s2] sm:$0x1]
  %v89 = vlaneseq
  %v90 = vshrl.u32 %v89, 7
  %v91 = vsub.s32 0, %v90
  %v92 = vrot.slane %v87, %v91
  %v102 = vunpack.c.l.b16 %v15
  %v103 = vunpack.c.h.b16 %v15
  %v104 = vunpack.c.l.b16 %v16
  %v105 = vunpack.c.h.b16 %v16
  %v106 = vunpack.c.l.b16 %v17
  %v107 = vunpack.c.h.b16 %v17
  %v108 = vunpack.c.l.b16 %v18
  %v109 = vunpack.c.h.b16 %v18
  %v110 = vunpack.c.l.b16 %v19
  %v111 = vunpack.c.h.b16 %v19
  %v112 = vunpack.c.l.b16 %v20
  %v113 = vunpack.c.h.b16 %v20
  %v114 = vunpack.c.l.b16 %v21
  %v115 = vunpack.c.h.b16 %v21
  %v116 = vunpack.c.l.b16 %v22
  %v117 = vunpack.c.h.b16 %v22
  %v118 = vpack.c.b16 %v106, %v102
  %v119 = vpack.c.b16 %v107, %v103
  %v120 = vpack.c.b16 %v108, %v104
  %v121 = vpack.c.b16 %v109, %v105
  %v122 = vpack.c.b16 %v114, %v110
  %v123 = vpack.c.b16 %v115, %v111
  %v124 = vpack.c.b16 %v116, %v112
  %v125 = vpack.c.b16 %v117, %v113
  %v198 = vunpack.c.l.b16 %v23
  %v199 = vunpack.c.l.b16 %v24
  %v200 = vunpack.c.l.b16 %v25
  %v201 = vunpack.c.l.b16 %v26
  %v202 = vunpack.c.l.b16 %v27
  %v203 = vunpack.c.l.b16 %v28
  %v204 = vunpack.c.l.b16 %v29
  %v205 = vunpack.c.l.b16 %v30
  %v206 = vunpack.c.l.b16 %v31
  %v207 = vunpack.c.l.b16 %v32
  %v208 = vunpack.c.l.b16 %v33
  %v209 = vunpack.c.l.b16 %v34
  %v210 = vunpack.c.l.b16 %v35
  %v211 = vunpack.c.l.b16 %v36
  %v212 = vunpack.c.l.b16 %v37
  %v213 = vunpack.c.l.b16 %v38
  %v214 = vunpack.c.l.b16 %v39
  %v215 = vunpack.c.l.b16 %v40
  %v216 = vunpack.c.l.b16 %v41
  %v217 = vunpack.c.l.b16 %v42
  %v218 = vunpack.c.l.b16 %v43
  %v219 = vunpack.c.l.b16 %v44
  %v220 = vunpack.c.l.b16 %v45
  %v221 = vunpack.c.l.b16 %v46
  %v222 = vunpack.c.l.b16 %v47
  %v223 = vunpack.c.l.b16 %v48
  %v224 = vunpack.c.l.b16 %v49
  %v225 = vunpack.c.l.b16 %v50
  %v226 = vunpack.c.l.b16 %v51
  %v227 = vunpack.c.l.b16 %v52
  %v228 = vunpack.c.l.b16 %v53
  %v229 = vunpack.c.l.b16 %v54
  %v230 = vunpack.c.l.b16 %v55
  %v231 = vunpack.c.l.b16 %v56
  %v232 = vunpack.c.l.b16 %v57
  %v233 = vunpack.c.l.b16 %v58
  %v234 = vunpack.c.l.b16 %v59
  %v235 = vunpack.c.l.b16 %v60
  %v236 = vunpack.c.l.b16 %v61
  %v237 = vunpack.c.l.b16 %v62
  %v238 = vunpack.c.l.b16 %v63
  %v239 = vunpack.c.l.b16 %v64
  %v240 = vunpack.c.l.b16 %v65
  %v241 = vunpack.c.l.b16 %v66
  %v242 = vunpack.c.l.b16 %v67
  %v243 = vunpack.c.l.b16 %v68
  %v244 = vunpack.c.l.b16 %v69
  %v245 = vunpack.c.l.b16 %v70
  %v246 = vunpack.c.l.b16 %v71
  %v247 = vunpack.c.l.b16 %v72
  %v248 = vunpack.c.l.b16 %v73
  %v249 = vunpack.c.l.b16 %v74
  %v250 = vunpack.c.l.b16 %v75
  %v251 = vunpack.c.l.b16 %v76
  %v252 = vunpack.c.l.b16 %v77
  %v253 = vunpack.c.l.b16 %v78
  %v254 = vunpack.c.l.b16 %v79
  %v255 = vunpack.c.l.b16 %v80
  %v256 = vunpack.c.l.b16 %v81
  %v257 = vunpack.c.l.b16 %v82
  %v258 = vunpack.c.l.b16 %v83
  %v259 = vunpack.c.l.b16 %v84
  %v260 = vunpack.c.l.b16 %v85
  %v261 = vunpack.c.l.b16 %v86
  %v262 = vpack.c.b16 %v199, %v198
  %v263 = vpack.c.b16 %v201, %v200
  %v264 = vpack.c.b16 %v203, %v202
  %v265 = vpack.c.b16 %v205, %v204
  %v266 = vpack.c.b16 %v207, %v206
  %v267 = vpack.c.b16 %v209, %v208
  %v268 = vpack.c.b16 %v211, %v210
  %v269 = vpack.c.b16 %v213, %v212
  %v270 = vpack.c.b16 %v215, %v214
  %v271 = vpack.c.b16 %v217, %v216
  %v272 = vpack.c.b16 %v219, %v218
  %v273 = vpack.c.b16 %v221, %v220
  %v274 = vpack.c.b16 %v223, %v222
  %v275 = vpack.c.b16 %v225, %v224
  %v276 = vpack.c.b16 %v227, %v226
  %v277 = vpack.c.b16 %v229, %v228
  %v278 = vpack.c.b16 %v231, %v230
  %v279 = vpack.c.b16 %v233, %v232
  %v280 = vpack.c.b16 %v235, %v234
  %v281 = vpack.c.b16 %v237, %v236
  %v282 = vpack.c.b16 %v239, %v238
  %v283 = vpack.c.b16 %v241, %v240
  %v284 = vpack.c.b16 %v243, %v242
  %v285 = vpack.c.b16 %v245, %v244
  %v286 = vpack.c.b16 %v247, %v246
  %v287 = vpack.c.b16 %v249, %v248
  %v288 = vpack.c.b16 %v251, %v250
  %v289 = vpack.c.b16 %v253, %v252
  %v290 = vpack.c.b16 %v255, %v254
  %v291 = vpack.c.b16 %v257, %v256
  %v292 = vpack.c.b16 %v259, %v258
  %v293 = vpack.c.b16 %v261, %v260
  %326 = vmatprep.subr.bf16.mxu0 0
  %327 = vmatpush1.bf16.msra.mxu0 %v262
  %328 = vmatprep.subr.bf16.mxu0 0
  %329 = vmatpush1.bf16.msra.mxu0 %v263
  %330 = vmatprep.subr.bf16.mxu0 0
  %331 = vmatpush1.bf16.msra.mxu0 %v264
  %332 = vmatprep.subr.bf16.mxu0 0
  %333 = vmatpush1.bf16.msra.mxu0 %v265
  %334 = vmatprep.subr.bf16.mxu0 0
  %335 = vmatpush1.bf16.msra.mxu0 %v266
  %336 = vmatprep.subr.bf16.mxu0 0
  %337 = vmatpush1.bf16.msra.mxu0 %v267
  %338 = vmatprep.subr.bf16.mxu0 0
  %339 = vmatpush1.bf16.msra.mxu0 %v268
  %340 = vmatprep.subr.bf16.mxu0 0
  %341 = vmatpush1.bf16.msra.mxu0 %v269
  %342 = vmatprep.subr.bf16.mxu0 0
  %343 = vmatpush1.bf16.msra.mxu0 %v270
  %344 = vmatprep.subr.bf16.mxu0 0
  %345 = vmatpush1.bf16.msra.mxu0 %v271
  %346 = vmatprep.subr.bf16.mxu0 0
  %347 = vmatpush1.bf16.msra.mxu0 %v272
  %348 = vmatprep.subr.bf16.mxu0 0
  %349 = vmatpush1.bf16.msra.mxu0 %v273
  %350 = vmatprep.subr.bf16.mxu0 0
  %351 = vmatpush1.bf16.msra.mxu0 %v274
  %352 = vmatprep.subr.bf16.mxu0 0
  %353 = vmatpush1.bf16.msra.mxu0 %v275
  %354 = vmatprep.subr.bf16.mxu0 0
  %355 = vmatpush1.bf16.msra.mxu0 %v276
  %356 = vmatprep.subr.bf16.mxu0 0
  %357 = vmatpush1.bf16.msra.mxu0 %v277
  %358 = vmatprep.mubr.bf16.mxu0 %v119
  %359 = vmatmul.mubr.bf16.gmra.mrb[0].mxu0 %v118
  %v360 = vpop.f32.mrb[0].mxu0
  %v361 = vadd.f32 %v92, %v360
  %v362 = vpop.f32.mrb[0].mxu0
  %v363 = vpop.f32.mrb[0].mxu0
  %v364 = vadd.f32 %v92, %v363
  %v365 = vpop.f32.mrb[0].mxu0
  %366 = vmatprep.mubr.bf16.mxu0 %v123
  %367 = vmatmul.mubr.bf16.gmra.mrb[0].mxu0 %v122
  %v368 = vpop.f32.mrb[0].mxu0
  %v369 = vadd.f32 %v92, %v368
  %v370 = vpop.f32.mrb[0].mxu0
  %v371 = vpop.f32.mrb[0].mxu0
  %v372 = vadd.f32 %v92, %v371
  %v373 = vpop.f32.mrb[0].mxu0
  %374 = vdwg.mxu0
  %375 = vmatprep.subr.bf16.mxu0 0
  %376 = vmatpush1.bf16.msra.mxu0 %v278
  %377 = vmatprep.subr.bf16.mxu0 0
  %378 = vmatpush1.bf16.msra.mxu0 %v279
  %379 = vmatprep.subr.bf16.mxu0 0
  %380 = vmatpush1.bf16.msra.mxu0 %v280
  %381 = vmatprep.subr.bf16.mxu0 0
  %382 = vmatpush1.bf16.msra.mxu0 %v281
  %383 = vmatprep.subr.bf16.mxu0 0
  %384 = vmatpush1.bf16.msra.mxu0 %v282
  %385 = vmatprep.subr.bf16.mxu0 0
  %386 = vmatpush1.bf16.msra.mxu0 %v283
  %387 = vmatprep.subr.bf16.mxu0 0
  %388 = vmatpush1.bf16.msra.mxu0 %v284
  %389 = vmatprep.subr.bf16.mxu0 0
  %390 = vmatpush1.bf16.msra.mxu0 %v285
  %391 = vmatprep.subr.bf16.mxu0 0
  %392 = vmatpush1.bf16.msra.mxu0 %v286
  %393 = vmatprep.subr.bf16.mxu0 0
  %394 = vmatpush1.bf16.msra.mxu0 %v287
  %395 = vmatprep.subr.bf16.mxu0 0
  %396 = vmatpush1.bf16.msra.mxu0 %v288
  %397 = vmatprep.subr.bf16.mxu0 0
  %398 = vmatpush1.bf16.msra.mxu0 %v289
  %399 = vmatprep.subr.bf16.mxu0 0
  %400 = vmatpush1.bf16.msra.mxu0 %v290
  %401 = vmatprep.subr.bf16.mxu0 0
  %402 = vmatpush1.bf16.msra.mxu0 %v291
  %403 = vmatprep.subr.bf16.mxu0 0
  %404 = vmatpush1.bf16.msra.mxu0 %v292
  %405 = vmatprep.subr.bf16.mxu0 0
  %406 = vmatpush1.bf16.msra.mxu0 %v293
  %407 = vmatprep.mubr.bf16.mxu0 %v121
  %408 = vmatmul.mubr.bf16.gmra.mrb[0].mxu0 %v120
  %v409 = vpop.f32.mrb[0].mxu0
  %v410 = vadd.f32 %v361, %v409
  %v411 = vpop.f32.mrb[0].mxu0
  %v412 = vpop.f32.mrb[0].mxu0
  %v413 = vadd.f32 %v364, %v412
  %v414 = vpop.f32.mrb[0].mxu0
  %415 = vmatprep.mubr.bf16.mxu0 %v125
  %416 = vmatmul.mubr.bf16.gmra.mrb[0].mxu0 %v124
  %v417 = vpop.f32.mrb[0].mxu0
  %v418 = vadd.f32 %v369, %v417
  %v419 = vpop.f32.mrb[0].mxu0
  %v420 = vpop.f32.mrb[0].mxu0
  %v421 = vadd.f32 %v372, %v420
  %v422 = vpop.f32.mrb[0].mxu0
  %423 = vdwg.mxu0
  %v424 = vmax.f32 %v410, 0.0
  %v425 = vmax.f32 %v413, 0.0
  %v426 = vmax.f32 %v418, 0.0
  %v427 = vmax.f32 %v421, 0.0
  %v428 = vpack.c.bf16 %v425, %v424
  %v429 = vpack.c.bf16 %v427, %v426
  %v432 = vunpack.c.l.b16 %v428
  %v433 = vunpack.c.h.b16 %v428
  %v434 = vunpack.c.l.b16 %v429
  %v435 = vunpack.c.h.b16 %v429
  %v436 = vpack.c.b16 %v432, %v432
  %v437 = vpack.c.b16 %v433, %v433
  %v438 = vpack.c.b16 %v434, %v434
  %v439 = vpack.c.b16 %v435, %v435
  %444 = vst [vmem:[%s3] sm:$0xf] %v436
  %445 = vst [vmem:[%s3 + $0x4] sm:$0xf] %v437
  %446 = vst [vmem:[%s3 + $0x8] sm:$0xf] %v438
  %447 = vst [vmem:[%s3 + $0xc] sm:$0xf] %v439
  // Predicated region
  $region14: #{pose_cnn_forward.9} parent=0 // pred_check
    _
  $region15: #{pose_cnn_forward.9} parent=0 // pred_check_branch
    %449 = sbr.rel (0) target = $region17
  $region16: #{pose_cnn_forward.9} parent=0 // pred_region
    _
  $region17: #{pose_cnn_forward.9} parent=0 // pred_fallthru
    _
  // Predicated region
  $region18: #{pose_cnn_forward.9} parent=0 // pred_check
    _
  $region19: #{pose_cnn_forward.9} parent=0 // pred_check_branch
    %451 = sbr.rel (0) target = $region21
  $region20: #{pose_cnn_forward.9} parent=0 // pred_region
    _
  $region21: #{pose_cnn_forward.9} parent=0 // pred_fallthru
    _

// kernel: pose_cnn_forward.10
$region0: #{pose_cnn_forward.10}
  #allocation0 [shape = 'u32[]', space=smem, size = 0x4, offset = 0x4, fixed_abs, tag = 'smem constant byte address 0x4 - core index']
  #allocation1 [shape = 'u32[144,128]{1,0:T(1,128)}', space=vmem, size = 0x12000, scoped, tag = 'internal scratch']
  %s0 = inlined_call_operand.vmem [shape: bf16[8,384], index: 0, kind: input, shape index: {}]
  %s1 = inlined_call_operand.vmem [shape: bf16[384,128], index: 1, kind: input, shape index: {}]
  %s2 = inlined_call_operand.vmem [shape: f32[1,128], index: 2, kind: input, shape index: {}]
  %s3 = inlined_call_operand.vmem [shape: bf16[8,128], index: 3, kind: output, shape index: {}]
  %s4 = sld [smem:[#allocation0]]
  $region22: #{pose_cnn_forward.10} parent=0
    _
  %s6 = ssub.s32 1, %s4
  %s7 = scalar_select 0, %s6, %s4
  // Predicated region
  $region2: #{pose_cnn_forward.10} parent=0 // pred_check
    _
  $region3: #{pose_cnn_forward.10} parent=0 // pred_check_branch
    %9 = sbr.rel (0) target = $region5
  $region4: #{pose_cnn_forward.10} parent=0 // pred_region
    _
  $region5: #{pose_cnn_forward.10} parent=0 // pred_fallthru
    _
  // Predicated region
  $region6: #{pose_cnn_forward.10} parent=0 // pred_check
    _
  $region7: #{pose_cnn_forward.10} parent=0 // pred_check_branch
    %11 = sbr.rel (0) target = $region9
  $region8: #{pose_cnn_forward.10} parent=0 // pred_region
    _
  $region9: #{pose_cnn_forward.10} parent=0 // pred_fallthru
    _
  // Predicated region
  $region10: #{pose_cnn_forward.10} parent=0 // pred_check
    _
  $region11: #{pose_cnn_forward.10} parent=0 // pred_check_branch
    %13 = sbr.rel (0) target = $region13
  $region12: #{pose_cnn_forward.10} parent=0 // pred_region
    _
  $region13: #{pose_cnn_forward.10} parent=0 // pred_fallthru
    _
  %v15 = vld [vmem:[%s0] sm:$0xff]
  %v16 = vld [vmem:[%s0 + $0x8] sm:$0xf]
  %v17 = vld [vmem:[%s1] sm:$0xf]
  %v18 = vld [vmem:[%s1 + $0x4] sm:$0xf]
  %v19 = vld [vmem:[%s1 + $0x8] sm:$0xf]
  %v20 = vld [vmem:[%s1 + $0xc] sm:$0xf]
  %v21 = vld [vmem:[%s1 + $0x10] sm:$0xf]
  %v22 = vld [vmem:[%s1 + $0x14] sm:$0xf]
  %v23 = vld [vmem:[%s1 + $0x18] sm:$0xf]
  %v24 = vld [vmem:[%s1 + $0x1c] sm:$0xf]
  %v25 = vld [vmem:[%s1 + $0x20] sm:$0xf]
  %v26 = vld [vmem:[%s1 + $0x24] sm:$0xf]
  %v27 = vld [vmem:[%s1 + $0x28] sm:$0xf]
  %v28 = vld [vmem:[%s1 + $0x2c] sm:$0xf]
  %v29 = vld [vmem:[%s1 + $0x30] sm:$0xf]
  %v30 = vld [vmem:[%s1 + $0x34] sm:$0xf]
  %v31 = vld [vmem:[%s1 + $0x38] sm:$0xf]
  %v32 = vld [vmem:[%s1 + $0x3c] sm:$0xf]
  %v33 = vld [vmem:[%s1 + $0x40] sm:$0xf]
  %v34 = vld [vmem:[%s1 + $0x44] sm:$0xf]
  %v35 = vld [vmem:[%s1 + $0x48] sm:$0xf]
  %v36 = vld [vmem:[%s1 + $0x4c] sm:$0xf]
  %v37 = vld [vmem:[%s1 + $0x50] sm:$0xf]
  %v38 = vld [vmem:[%s1 + $0x54] sm:$0xf]
  %v39 = vld [vmem:[%s1 + $0x58] sm:$0xf]
  %v40 = vld [vmem:[%s1 + $0x5c] sm:$0xf]
  %v41 = vld [vmem:[%s1 + $0x60] sm:$0xf]
  %v42 = vld [vmem:[%s1 + $0x64] sm:$0xf]
  %v43 = vld [vmem:[%s1 + $0x68] sm:$0xf]
  %v44 = vld [vmem:[%s1 + $0x6c] sm:$0xf]
  %v45 = vld [vmem:[%s1 + $0x70] sm:$0xf]
  %v46 = vld [vmem:[%s1 + $0x74] sm:$0xf]
  %v47 = vld [vmem:[%s1 + $0x78] sm:$0xf]
  %v48 = vld [vmem:[%s1 + $0x7c] sm:$0xf]
  %v49 = vld [vmem:[%s1 + $0x80] sm:$0xf]
  %v50 = vld [vmem:[%s1 + $0x84] sm:$0xf]
  %v51 = vld [vmem:[%s1 + $0x88] sm:$0xf]
  %v52 = vld [vmem:[%s1 + $0x8c] sm:$0xf]
  %v53 = vld [vmem:[%s1 + $0x90] sm:$0xf]
  %v54 = vld [vmem:[%s1 + $0x94] sm:$0xf]
  %v55 = vld [vmem:[%s1 + $0x98] sm:$0xf]
  %v56 = vld [vmem:[%s1 + $0x9c] sm:$0xf]
  %v57 = vld [vmem:[%s1 + $0xa0] sm:$0xf]
  %v58 = vld [vmem:[%s1 + $0xa4] sm:$0xf]
  %v59 = vld [vmem:[%s1 + $0xa8] sm:$0xf]
  %v60 = vld [vmem:[%s1 + $0xac] sm:$0xf]
  %v61 = vld [vmem:[%s1 + $0xb0] sm:$0xf]
  %v62 = vld [vmem:[%s1 + $0xb4] sm:$0xf]
  %v63 = vld [vmem:[%s1 + $0xb8] sm:$0xf]
  %v64 = vld [vmem:[%s1 + $0xbc] sm:$0xf]
  %v65 = vld [vmem:[%s2] sm:$0x1]
  %v67 = vlaneseq
  %v68 = vshrl.u32 %v67, 7
  %v69 = vsub.s32 0, %v68
  %v70 = vrot.slane %v65, %v69
  %v74 = vunpack.c.l.b16 %v15
  %v75 = vunpack.c.h.b16 %v15
  %v76 = vunpack.c.l.b16 %v16
  %v77 = vpack.c.b16 %v74, %v74
  %v78 = vpack.c.b16 %v75, %v75
  %v79 = vpack.c.b16 %v76, %v76
  %v131 = vunpack.c.l.b16 %v17
  %v132 = vunpack.c.l.b16 %v18
  %v133 = vunpack.c.l.b16 %v19
  %v134 = vunpack.c.l.b16 %v20
  %v135 = vunpack.c.l.b16 %v21
  %v136 = vunpack.c.l.b16 %v22
  %v137 = vunpack.c.l.b16 %v23
  %v138 = vunpack.c.l.b16 %v24
  %v139 = vunpack.c.l.b16 %v25
  %v140 = vunpack.c.l.b16 %v26
  %v141 = vunpack.c.l.b16 %v27
  %v142 = vunpack.c.l.b16 %v28
  %v143 = vunpack.c.l.b16 %v29
  %v144 = vunpack.c.l.b16 %v30
  %v145 = vunpack.c.l.b16 %v31
  %v146 = vunpack.c.l.b16 %v32
  %v147 = vunpack.c.l.b16 %v33
  %v148 = vunpack.c.l.b16 %v34
  %v149 = vunpack.c.l.b16 %v35
  %v150 = vunpack.c.l.b16 %v36
  %v151 = vunpack.c.l.b16 %v37
  %v152 = vunpack.c.l.b16 %v38
  %v153 = vunpack.c.l.b16 %v39
  %v154 = vunpack.c.l.b16 %v40
  %v155 = vunpack.c.l.b16 %v41
  %v156 = vunpack.c.l.b16 %v42
  %v157 = vunpack.c.l.b16 %v43
  %v158 = vunpack.c.l.b16 %v44
  %v159 = vunpack.c.l.b16 %v45
  %v160 = vunpack.c.l.b16 %v46
  %v161 = vunpack.c.l.b16 %v47
  %v162 = vunpack.c.l.b16 %v48
  %v163 = vunpack.c.l.b16 %v49
  %v164 = vunpack.c.l.b16 %v50
  %v165 = vunpack.c.l.b16 %v51
  %v166 = vunpack.c.l.b16 %v52
  %v167 = vunpack.c.l.b16 %v53
  %v168 = vunpack.c.l.b16 %v54
  %v169 = vunpack.c.l.b16 %v55
  %v170 = vunpack.c.l.b16 %v56
  %v171 = vunpack.c.l.b16 %v57
  %v172 = vunpack.c.l.b16 %v58
  %v173 = vunpack.c.l.b16 %v59
  %v174 = vunpack.c.l.b16 %v60
  %v175 = vunpack.c.l.b16 %v61
  %v176 = vunpack.c.l.b16 %v62
  %v177 = vunpack.c.l.b16 %v63
  %v178 = vunpack.c.l.b16 %v64
  %v179 = vpack.c.b16 %v132, %v131
  %v180 = vpack.c.b16 %v134, %v133
  %v181 = vpack.c.b16 %v136, %v135
  %v182 = vpack.c.b16 %v138, %v137
  %v183 = vpack.c.b16 %v140, %v139
  %v184 = vpack.c.b16 %v142, %v141
  %v185 = vpack.c.b16 %v144, %v143
  %v186 = vpack.c.b16 %v146, %v145
  %v187 = vpack.c.b16 %v148, %v147
  %v188 = vpack.c.b16 %v150, %v149
  %v189 = vpack.c.b16 %v152, %v151
  %v190 = vpack.c.b16 %v154, %v153
  %v191 = vpack.c.b16 %v156, %v155
  %v192 = vpack.c.b16 %v158, %v157
  %v193 = vpack.c.b16 %v160, %v159
  %v194 = vpack.c.b16 %v162, %v161
  %v195 = vpack.c.b16 %v164, %v163
  %v196 = vpack.c.b16 %v166, %v165
  %v197 = vpack.c.b16 %v168, %v167
  %v198 = vpack.c.b16 %v170, %v169
  %v199 = vpack.c.b16 %v172, %v171
  %v200 = vpack.c.b16 %v174, %v173
  %v201 = vpack.c.b16 %v176, %v175
  %v202 = vpack.c.b16 %v178, %v177
  %227 = vmatprep.subr.bf16.mxu0 0
  %228 = vmatpush1.bf16.msra.mxu0 %v179
  %229 = vmatprep.subr.bf16.mxu0 0
  %230 = vmatpush1.bf16.msra.mxu0 %v180
  %231 = vmatprep.subr.bf16.mxu0 0
  %232 = vmatpush1.bf16.msra.mxu0 %v181
  %233 = vmatprep.subr.bf16.mxu0 0
  %234 = vmatpush1.bf16.msra.mxu0 %v182
  %235 = vmatprep.subr.bf16.mxu0 0
  %236 = vmatpush1.bf16.msra.mxu0 %v183
  %237 = vmatprep.subr.bf16.mxu0 0
  %238 = vmatpush1.bf16.msra.mxu0 %v184
  %239 = vmatprep.subr.bf16.mxu0 0
  %240 = vmatpush1.bf16.msra.mxu0 %v185
  %241 = vmatprep.subr.bf16.mxu0 0
  %242 = vmatpush1.bf16.msra.mxu0 %v186
  %243 = vmatprep.subr.bf16.mxu0 0
  %244 = vmatpush1.bf16.msra.mxu0 %v187
  %245 = vmatprep.subr.bf16.mxu0 0
  %246 = vmatpush1.bf16.msra.mxu0 %v188
  %247 = vmatprep.subr.bf16.mxu0 0
  %248 = vmatpush1.bf16.msra.mxu0 %v189
  %249 = vmatprep.subr.bf16.mxu0 0
  %250 = vmatpush1.bf16.msra.mxu0 %v190
  %251 = vmatprep.subr.bf16.mxu0 0
  %252 = vmatpush1.bf16.msra.mxu0 %v191
  %253 = vmatprep.subr.bf16.mxu0 0
  %254 = vmatpush1.bf16.msra.mxu0 %v192
  %255 = vmatprep.subr.bf16.mxu0 0
  %256 = vmatpush1.bf16.msra.mxu0 %v193
  %257 = vmatprep.subr.bf16.mxu0 0
  %258 = vmatpush1.bf16.msra.mxu0 %v194
  %259 = vmatprep.mubr.bf16.mxu0 %v78
  %260 = vmatmul.mubr.bf16.gmra.mrb[0].mxu0 %v77
  %v261 = vpop.f32.mrb[0].mxu0
  %v262 = vadd.f32 %v70, %v261
  %v263 = vpop.f32.mrb[0].mxu0
  %v264 = vpop.f32.mrb[0].mxu0
  %v265 = vpop.f32.mrb[0].mxu0
  %266 = vdwg.mxu0
  %267 = vmatprep.subr.bf16.mxu0 0
  %268 = vmatpush1.bf16.msra.mxu0 %v195
  %269 = vmatprep.subr.bf16.mxu0 0
  %270 = vmatpush1.bf16.msra.mxu0 %v196
  %271 = vmatprep.subr.bf16.mxu0 0
  %272 = vmatpush1.bf16.msra.mxu0 %v197
  %273 = vmatprep.subr.bf16.mxu0 0
  %274 = vmatpush1.bf16.msra.mxu0 %v198
  %275 = vmatprep.subr.bf16.mxu0 0
  %276 = vmatpush1.bf16.msra.mxu0 %v199
  %277 = vmatprep.subr.bf16.mxu0 0
  %278 = vmatpush1.bf16.msra.mxu0 %v200
  %279 = vmatprep.subr.bf16.mxu0 0
  %280 = vmatpush1.bf16.msra.mxu0 %v201
  %281 = vmatprep.subr.bf16.mxu0 0
  %282 = vmatpush1.bf16.msra.mxu0 %v202
  %283 = vmatprep.subr.bf16.mxu0 0
  %284 = vmatpush1.bf16.msra.mxu0 0
  %285 = vmatprep.subr.bf16.mxu0 0
  %286 = vmatpush1.bf16.msra.mxu0 0
  %287 = vmatprep.subr.bf16.mxu0 0
  %288 = vmatpush1.bf16.msra.mxu0 0
  %289 = vmatprep.subr.bf16.mxu0 0
  %290 = vmatpush1.bf16.msra.mxu0 0
  %291 = vmatprep.subr.bf16.mxu0 0
  %292 = vmatpush1.bf16.msra.mxu0 0
  %293 = vmatprep.subr.bf16.mxu0 0
  %294 = vmatpush1.bf16.msra.mxu0 0
  %295 = vmatprep.subr.bf16.mxu0 0
  %296 = vmatpush1.bf16.msra.mxu0 0
  %297 = vmatprep.subr.bf16.mxu0 0
  %298 = vmatpush1.bf16.msra.mxu0 0
  %299 = vmatprep.mubr.bf16.mxu0 0
  %300 = vmatmul.mubr.bf16.gmra.mrb[0].mxu0 %v79
  %v301 = vpop.f32.mrb[0].mxu0
  %v302 = vadd.f32 %v262, %v301
  %v303 = vpop.f32.mrb[0].mxu0
  %v304 = vpop.f32.mrb[0].mxu0
  %v305 = vpop.f32.mrb[0].mxu0
  %306 = vdwg.mxu0
  %v307 = vmax.f32 %v302, 0.0
  %v308 = vpack.c.bf16 %v307, %v307
  %309 = vst [vmem:[%s3] sm:$0xf] %v308
  // Predicated region
  $region14: #{pose_cnn_forward.10} parent=0 // pred_check
    _
  $region15: #{pose_cnn_forward.10} parent=0 // pred_check_branch
    %311 = sbr.rel (0) target = $region17
  $region16: #{pose_cnn_forward.10} parent=0 // pred_region
    _
  $region17: #{pose_cnn_forward.10} parent=0 // pred_fallthru
    _
  // Predicated region
  $region18: #{pose_cnn_forward.10} parent=0 // pred_check
    _
  $region19: #{pose_cnn_forward.10} parent=0 // pred_check_branch
    %313 = sbr.rel (0) target = $region21
  $region20: #{pose_cnn_forward.10} parent=0 // pred_region
    _
  $region21: #{pose_cnn_forward.10} parent=0 // pred_fallthru
    _

// kernel: pose_cnn_forward.11
$region0: #{pose_cnn_forward.11}
  #allocation0 [shape = 'u32[]', space=smem, size = 0x4, offset = 0x4, fixed_abs, tag = 'smem constant byte address 0x4 - core index']
  #allocation1 [shape = 'u32[144,128]{1,0:T(1,128)}', space=vmem, size = 0x12000, scoped, tag = 'internal scratch']
  %s0 = inlined_call_operand.vmem [shape: bf16[2,640], index: 0, kind: input, shape index: {}]
  %s1 = inlined_call_operand.vmem [shape: bf16[640,128], index: 1, kind: input, shape index: {}]
  %s2 = inlined_call_operand.vmem [shape: f32[1,128], index: 2, kind: input, shape index: {}]
  %s3 = inlined_call_operand.vmem [shape: bf16[2,128], index: 3, kind: output, shape index: {}]
  %s4 = sld [smem:[#allocation0]]
  $region22: #{pose_cnn_forward.11} parent=0
    _
  %s6 = ssub.s32 1, %s4
  %s7 = scalar_select 0, %s6, %s4
  // Predicated region
  $region2: #{pose_cnn_forward.11} parent=0 // pred_check
    _
  $region3: #{pose_cnn_forward.11} parent=0 // pred_check_branch
    %9 = sbr.rel (0) target = $region5
  $region4: #{pose_cnn_forward.11} parent=0 // pred_region
    _
  $region5: #{pose_cnn_forward.11} parent=0 // pred_fallthru
    _
  // Predicated region
  $region6: #{pose_cnn_forward.11} parent=0 // pred_check
    _
  $region7: #{pose_cnn_forward.11} parent=0 // pred_check_branch
    %11 = sbr.rel (0) target = $region9
  $region8: #{pose_cnn_forward.11} parent=0 // pred_region
    _
  $region9: #{pose_cnn_forward.11} parent=0 // pred_fallthru
    _
  // Predicated region
  $region10: #{pose_cnn_forward.11} parent=0 // pred_check
    _
  $region11: #{pose_cnn_forward.11} parent=0 // pred_check_branch
    %13 = sbr.rel (0) target = $region13
  $region12: #{pose_cnn_forward.11} parent=0 // pred_region
    _
  $region13: #{pose_cnn_forward.11} parent=0 // pred_fallthru
    _
  %v15 = vld [vmem:[%s0] sm:$0x1f]
  %v16 = vld [vmem:[%s1] sm:$0xf]
  %v17 = vld [vmem:[%s1 + $0x4] sm:$0xf]
  %v18 = vld [vmem:[%s1 + $0x8] sm:$0xf]
  %v19 = vld [vmem:[%s1 + $0xc] sm:$0xf]
  %v20 = vld [vmem:[%s1 + $0x10] sm:$0xf]
  %v21 = vld [vmem:[%s1 + $0x14] sm:$0xf]
  %v22 = vld [vmem:[%s1 + $0x18] sm:$0xf]
  %v23 = vld [vmem:[%s1 + $0x1c] sm:$0xf]
  %v24 = vld [vmem:[%s1 + $0x20] sm:$0xf]
  %v25 = vld [vmem:[%s1 + $0x24] sm:$0xf]
  %v26 = vld [vmem:[%s1 + $0x28] sm:$0xf]
  %v27 = vld [vmem:[%s1 + $0x2c] sm:$0xf]
  %v28 = vld [vmem:[%s1 + $0x30] sm:$0xf]
  %v29 = vld [vmem:[%s1 + $0x34] sm:$0xf]
  %v30 = vld [vmem:[%s1 + $0x38] sm:$0xf]
  %v31 = vld [vmem:[%s1 + $0x3c] sm:$0xf]
  %v32 = vld [vmem:[%s1 + $0x40] sm:$0xf]
  %v33 = vld [vmem:[%s1 + $0x44] sm:$0xf]
  %v34 = vld [vmem:[%s1 + $0x48] sm:$0xf]
  %v35 = vld [vmem:[%s1 + $0x4c] sm:$0xf]
  %v36 = vld [vmem:[%s1 + $0x50] sm:$0xf]
  %v37 = vld [vmem:[%s1 + $0x54] sm:$0xf]
  %v38 = vld [vmem:[%s1 + $0x58] sm:$0xf]
  %v39 = vld [vmem:[%s1 + $0x5c] sm:$0xf]
  %v40 = vld [vmem:[%s1 + $0x60] sm:$0xf]
  %v41 = vld [vmem:[%s1 + $0x64] sm:$0xf]
  %v42 = vld [vmem:[%s1 + $0x68] sm:$0xf]
  %v43 = vld [vmem:[%s1 + $0x6c] sm:$0xf]
  %v44 = vld [vmem:[%s1 + $0x70] sm:$0xf]
  %v45 = vld [vmem:[%s1 + $0x74] sm:$0xf]
  %v46 = vld [vmem:[%s1 + $0x78] sm:$0xf]
  %v47 = vld [vmem:[%s1 + $0x7c] sm:$0xf]
  %v48 = vld [vmem:[%s1 + $0x80] sm:$0xf]
  %v49 = vld [vmem:[%s1 + $0x84] sm:$0xf]
  %v50 = vld [vmem:[%s1 + $0x88] sm:$0xf]
  %v51 = vld [vmem:[%s1 + $0x8c] sm:$0xf]
  %v52 = vld [vmem:[%s1 + $0x90] sm:$0xf]
  %v53 = vld [vmem:[%s1 + $0x94] sm:$0xf]
  %v54 = vld [vmem:[%s1 + $0x98] sm:$0xf]
  %v55 = vld [vmem:[%s1 + $0x9c] sm:$0xf]
  %v56 = vld [vmem:[%s1 + $0xa0] sm:$0xf]
  %v57 = vld [vmem:[%s1 + $0xa4] sm:$0xf]
  %v58 = vld [vmem:[%s1 + $0xa8] sm:$0xf]
  %v59 = vld [vmem:[%s1 + $0xac] sm:$0xf]
  %v60 = vld [vmem:[%s1 + $0xb0] sm:$0xf]
  %v61 = vld [vmem:[%s1 + $0xb4] sm:$0xf]
  %v62 = vld [vmem:[%s1 + $0xb8] sm:$0xf]
  %v63 = vld [vmem:[%s1 + $0xbc] sm:$0xf]
  %v64 = vld [vmem:[%s1 + $0xc0] sm:$0xf]
  %v65 = vld [vmem:[%s1 + $0xc4] sm:$0xf]
  %v66 = vld [vmem:[%s1 + $0xc8] sm:$0xf]
  %v67 = vld [vmem:[%s1 + $0xcc] sm:$0xf]
  %v68 = vld [vmem:[%s1 + $0xd0] sm:$0xf]
  %v69 = vld [vmem:[%s1 + $0xd4] sm:$0xf]
  %v70 = vld [vmem:[%s1 + $0xd8] sm:$0xf]
  %v71 = vld [vmem:[%s1 + $0xdc] sm:$0xf]
  %v72 = vld [vmem:[%s1 + $0xe0] sm:$0xf]
  %v73 = vld [vmem:[%s1 + $0xe4] sm:$0xf]
  %v74 = vld [vmem:[%s1 + $0xe8] sm:$0xf]
  %v75 = vld [vmem:[%s1 + $0xec] sm:$0xf]
  %v76 = vld [vmem:[%s1 + $0xf0] sm:$0xf]
  %v77 = vld [vmem:[%s1 + $0xf4] sm:$0xf]
  %v78 = vld [vmem:[%s1 + $0xf8] sm:$0xf]
  %v79 = vld [vmem:[%s1 + $0xfc] sm:$0xf]
  %v80 = vld [vmem:[%s1 + $0x100] sm:$0xf]
  %v81 = vld [vmem:[%s1 + $0x104] sm:$0xf]
  %v82 = vld [vmem:[%s1 + $0x108] sm:$0xf]
  %v83 = vld [vmem:[%s1 + $0x10c] sm:$0xf]
  %v84 = vld [vmem:[%s1 + $0x110] sm:$0xf]
  %v85 = vld [vmem:[%s1 + $0x114] sm:$0xf]
  %v86 = vld [vmem:[%s1 + $0x118] sm:$0xf]
  %v87 = vld [vmem:[%s1 + $0x11c] sm:$0xf]
  %v88 = vld [vmem:[%s1 + $0x120] sm:$0xf]
  %v89 = vld [vmem:[%s1 + $0x124] sm:$0xf]
  %v90 = vld [vmem:[%s1 + $0x128] sm:$0xf]
  %v91 = vld [vmem:[%s1 + $0x12c] sm:$0xf]
  %v92 = vld [vmem:[%s1 + $0x130] sm:$0xf]
  %v93 = vld [vmem:[%s1 + $0x134] sm:$0xf]
  %v94 = vld [vmem:[%s1 + $0x138] sm:$0xf]
  %v95 = vld [vmem:[%s1 + $0x13c] sm:$0xf]
  %v96 = vld [vmem:[%s2] sm:$0x1]
  %v98 = vlaneseq
  %v99 = vshrl.u32 %v98, 7
  %v100 = vsub.s32 0, %v99
  %v101 = vrot.slane %v96, %v100
  %v104 = vcombine.high %v15, %v15
  %v106 = vunpack.c.l.s4 1966171168
  %v107 = vunpack.c.0.s8 %v106
  %v108 = vlaneseq
  %v109 = vshrl.u32 %v108, 7
  %v110 = vsub.s32 %v107, %v109
  %v111 = vrot.slane %v15, %v110
  %v113 = vunpack.c.l.s4 1966171168
  %v114 = vunpack.c.0.s8 %v113
  %v115 = vlaneseq
  %v116 = vshrl.u32 %v115, 7
  %v117 = vsub.s32 %v114, %v116
  %v118 = vrot.slane %v104, %v117
  %v119 = vcombine.high %v111, %v111
  %v121 = vunpack.c.l.s4 1966171168
  %v122 = vunpack.c.0.s8 %v121
  %v123 = vlaneseq
  %v124 = vshrl.u32 %v123, 7
  %v125 = vsub.s32 %v122, %v124
  %v126 = vrot.slane %v111, %v125
  %v128 = vunpack.c.l.s4 1966171168
  %v129 = vunpack.c.0.s8 %v128
  %v130 = vlaneseq
  %v131 = vshrl.u32 %v130, 7
  %v132 = vsub.s32 %v129, %v131
  %v133 = vrot.slane %v118, %v132
  %v135 = vunpack.c.l.s4 1966171168
  %v136 = vunpack.c.0.s8 %v135
  %v137 = vlaneseq
  %v138 = vshrl.u32 %v137, 7
  %v139 = vsub.s32 %v136, %v138
  %v140 = vrot.slane %v119, %v139
  %v141 = vcombine.high %v126, %v126
  %v142 = vcombine.high %v140, %v140
  %v228 = vunpack.c.l.b16 %v16
  %v229 = vunpack.c.l.b16 %v17
  %v230 = vunpack.c.l.b16 %v18
  %v231 = vunpack.c.l.b16 %v19
  %v232 = vunpack.c.l.b16 %v20
  %v233 = vunpack.c.l.b16 %v21
  %v234 = vunpack.c.l.b16 %v22
  %v235 = vunpack.c.l.b16 %v23
  %v236 = vunpack.c.l.b16 %v24
  %v237 = vunpack.c.l.b16 %v25
  %v238 = vunpack.c.l.b16 %v26
  %v239 = vunpack.c.l.b16 %v27
  %v240 = vunpack.c.l.b16 %v28
  %v241 = vunpack.c.l.b16 %v29
  %v242 = vunpack.c.l.b16 %v30
  %v243 = vunpack.c.l.b16 %v31
  %v244 = vunpack.c.l.b16 %v32
  %v245 = vunpack.c.l.b16 %v33
  %v246 = vunpack.c.l.b16 %v34
  %v247 = vunpack.c.l.b16 %v35
  %v248 = vunpack.c.l.b16 %v36
  %v249 = vunpack.c.l.b16 %v37
  %v250 = vunpack.c.l.b16 %v38
  %v251 = vunpack.c.l.b16 %v39
  %v252 = vunpack.c.l.b16 %v40
  %v253 = vunpack.c.l.b16 %v41
  %v254 = vunpack.c.l.b16 %v42
  %v255 = vunpack.c.l.b16 %v43
  %v256 = vunpack.c.l.b16 %v44
  %v257 = vunpack.c.l.b16 %v45
  %v258 = vunpack.c.l.b16 %v46
  %v259 = vunpack.c.l.b16 %v47
  %v260 = vunpack.c.l.b16 %v48
  %v261 = vunpack.c.l.b16 %v49
  %v262 = vunpack.c.l.b16 %v50
  %v263 = vunpack.c.l.b16 %v51
  %v264 = vunpack.c.l.b16 %v52
  %v265 = vunpack.c.l.b16 %v53
  %v266 = vunpack.c.l.b16 %v54
  %v267 = vunpack.c.l.b16 %v55
  %v268 = vunpack.c.l.b16 %v56
  %v269 = vunpack.c.l.b16 %v57
  %v270 = vunpack.c.l.b16 %v58
  %v271 = vunpack.c.l.b16 %v59
  %v272 = vunpack.c.l.b16 %v60
  %v273 = vunpack.c.l.b16 %v61
  %v274 = vunpack.c.l.b16 %v62
  %v275 = vunpack.c.l.b16 %v63
  %v276 = vunpack.c.l.b16 %v64
  %v277 = vunpack.c.l.b16 %v65
  %v278 = vunpack.c.l.b16 %v66
  %v279 = vunpack.c.l.b16 %v67
  %v280 = vunpack.c.l.b16 %v68
  %v281 = vunpack.c.l.b16 %v69
  %v282 = vunpack.c.l.b16 %v70
  %v283 = vunpack.c.l.b16 %v71
  %v284 = vunpack.c.l.b16 %v72
  %v285 = vunpack.c.l.b16 %v73
  %v286 = vunpack.c.l.b16 %v74
  %v287 = vunpack.c.l.b16 %v75
  %v288 = vunpack.c.l.b16 %v76
  %v289 = vunpack.c.l.b16 %v77
  %v290 = vunpack.c.l.b16 %v78
  %v291 = vunpack.c.l.b16 %v79
  %v292 = vunpack.c.l.b16 %v80
  %v293 = vunpack.c.l.b16 %v81
  %v294 = vunpack.c.l.b16 %v82
  %v295 = vunpack.c.l.b16 %v83
  %v296 = vunpack.c.l.b16 %v84
  %v297 = vunpack.c.l.b16 %v85
  %v298 = vunpack.c.l.b16 %v86
  %v299 = vunpack.c.l.b16 %v87
  %v300 = vunpack.c.l.b16 %v88
  %v301 = vunpack.c.l.b16 %v89
  %v302 = vunpack.c.l.b16 %v90
  %v303 = vunpack.c.l.b16 %v91
  %v304 = vunpack.c.l.b16 %v92
  %v305 = vunpack.c.l.b16 %v93
  %v306 = vunpack.c.l.b16 %v94
  %v307 = vunpack.c.l.b16 %v95
  %v308 = vpack.c.b16 %v229, %v228
  %v309 = vpack.c.b16 %v231, %v230
  %v310 = vpack.c.b16 %v233, %v232
  %v311 = vpack.c.b16 %v235, %v234
  %v312 = vpack.c.b16 %v237, %v236
  %v313 = vpack.c.b16 %v239, %v238
  %v314 = vpack.c.b16 %v241, %v240
  %v315 = vpack.c.b16 %v243, %v242
  %v316 = vpack.c.b16 %v245, %v244
  %v317 = vpack.c.b16 %v247, %v246
  %v318 = vpack.c.b16 %v249, %v248
  %v319 = vpack.c.b16 %v251, %v250
  %v320 = vpack.c.b16 %v253, %v252
  %v321 = vpack.c.b16 %v255, %v254
  %v322 = vpack.c.b16 %v257, %v256
  %v323 = vpack.c.b16 %v259, %v258
  %v324 = vpack.c.b16 %v261, %v260
  %v325 = vpack.c.b16 %v263, %v262
  %v326 = vpack.c.b16 %v265, %v264
  %v327 = vpack.c.b16 %v267, %v266
  %v328 = vpack.c.b16 %v269, %v268
  %v329 = vpack.c.b16 %v271, %v270
  %v330 = vpack.c.b16 %v273, %v272
  %v331 = vpack.c.b16 %v275, %v274
  %v332 = vpack.c.b16 %v277, %v276
  %v333 = vpack.c.b16 %v279, %v278
  %v334 = vpack.c.b16 %v281, %v280
  %v335 = vpack.c.b16 %v283, %v282
  %v336 = vpack.c.b16 %v285, %v284
  %v337 = vpack.c.b16 %v287, %v286
  %v338 = vpack.c.b16 %v289, %v288
  %v339 = vpack.c.b16 %v291, %v290
  %v340 = vpack.c.b16 %v293, %v292
  %v341 = vpack.c.b16 %v295, %v294
  %v342 = vpack.c.b16 %v297, %v296
  %v343 = vpack.c.b16 %v299, %v298
  %v344 = vpack.c.b16 %v301, %v300
  %v345 = vpack.c.b16 %v303, %v302
  %v346 = vpack.c.b16 %v305, %v304
  %v347 = vpack.c.b16 %v307, %v306
  %388 = vmatprep.subr.bf16.mxu0 0
  %389 = vmatpush1.bf16.msra.mxu0 %v308
  %390 = vmatprep.subr.bf16.mxu0 0
  %391 = vmatpush1.bf16.msra.mxu0 %v309
  %392 = vmatprep.subr.bf16.mxu0 0
  %393 = vmatpush1.bf16.msra.mxu0 %v310
  %394 = vmatprep.subr.bf16.mxu0 0
  %395 = vmatpush1.bf16.msra.mxu0 %v311
  %396 = vmatprep.subr.bf16.mxu0 0
  %397 = vmatpush1.bf16.msra.mxu0 %v312
  %398 = vmatprep.subr.bf16.mxu0 0
  %399 = vmatpush1.bf16.msra.mxu0 %v313
  %400 = vmatprep.subr.bf16.mxu0 0
  %401 = vmatpush1.bf16.msra.mxu0 %v314
  %402 = vmatprep.subr.bf16.mxu0 0
  %403 = vmatpush1.bf16.msra.mxu0 %v315
  %404 = vmatprep.subr.bf16.mxu0 0
  %405 = vmatpush1.bf16.msra.mxu0 %v316
  %406 = vmatprep.subr.bf16.mxu0 0
  %407 = vmatpush1.bf16.msra.mxu0 %v317
  %408 = vmatprep.subr.bf16.mxu0 0
  %409 = vmatpush1.bf16.msra.mxu0 %v318
  %410 = vmatprep.subr.bf16.mxu0 0
  %411 = vmatpush1.bf16.msra.mxu0 %v319
  %412 = vmatprep.subr.bf16.mxu0 0
  %413 = vmatpush1.bf16.msra.mxu0 %v320
  %414 = vmatprep.subr.bf16.mxu0 0
  %415 = vmatpush1.bf16.msra.mxu0 %v321
  %416 = vmatprep.subr.bf16.mxu0 0
  %417 = vmatpush1.bf16.msra.mxu0 %v322
  %418 = vmatprep.subr.bf16.mxu0 0
  %419 = vmatpush1.bf16.msra.mxu0 %v323
  %420 = vmatprep.mubr.bf16.mxu0 %v140
  %421 = vmatmul.mubr.bf16.gmra.mrb[0].mxu0 %v126
  %v422 = vpop.f32.mrb[0].mxu0
  %v423 = vadd.f32 %v101, %v422
  %v424 = vpop.f32.mrb[0].mxu0
  %v425 = vpop.f32.mrb[0].mxu0
  %v426 = vpop.f32.mrb[0].mxu0
  %427 = vdwg.mxu0
  %428 = vmatprep.subr.bf16.mxu0 0
  %429 = vmatpush1.bf16.msra.mxu0 %v324
  %430 = vmatprep.subr.bf16.mxu0 0
  %431 = vmatpush1.bf16.msra.mxu0 %v325
  %432 = vmatprep.subr.bf16.mxu0 0
  %433 = vmatpush1.bf16.msra.mxu0 %v326
  %434 = vmatprep.subr.bf16.mxu0 0
  %435 = vmatpush1.bf16.msra.mxu0 %v327
  %436 = vmatprep.subr.bf16.mxu0 0
  %437 = vmatpush1.bf16.msra.mxu0 %v328
  %438 = vmatprep.subr.bf16.mxu0 0
  %439 = vmatpush1.bf16.msra.mxu0 %v329
  %440 = vmatprep.subr.bf16.mxu0 0
  %441 = vmatpush1.bf16.msra.mxu0 %v330
  %442 = vmatprep.subr.bf16.mxu0 0
  %443 = vmatpush1.bf16.msra.mxu0 %v331
  %444 = vmatprep.subr.bf16.mxu0 0
  %445 = vmatpush1.bf16.msra.mxu0 %v332
  %446 = vmatprep.subr.bf16.mxu0 0
  %447 = vmatpush1.bf16.msra.mxu0 %v333
  %448 = vmatprep.subr.bf16.mxu0 0
  %449 = vmatpush1.bf16.msra.mxu0 %v334
  %450 = vmatprep.subr.bf16.mxu0 0
  %451 = vmatpush1.bf16.msra.mxu0 %v335
  %452 = vmatprep.subr.bf16.mxu0 0
  %453 = vmatpush1.bf16.msra.mxu0 %v336
  %454 = vmatprep.subr.bf16.mxu0 0
  %455 = vmatpush1.bf16.msra.mxu0 %v337
  %456 = vmatprep.subr.bf16.mxu0 0
  %457 = vmatpush1.bf16.msra.mxu0 %v338
  %458 = vmatprep.subr.bf16.mxu0 0
  %459 = vmatpush1.bf16.msra.mxu0 %v339
  %460 = vmatprep.mubr.bf16.mxu0 %v142
  %461 = vmatmul.mubr.bf16.gmra.mrb[0].mxu0 %v141
  %v462 = vpop.f32.mrb[0].mxu0
  %v463 = vadd.f32 %v423, %v462
  %v464 = vpop.f32.mrb[0].mxu0
  %v465 = vpop.f32.mrb[0].mxu0
  %v466 = vpop.f32.mrb[0].mxu0
  %467 = vdwg.mxu0
  %468 = vmatprep.subr.bf16.mxu0 0
  %469 = vmatpush1.bf16.msra.mxu0 %v340
  %470 = vmatprep.subr.bf16.mxu0 0
  %471 = vmatpush1.bf16.msra.mxu0 %v341
  %472 = vmatprep.subr.bf16.mxu0 0
  %473 = vmatpush1.bf16.msra.mxu0 %v342
  %474 = vmatprep.subr.bf16.mxu0 0
  %475 = vmatpush1.bf16.msra.mxu0 %v343
  %476 = vmatprep.subr.bf16.mxu0 0
  %477 = vmatpush1.bf16.msra.mxu0 %v344
  %478 = vmatprep.subr.bf16.mxu0 0
  %479 = vmatpush1.bf16.msra.mxu0 %v345
  %480 = vmatprep.subr.bf16.mxu0 0
  %481 = vmatpush1.bf16.msra.mxu0 %v346
  %482 = vmatprep.subr.bf16.mxu0 0
  %483 = vmatpush1.bf16.msra.mxu0 %v347
  %484 = vmatprep.subr.bf16.mxu0 0
  %485 = vmatpush1.bf16.msra.mxu0 0
  %486 = vmatprep.subr.bf16.mxu0 0
  %487 = vmatpush1.bf16.msra.mxu0 0
  %488 = vmatprep.subr.bf16.mxu0 0
  %489 = vmatpush1.bf16.msra.mxu0 0
  %490 = vmatprep.subr.bf16.mxu0 0
  %491 = vmatpush1.bf16.msra.mxu0 0
  %492 = vmatprep.subr.bf16.mxu0 0
  %493 = vmatpush1.bf16.msra.mxu0 0
  %494 = vmatprep.subr.bf16.mxu0 0
  %495 = vmatpush1.bf16.msra.mxu0 0
  %496 = vmatprep.subr.bf16.mxu0 0
  %497 = vmatpush1.bf16.msra.mxu0 0
  %498 = vmatprep.subr.bf16.mxu0 0
  %499 = vmatpush1.bf16.msra.mxu0 0
  %500 = vmatprep.mubr.bf16.mxu0 0
  %501 = vmatmul.mubr.bf16.gmra.mrb[0].mxu0 %v133
  %v502 = vpop.f32.mrb[0].mxu0
  %v503 = vadd.f32 %v463, %v502
  %v504 = vpop.f32.mrb[0].mxu0
  %v505 = vpop.f32.mrb[0].mxu0
  %v506 = vpop.f32.mrb[0].mxu0
  %507 = vdwg.mxu0
  %v508 = vmax.f32 %v503, 0.0
  %v509 = vpack.c.bf16 %v508, %v508
  %510 = vst [vmem:[%s3] sm:$0x1] %v509
  // Predicated region
  $region14: #{pose_cnn_forward.11} parent=0 // pred_check
    _
  $region15: #{pose_cnn_forward.11} parent=0 // pred_check_branch
    %512 = sbr.rel (0) target = $region17
  $region16: #{pose_cnn_forward.11} parent=0 // pred_region
    _
  $region17: #{pose_cnn_forward.11} parent=0 // pred_fallthru
    _
  // Predicated region
  $region18: #{pose_cnn_forward.11} parent=0 // pred_check
    _
  $region19: #{pose_cnn_forward.11} parent=0 // pred_check_branch
    %514 = sbr.rel (0) target = $region21
  $region20: #{pose_cnn_forward.11} parent=0 // pred_region
    _
  $region21: #{pose_cnn_forward.11} parent=0 // pred_fallthru
    _

// kernel: pose_cnn_forward.12
$region0: #{pose_cnn_forward.12}
  #allocation0 [shape = 'u32[]', space=smem, size = 0x4, offset = 0x4, fixed_abs, tag = 'smem constant byte address 0x4 - core index']
  #allocation1 [shape = 'u32[144,128]{1,0:T(1,128)}', space=vmem, size = 0x12000, scoped, tag = 'internal scratch']
  %s0 = inlined_call_operand.vmem [shape: bf16[2,1152], index: 0, kind: input, shape index: {}]
  %s1 = inlined_call_operand.vmem [shape: bf16[1152,256], index: 1, kind: input, shape index: {}]
  %s2 = inlined_call_operand.vmem [shape: f32[1,256], index: 2, kind: input, shape index: {}]
  %s3 = inlined_call_operand.vmem [shape: bf16[2,256], index: 3, kind: output, shape index: {}]
  %s4 = sld [smem:[#allocation0]]
  $region86: #{pose_cnn_forward.12} parent=0
    _
  %s6 = ssub.s32 1, %s4
  %s7 = scalar_select 0, %s6, %s4
  $region1: #{pose_cnn_forward.12} parent=0
    #allocation2 [shape = 'u8[589824]{0}', space=vmem, size = 0x90000, scoped, tag = 'input window, operand 1']
    loop: start=0, step=1, limit=4
    $region2: #{pose_cnn_forward.12} parent=1 // loop_pre_header
      _
    $region3: #{pose_cnn_forward.12} parent=1 // loop_header
      %s9 = sphi 0, %s13
      %p10 = scmp.ge.s32.totalorder %s9, 4
      %s16 = sphi 0, %s28
      %s17 = sphi 0, %s24
      %s18 = sphi 0, %s16
      %s19 = sphi 0, %s17
      %s20 = sphi 0, %s18
      %s21 = sphi 0, %s19
      %s31 = sphi 0, %s33
      %s34 = sphi 0, %s31
      %s35 = sphi 0, %s34
      %s51 = sphi 0, %s35
      %s57 = sphi 0, %s59
      %s60 = sphi 0, %s57
      %s61 = sphi 0, %s60
      %s77 = sphi 0, %s61
      %s83 = sphi 0, %s85
      %s86 = sphi 0, %s83
      %s87 = sphi 0, %s86
      %s103 = sphi 0, %s87
      %s111 = sphi 0, %s113
      %s114 = sphi 0, %s111
      %s115 = sphi 0, %s114
      %s131 = sphi 0, %s115
    $region4: #{pose_cnn_forward.12} parent=1 // loop_header_branch
      %12 = sbr.rel (%p10) target = $region8
    $region5: #{pose_cnn_forward.12} parent=1 // loop_body
      %s14 = ssub.s32 %s9, 1
      %s15 = ssub.s32 %s9, 2
      %s22 = sadd.s32 1, %s17
      %p23 = scmp.ge.s32.totalorder %s22, 2
      %s24 = scalar_select %p23, 0, %s22
      %s25 = sadd.s32 1, %s16
      %s26 = scalar_select %p23, %s25, %s16
      %p27 = scmp.ge.s32.totalorder %s26, 1
      %s28 = scalar_select %p27, 0, %s26
      %s29 = ssub.s32 %s16, %s28
      %p30 = scmp.eq.s32.totalorder %s29, 0
      %s32 = sadd.s32 %s31, 1
      %s33 = scalar_select %p30, %s31, %s32
      %p36 = pneg %p30
      %p37 = scmp.eq.s32.totalorder %s9, 1
      %p38 = por %p36, %p37
      %p39 = scmp.ne.s32.totalorder %s31, %s34
      %p40 = scmp.eq.s32.totalorder %s9, 0
      %p41 = por %p39, %p40
      %p42 = scmp.ne.s32.totalorder %s31, %s34
      %p43 = scmp.eq.s32.totalorder %s14, 1
      %p44 = por %p42, %p43
      %p45 = scmp.ne.s32.totalorder %s34, %s35
      %p46 = scmp.eq.s32.totalorder %s14, 0
      %p47 = por %p45, %p46
      %p48 = scmp.ne.s32.totalorder %s34, %s35
      %p49 = scmp.eq.s32.totalorder %s15, 1
      %p50 = por %p48, %p49
      %p52 = scmp.ne.s32.totalorder %s35, %s51
      %p53 = scmp.eq.s32.totalorder %s15, 0
      %p54 = por %p52, %p53
      %s55 = ssub.s32 %s17, %s24
      %p56 = scmp.eq.s32.totalorder %s55, 0
      %s58 = sadd.s32 %s57, 1
      %s59 = scalar_select %p56, %s57, %s58
      %p62 = pneg %p56
      %p63 = scmp.eq.s32.totalorder %s9, 1
      %p64 = por %p62, %p63
      %p65 = scmp.ne.s32.totalorder %s57, %s60
      %p66 = scmp.eq.s32.totalorder %s9, 0
      %p67 = por %p65, %p66
      %p68 = scmp.ne.s32.totalorder %s57, %s60
      %p69 = scmp.eq.s32.totalorder %s14, 1
      %p70 = por %p68, %p69
      %p71 = scmp.ne.s32.totalorder %s60, %s61
      %p72 = scmp.eq.s32.totalorder %s14, 0
      %p73 = por %p71, %p72
      %p74 = scmp.ne.s32.totalorder %s60, %s61
      %p75 = scmp.eq.s32.totalorder %s15, 1
      %p76 = por %p74, %p75
      %p78 = scmp.ne.s32.totalorder %s61, %s77
      %p79 = scmp.eq.s32.totalorder %s15, 0
      %p80 = por %p78, %p79
      %s81 = ssub.s32 %s17, %s24
      %p82 = scmp.eq.s32.totalorder %s81, 0
      %s84 = sadd.s32 %s83, 1
      %s85 = scalar_select %p82, %s83, %s84
      %p88 = pneg %p82
      %p89 = scmp.eq.s32.totalorder %s9, 1
      %p90 = por %p88, %p89
      %p91 = scmp.ne.s32.totalorder %s83, %s86
      %p92 = scmp.eq.s32.totalorder %s9, 0
      %p93 = por %p91, %p92
      %p94 = scmp.ne.s32.totalorder %s83, %s86
      %p95 = scmp.eq.s32.totalorder %s14, 1
      %p96 = por %p94, %p95
      %p97 = scmp.ne.s32.totalorder %s86, %s87
      %p98 = scmp.eq.s32.totalorder %s14, 0
      %p99 = por %p97, %p98
      %p100 = scmp.ne.s32.totalorder %s86, %s87
      %p101 = scmp.eq.s32.totalorder %s15, 1
      %p102 = por %p100, %p101
      %p104 = scmp.ne.s32.totalorder %s87, %s103
      %p105 = scmp.eq.s32.totalorder %s15, 0
      %p106 = por %p104, %p105
      %s107 = ssub.s32 %s16, %s28
      %s108 = ssub.s32 %s17, %s24
      %s109 = sor.u32 %s107, %s108
      %p110 = scmp.eq.s32.totalorder %s109, 0
      %s112 = sadd.s32 %s111, 1
      %s113 = scalar_select %p110, %s111, %s112
      %p116 = pneg %p110
      %p117 = scmp.eq.s32.totalorder %s9, 1
      %p118 = por %p116, %p117
      %p119 = scmp.ne.s32.totalorder %s111, %s114
      %p120 = scmp.eq.s32.totalorder %s9, 0
      %p121 = por %p119, %p120
      %p122 = scmp.ne.s32.totalorder %s111, %s114
      %p123 = scmp.eq.s32.totalorder %s14, 1
      %p124 = por %p122, %p123
      %p125 = scmp.ne.s32.totalorder %s114, %s115
      %p126 = scmp.eq.s32.totalorder %s14, 0
      %p127 = por %p125, %p126
      %p128 = scmp.ne.s32.totalorder %s114, %s115
      %p129 = scmp.eq.s32.totalorder %s15, 1
      %p130 = por %p128, %p129
      %p132 = scmp.ne.s32.totalorder %s115, %s131
      %p133 = scmp.eq.s32.totalorder %s15, 0
      %p134 = por %p132, %p133
      %p135 = scmp.le.s32.totalorder 1, %s9
      %p136 = scmp.lt.s32.totalorder %s9, 3
      %p137 = pnand %p135, %p136
      %p138 = pneg %p137
      // Predicated region
      $region9: #{pose_cnn_forward.12} parent=5 // pred_check
        _
      $region10: #{pose_cnn_forward.12} parent=5 // pred_check_branch
        %140 = sbr.rel (%p137) target = $region12
      $region11: #{pose_cnn_forward.12} parent=5 // pred_region
        %s141 = ssub.s32 %s9, 1
        // Predicated region
        $region13: #{pose_cnn_forward.12} parent=11 // pred_check
          %p142 = pneg %p47
        $region14: #{pose_cnn_forward.12} parent=11 // pred_check_branch
          %144 = sbr.rel (%p142) target = $region16
        $region15: #{pose_cnn_forward.12} parent=11 // pred_region
          %p145 = scmp.lt.s32.totalorder %s18, 0
          %s146 = scalar_select %p145, %s18, 0
          %s147 = smul.addr %s146, 9
          %s148 = scalar_lea.vmem %s0, %s147
        $region16: #{pose_cnn_forward.12} parent=11 // pred_fallthru
          _
      $region12: #{pose_cnn_forward.12} parent=5 // pred_fallthru
        _
      %p149 = scmp.lt.s32.totalorder %s9, 2
      // Predicated region
      $region17: #{pose_cnn_forward.12} parent=5 // pred_check
        %p150 = pneg %p149
      $region18: #{pose_cnn_forward.12} parent=5 // pred_check_branch
        %152 = sbr.rel (%p150) target = $region20
      $region19: #{pose_cnn_forward.12} parent=5 // pred_region
        // Predicated region
        $region21: #{pose_cnn_forward.12} parent=19 // pred_check
          %p153 = pneg %p67
        $region22: #{pose_cnn_forward.12} parent=19 // pred_check_branch
          %155 = sbr.rel (%p153) target = $region24
        $region23: #{pose_cnn_forward.12} parent=19 // pred_region
          %s156 = sand.u32 %s57, 1
          %s157 = sand.u32 %s57, 1
          %s158 = smul.addr %s157, 576
          %s159 = scalar_lea.vmem [#allocation2], %s158
          %s160 = smul.addr %s17, 4
          %s161 = scalar_lea.vmem %s1, %s160
          // Predicated region
          $region25: #{pose_cnn_forward.12} parent=23 // pred_check
            _
          $region26: #{pose_cnn_forward.12} parent=23 // pred_check_branch
            %163 = sbr.rel (0) target = $region28
          $region27: #{pose_cnn_forward.12} parent=23 // pred_region
            // Predicated region
            $region29: #{pose_cnn_forward.12} parent=27 // pred_check
              _
            $region30: #{pose_cnn_forward.12} parent=27 // pred_check_branch
              %165 = sbr.rel target = $region32
            $region31: #{pose_cnn_forward.12} parent=27 // pred_region
              // Predicated region
              $region44: #{pose_cnn_forward.12} parent=31 // pred_check
                _
              $region45: #{pose_cnn_forward.12} parent=31 // pred_check_branch
                %466 = sbr.rel (0) target = $region47
              $region46: #{pose_cnn_forward.12} parent=31 // pred_region
                loop: start=0, step=1, limit=1
                $region48: #{pose_cnn_forward.12} parent=46 // loop_pre_header
                  _
                $region49: #{pose_cnn_forward.12} parent=46 // loop_header
                  %s468 = sphi 0, %s472
                  %p469 = scmp.ge.s32.totalorder %s468, 1
                  %s473 = sphi %s161, %s161
                  %s474 = sphi %s159, %s159
                $region50: #{pose_cnn_forward.12} parent=46 // loop_header_branch
                  %471 = sbr.rel (%p469) target = $region54
                $region51: #{pose_cnn_forward.12} parent=46 // loop_body
                  _
                $region52: #{pose_cnn_forward.12} parent=46 // loop_footer
                  %s472 = sadd.s32 1, %s468
                $region53: #{pose_cnn_forward.12} parent=46 // loop_footer_branch
                  %467 = sbr.rel target = $region49
                $region54: #{pose_cnn_forward.12} parent=46 // loop_exit
                  _
                loop: start=0, step=1, limit=1
                $region55: #{pose_cnn_forward.12} parent=46 // loop_pre_header
                  _
                $region56: #{pose_cnn_forward.12} parent=46 // loop_header
                  %s477 = sphi 0, %s481
                  %p478 = scmp.ge.s32.totalorder %s477, 1
                  %s482 = sphi %s161, %s161
                  %s483 = sphi %s159, %s159
                $region57: #{pose_cnn_forward.12} parent=46 // loop_header_branch
                  %480 = sbr.rel (%p478) target = $region61
                $region58: #{pose_cnn_forward.12} parent=46 // loop_body
                  %v484 = vld [vmem:[%s482] sm:$0xf]
                  %485 = vst [vmem:[%s483] sm:$0xf] %v484
                  %v486 = vld [vmem:[%s482 + $0x8] sm:$0xf]
                  %487 = vst [vmem:[%s483 + $0x4] sm:$0xf] %v486
                  %v488 = vld [vmem:[%s482 + $0x10] sm:$0xf]
                  %489 = vst [vmem:[%s483 + $0x8] sm:$0xf] %v488
                  %v490 = vld [vmem:[%s482 + $0x18] sm:$0xf]
                  %491 = vst [vmem:[%s483 + $0xc] sm:$0xf] %v490
                  %v492 = vld [vmem:[%s482 + $0x20] sm:$0xf]
                  %493 = vst [vmem:[%s483 + $0x10] sm:$0xf] %v492
                  %v494 = vld [vmem:[%s482 + $0x28] sm:$0xf]
                  %495 = vst [vmem:[%s483 + $0x14] sm:$0xf] %v494
                  %v496 = vld [vmem:[%s482 + $0x30] sm:$0xf]
                  %497 = vst [vmem:[%s483 + $0x18] sm:$0xf] %v496
                  %v498 = vld [vmem:[%s482 + $0x38] sm:$0xf]
                  %499 = vst [vmem:[%s483 + $0x1c] sm:$0xf] %v498
                  %v500 = vld [vmem:[%s482 + $0x40] sm:$0xf]
                  %501 = vst [vmem:[%s483 + $0x20] sm:$0xf] %v500
                  %v502 = vld [vmem:[%s482 + $0x48] sm:$0xf]
                  %503 = vst [vmem:[%s483 + $0x24] sm:$0xf] %v502
                  %v504 = vld [vmem:[%s482 + $0x50] sm:$0xf]
                  %505 = vst [vmem:[%s483 + $0x28] sm:$0xf] %v504
                  %v506 = vld [vmem:[%s482 + $0x58] sm:$0xf]
                  %507 = vst [vmem:[%s483 + $0x2c] sm:$0xf] %v506
                  %v508 = vld [vmem:[%s482 + $0x60] sm:$0xf]
                  %509 = vst [vmem:[%s483 + $0x30] sm:$0xf] %v508
                  %v510 = vld [vmem:[%s482 + $0x68] sm:$0xf]
                  %511 = vst [vmem:[%s483 + $0x34] sm:$0xf] %v510
                  %v512 = vld [vmem:[%s482 + $0x70] sm:$0xf]
                  %513 = vst [vmem:[%s483 + $0x38] sm:$0xf] %v512
                  %v514 = vld [vmem:[%s482 + $0x78] sm:$0xf]
                  %515 = vst [vmem:[%s483 + $0x3c] sm:$0xf] %v514
                  %v516 = vld [vmem:[%s482 + $0x80] sm:$0xf]
                  %517 = vst [vmem:[%s483 + $0x40] sm:$0xf] %v516
                  %v518 = vld [vmem:[%s482 + $0x88] sm:$0xf]
                  %519 = vst [vmem:[%s483 + $0x44] sm:$0xf] %v518
                  %v520 = vld [vmem:[%s482 + $0x90] sm:$0xf]
                  %521 = vst [vmem:[%s483 + $0x48] sm:$0xf] %v520
                  %v522 = vld [vmem:[%s482 + $0x98] sm:$0xf]
                  %523 = vst [vmem:[%s483 + $0x4c] sm:$0xf] %v522
                  %v524 = vld [vmem:[%s482 + $0xa0] sm:$0xf]
                  %525 = vst [vmem:[%s483 + $0x50] sm:$0xf] %v524
                  %v526 = vld [vmem:[%s482 + $0xa8] sm:$0xf]
                  %527 = vst [vmem:[%s483 + $0x54] sm:$0xf] %v526
                  %v528 = vld [vmem:[%s482 + $0xb0] sm:$0xf]
                  %529 = vst [vmem:[%s483 + $0x58] sm:$0xf] %v528
                  %v530 = vld [vmem:[%s482 + $0xb8] sm:$0xf]
                  %531 = vst [vmem:[%s483 + $0x5c] sm:$0xf] %v530
                  %v532 = vld [vmem:[%s482 + $0xc0] sm:$0xf]
                  %533 = vst [vmem:[%s483 + $0x60] sm:$0xf] %v532
                  %v534 = vld [vmem:[%s482 + $0xc8] sm:$0xf]
                  %535 = vst [vmem:[%s483 + $0x64] sm:$0xf] %v534
                  %v536 = vld [vmem:[%s482 + $0xd0] sm:$0xf]
                  %537 = vst [vmem:[%s483 + $0x68] sm:$0xf] %v536
                  %v538 = vld [vmem:[%s482 + $0xd8] sm:$0xf]
                  %539 = vst [vmem:[%s483 + $0x6c] sm:$0xf] %v538
                  %v540 = vld [vmem:[%s482 + $0xe0] sm:$0xf]
                  %541 = vst [vmem:[%s483 + $0x70] sm:$0xf] %v540
                  %v542 = vld [vmem:[%s482 + $0xe8] sm:$0xf]
                  %543 = vst [vmem:[%s483 + $0x74] sm:$0xf] %v542
                  %v544 = vld [vmem:[%s482 + $0xf0] sm:$0xf]
                  %545 = vst [vmem:[%s483 + $0x78] sm:$0xf] %v544
                  %v546 = vld [vmem:[%s482 + $0xf8] sm:$0xf]
                  %547 = vst [vmem:[%s483 + $0x7c] sm:$0xf] %v546
                  %v548 = vld [vmem:[%s482 + $0x100] sm:$0xf]
                  %549 = vst [vmem:[%s483 + $0x80] sm:$0xf] %v548
                  %v550 = vld [vmem:[%s482 + $0x108] sm:$0xf]
                  %551 = vst [vmem:[%s483 + $0x84] sm:$0xf] %v550
                  %v552 = vld [vmem:[%s482 + $0x110] sm:$0xf]
                  %553 = vst [vmem:[%s483 + $0x88] sm:$0xf] %v552
                  %v554 = vld [vmem:[%s482 + $0x118] sm:$0xf]
                  %555 = vst [vmem:[%s483 + $0x8c] sm:$0xf] %v554
                  %v556 = vld [vmem:[%s482 + $0x120] sm:$0xf]
                  %557 = vst [vmem:[%s483 + $0x90] sm:$0xf] %v556
                  %v558 = vld [vmem:[%s482 + $0x128] sm:$0xf]
                  %559 = vst [vmem:[%s483 + $0x94] sm:$0xf] %v558
                  %v560 = vld [vmem:[%s482 + $0x130] sm:$0xf]
                  %561 = vst [vmem:[%s483 + $0x98] sm:$0xf] %v560
                  %v562 = vld [vmem:[%s482 + $0x138] sm:$0xf]
                  %563 = vst [vmem:[%s483 + $0x9c] sm:$0xf] %v562
                  %v564 = vld [vmem:[%s482 + $0x140] sm:$0xf]
                  %565 = vst [vmem:[%s483 + $0xa0] sm:$0xf] %v564
                  %v566 = vld [vmem:[%s482 + $0x148] sm:$0xf]
                  %567 = vst [vmem:[%s483 + $0xa4] sm:$0xf] %v566
                  %v568 = vld [vmem:[%s482 + $0x150] sm:$0xf]
                  %569 = vst [vmem:[%s483 + $0xa8] sm:$0xf] %v568
                  %v570 = vld [vmem:[%s482 + $0x158] sm:$0xf]
                  %571 = vst [vmem:[%s483 + $0xac] sm:$0xf] %v570
                  %v572 = vld [vmem:[%s482 + $0x160] sm:$0xf]
                  %573 = vst [vmem:[%s483 + $0xb0] sm:$0xf] %v572
                  %v574 = vld [vmem:[%s482 + $0x168] sm:$0xf]
                  %575 = vst [vmem:[%s483 + $0xb4] sm:$0xf] %v574
                  %v576 = vld [vmem:[%s482 + $0x170] sm:$0xf]
                  %577 = vst [vmem:[%s483 + $0xb8] sm:$0xf] %v576
                  %v578 = vld [vmem:[%s482 + $0x178] sm:$0xf]
                  %579 = vst [vmem:[%s483 + $0xbc] sm:$0xf] %v578
                  %v580 = vld [vmem:[%s482 + $0x180] sm:$0xf]
                  %581 = vst [vmem:[%s483 + $0xc0] sm:$0xf] %v580
                  %v582 = vld [vmem:[%s482 + $0x188] sm:$0xf]
                  %583 = vst [vmem:[%s483 + $0xc4] sm:$0xf] %v582
                  %v584 = vld [vmem:[%s482 + $0x190] sm:$0xf]
                  %585 = vst [vmem:[%s483 + $0xc8] sm:$0xf] %v584
                  %v586 = vld [vmem:[%s482 + $0x198] sm:$0xf]
                  %587 = vst [vmem:[%s483 + $0xcc] sm:$0xf] %v586
                  %v588 = vld [vmem:[%s482 + $0x1a0] sm:$0xf]
                  %589 = vst [vmem:[%s483 + $0xd0] sm:$0xf] %v588
                  %v590 = vld [vmem:[%s482 + $0x1a8] sm:$0xf]
                  %591 = vst [vmem:[%s483 + $0xd4] sm:$0xf] %v590
                  %v592 = vld [vmem:[%s482 + $0x1b0] sm:$0xf]
                  %593 = vst [vmem:[%s483 + $0xd8] sm:$0xf] %v592
                  %v594 = vld [vmem:[%s482 + $0x1b8] sm:$0xf]
                  %595 = vst [vmem:[%s483 + $0xdc] sm:$0xf] %v594
                  %v596 = vld [vmem:[%s482 + $0x1c0] sm:$0xf]
                  %597 = vst [vmem:[%s483 + $0xe0] sm:$0xf] %v596
                  %v598 = vld [vmem:[%s482 + $0x1c8] sm:$0xf]
                  %599 = vst [vmem:[%s483 + $0xe4] sm:$0xf] %v598
                  %v600 = vld [vmem:[%s482 + $0x1d0] sm:$0xf]
                  %601 = vst [vmem:[%s483 + $0xe8] sm:$0xf] %v600
                  %v602 = vld [vmem:[%s482 + $0x1d8] sm:$0xf]
                  %603 = vst [vmem:[%s483 + $0xec] sm:$0xf] %v602
                  %v604 = vld [vmem:[%s482 + $0x1e0] sm:$0xf]
                  %605 = vst [vmem:[%s483 + $0xf0] sm:$0xf] %v604
                  %v606 = vld [vmem:[%s482 + $0x1e8] sm:$0xf]
                  %607 = vst [vmem:[%s483 + $0xf4] sm:$0xf] %v606
                  %v608 = vld [vmem:[%s482 + $0x1f0] sm:$0xf]
                  %609 = vst [vmem:[%s483 + $0xf8] sm:$0xf] %v608
                  %v610 = vld [vmem:[%s482 + $0x1f8] sm:$0xf]
                  %611 = vst [vmem:[%s483 + $0xfc] sm:$0xf] %v610
                  %v612 = vld [vmem:[%s482 + $0x200] sm:$0xf]
                  %613 = vst [vmem:[%s483 + $0x100] sm:$0xf] %v612
                  %v614 = vld [vmem:[%s482 + $0x208] sm:$0xf]
                  %615 = vst [vmem:[%s483 + $0x104] sm:$0xf] %v614
                  %v616 = vld [vmem:[%s482 + $0x210] sm:$0xf]
                  %617 = vst [vmem:[%s483 + $0x108] sm:$0xf] %v616
                  %v618 = vld [vmem:[%s482 + $0x218] sm:$0xf]
                  %619 = vst [vmem:[%s483 + $0x10c] sm:$0xf] %v618
                  %v620 = vld [vmem:[%s482 + $0x220] sm:$0xf]
                  %621 = vst [vmem:[%s483 + $0x110] sm:$0xf] %v620
                  %v622 = vld [vmem:[%s482 + $0x228] sm:$0xf]
                  %623 = vst [vmem:[%s483 + $0x114] sm:$0xf] %v622
                  %v624 = vld [vmem:[%s482 + $0x230] sm:$0xf]
                  %625 = vst [vmem:[%s483 + $0x118] sm:$0xf] %v624
                  %v626 = vld [vmem:[%s482 + $0x238] sm:$0xf]
                  %627 = vst [vmem:[%s483 + $0x11c] sm:$0xf] %v626
                  %v628 = vld [vmem:[%s482 + $0x240] sm:$0xf]
                  %629 = vst [vmem:[%s483 + $0x120] sm:$0xf] %v628
                  %v630 = vld [vmem:[%s482 + $0x248] sm:$0xf]
                  %631 = vst [vmem:[%s483 + $0x124] sm:$0xf] %v630
                  %v632 = vld [vmem:[%s482 + $0x250] sm:$0xf]
                  %633 = vst [vmem:[%s483 + $0x128] sm:$0xf] %v632
                  %v634 = vld [vmem:[%s482 + $0x258] sm:$0xf]
                  %635 = vst [vmem:[%s483 + $0x12c] sm:$0xf] %v634
                  %v636 = vld [vmem:[%s482 + $0x260] sm:$0xf]
                  %637 = vst [vmem:[%s483 + $0x130] sm:$0xf] %v636
                  %v638 = vld [vmem:[%s482 + $0x268] sm:$0xf]
                  %639 = vst [vmem:[%s483 + $0x134] sm:$0xf] %v638
                  %v640 = vld [vmem:[%s482 + $0x270] sm:$0xf]
                  %641 = vst [vmem:[%s483 + $0x138] sm:$0xf] %v640
                  %v642 = vld [vmem:[%s482 + $0x278] sm:$0xf]
                  %643 = vst [vmem:[%s483 + $0x13c] sm:$0xf] %v642
                  %v644 = vld [vmem:[%s482 + $0x280] sm:$0xf]
                  %645 = vst [vmem:[%s483 + $0x140] sm:$0xf] %v644
                  %v646 = vld [vmem:[%s482 + $0x288] sm:$0xf]
                  %647 = vst [vmem:[%s483 + $0x144] sm:$0xf] %v646
                  %v648 = vld [vmem:[%s482 + $0x290] sm:$0xf]
                  %649 = vst [vmem:[%s483 + $0x148] sm:$0xf] %v648
                  %v650 = vld [vmem:[%s482 + $0x298] sm:$0xf]
                  %651 = vst [vmem:[%s483 + $0x14c] sm:$0xf] %v650
                  %v652 = vld [vmem:[%s482 + $0x2a0] sm:$0xf]
                  %653 = vst [vmem:[%s483 + $0x150] sm:$0xf] %v652
                  %v654 = vld [vmem:[%s482 + $0x2a8] sm:$0xf]
                  %655 = vst [vmem:[%s483 + $0x154] sm:$0xf] %v654
                  %v656 = vld [vmem:[%s482 + $0x2b0] sm:$0xf]
                  %657 = vst [vmem:[%s483 + $0x158] sm:$0xf] %v656
                  %v658 = vld [vmem:[%s482 + $0x2b8] sm:$0xf]
                  %659 = vst [vmem:[%s483 + $0x15c] sm:$0xf] %v658
                  %v660 = vld [vmem:[%s482 + $0x2c0] sm:$0xf]
                  %661 = vst [vmem:[%s483 + $0x160] sm:$0xf] %v660
                  %v662 = vld [vmem:[%s482 + $0x2c8] sm:$0xf]
                  %663 = vst [vmem:[%s483 + $0x164] sm:$0xf] %v662
                  %v664 = vld [vmem:[%s482 + $0x2d0] sm:$0xf]
                  %665 = vst [vmem:[%s483 + $0x168] sm:$0xf] %v664
                  %v666 = vld [vmem:[%s482 + $0x2d8] sm:$0xf]
                  %667 = vst [vmem:[%s483 + $0x16c] sm:$0xf] %v666
                  %v668 = vld [vmem:[%s482 + $0x2e0] sm:$0xf]
                  %669 = vst [vmem:[%s483 + $0x170] sm:$0xf] %v668
                  %v670 = vld [vmem:[%s482 + $0x2e8] sm:$0xf]
                  %671 = vst [vmem:[%s483 + $0x174] sm:$0xf] %v670
                  %v672 = vld [vmem:[%s482 + $0x2f0] sm:$0xf]
                  %673 = vst [vmem:[%s483 + $0x178] sm:$0xf] %v672
                  %v674 = vld [vmem:[%s482 + $0x2f8] sm:$0xf]
                  %675 = vst [vmem:[%s483 + $0x17c] sm:$0xf] %v674
                  %v676 = vld [vmem:[%s482 + $0x300] sm:$0xf]
                  %677 = vst [vmem:[%s483 + $0x180] sm:$0xf] %v676
                  %v678 = vld [vmem:[%s482 + $0x308] sm:$0xf]
                  %679 = vst [vmem:[%s483 + $0x184] sm:$0xf] %v678
                  %v680 = vld [vmem:[%s482 + $0x310] sm:$0xf]
                  %681 = vst [vmem:[%s483 + $0x188] sm:$0xf] %v680
                  %v682 = vld [vmem:[%s482 + $0x318] sm:$0xf]
                  %683 = vst [vmem:[%s483 + $0x18c] sm:$0xf] %v682
                  %v684 = vld [vmem:[%s482 + $0x320] sm:$0xf]
                  %685 = vst [vmem:[%s483 + $0x190] sm:$0xf] %v684
                  %v686 = vld [vmem:[%s482 + $0x328] sm:$0xf]
                  %687 = vst [vmem:[%s483 + $0x194] sm:$0xf] %v686
                  %v688 = vld [vmem:[%s482 + $0x330] sm:$0xf]
                  %689 = vst [vmem:[%s483 + $0x198] sm:$0xf] %v688
                  %v690 = vld [vmem:[%s482 + $0x338] sm:$0xf]
                  %691 = vst [vmem:[%s483 + $0x19c] sm:$0xf] %v690
                  %v692 = vld [vmem:[%s482 + $0x340] sm:$0xf]
                  %693 = vst [vmem:[%s483 + $0x1a0] sm:$0xf] %v692
                  %v694 = vld [vmem:[%s482 + $0x348] sm:$0xf]
                  %695 = vst [vmem:[%s483 + $0x1a4] sm:$0xf] %v694
                  %v696 = vld [vmem:[%s482 + $0x350] sm:$0xf]
                  %697 = vst [vmem:[%s483 + $0x1a8] sm:$0xf] %v696
                  %v698 = vld [vmem:[%s482 + $0x358] sm:$0xf]
                  %699 = vst [vmem:[%s483 + $0x1ac] sm:$0xf] %v698
                  %v700 = vld [vmem:[%s482 + $0x360] sm:$0xf]
                  %701 = vst [vmem:[%s483 + $0x1b0] sm:$0xf] %v700
                  %v702 = vld [vmem:[%s482 + $0x368] sm:$0xf]
                  %703 = vst [vmem:[%s483 + $0x1b4] sm:$0xf] %v702
                  %v704 = vld [vmem:[%s482 + $0x370] sm:$0xf]
                  %705 = vst [vmem:[%s483 + $0x1b8] sm:$0xf] %v704
                  %v706 = vld [vmem:[%s482 + $0x378] sm:$0xf]
                  %707 = vst [vmem:[%s483 + $0x1bc] sm:$0xf] %v706
                  %v708 = vld [vmem:[%s482 + $0x380] sm:$0xf]
                  %709 = vst [vmem:[%s483 + $0x1c0] sm:$0xf] %v708
                  %v710 = vld [vmem:[%s482 + $0x388] sm:$0xf]
                  %711 = vst [vmem:[%s483 + $0x1c4] sm:$0xf] %v710
                  %v712 = vld [vmem:[%s482 + $0x390] sm:$0xf]
                  %713 = vst [vmem:[%s483 + $0x1c8] sm:$0xf] %v712
                  %v714 = vld [vmem:[%s482 + $0x398] sm:$0xf]
                  %715 = vst [vmem:[%s483 + $0x1cc] sm:$0xf] %v714
                  %v716 = vld [vmem:[%s482 + $0x3a0] sm:$0xf]
                  %717 = vst [vmem:[%s483 + $0x1d0] sm:$0xf] %v716
                  %v718 = vld [vmem:[%s482 + $0x3a8] sm:$0xf]
                  %719 = vst [vmem:[%s483 + $0x1d4] sm:$0xf] %v718
                  %v720 = vld [vmem:[%s482 + $0x3b0] sm:$0xf]
                  %721 = vst [vmem:[%s483 + $0x1d8] sm:$0xf] %v720
                  %v722 = vld [vmem:[%s482 + $0x3b8] sm:$0xf]
                  %723 = vst [vmem:[%s483 + $0x1dc] sm:$0xf] %v722
                  %v724 = vld [vmem:[%s482 + $0x3c0] sm:$0xf]
                  %725 = vst [vmem:[%s483 + $0x1e0] sm:$0xf] %v724
                  %v726 = vld [vmem:[%s482 + $0x3c8] sm:$0xf]
                  %727 = vst [vmem:[%s483 + $0x1e4] sm:$0xf] %v726
                  %v728 = vld [vmem:[%s482 + $0x3d0] sm:$0xf]
                  %729 = vst [vmem:[%s483 + $0x1e8] sm:$0xf] %v728
                  %v730 = vld [vmem:[%s482 + $0x3d8] sm:$0xf]
                  %731 = vst [vmem:[%s483 + $0x1ec] sm:$0xf] %v730
                  %v732 = vld [vmem:[%s482 + $0x3e0] sm:$0xf]
                  %733 = vst [vmem:[%s483 + $0x1f0] sm:$0xf] %v732
                  %v734 = vld [vmem:[%s482 + $0x3e8] sm:$0xf]
                  %735 = vst [vmem:[%s483 + $0x1f4] sm:$0xf] %v734
                  %v736 = vld [vmem:[%s482 + $0x3f0] sm:$0xf]
                  %737 = vst [vmem:[%s483 + $0x1f8] sm:$0xf] %v736
                  %v738 = vld [vmem:[%s482 + $0x3f8] sm:$0xf]
                  %739 = vst [vmem:[%s483 + $0x1fc] sm:$0xf] %v738
                  %v740 = vld [vmem:[%s482 + $0x400] sm:$0xf]
                  %741 = vst [vmem:[%s483 + $0x200] sm:$0xf] %v740
                  %v742 = vld [vmem:[%s482 + $0x408] sm:$0xf]
                  %743 = vst [vmem:[%s483 + $0x204] sm:$0xf] %v742
                  %v744 = vld [vmem:[%s482 + $0x410] sm:$0xf]
                  %745 = vst [vmem:[%s483 + $0x208] sm:$0xf] %v744
                  %v746 = vld [vmem:[%s482 + $0x418] sm:$0xf]
                  %747 = vst [vmem:[%s483 + $0x20c] sm:$0xf] %v746
                  %v748 = vld [vmem:[%s482 + $0x420] sm:$0xf]
                  %749 = vst [vmem:[%s483 + $0x210] sm:$0xf] %v748
                  %v750 = vld [vmem:[%s482 + $0x428] sm:$0xf]
                  %751 = vst [vmem:[%s483 + $0x214] sm:$0xf] %v750
                  %v752 = vld [vmem:[%s482 + $0x430] sm:$0xf]
                  %753 = vst [vmem:[%s483 + $0x218] sm:$0xf] %v752
                  %v754 = vld [vmem:[%s482 + $0x438] sm:$0xf]
                  %755 = vst [vmem:[%s483 + $0x21c] sm:$0xf] %v754
                  %v756 = vld [vmem:[%s482 + $0x440] sm:$0xf]
                  %757 = vst [vmem:[%s483 + $0x220] sm:$0xf] %v756
                  %v758 = vld [vmem:[%s482 + $0x448] sm:$0xf]
                  %759 = vst [vmem:[%s483 + $0x224] sm:$0xf] %v758
                  %v760 = vld [vmem:[%s482 + $0x450] sm:$0xf]
                  %761 = vst [vmem:[%s483 + $0x228] sm:$0xf] %v760
                  %v762 = vld [vmem:[%s482 + $0x458] sm:$0xf]
                  %763 = vst [vmem:[%s483 + $0x22c] sm:$0xf] %v762
                  %v764 = vld [vmem:[%s482 + $0x460] sm:$0xf]
                  %765 = vst [vmem:[%s483 + $0x230] sm:$0xf] %v764
                  %v766 = vld [vmem:[%s482 + $0x468] sm:$0xf]
                  %767 = vst [vmem:[%s483 + $0x234] sm:$0xf] %v766
                  %v768 = vld [vmem:[%s482 + $0x470] sm:$0xf]
                  %769 = vst [vmem:[%s483 + $0x238] sm:$0xf] %v768
                  %v770 = vld [vmem:[%s482 + $0x478] sm:$0xf]
                  %771 = vst [vmem:[%s483 + $0x23c] sm:$0xf] %v770
                $region59: #{pose_cnn_forward.12} parent=46 // loop_footer
                  %s481 = sadd.s32 1, %s477
                $region60: #{pose_cnn_forward.12} parent=46 // loop_footer_branch
                  %476 = sbr.rel target = $region56
                $region61: #{pose_cnn_forward.12} parent=46 // loop_exit
                  _
              $region47: #{pose_cnn_forward.12} parent=31 // pred_fallthru
                _
            $region32: #{pose_cnn_forward.12} parent=27 // pred_fallthru
              _
            // Predicated region
            $region33: #{pose_cnn_forward.12} parent=27 // pred_check
              _
            $region34: #{pose_cnn_forward.12} parent=27 // pred_check_branch
              %167 = sbr.rel (0) target = $region36
            $region35: #{pose_cnn_forward.12} parent=27 // pred_region
              loop: start=0, step=1, limit=1
              $region37: #{pose_cnn_forward.12} parent=35 // loop_pre_header
                _
              $region38: #{pose_cnn_forward.12} parent=35 // loop_header
                %s170 = sphi 0, %s174
                %p171 = scmp.ge.s32.totalorder %s170, 1
                %s175 = sphi %s161, %s161
                %s176 = sphi %s159, %s159
              $region39: #{pose_cnn_forward.12} parent=35 // loop_header_branch
                %173 = sbr.rel (%p171) target = $region43
              $region40: #{pose_cnn_forward.12} parent=35 // loop_body
                %v177 = vld [vmem:[%s175] sm:$0xf]
                %178 = vst [vmem:[%s176] sm:$0xf] %v177
                %v179 = vld [vmem:[%s175 + $0x8] sm:$0xf]
                %180 = vst [vmem:[%s176 + $0x4] sm:$0xf] %v179
                %v181 = vld [vmem:[%s175 + $0x10] sm:$0xf]
                %182 = vst [vmem:[%s176 + $0x8] sm:$0xf] %v181
                %v183 = vld [vmem:[%s175 + $0x18] sm:$0xf]
                %184 = vst [vmem:[%s176 + $0xc] sm:$0xf] %v183
                %v185 = vld [vmem:[%s175 + $0x20] sm:$0xf]
                %186 = vst [vmem:[%s176 + $0x10] sm:$0xf] %v185
                %v187 = vld [vmem:[%s175 + $0x28] sm:$0xf]
                %188 = vst [vmem:[%s176 + $0x14] sm:$0xf] %v187
                %v189 = vld [vmem:[%s175 + $0x30] sm:$0xf]
                %190 = vst [vmem:[%s176 + $0x18] sm:$0xf] %v189
                %v191 = vld [vmem:[%s175 + $0x38] sm:$0xf]
                %192 = vst [vmem:[%s176 + $0x1c] sm:$0xf] %v191
                %v193 = vld [vmem:[%s175 + $0x40] sm:$0xf]
                %194 = vst [vmem:[%s176 + $0x20] sm:$0xf] %v193
                %v195 = vld [vmem:[%s175 + $0x48] sm:$0xf]
                %196 = vst [vmem:[%s176 + $0x24] sm:$0xf] %v195
                %v197 = vld [vmem:[%s175 + $0x50] sm:$0xf]
                %198 = vst [vmem:[%s176 + $0x28] sm:$0xf] %v197
                %v199 = vld [vmem:[%s175 + $0x58] sm:$0xf]
                %200 = vst [vmem:[%s176 + $0x2c] sm:$0xf] %v199
                %v201 = vld [vmem:[%s175 + $0x60] sm:$0xf]
                %202 = vst [vmem:[%s176 + $0x30] sm:$0xf] %v201
                %v203 = vld [vmem:[%s175 + $0x68] sm:$0xf]
                %204 = vst [vmem:[%s176 + $0x34] sm:$0xf] %v203
                %v205 = vld [vmem:[%s175 + $0x70] sm:$0xf]
                %206 = vst [vmem:[%s176 + $0x38] sm:$0xf] %v205
                %v207 = vld [vmem:[%s175 + $0x78] sm:$0xf]
                %208 = vst [vmem:[%s176 + $0x3c] sm:$0xf] %v207
                %v209 = vld [vmem:[%s175 + $0x80] sm:$0xf]
                %210 = vst [vmem:[%s176 + $0x40] sm:$0xf] %v209
                %v211 = vld [vmem:[%s175 + $0x88] sm:$0xf]
                %212 = vst [vmem:[%s176 + $0x44] sm:$0xf] %v211
                %v213 = vld [vmem:[%s175 + $0x90] sm:$0xf]
                %214 = vst [vmem:[%s176 + $0x48] sm:$0xf] %v213
                %v215 = vld [vmem:[%s175 + $0x98] sm:$0xf]
                %216 = vst [vmem:[%s176 + $0x4c] sm:$0xf] %v215
                %v217 = vld [vmem:[%s175 + $0xa0] sm:$0xf]
                %218 = vst [vmem:[%s176 + $0x50] sm:$0xf] %v217
                %v219 = vld [vmem:[%s175 + $0xa8] sm:$0xf]
                %220 = vst [vmem:[%s176 + $0x54] sm:$0xf] %v219
                %v221 = vld [vmem:[%s175 + $0xb0] sm:$0xf]
                %222 = vst [vmem:[%s176 + $0x58] sm:$0xf] %v221
                %v223 = vld [vmem:[%s175 + $0xb8] sm:$0xf]
                %224 = vst [vmem:[%s176 + $0x5c] sm:$0xf] %v223
                %v225 = vld [vmem:[%s175 + $0xc0] sm:$0xf]
                %226 = vst [vmem:[%s176 + $0x60] sm:$0xf] %v225
                %v227 = vld [vmem:[%s175 + $0xc8] sm:$0xf]
                %228 = vst [vmem:[%s176 + $0x64] sm:$0xf] %v227
                %v229 = vld [vmem:[%s175 + $0xd0] sm:$0xf]
                %230 = vst [vmem:[%s176 + $0x68] sm:$0xf] %v229
                %v231 = vld [vmem:[%s175 + $0xd8] sm:$0xf]
                %232 = vst [vmem:[%s176 + $0x6c] sm:$0xf] %v231
                %v233 = vld [vmem:[%s175 + $0xe0] sm:$0xf]
                %234 = vst [vmem:[%s176 + $0x70] sm:$0xf] %v233
                %v235 = vld [vmem:[%s175 + $0xe8] sm:$0xf]
                %236 = vst [vmem:[%s176 + $0x74] sm:$0xf] %v235
                %v237 = vld [vmem:[%s175 + $0xf0] sm:$0xf]
                %238 = vst [vmem:[%s176 + $0x78] sm:$0xf] %v237
                %v239 = vld [vmem:[%s175 + $0xf8] sm:$0xf]
                %240 = vst [vmem:[%s176 + $0x7c] sm:$0xf] %v239
                %v241 = vld [vmem:[%s175 + $0x100] sm:$0xf]
                %242 = vst [vmem:[%s176 + $0x80] sm:$0xf] %v241
                %v243 = vld [vmem:[%s175 + $0x108] sm:$0xf]
                %244 = vst [vmem:[%s176 + $0x84] sm:$0xf] %v243
                %v245 = vld [vmem:[%s175 + $0x110] sm:$0xf]
                %246 = vst [vmem:[%s176 + $0x88] sm:$0xf] %v245
                %v247 = vld [vmem:[%s175 + $0x118] sm:$0xf]
                %248 = vst [vmem:[%s176 + $0x8c] sm:$0xf] %v247
                %v249 = vld [vmem:[%s175 + $0x120] sm:$0xf]
                %250 = vst [vmem:[%s176 + $0x90] sm:$0xf] %v249
                %v251 = vld [vmem:[%s175 + $0x128] sm:$0xf]
                %252 = vst [vmem:[%s176 + $0x94] sm:$0xf] %v251
                %v253 = vld [vmem:[%s175 + $0x130] sm:$0xf]
                %254 = vst [vmem:[%s176 + $0x98] sm:$0xf] %v253
                %v255 = vld [vmem:[%s175 + $0x138] sm:$0xf]
                %256 = vst [vmem:[%s176 + $0x9c] sm:$0xf] %v255
                %v257 = vld [vmem:[%s175 + $0x140] sm:$0xf]
                %258 = vst [vmem:[%s176 + $0xa0] sm:$0xf] %v257
                %v259 = vld [vmem:[%s175 + $0x148] sm:$0xf]
                %260 = vst [vmem:[%s176 + $0xa4] sm:$0xf] %v259
                %v261 = vld [vmem:[%s175 + $0x150] sm:$0xf]
                %262 = vst [vmem:[%s176 + $0xa8] sm:$0xf] %v261
                %v263 = vld [vmem:[%s175 + $0x158] sm:$0xf]
                %264 = vst [vmem:[%s176 + $0xac] sm:$0xf] %v263
                %v265 = vld [vmem:[%s175 + $0x160] sm:$0xf]
                %266 = vst [vmem:[%s176 + $0xb0] sm:$0xf] %v265
                %v267 = vld [vmem:[%s175 + $0x168] sm:$0xf]
                %268 = vst [vmem:[%s176 + $0xb4] sm:$0xf] %v267
                %v269 = vld [vmem:[%s175 + $0x170] sm:$0xf]
                %270 = vst [vmem:[%s176 + $0xb8] sm:$0xf] %v269
                %v271 = vld [vmem:[%s175 + $0x178] sm:$0xf]
                %272 = vst [vmem:[%s176 + $0xbc] sm:$0xf] %v271
                %v273 = vld [vmem:[%s175 + $0x180] sm:$0xf]
                %274 = vst [vmem:[%s176 + $0xc0] sm:$0xf] %v273
                %v275 = vld [vmem:[%s175 + $0x188] sm:$0xf]
                %276 = vst [vmem:[%s176 + $0xc4] sm:$0xf] %v275
                %v277 = vld [vmem:[%s175 + $0x190] sm:$0xf]
                %278 = vst [vmem:[%s176 + $0xc8] sm:$0xf] %v277
                %v279 = vld [vmem:[%s175 + $0x198] sm:$0xf]
                %280 = vst [vmem:[%s176 + $0xcc] sm:$0xf] %v279
                %v281 = vld [vmem:[%s175 + $0x1a0] sm:$0xf]
                %282 = vst [vmem:[%s176 + $0xd0] sm:$0xf] %v281
                %v283 = vld [vmem:[%s175 + $0x1a8] sm:$0xf]
                %284 = vst [vmem:[%s176 + $0xd4] sm:$0xf] %v283
                %v285 = vld [vmem:[%s175 + $0x1b0] sm:$0xf]
                %286 = vst [vmem:[%s176 + $0xd8] sm:$0xf] %v285
                %v287 = vld [vmem:[%s175 + $0x1b8] sm:$0xf]
                %288 = vst [vmem:[%s176 + $0xdc] sm:$0xf] %v287
                %v289 = vld [vmem:[%s175 + $0x1c0] sm:$0xf]
                %290 = vst [vmem:[%s176 + $0xe0] sm:$0xf] %v289
                %v291 = vld [vmem:[%s175 + $0x1c8] sm:$0xf]
                %292 = vst [vmem:[%s176 + $0xe4] sm:$0xf] %v291
                %v293 = vld [vmem:[%s175 + $0x1d0] sm:$0xf]
                %294 = vst [vmem:[%s176 + $0xe8] sm:$0xf] %v293
                %v295 = vld [vmem:[%s175 + $0x1d8] sm:$0xf]
                %296 = vst [vmem:[%s176 + $0xec] sm:$0xf] %v295
                %v297 = vld [vmem:[%s175 + $0x1e0] sm:$0xf]
                %298 = vst [vmem:[%s176 + $0xf0] sm:$0xf] %v297
                %v299 = vld [vmem:[%s175 + $0x1e8] sm:$0xf]
                %300 = vst [vmem:[%s176 + $0xf4] sm:$0xf] %v299
                %v301 = vld [vmem:[%s175 + $0x1f0] sm:$0xf]
                %302 = vst [vmem:[%s176 + $0xf8] sm:$0xf] %v301
                %v303 = vld [vmem:[%s175 + $0x1f8] sm:$0xf]
                %304 = vst [vmem:[%s176 + $0xfc] sm:$0xf] %v303
                %v305 = vld [vmem:[%s175 + $0x200] sm:$0xf]
                %306 = vst [vmem:[%s176 + $0x100] sm:$0xf] %v305
                %v307 = vld [vmem:[%s175 + $0x208] sm:$0xf]
                %308 = vst [vmem:[%s176 + $0x104] sm:$0xf] %v307
                %v309 = vld [vmem:[%s175 + $0x210] sm:$0xf]
                %310 = vst [vmem:[%s176 + $0x108] sm:$0xf] %v309
                %v311 = vld [vmem:[%s175 + $0x218] sm:$0xf]
                %312 = vst [vmem:[%s176 + $0x10c] sm:$0xf] %v311
                %v313 = vld [vmem:[%s175 + $0x220] sm:$0xf]
                %314 = vst [vmem:[%s176 + $0x110] sm:$0xf] %v313
                %v315 = vld [vmem:[%s175 + $0x228] sm:$0xf]
                %316 = vst [vmem:[%s176 + $0x114] sm:$0xf] %v315
                %v317 = vld [vmem:[%s175 + $0x230] sm:$0xf]
                %318 = vst [vmem:[%s176 + $0x118] sm:$0xf] %v317
                %v319 = vld [vmem:[%s175 + $0x238] sm:$0xf]
                %320 = vst [vmem:[%s176 + $0x11c] sm:$0xf] %v319
                %v321 = vld [vmem:[%s175 + $0x240] sm:$0xf]
                %322 = vst [vmem:[%s176 + $0x120] sm:$0xf] %v321
                %v323 = vld [vmem:[%s175 + $0x248] sm:$0xf]
                %324 = vst [vmem:[%s176 + $0x124] sm:$0xf] %v323
                %v325 = vld [vmem:[%s175 + $0x250] sm:$0xf]
                %326 = vst [vmem:[%s176 + $0x128] sm:$0xf] %v325
                %v327 = vld [vmem:[%s175 + $0x258] sm:$0xf]
                %328 = vst [vmem:[%s176 + $0x12c] sm:$0xf] %v327
                %v329 = vld [vmem:[%s175 + $0x260] sm:$0xf]
                %330 = vst [vmem:[%s176 + $0x130] sm:$0xf] %v329
                %v331 = vld [vmem:[%s175 + $0x268] sm:$0xf]
                %332 = vst [vmem:[%s176 + $0x134] sm:$0xf] %v331
                %v333 = vld [vmem:[%s175 + $0x270] sm:$0xf]
                %334 = vst [vmem:[%s176 + $0x138] sm:$0xf] %v333
                %v335 = vld [vmem:[%s175 + $0x278] sm:$0xf]
                %336 = vst [vmem:[%s176 + $0x13c] sm:$0xf] %v335
                %v337 = vld [vmem:[%s175 + $0x280] sm:$0xf]
                %338 = vst [vmem:[%s176 + $0x140] sm:$0xf] %v337
                %v339 = vld [vmem:[%s175 + $0x288] sm:$0xf]
                %340 = vst [vmem:[%s176 + $0x144] sm:$0xf] %v339
                %v341 = vld [vmem:[%s175 + $0x290] sm:$0xf]
                %342 = vst [vmem:[%s176 + $0x148] sm:$0xf] %v341
                %v343 = vld [vmem:[%s175 + $0x298] sm:$0xf]
                %344 = vst [vmem:[%s176 + $0x14c] sm:$0xf] %v343
                %v345 = vld [vmem:[%s175 + $0x2a0] sm:$0xf]
                %346 = vst [vmem:[%s176 + $0x150] sm:$0xf] %v345
                %v347 = vld [vmem:[%s175 + $0x2a8] sm:$0xf]
                %348 = vst [vmem:[%s176 + $0x154] sm:$0xf] %v347
                %v349 = vld [vmem:[%s175 + $0x2b0] sm:$0xf]
                %350 = vst [vmem:[%s176 + $0x158] sm:$0xf] %v349
                %v351 = vld [vmem:[%s175 + $0x2b8] sm:$0xf]
                %352 = vst [vmem:[%s176 + $0x15c] sm:$0xf] %v351
                %v353 = vld [vmem:[%s175 + $0x2c0] sm:$0xf]
                %354 = vst [vmem:[%s176 + $0x160] sm:$0xf] %v353
                %v355 = vld [vmem:[%s175 + $0x2c8] sm:$0xf]
                %356 = vst [vmem:[%s176 + $0x164] sm:$0xf] %v355
                %v357 = vld [vmem:[%s175 + $0x2d0] sm:$0xf]
                %358 = vst [vmem:[%s176 + $0x168] sm:$0xf] %v357
                %v359 = vld [vmem:[%s175 + $0x2d8] sm:$0xf]
                %360 = vst [vmem:[%s176 + $0x16c] sm:$0xf] %v359
                %v361 = vld [vmem:[%s175 + $0x2e0] sm:$0xf]
                %362 = vst [vmem:[%s176 + $0x170] sm:$0xf] %v361
                %v363 = vld [vmem:[%s175 + $0x2e8] sm:$0xf]
                %364 = vst [vmem:[%s176 + $0x174] sm:$0xf] %v363
                %v365 = vld [vmem:[%s175 + $0x2f0] sm:$0xf]
                %366 = vst [vmem:[%s176 + $0x178] sm:$0xf] %v365
                %v367 = vld [vmem:[%s175 + $0x2f8] sm:$0xf]
                %368 = vst [vmem:[%s176 + $0x17c] sm:$0xf] %v367
                %v369 = vld [vmem:[%s175 + $0x300] sm:$0xf]
                %370 = vst [vmem:[%s176 + $0x180] sm:$0xf] %v369
                %v371 = vld [vmem:[%s175 + $0x308] sm:$0xf]
                %372 = vst [vmem:[%s176 + $0x184] sm:$0xf] %v371
                %v373 = vld [vmem:[%s175 + $0x310] sm:$0xf]
                %374 = vst [vmem:[%s176 + $0x188] sm:$0xf] %v373
                %v375 = vld [vmem:[%s175 + $0x318] sm:$0xf]
                %376 = vst [vmem:[%s176 + $0x18c] sm:$0xf] %v375
                %v377 = vld [vmem:[%s175 + $0x320] sm:$0xf]
                %378 = vst [vmem:[%s176 + $0x190] sm:$0xf] %v377
                %v379 = vld [vmem:[%s175 + $0x328] sm:$0xf]
                %380 = vst [vmem:[%s176 + $0x194] sm:$0xf] %v379
                %v381 = vld [vmem:[%s175 + $0x330] sm:$0xf]
                %382 = vst [vmem:[%s176 + $0x198] sm:$0xf] %v381
                %v383 = vld [vmem:[%s175 + $0x338] sm:$0xf]
                %384 = vst [vmem:[%s176 + $0x19c] sm:$0xf] %v383
                %v385 = vld [vmem:[%s175 + $0x340] sm:$0xf]
                %386 = vst [vmem:[%s176 + $0x1a0] sm:$0xf] %v385
                %v387 = vld [vmem:[%s175 + $0x348] sm:$0xf]
                %388 = vst [vmem:[%s176 + $0x1a4] sm:$0xf] %v387
                %v389 = vld [vmem:[%s175 + $0x350] sm:$0xf]
                %390 = vst [vmem:[%s176 + $0x1a8] sm:$0xf] %v389
                %v391 = vld [vmem:[%s175 + $0x358] sm:$0xf]
                %392 = vst [vmem:[%s176 + $0x1ac] sm:$0xf] %v391
                %v393 = vld [vmem:[%s175 + $0x360] sm:$0xf]
                %394 = vst [vmem:[%s176 + $0x1b0] sm:$0xf] %v393
                %v395 = vld [vmem:[%s175 + $0x368] sm:$0xf]
                %396 = vst [vmem:[%s176 + $0x1b4] sm:$0xf] %v395
                %v397 = vld [vmem:[%s175 + $0x370] sm:$0xf]
                %398 = vst [vmem:[%s176 + $0x1b8] sm:$0xf] %v397
                %v399 = vld [vmem:[%s175 + $0x378] sm:$0xf]
                %400 = vst [vmem:[%s176 + $0x1bc] sm:$0xf] %v399
                %v401 = vld [vmem:[%s175 + $0x380] sm:$0xf]
                %402 = vst [vmem:[%s176 + $0x1c0] sm:$0xf] %v401
                %v403 = vld [vmem:[%s175 + $0x388] sm:$0xf]
                %404 = vst [vmem:[%s176 + $0x1c4] sm:$0xf] %v403
                %v405 = vld [vmem:[%s175 + $0x390] sm:$0xf]
                %406 = vst [vmem:[%s176 + $0x1c8] sm:$0xf] %v405
                %v407 = vld [vmem:[%s175 + $0x398] sm:$0xf]
                %408 = vst [vmem:[%s176 + $0x1cc] sm:$0xf] %v407
                %v409 = vld [vmem:[%s175 + $0x3a0] sm:$0xf]
                %410 = vst [vmem:[%s176 + $0x1d0] sm:$0xf] %v409
                %v411 = vld [vmem:[%s175 + $0x3a8] sm:$0xf]
                %412 = vst [vmem:[%s176 + $0x1d4] sm:$0xf] %v411
                %v413 = vld [vmem:[%s175 + $0x3b0] sm:$0xf]
                %414 = vst [vmem:[%s176 + $0x1d8] sm:$0xf] %v413
                %v415 = vld [vmem:[%s175 + $0x3b8] sm:$0xf]
                %416 = vst [vmem:[%s176 + $0x1dc] sm:$0xf] %v415
                %v417 = vld [vmem:[%s175 + $0x3c0] sm:$0xf]
                %418 = vst [vmem:[%s176 + $0x1e0] sm:$0xf] %v417
                %v419 = vld [vmem:[%s175 + $0x3c8] sm:$0xf]
                %420 = vst [vmem:[%s176 + $0x1e4] sm:$0xf] %v419
                %v421 = vld [vmem:[%s175 + $0x3d0] sm:$0xf]
                %422 = vst [vmem:[%s176 + $0x1e8] sm:$0xf] %v421
                %v423 = vld [vmem:[%s175 + $0x3d8] sm:$0xf]
                %424 = vst [vmem:[%s176 + $0x1ec] sm:$0xf] %v423
                %v425 = vld [vmem:[%s175 + $0x3e0] sm:$0xf]
                %426 = vst [vmem:[%s176 + $0x1f0] sm:$0xf] %v425
                %v427 = vld [vmem:[%s175 + $0x3e8] sm:$0xf]
                %428 = vst [vmem:[%s176 + $0x1f4] sm:$0xf] %v427
                %v429 = vld [vmem:[%s175 + $0x3f0] sm:$0xf]
                %430 = vst [vmem:[%s176 + $0x1f8] sm:$0xf] %v429
                %v431 = vld [vmem:[%s175 + $0x3f8] sm:$0xf]
                %432 = vst [vmem:[%s176 + $0x1fc] sm:$0xf] %v431
                %v433 = vld [vmem:[%s175 + $0x400] sm:$0xf]
                %434 = vst [vmem:[%s176 + $0x200] sm:$0xf] %v433
                %v435 = vld [vmem:[%s175 + $0x408] sm:$0xf]
                %436 = vst [vmem:[%s176 + $0x204] sm:$0xf] %v435
                %v437 = vld [vmem:[%s175 + $0x410] sm:$0xf]
                %438 = vst [vmem:[%s176 + $0x208] sm:$0xf] %v437
                %v439 = vld [vmem:[%s175 + $0x418] sm:$0xf]
                %440 = vst [vmem:[%s176 + $0x20c] sm:$0xf] %v439
                %v441 = vld [vmem:[%s175 + $0x420] sm:$0xf]
                %442 = vst [vmem:[%s176 + $0x210] sm:$0xf] %v441
                %v443 = vld [vmem:[%s175 + $0x428] sm:$0xf]
                %444 = vst [vmem:[%s176 + $0x214] sm:$0xf] %v443
                %v445 = vld [vmem:[%s175 + $0x430] sm:$0xf]
                %446 = vst [vmem:[%s176 + $0x218] sm:$0xf] %v445
                %v447 = vld [vmem:[%s175 + $0x438] sm:$0xf]
                %448 = vst [vmem:[%s176 + $0x21c] sm:$0xf] %v447
                %v449 = vld [vmem:[%s175 + $0x440] sm:$0xf]
                %450 = vst [vmem:[%s176 + $0x220] sm:$0xf] %v449
                %v451 = vld [vmem:[%s175 + $0x448] sm:$0xf]
                %452 = vst [vmem:[%s176 + $0x224] sm:$0xf] %v451
                %v453 = vld [vmem:[%s175 + $0x450] sm:$0xf]
                %454 = vst [vmem:[%s176 + $0x228] sm:$0xf] %v453
                %v455 = vld [vmem:[%s175 + $0x458] sm:$0xf]
                %456 = vst [vmem:[%s176 + $0x22c] sm:$0xf] %v455
                %v457 = vld [vmem:[%s175 + $0x460] sm:$0xf]
                %458 = vst [vmem:[%s176 + $0x230] sm:$0xf] %v457
                %v459 = vld [vmem:[%s175 + $0x468] sm:$0xf]
                %460 = vst [vmem:[%s176 + $0x234] sm:$0xf] %v459
                %v461 = vld [vmem:[%s175 + $0x470] sm:$0xf]
                %462 = vst [vmem:[%s176 + $0x238] sm:$0xf] %v461
                %v463 = vld [vmem:[%s175 + $0x478] sm:$0xf]
                %464 = vst [vmem:[%s176 + $0x23c] sm:$0xf] %v463
              $region41: #{pose_cnn_forward.12} parent=35 // loop_footer
                %s174 = sadd.s32 1, %s170
              $region42: #{pose_cnn_forward.12} parent=35 // loop_footer_branch
                %169 = sbr.rel target = $region38
              $region43: #{pose_cnn_forward.12} parent=35 // loop_exit
                _
            $region36: #{pose_cnn_forward.12} parent=27 // pred_fallthru
              _
          $region28: #{pose_cnn_forward.12} parent=23 // pred_fallthru
            _
          %772 = vnop
        $region24: #{pose_cnn_forward.12} parent=19 // pred_fallthru
          _
        // Predicated region
        $region62: #{pose_cnn_forward.12} parent=19 // pred_check
          %p773 = pneg %p93
        $region63: #{pose_cnn_forward.12} parent=19 // pred_check_branch
          %775 = sbr.rel (%p773) target = $region65
        $region64: #{pose_cnn_forward.12} parent=19 // pred_region
          %p776 = scmp.lt.s32.totalorder %s17, 1
          %s777 = scalar_select %p776, %s17, 1
          %s778 = scalar_lea.vmem %s2, %s777
        $region65: #{pose_cnn_forward.12} parent=19 // pred_fallthru
          _
      $region20: #{pose_cnn_forward.12} parent=5 // pred_fallthru
        _
      %p779 = scmp.le.s32.totalorder 1, %s9
      %p780 = scmp.lt.s32.totalorder %s9, 3
      %p781 = pnand %p779, %p780
      %p782 = pneg %p781
      // Predicated region
      $region66: #{pose_cnn_forward.12} parent=5 // pred_check
        _
      $region67: #{pose_cnn_forward.12} parent=5 // pred_check_branch
        %784 = sbr.rel (%p781) target = $region69
      $region68: #{pose_cnn_forward.12} parent=5 // pred_region
        %s785 = ssub.s32 %s9, 1
        %s786 = sand.u32 %s60, 1
        %s787 = sand.u32 %s60, 1
        %s788 = smul.addr %s787, 576
        %s789 = scalar_lea.vmem [#allocation2], %s788
        // Predicated region
        $region70: #{pose_cnn_forward.12} parent=68 // pred_check
          %p790 = pneg %p73
        $region71: #{pose_cnn_forward.12} parent=68 // pred_check_branch
          %792 = sbr.rel (%p790) target = $region73
        $region72: #{pose_cnn_forward.12} parent=68 // pred_region
          _
        $region73: #{pose_cnn_forward.12} parent=68 // pred_fallthru
          _
        %p793 = scmp.lt.s32.totalorder %s18, 0
        %s794 = scalar_select %p793, %s18, 0
        %s795 = smul.addr %s794, 9
        %s796 = scalar_lea.vmem %s0, %s795
        %p797 = pneg %p47
        %p798 = pneg %p44
        %s799 = sand.u32 %s60, 1
        %s800 = sand.u32 %s60, 1
        %s801 = smul.addr %s800, 576
        %s802 = scalar_lea.vmem [#allocation2], %s801
        %p803 = pneg %p73
        %p804 = pneg %p70
        %p805 = scmp.lt.s32.totalorder %s19, 1
        %s806 = scalar_select %p805, %s19, 1
        %s807 = scalar_lea.vmem %s2, %s806
        %p808 = pneg %p99
        %p809 = pneg %p96
        %p810 = pneg %p127
        %p811 = pneg %p124
        %p812 = scmp.lt.s32.totalorder %s18, 0
        %s813 = scalar_select %p812, %s18, 0
        %p814 = scmp.lt.s32.totalorder %s19, 1
        %s815 = scalar_select %p814, %s19, 1
        %s816 = smul.addr %s813, 2
        %s817 = sadd.s32 %s815, %s816
        %s818 = scalar_lea.vmem %s3, %s817
        %p819 = scmp.lt.s32.totalorder %s18, 0
        %s820 = scalar_select %p819, %s18, 0
        %s821 = smul.addr %s820, 9
        %s822 = scalar_lea.vmem %s0, %s821
        %p823 = scmp.lt.s32.totalorder %s19, 1
        %s824 = scalar_select %p823, %s19, 1
        %s825 = scalar_lea.vmem %s2, %s824
        %p826 = scmp.lt.s32.totalorder %s18, 0
        %s827 = scalar_select %p826, %s18, 0
        %p828 = scmp.lt.s32.totalorder %s19, 1
        %s829 = scalar_select %p828, %s19, 1
        %s830 = smul.addr %s827, 2
        %s831 = sadd.s32 %s829, %s830
        %s832 = scalar_lea.vmem %s3, %s831
        %v834 = vld [vmem:[%s822] sm:$0xff]
        %v835 = vld [vmem:[%s822 + $0x8] sm:$0x1]
        %v836 = vld [vmem:[%s789] sm:$0xf]
        %v837 = vld [vmem:[%s789 + $0x4] sm:$0xf]
        %v838 = vld [vmem:[%s789 + $0x8] sm:$0xf]
        %v839 = vld [vmem:[%s789 + $0xc] sm:$0xf]
        %v840 = vld [vmem:[%s789 + $0x10] sm:$0xf]
        %v841 = vld [vmem:[%s789 + $0x14] sm:$0xf]
        %v842 = vld [vmem:[%s789 + $0x18] sm:$0xf]
        %v843 = vld [vmem:[%s789 + $0x1c] sm:$0xf]
        %v844 = vld [vmem:[%s789 + $0x20] sm:$0xf]
        %v845 = vld [vmem:[%s789 + $0x24] sm:$0xf]
        %v846 = vld [vmem:[%s789 + $0x28] sm:$0xf]
        %v847 = vld [vmem:[%s789 + $0x2c] sm:$0xf]
        %v848 = vld [vmem:[%s789 + $0x30] sm:$0xf]
        %v849 = vld [vmem:[%s789 + $0x34] sm:$0xf]
        %v850 = vld [vmem:[%s789 + $0x38] sm:$0xf]
        %v851 = vld [vmem:[%s789 + $0x3c] sm:$0xf]
        %v852 = vld [vmem:[%s789 + $0x40] sm:$0xf]
        %v853 = vld [vmem:[%s789 + $0x44] sm:$0xf]
        %v854 = vld [vmem:[%s789 + $0x48] sm:$0xf]
        %v855 = vld [vmem:[%s789 + $0x4c] sm:$0xf]
        %v856 = vld [vmem:[%s789 + $0x50] sm:$0xf]
        %v857 = vld [vmem:[%s789 + $0x54] sm:$0xf]
        %v858 = vld [vmem:[%s789 + $0x58] sm:$0xf]
        %v859 = vld [vmem:[%s789 + $0x5c] sm:$0xf]
        %v860 = vld [vmem:[%s789 + $0x60] sm:$0xf]
        %v861 = vld [vmem:[%s789 + $0x64] sm:$0xf]
        %v862 = vld [vmem:[%s789 + $0x68] sm:$0xf]
        %v863 = vld [vmem:[%s789 + $0x6c] sm:$0xf]
        %v864 = vld [vmem:[%s789 + $0x70] sm:$0xf]
        %v865 = vld [vmem:[%s789 + $0x74] sm:$0xf]
        %v866 = vld [vmem:[%s789 + $0x78] sm:$0xf]
        %v867 = vld [vmem:[%s789 + $0x7c] sm:$0xf]
        %v868 = vld [vmem:[%s789 + $0x80] sm:$0xf]
        %v869 = vld [vmem:[%s789 + $0x84] sm:$0xf]
        %v870 = vld [vmem:[%s789 + $0x88] sm:$0xf]
        %v871 = vld [vmem:[%s789 + $0x8c] sm:$0xf]
        %v872 = vld [vmem:[%s789 + $0x90] sm:$0xf]
        %v873 = vld [vmem:[%s789 + $0x94] sm:$0xf]
        %v874 = vld [vmem:[%s789 + $0x98] sm:$0xf]
        %v875 = vld [vmem:[%s789 + $0x9c] sm:$0xf]
        %v876 = vld [vmem:[%s789 + $0xa0] sm:$0xf]
        %v877 = vld [vmem:[%s789 + $0xa4] sm:$0xf]
        %v878 = vld [vmem:[%s789 + $0xa8] sm:$0xf]
        %v879 = vld [vmem:[%s789 + $0xac] sm:$0xf]
        %v880 = vld [vmem:[%s789 + $0xb0] sm:$0xf]
        %v881 = vld [vmem:[%s789 + $0xb4] sm:$0xf]
        %v882 = vld [vmem:[%s789 + $0xb8] sm:$0xf]
        %v883 = vld [vmem:[%s789 + $0xbc] sm:$0xf]
        %v884 = vld [vmem:[%s789 + $0xc0] sm:$0xf]
        %v885 = vld [vmem:[%s789 + $0xc4] sm:$0xf]
        %v886 = vld [vmem:[%s789 + $0xc8] sm:$0xf]
        %v887 = vld [vmem:[%s789 + $0xcc] sm:$0xf]
        %v888 = vld [vmem:[%s789 + $0xd0] sm:$0xf]
        %v889 = vld [vmem:[%s789 + $0xd4] sm:$0xf]
        %v890 = vld [vmem:[%s789 + $0xd8] sm:$0xf]
        %v891 = vld [vmem:[%s789 + $0xdc] sm:$0xf]
        %v892 = vld [vmem:[%s789 + $0xe0] sm:$0xf]
        %v893 = vld [vmem:[%s789 + $0xe4] sm:$0xf]
        %v894 = vld [vmem:[%s789 + $0xe8] sm:$0xf]
        %v895 = vld [vmem:[%s789 + $0xec] sm:$0xf]
        %v896 = vld [vmem:[%s789 + $0xf0] sm:$0xf]
        %v897 = vld [vmem:[%s789 + $0xf4] sm:$0xf]
        %v898 = vld [vmem:[%s789 + $0xf8] sm:$0xf]
        %v899 = vld [vmem:[%s789 + $0xfc] sm:$0xf]
        %v900 = vld [vmem:[%s789 + $0x100] sm:$0xf]
        %v901 = vld [vmem:[%s789 + $0x104] sm:$0xf]
        %v902 = vld [vmem:[%s789 + $0x108] sm:$0xf]
        %v903 = vld [vmem:[%s789 + $0x10c] sm:$0xf]
        %v904 = vld [vmem:[%s789 + $0x110] sm:$0xf]
        %v905 = vld [vmem:[%s789 + $0x114] sm:$0xf]
        %v906 = vld [vmem:[%s789 + $0x118] sm:$0xf]
        %v907 = vld [vmem:[%s789 + $0x11c] sm:$0xf]
        %v908 = vld [vmem:[%s789 + $0x120] sm:$0xf]
        %v909 = vld [vmem:[%s789 + $0x124] sm:$0xf]
        %v910 = vld [vmem:[%s789 + $0x128] sm:$0xf]
        %v911 = vld [vmem:[%s789 + $0x12c] sm:$0xf]
        %v912 = vld [vmem:[%s789 + $0x130] sm:$0xf]
        %v913 = vld [vmem:[%s789 + $0x134] sm:$0xf]
        %v914 = vld [vmem:[%s789 + $0x138] sm:$0xf]
        %v915 = vld [vmem:[%s789 + $0x13c] sm:$0xf]
        %v916 = vld [vmem:[%s789 + $0x140] sm:$0xf]
        %v917 = vld [vmem:[%s789 + $0x144] sm:$0xf]
        %v918 = vld [vmem:[%s789 + $0x148] sm:$0xf]
        %v919 = vld [vmem:[%s789 + $0x14c] sm:$0xf]
        %v920 = vld [vmem:[%s789 + $0x150] sm:$0xf]
        %v921 = vld [vmem:[%s789 + $0x154] sm:$0xf]
        %v922 = vld [vmem:[%s789 + $0x158] sm:$0xf]
        %v923 = vld [vmem:[%s789 + $0x15c] sm:$0xf]
        %v924 = vld [vmem:[%s789 + $0x160] sm:$0xf]
        %v925 = vld [vmem:[%s789 + $0x164] sm:$0xf]
        %v926 = vld [vmem:[%s789 + $0x168] sm:$0xf]
        %v927 = vld [vmem:[%s789 + $0x16c] sm:$0xf]
        %v928 = vld [vmem:[%s789 + $0x170] sm:$0xf]
        %v929 = vld [vmem:[%s789 + $0x174] sm:$0xf]
        %v930 = vld [vmem:[%s789 + $0x178] sm:$0xf]
        %v931 = vld [vmem:[%s789 + $0x17c] sm:$0xf]
        %v932 = vld [vmem:[%s789 + $0x180] sm:$0xf]
        %v933 = vld [vmem:[%s789 + $0x184] sm:$0xf]
        %v934 = vld [vmem:[%s789 + $0x188] sm:$0xf]
        %v935 = vld [vmem:[%s789 + $0x18c] sm:$0xf]
        %v936 = vld [vmem:[%s789 + $0x190] sm:$0xf]
        %v937 = vld [vmem:[%s789 + $0x194] sm:$0xf]
        %v938 = vld [vmem:[%s789 + $0x198] sm:$0xf]
        %v939 = vld [vmem:[%s789 + $0x19c] sm:$0xf]
        %v940 = vld [vmem:[%s789 + $0x1a0] sm:$0xf]
        %v941 = vld [vmem:[%s789 + $0x1a4] sm:$0xf]
        %v942 = vld [vmem:[%s789 + $0x1a8] sm:$0xf]
        %v943 = vld [vmem:[%s789 + $0x1ac] sm:$0xf]
        %v944 = vld [vmem:[%s789 + $0x1b0] sm:$0xf]
        %v945 = vld [vmem:[%s789 + $0x1b4] sm:$0xf]
        %v946 = vld [vmem:[%s789 + $0x1b8] sm:$0xf]
        %v947 = vld [vmem:[%s789 + $0x1bc] sm:$0xf]
        %v948 = vld [vmem:[%s789 + $0x1c0] sm:$0xf]
        %v949 = vld [vmem:[%s789 + $0x1c4] sm:$0xf]
        %v950 = vld [vmem:[%s789 + $0x1c8] sm:$0xf]
        %v951 = vld [vmem:[%s789 + $0x1cc] sm:$0xf]
        %v952 = vld [vmem:[%s789 + $0x1d0] sm:$0xf]
        %v953 = vld [vmem:[%s789 + $0x1d4] sm:$0xf]
        %v954 = vld [vmem:[%s789 + $0x1d8] sm:$0xf]
        %v955 = vld [vmem:[%s789 + $0x1dc] sm:$0xf]
        %v956 = vld [vmem:[%s789 + $0x1e0] sm:$0xf]
        %v957 = vld [vmem:[%s789 + $0x1e4] sm:$0xf]
        %v958 = vld [vmem:[%s789 + $0x1e8] sm:$0xf]
        %v959 = vld [vmem:[%s789 + $0x1ec] sm:$0xf]
        %v960 = vld [vmem:[%s789 + $0x1f0] sm:$0xf]
        %v961 = vld [vmem:[%s789 + $0x1f4] sm:$0xf]
        %v962 = vld [vmem:[%s789 + $0x1f8] sm:$0xf]
        %v963 = vld [vmem:[%s789 + $0x1fc] sm:$0xf]
        %v964 = vld [vmem:[%s789 + $0x200] sm:$0xf]
        %v965 = vld [vmem:[%s789 + $0x204] sm:$0xf]
        %v966 = vld [vmem:[%s789 + $0x208] sm:$0xf]
        %v967 = vld [vmem:[%s789 + $0x20c] sm:$0xf]
        %v968 = vld [vmem:[%s789 + $0x210] sm:$0xf]
        %v969 = vld [vmem:[%s789 + $0x214] sm:$0xf]
        %v970 = vld [vmem:[%s789 + $0x218] sm:$0xf]
        %v971 = vld [vmem:[%s789 + $0x21c] sm:$0xf]
        %v972 = vld [vmem:[%s789 + $0x220] sm:$0xf]
        %v973 = vld [vmem:[%s789 + $0x224] sm:$0xf]
        %v974 = vld [vmem:[%s789 + $0x228] sm:$0xf]
        %v975 = vld [vmem:[%s789 + $0x22c] sm:$0xf]
        %v976 = vld [vmem:[%s789 + $0x230] sm:$0xf]
        %v977 = vld [vmem:[%s789 + $0x234] sm:$0xf]
        %v978 = vld [vmem:[%s789 + $0x238] sm:$0xf]
        %v979 = vld [vmem:[%s789 + $0x23c] sm:$0xf]
        %v980 = vld [vmem:[%s825] sm:$0x1]
        %v982 = vlaneseq
        %v983 = vshrl.u32 %v982, 7
        %v984 = vsub.s32 0, %v983
        %v985 = vrot.slane %v980, %v984
        %v989 = vcombine.high %v834, %v834
        %v991 = vunpack.c.l.s4 1966171168
        %v992 = vunpack.c.0.s8 %v991
        %v993 = vlaneseq
        %v994 = vshrl.u32 %v993, 7
        %v995 = vsub.s32 %v992, %v994
        %v996 = vrot.slane %v834, %v995
        %v998 = vunpack.c.l.s4 1966171168
        %v999 = vunpack.c.0.s8 %v998
        %v1000 = vlaneseq
        %v1001 = vshrl.u32 %v1000, 7
        %v1002 = vsub.s32 %v999, %v1001
        %v1003 = vrot.slane %v989, %v1002
        %v1004 = vcombine.high %v996, %v996
        %v1005 = vcombine.high %v1003, %v1003
        %v1007 = vunpack.c.l.s4 1966171168
        %v1008 = vunpack.c.0.s8 %v1007
        %v1009 = vlaneseq
        %v1010 = vshrl.u32 %v1009, 7
        %v1011 = vsub.s32 %v1008, %v1010
        %v1012 = vrot.slane %v996, %v1011
        %v1014 = vunpack.c.l.s4 1966171168
        %v1015 = vunpack.c.0.s8 %v1014
        %v1016 = vlaneseq
        %v1017 = vshrl.u32 %v1016, 7
        %v1018 = vsub.s32 %v1015, %v1017
        %v1019 = vrot.slane %v1003, %v1018
        %v1021 = vunpack.c.l.s4 1966171168
        %v1022 = vunpack.c.0.s8 %v1021
        %v1023 = vlaneseq
        %v1024 = vshrl.u32 %v1023, 7
        %v1025 = vsub.s32 %v1022, %v1024
        %v1026 = vrot.slane %v1004, %v1025
        %v1028 = vunpack.c.l.s4 1966171168
        %v1029 = vunpack.c.0.s8 %v1028
        %v1030 = vlaneseq
        %v1031 = vshrl.u32 %v1030, 7
        %v1032 = vsub.s32 %v1029, %v1031
        %v1033 = vrot.slane %v1005, %v1032
        %v1034 = vcombine.high %v1012, %v1012
        %v1035 = vcombine.high %v1019, %v1019
        %v1036 = vcombine.high %v1026, %v1026
        %v1037 = vcombine.high %v1033, %v1033
        %v1039 = vunpack.c.l.s4 1966171168
        %v1040 = vunpack.c.0.s8 %v1039
        %v1041 = vlaneseq
        %v1042 = vshrl.u32 %v1041, 7
        %v1043 = vsub.s32 %v1040, %v1042
        %v1044 = vrot.slane %v835, %v1043
        %v1046 = vunpack.c.l.s4 1966171168
        %v1047 = vunpack.c.0.s8 %v1046
        %v1048 = vlaneseq
        %v1049 = vshrl.u32 %v1048, 7
        %v1050 = vsub.s32 %v1047, %v1049
        %v1051 = vrot.slane %v1044, %v1050
        %v1205 = vunpack.c.l.b16 %v836
        %v1206 = vunpack.c.l.b16 %v837
        %v1207 = vunpack.c.l.b16 %v838
        %v1208 = vunpack.c.l.b16 %v839
        %v1209 = vunpack.c.l.b16 %v840
        %v1210 = vunpack.c.l.b16 %v841
        %v1211 = vunpack.c.l.b16 %v842
        %v1212 = vunpack.c.l.b16 %v843
        %v1213 = vunpack.c.l.b16 %v844
        %v1214 = vunpack.c.l.b16 %v845
        %v1215 = vunpack.c.l.b16 %v846
        %v1216 = vunpack.c.l.b16 %v847
        %v1217 = vunpack.c.l.b16 %v848
        %v1218 = vunpack.c.l.b16 %v849
        %v1219 = vunpack.c.l.b16 %v850
        %v1220 = vunpack.c.l.b16 %v851
        %v1221 = vunpack.c.l.b16 %v852
        %v1222 = vunpack.c.l.b16 %v853
        %v1223 = vunpack.c.l.b16 %v854
        %v1224 = vunpack.c.l.b16 %v855
        %v1225 = vunpack.c.l.b16 %v856
        %v1226 = vunpack.c.l.b16 %v857
        %v1227 = vunpack.c.l.b16 %v858
        %v1228 = vunpack.c.l.b16 %v859
        %v1229 = vunpack.c.l.b16 %v860
        %v1230 = vunpack.c.l.b16 %v861
        %v1231 = vunpack.c.l.b16 %v862
        %v1232 = vunpack.c.l.b16 %v863
        %v1233 = vunpack.c.l.b16 %v864
        %v1234 = vunpack.c.l.b16 %v865
        %v1235 = vunpack.c.l.b16 %v866
        %v1236 = vunpack.c.l.b16 %v867
        %v1237 = vunpack.c.l.b16 %v868
        %v1238 = vunpack.c.l.b16 %v869
        %v1239 = vunpack.c.l.b16 %v870
        %v1240 = vunpack.c.l.b16 %v871
        %v1241 = vunpack.c.l.b16 %v872
        %v1242 = vunpack.c.l.b16 %v873
        %v1243 = vunpack.c.l.b16 %v874
        %v1244 = vunpack.c.l.b16 %v875
        %v1245 = vunpack.c.l.b16 %v876
        %v1246 = vunpack.c.l.b16 %v877
        %v1247 = vunpack.c.l.b16 %v878
        %v1248 = vunpack.c.l.b16 %v879
        %v1249 = vunpack.c.l.b16 %v880
        %v1250 = vunpack.c.l.b16 %v881
        %v1251 = vunpack.c.l.b16 %v882
        %v1252 = vunpack.c.l.b16 %v883
        %v1253 = vunpack.c.l.b16 %v884
        %v1254 = vunpack.c.l.b16 %v885
        %v1255 = vunpack.c.l.b16 %v886
        %v1256 = vunpack.c.l.b16 %v887
        %v1257 = vunpack.c.l.b16 %v888
        %v1258 = vunpack.c.l.b16 %v889
        %v1259 = vunpack.c.l.b16 %v890
        %v1260 = vunpack.c.l.b16 %v891
        %v1261 = vunpack.c.l.b16 %v892
        %v1262 = vunpack.c.l.b16 %v893
        %v1263 = vunpack.c.l.b16 %v894
        %v1264 = vunpack.c.l.b16 %v895
        %v1265 = vunpack.c.l.b16 %v896
        %v1266 = vunpack.c.l.b16 %v897
        %v1267 = vunpack.c.l.b16 %v898
        %v1268 = vunpack.c.l.b16 %v899
        %v1269 = vunpack.c.l.b16 %v900
        %v1270 = vunpack.c.l.b16 %v901
        %v1271 = vunpack.c.l.b16 %v902
        %v1272 = vunpack.c.l.b16 %v903
        %v1273 = vunpack.c.l.b16 %v904
        %v1274 = vunpack.c.l.b16 %v905
        %v1275 = vunpack.c.l.b16 %v906
        %v1276 = vunpack.c.l.b16 %v907
        %v1277 = vunpack.c.l.b16 %v908
        %v1278 = vunpack.c.l.b16 %v909
        %v1279 = vunpack.c.l.b16 %v910
        %v1280 = vunpack.c.l.b16 %v911
        %v1281 = vunpack.c.l.b16 %v912
        %v1282 = vunpack.c.l.b16 %v913
        %v1283 = vunpack.c.l.b16 %v914
        %v1284 = vunpack.c.l.b16 %v915
        %v1285 = vunpack.c.l.b16 %v916
        %v1286 = vunpack.c.l.b16 %v917
        %v1287 = vunpack.c.l.b16 %v918
        %v1288 = vunpack.c.l.b16 %v919
        %v1289 = vunpack.c.l.b16 %v920
        %v1290 = vunpack.c.l.b16 %v921
        %v1291 = vunpack.c.l.b16 %v922
        %v1292 = vunpack.c.l.b16 %v923
        %v1293 = vunpack.c.l.b16 %v924
        %v1294 = vunpack.c.l.b16 %v925
        %v1295 = vunpack.c.l.b16 %v926
        %v1296 = vunpack.c.l.b16 %v927
        %v1297 = vunpack.c.l.b16 %v928
        %v1298 = vunpack.c.l.b16 %v929
        %v1299 = vunpack.c.l.b16 %v930
        %v1300 = vunpack.c.l.b16 %v931
        %v1301 = vunpack.c.l.b16 %v932
        %v1302 = vunpack.c.l.b16 %v933
        %v1303 = vunpack.c.l.b16 %v934
        %v1304 = vunpack.c.l.b16 %v935
        %v1305 = vunpack.c.l.b16 %v936
        %v1306 = vunpack.c.l.b16 %v937
        %v1307 = vunpack.c.l.b16 %v938
        %v1308 = vunpack.c.l.b16 %v939
        %v1309 = vunpack.c.l.b16 %v940
        %v1310 = vunpack.c.l.b16 %v941
        %v1311 = vunpack.c.l.b16 %v942
        %v1312 = vunpack.c.l.b16 %v943
        %v1313 = vunpack.c.l.b16 %v944
        %v1314 = vunpack.c.l.b16 %v945
        %v1315 = vunpack.c.l.b16 %v946
        %v1316 = vunpack.c.l.b16 %v947
        %v1317 = vunpack.c.l.b16 %v948
        %v1318 = vunpack.c.l.b16 %v949
        %v1319 = vunpack.c.l.b16 %v950
        %v1320 = vunpack.c.l.b16 %v951
        %v1321 = vunpack.c.l.b16 %v952
        %v1322 = vunpack.c.l.b16 %v953
        %v1323 = vunpack.c.l.b16 %v954
        %v1324 = vunpack.c.l.b16 %v955
        %v1325 = vunpack.c.l.b16 %v956
        %v1326 = vunpack.c.l.b16 %v957
        %v1327 = vunpack.c.l.b16 %v958
        %v1328 = vunpack.c.l.b16 %v959
        %v1329 = vunpack.c.l.b16 %v960
        %v1330 = vunpack.c.l.b16 %v961
        %v1331 = vunpack.c.l.b16 %v962
        %v1332 = vunpack.c.l.b16 %v963
        %v1333 = vunpack.c.l.b16 %v964
        %v1334 = vunpack.c.l.b16 %v965
        %v1335 = vunpack.c.l.b16 %v966
        %v1336 = vunpack.c.l.b16 %v967
        %v1337 = vunpack.c.l.b16 %v968
        %v1338 = vunpack.c.l.b16 %v969
        %v1339 = vunpack.c.l.b16 %v970
        %v1340 = vunpack.c.l.b16 %v971
        %v1341 = vunpack.c.l.b16 %v972
        %v1342 = vunpack.c.l.b16 %v973
        %v1343 = vunpack.c.l.b16 %v974
        %v1344 = vunpack.c.l.b16 %v975
        %v1345 = vunpack.c.l.b16 %v976
        %v1346 = vunpack.c.l.b16 %v977
        %v1347 = vunpack.c.l.b16 %v978
        %v1348 = vunpack.c.l.b16 %v979
        %v1349 = vpack.c.b16 %v1206, %v1205
        %v1350 = vpack.c.b16 %v1208, %v1207
        %v1351 = vpack.c.b16 %v1210, %v1209
        %v1352 = vpack.c.b16 %v1212, %v1211
        %v1353 = vpack.c.b16 %v1214, %v1213
        %v1354 = vpack.c.b16 %v1216, %v1215
        %v1355 = vpack.c.b16 %v1218, %v1217
        %v1356 = vpack.c.b16 %v1220, %v1219
        %v1357 = vpack.c.b16 %v1222, %v1221
        %v1358 = vpack.c.b16 %v1224, %v1223
        %v1359 = vpack.c.b16 %v1226, %v1225
        %v1360 = vpack.c.b16 %v1228, %v1227
        %v1361 = vpack.c.b16 %v1230, %v1229
        %v1362 = vpack.c.b16 %v1232, %v1231
        %v1363 = vpack.c.b16 %v1234, %v1233
        %v1364 = vpack.c.b16 %v1236, %v1235
        %v1365 = vpack.c.b16 %v1238, %v1237
        %v1366 = vpack.c.b16 %v1240, %v1239
        %v1367 = vpack.c.b16 %v1242, %v1241
        %v1368 = vpack.c.b16 %v1244, %v1243
        %v1369 = vpack.c.b16 %v1246, %v1245
        %v1370 = vpack.c.b16 %v1248, %v1247
        %v1371 = vpack.c.b16 %v1250, %v1249
        %v1372 = vpack.c.b16 %v1252, %v1251
        %v1373 = vpack.c.b16 %v1254, %v1253
        %v1374 = vpack.c.b16 %v1256, %v1255
        %v1375 = vpack.c.b16 %v1258, %v1257
        %v1376 = vpack.c.b16 %v1260, %v1259
        %v1377 = vpack.c.b16 %v1262, %v1261
        %v1378 = vpack.c.b16 %v1264, %v1263
        %v1379 = vpack.c.b16 %v1266, %v1265
        %v1380 = vpack.c.b16 %v1268, %v1267
        %v1381 = vpack.c.b16 %v1270, %v1269
        %v1382 = vpack.c.b16 %v1272, %v1271
        %v1383 = vpack.c.b16 %v1274, %v1273
        %v1384 = vpack.c.b16 %v1276, %v1275
        %v1385 = vpack.c.b16 %v1278, %v1277
        %v1386 = vpack.c.b16 %v1280, %v1279
        %v1387 = vpack.c.b16 %v1282, %v1281
        %v1388 = vpack.c.b16 %v1284, %v1283
        %v1389 = vpack.c.b16 %v1286, %v1285
        %v1390 = vpack.c.b16 %v1288, %v1287
        %v1391 = vpack.c.b16 %v1290, %v1289
        %v1392 = vpack.c.b16 %v1292, %v1291
        %v1393 = vpack.c.b16 %v1294, %v1293
        %v1394 = vpack.c.b16 %v1296, %v1295
        %v1395 = vpack.c.b16 %v1298, %v1297
        %v1396 = vpack.c.b16 %v1300, %v1299
        %v1397 = vpack.c.b16 %v1302, %v1301
        %v1398 = vpack.c.b16 %v1304, %v1303
        %v1399 = vpack.c.b16 %v1306, %v1305
        %v1400 = vpack.c.b16 %v1308, %v1307
        %v1401 = vpack.c.b16 %v1310, %v1309
        %v1402 = vpack.c.b16 %v1312, %v1311
        %v1403 = vpack.c.b16 %v1314, %v1313
        %v1404 = vpack.c.b16 %v1316, %v1315
        %v1405 = vpack.c.b16 %v1318, %v1317
        %v1406 = vpack.c.b16 %v1320, %v1319
        %v1407 = vpack.c.b16 %v1322, %v1321
        %v1408 = vpack.c.b16 %v1324, %v1323
        %v1409 = vpack.c.b16 %v1326, %v1325
        %v1410 = vpack.c.b16 %v1328, %v1327
        %v1411 = vpack.c.b16 %v1330, %v1329
        %v1412 = vpack.c.b16 %v1332, %v1331
        %v1413 = vpack.c.b16 %v1334, %v1333
        %v1414 = vpack.c.b16 %v1336, %v1335
        %v1415 = vpack.c.b16 %v1338, %v1337
        %v1416 = vpack.c.b16 %v1340, %v1339
        %v1417 = vpack.c.b16 %v1342, %v1341
        %v1418 = vpack.c.b16 %v1344, %v1343
        %v1419 = vpack.c.b16 %v1346, %v1345
        %v1420 = vpack.c.b16 %v1348, %v1347
        %1493 = vmatprep.subr.bf16.mxu0 0
        %1494 = vmatpush1.bf16.msra.mxu0 %v1349
        %1495 = vmatprep.subr.bf16.mxu0 0
        %1496 = vmatpush1.bf16.msra.mxu0 %v1350
        %1497 = vmatprep.subr.bf16.mxu0 0
        %1498 = vmatpush1.bf16.msra.mxu0 %v1351
        %1499 = vmatprep.subr.bf16.mxu0 0
        %1500 = vmatpush1.bf16.msra.mxu0 %v1352
        %1501 = vmatprep.subr.bf16.mxu0 0
        %1502 = vmatpush1.bf16.msra.mxu0 %v1353
        %1503 = vmatprep.subr.bf16.mxu0 0
        %1504 = vmatpush1.bf16.msra.mxu0 %v1354
        %1505 = vmatprep.subr.bf16.mxu0 0
        %1506 = vmatpush1.bf16.msra.mxu0 %v1355
        %1507 = vmatprep.subr.bf16.mxu0 0
        %1508 = vmatpush1.bf16.msra.mxu0 %v1356
        %1509 = vmatprep.subr.bf16.mxu0 0
        %1510 = vmatpush1.bf16.msra.mxu0 %v1357
        %1511 = vmatprep.subr.bf16.mxu0 0
        %1512 = vmatpush1.bf16.msra.mxu0 %v1358
        %1513 = vmatprep.subr.bf16.mxu0 0
        %1514 = vmatpush1.bf16.msra.mxu0 %v1359
        %1515 = vmatprep.subr.bf16.mxu0 0
        %1516 = vmatpush1.bf16.msra.mxu0 %v1360
        %1517 = vmatprep.subr.bf16.mxu0 0
        %1518 = vmatpush1.bf16.msra.mxu0 %v1361
        %1519 = vmatprep.subr.bf16.mxu0 0
        %1520 = vmatpush1.bf16.msra.mxu0 %v1362
        %1521 = vmatprep.subr.bf16.mxu0 0
        %1522 = vmatpush1.bf16.msra.mxu0 %v1363
        %1523 = vmatprep.subr.bf16.mxu0 0
        %1524 = vmatpush1.bf16.msra.mxu0 %v1364
        %1525 = vmatprep.mubr.bf16.mxu0 %v1026
        %1526 = vmatmul.mubr.bf16.gmra.mrb[0].mxu0 %v1012
        %v1527 = vpop.f32.mrb[0].mxu0
        %v1528 = vadd.f32 %v985, %v1527
        %v1529 = vpop.f32.mrb[0].mxu0
        %v1530 = vpop.f32.mrb[0].mxu0
        %v1531 = vpop.f32.mrb[0].mxu0
        %1532 = vdwg.mxu0
        %1533 = vmatprep.subr.bf16.mxu0 0
        %1534 = vmatpush1.bf16.msra.mxu0 %v1365
        %1535 = vmatprep.subr.bf16.mxu0 0
        %1536 = vmatpush1.bf16.msra.mxu0 %v1366
        %1537 = vmatprep.subr.bf16.mxu0 0
        %1538 = vmatpush1.bf16.msra.mxu0 %v1367
        %1539 = vmatprep.subr.bf16.mxu0 0
        %1540 = vmatpush1.bf16.msra.mxu0 %v1368
        %1541 = vmatprep.subr.bf16.mxu0 0
        %1542 = vmatpush1.bf16.msra.mxu0 %v1369
        %1543 = vmatprep.subr.bf16.mxu0 0
        %1544 = vmatpush1.bf16.msra.mxu0 %v1370
        %1545 = vmatprep.subr.bf16.mxu0 0
        %1546 = vmatpush1.bf16.msra.mxu0 %v1371
        %1547 = vmatprep.subr.bf16.mxu0 0
        %1548 = vmatpush1.bf16.msra.mxu0 %v1372
        %1549 = vmatprep.subr.bf16.mxu0 0
        %1550 = vmatpush1.bf16.msra.mxu0 %v1373
        %1551 = vmatprep.subr.bf16.mxu0 0
        %1552 = vmatpush1.bf16.msra.mxu0 %v1374
        %1553 = vmatprep.subr.bf16.mxu0 0
        %1554 = vmatpush1.bf16.msra.mxu0 %v1375
        %1555 = vmatprep.subr.bf16.mxu0 0
        %1556 = vmatpush1.bf16.msra.mxu0 %v1376
        %1557 = vmatprep.subr.bf16.mxu0 0
        %1558 = vmatpush1.bf16.msra.mxu0 %v1377
        %1559 = vmatprep.subr.bf16.mxu0 0
        %1560 = vmatpush1.bf16.msra.mxu0 %v1378
        %1561 = vmatprep.subr.bf16.mxu0 0
        %1562 = vmatpush1.bf16.msra.mxu0 %v1379
        %1563 = vmatprep.subr.bf16.mxu0 0
        %1564 = vmatpush1.bf16.msra.mxu0 %v1380
        %1565 = vmatprep.mubr.bf16.mxu0 %v1036
        %1566 = vmatmul.mubr.bf16.gmra.mrb[0].mxu0 %v1034
        %v1567 = vpop.f32.mrb[0].mxu0
        %v1568 = vadd.f32 %v1528, %v1567
        %v1569 = vpop.f32.mrb[0].mxu0
        %v1570 = vpop.f32.mrb[0].mxu0
        %v1571 = vpop.f32.mrb[0].mxu0
        %1572 = vdwg.mxu0
        %1573 = vmatprep.subr.bf16.mxu0 0
        %1574 = vmatpush1.bf16.msra.mxu0 %v1381
        %1575 = vmatprep.subr.bf16.mxu0 0
        %1576 = vmatpush1.bf16.msra.mxu0 %v1382
        %1577 = vmatprep.subr.bf16.mxu0 0
        %1578 = vmatpush1.bf16.msra.mxu0 %v1383
        %1579 = vmatprep.subr.bf16.mxu0 0
        %1580 = vmatpush1.bf16.msra.mxu0 %v1384
        %1581 = vmatprep.subr.bf16.mxu0 0
        %1582 = vmatpush1.bf16.msra.mxu0 %v1385
        %1583 = vmatprep.subr.bf16.mxu0 0
        %1584 = vmatpush1.bf16.msra.mxu0 %v1386
        %1585 = vmatprep.subr.bf16.mxu0 0
        %1586 = vmatpush1.bf16.msra.mxu0 %v1387
        %1587 = vmatprep.subr.bf16.mxu0 0
        %1588 = vmatpush1.bf16.msra.mxu0 %v1388
        %1589 = vmatprep.subr.bf16.mxu0 0
        %1590 = vmatpush1.bf16.msra.mxu0 %v1389
        %1591 = vmatprep.subr.bf16.mxu0 0
        %1592 = vmatpush1.bf16.msra.mxu0 %v1390
        %1593 = vmatprep.subr.bf16.mxu0 0
        %1594 = vmatpush1.bf16.msra.mxu0 %v1391
        %1595 = vmatprep.subr.bf16.mxu0 0
        %1596 = vmatpush1.bf16.msra.mxu0 %v1392
        %1597 = vmatprep.subr.bf16.mxu0 0
        %1598 = vmatpush1.bf16.msra.mxu0 %v1393
        %1599 = vmatprep.subr.bf16.mxu0 0
        %1600 = vmatpush1.bf16.msra.mxu0 %v1394
        %1601 = vmatprep.subr.bf16.mxu0 0
        %1602 = vmatpush1.bf16.msra.mxu0 %v1395
        %1603 = vmatprep.subr.bf16.mxu0 0
        %1604 = vmatpush1.bf16.msra.mxu0 %v1396
        %1605 = vmatprep.mubr.bf16.mxu0 %v1033
        %1606 = vmatmul.mubr.bf16.gmra.mrb[0].mxu0 %v1019
        %v1607 = vpop.f32.mrb[0].mxu0
        %v1608 = vadd.f32 %v1568, %v1607
        %v1609 = vpop.f32.mrb[0].mxu0
        %v1610 = vpop.f32.mrb[0].mxu0
        %v1611 = vpop.f32.mrb[0].mxu0
        %1612 = vdwg.mxu0
        %1613 = vmatprep.subr.bf16.mxu0 0
        %1614 = vmatpush1.bf16.msra.mxu0 %v1397
        %1615 = vmatprep.subr.bf16.mxu0 0
        %1616 = vmatpush1.bf16.msra.mxu0 %v1398
        %1617 = vmatprep.subr.bf16.mxu0 0
        %1618 = vmatpush1.bf16.msra.mxu0 %v1399
        %1619 = vmatprep.subr.bf16.mxu0 0
        %1620 = vmatpush1.bf16.msra.mxu0 %v1400
        %1621 = vmatprep.subr.bf16.mxu0 0
        %1622 = vmatpush1.bf16.msra.mxu0 %v1401
        %1623 = vmatprep.subr.bf16.mxu0 0
        %1624 = vmatpush1.bf16.msra.mxu0 %v1402
        %1625 = vmatprep.subr.bf16.mxu0 0
        %1626 = vmatpush1.bf16.msra.mxu0 %v1403
        %1627 = vmatprep.subr.bf16.mxu0 0
        %1628 = vmatpush1.bf16.msra.mxu0 %v1404
        %1629 = vmatprep.subr.bf16.mxu0 0
        %1630 = vmatpush1.bf16.msra.mxu0 %v1405
        %1631 = vmatprep.subr.bf16.mxu0 0
        %1632 = vmatpush1.bf16.msra.mxu0 %v1406
        %1633 = vmatprep.subr.bf16.mxu0 0
        %1634 = vmatpush1.bf16.msra.mxu0 %v1407
        %1635 = vmatprep.subr.bf16.mxu0 0
        %1636 = vmatpush1.bf16.msra.mxu0 %v1408
        %1637 = vmatprep.subr.bf16.mxu0 0
        %1638 = vmatpush1.bf16.msra.mxu0 %v1409
        %1639 = vmatprep.subr.bf16.mxu0 0
        %1640 = vmatpush1.bf16.msra.mxu0 %v1410
        %1641 = vmatprep.subr.bf16.mxu0 0
        %1642 = vmatpush1.bf16.msra.mxu0 %v1411
        %1643 = vmatprep.subr.bf16.mxu0 0
        %1644 = vmatpush1.bf16.msra.mxu0 %v1412
        %1645 = vmatprep.mubr.bf16.mxu0 %v1037
        %1646 = vmatmul.mubr.bf16.gmra.mrb[0].mxu0 %v1035
        %v1647 = vpop.f32.mrb[0].mxu0
        %v1648 = vadd.f32 %v1608, %v1647
        %v1649 = vpop.f32.mrb[0].mxu0
        %v1650 = vpop.f32.mrb[0].mxu0
        %v1651 = vpop.f32.mrb[0].mxu0
        %1652 = vdwg.mxu0
        %1653 = vmatprep.subr.bf16.mxu0 0
        %1654 = vmatpush1.bf16.msra.mxu0 %v1413
        %1655 = vmatprep.subr.bf16.mxu0 0
        %1656 = vmatpush1.bf16.msra.mxu0 %v1414
        %1657 = vmatprep.subr.bf16.mxu0 0
        %1658 = vmatpush1.bf16.msra.mxu0 %v1415
        %1659 = vmatprep.subr.bf16.mxu0 0
        %1660 = vmatpush1.bf16.msra.mxu0 %v1416
        %1661 = vmatprep.subr.bf16.mxu0 0
        %1662 = vmatpush1.bf16.msra.mxu0 %v1417
        %1663 = vmatprep.subr.bf16.mxu0 0
        %1664 = vmatpush1.bf16.msra.mxu0 %v1418
        %1665 = vmatprep.subr.bf16.mxu0 0
        %1666 = vmatpush1.bf16.msra.mxu0 %v1419
        %1667 = vmatprep.subr.bf16.mxu0 0
        %1668 = vmatpush1.bf16.msra.mxu0 %v1420
        %1669 = vmatprep.subr.bf16.mxu0 0
        %1670 = vmatpush1.bf16.msra.mxu0 0
        %1671 = vmatprep.subr.bf16.mxu0 0
        %1672 = vmatpush1.bf16.msra.mxu0 0
        %1673 = vmatprep.subr.bf16.mxu0 0
        %1674 = vmatpush1.bf16.msra.mxu0 0
        %1675 = vmatprep.subr.bf16.mxu0 0
        %1676 = vmatpush1.bf16.msra.mxu0 0
        %1677 = vmatprep.subr.bf16.mxu0 0
        %1678 = vmatpush1.bf16.msra.mxu0 0
        %1679 = vmatprep.subr.bf16.mxu0 0
        %1680 = vmatpush1.bf16.msra.mxu0 0
        %1681 = vmatprep.subr.bf16.mxu0 0
        %1682 = vmatpush1.bf16.msra.mxu0 0
        %1683 = vmatprep.subr.bf16.mxu0 0
        %1684 = vmatpush1.bf16.msra.mxu0 0
        %1685 = vmatprep.mubr.bf16.mxu0 0
        %1686 = vmatmul.mubr.bf16.gmra.mrb[0].mxu0 %v1051
        %v1687 = vpop.f32.mrb[0].mxu0
        %v1688 = vadd.f32 %v1648, %v1687
        %v1689 = vpop.f32.mrb[0].mxu0
        %v1690 = vpop.f32.mrb[0].mxu0
        %v1691 = vpop.f32.mrb[0].mxu0
        %1692 = vdwg.mxu0
        %v1693 = vmax.f32 %v1688, 0.0
        %v1694 = vpack.c.bf16 %v1693, %v1693
        %1695 = vst [vmem:[%s832] sm:$0x1] %v1694
        %p1696 = scmp.lt.s32.totalorder %s18, 0
        %s1697 = scalar_select %p1696, %s18, 0
        %p1698 = scmp.lt.s32.totalorder %s19, 1
        %s1699 = scalar_select %p1698, %s19, 1
        %s1700 = smul.addr %s1697, 2
        %s1701 = sadd.s32 %s1699, %s1700
        %s1702 = scalar_lea.vmem %s3, %s1701
        // Predicated region
        $region74: #{pose_cnn_forward.12} parent=68 // pred_check
          %p1703 = pneg %p124
        $region75: #{pose_cnn_forward.12} parent=68 // pred_check_branch
          %1705 = sbr.rel (%p1703) target = $region77
        $region76: #{pose_cnn_forward.12} parent=68 // pred_region
          _
        $region77: #{pose_cnn_forward.12} parent=68 // pred_fallthru
          _
      $region69: #{pose_cnn_forward.12} parent=5 // pred_fallthru
        _
      %p1706 = scmp.le.s32.totalorder 2, %s9
      // Predicated region
      $region78: #{pose_cnn_forward.12} parent=5 // pred_check
        %p1707 = pneg %p1706
      $region79: #{pose_cnn_forward.12} parent=5 // pred_check_branch
        %1709 = sbr.rel (%p1707) target = $region81
      $region80: #{pose_cnn_forward.12} parent=5 // pred_region
        %s1710 = ssub.s32 %s9, 2
        // Predicated region
        $region82: #{pose_cnn_forward.12} parent=80 // pred_check
          %p1711 = pneg %p130
        $region83: #{pose_cnn_forward.12} parent=80 // pred_check_branch
          %1713 = sbr.rel (%p1711) target = $region85
        $region84: #{pose_cnn_forward.12} parent=80 // pred_region
          %p1714 = scmp.lt.s32.totalorder %s20, 0
          %s1715 = scalar_select %p1714, %s20, 0
          %p1716 = scmp.lt.s32.totalorder %s21, 1
          %s1717 = scalar_select %p1716, %s21, 1
          %s1718 = smul.addr %s1715, 2
          %s1719 = sadd.s32 %s1717, %s1718
          %s1720 = scalar_lea.vmem %s3, %s1719
        $region85: #{pose_cnn_forward.12} parent=80 // pred_fallthru
          _
      $region81: #{pose_cnn_forward.12} parent=5 // pred_fallthru
        _
    $region6: #{pose_cnn_forward.12} parent=1 // loop_footer
      %s13 = sadd.s32 1, %s9
    $region7: #{pose_cnn_forward.12} parent=1 // loop_footer_branch
      %8 = sbr.rel target = $region3
    $region8: #{pose_cnn_forward.12} parent=1 // loop_exit
      _

// kernel: pose_cnn_forward.15
$region0: #{pose_cnn_forward.15}
  #allocation0 [shape = 'u32[]', space=smem, size = 0x4, offset = 0x4, fixed_abs, tag = 'smem constant byte address 0x4 - core index']
  #allocation1 [shape = 'u32[144,128]{1,0:T(1,128)}', space=vmem, size = 0x12000, scoped, tag = 'internal scratch']
  %s0 = inlined_call_operand.vmem [shape: bf16[2,1,256], index: 0, kind: input, shape index: {}]
  %s1 = inlined_call_operand.vmem [shape: f32[256,128], index: 1, kind: input, shape index: {}]
  %s2 = inlined_call_operand.vmem [shape: f32[1,128], index: 2, kind: input, shape index: {}]
  %s3 = inlined_call_operand.hbm [shape: f32[2,128], index: 3, kind: output, shape index: {}]
  %s4 = sld [smem:[#allocation0]]
  $region22: #{pose_cnn_forward.15} parent=0
    _
  %s6 = ssub.s32 1, %s4
  %s7 = scalar_select 0, %s6, %s4
  $region1: #{pose_cnn_forward.15} parent=0
    #allocation2 [shape = 'u8[1024]{0}', space=vmem, size = 0x400, scoped, tag = 'output window, operand 0, single buffered']
    #allocation3 [shape = 's32[1]{0}', space=sflag, size = 0x4, scoped, tag = 'scoped memory for pose_cnn_forward.15']
    %8 = vsyncpa [#allocation3], 0
    // Predicated region
    $region2: #{pose_cnn_forward.15} parent=1 // pred_check
      _
    $region3: #{pose_cnn_forward.15} parent=1 // pred_check_branch
      %10 = sbr.rel (0) target = $region5
    $region4: #{pose_cnn_forward.15} parent=1 // pred_region
      _
    $region5: #{pose_cnn_forward.15} parent=1 // pred_fallthru
      _
    // Predicated region
    $region6: #{pose_cnn_forward.15} parent=1 // pred_check
      _
    $region7: #{pose_cnn_forward.15} parent=1 // pred_check_branch
      %12 = sbr.rel (0) target = $region9
    $region8: #{pose_cnn_forward.15} parent=1 // pred_region
      _
    $region9: #{pose_cnn_forward.15} parent=1 // pred_fallthru
      _
    // Predicated region
    $region10: #{pose_cnn_forward.15} parent=1 // pred_check
      _
    $region11: #{pose_cnn_forward.15} parent=1 // pred_check_branch
      %14 = sbr.rel (0) target = $region13
    $region12: #{pose_cnn_forward.15} parent=1 // pred_region
      _
    $region13: #{pose_cnn_forward.15} parent=1 // pred_fallthru
      _
    %v15 = vld [vmem:[%s0] sm:$0x3]
    %v16 = vld [vmem:[%s0 + $0x2] sm:$0x3]
    %v17 = vunpack.c.l.bf16 %v15
    %v18 = vunpack.c.l.bf16 %v16
    %v19 = vadd.f32 %v17, 0.0
    %v20 = vadd.f32 %v18, 0.0
    %v21 = vld [vmem:[%s1] sm:$0xff]
    %v22 = vld [vmem:[%s1 + $0x8] sm:$0xff]
    %v23 = vld [vmem:[%s1 + $0x10] sm:$0xff]
    %v24 = vld [vmem:[%s1 + $0x18] sm:$0xff]
    %v25 = vld [vmem:[%s1 + $0x20] sm:$0xff]
    %v26 = vld [vmem:[%s1 + $0x28] sm:$0xff]
    %v27 = vld [vmem:[%s1 + $0x30] sm:$0xff]
    %v28 = vld [vmem:[%s1 + $0x38] sm:$0xff]
    %v29 = vld [vmem:[%s1 + $0x40] sm:$0xff]
    %v30 = vld [vmem:[%s1 + $0x48] sm:$0xff]
    %v31 = vld [vmem:[%s1 + $0x50] sm:$0xff]
    %v32 = vld [vmem:[%s1 + $0x58] sm:$0xff]
    %v33 = vld [vmem:[%s1 + $0x60] sm:$0xff]
    %v34 = vld [vmem:[%s1 + $0x68] sm:$0xff]
    %v35 = vld [vmem:[%s1 + $0x70] sm:$0xff]
    %v36 = vld [vmem:[%s1 + $0x78] sm:$0xff]
    %v37 = vld [vmem:[%s1 + $0x80] sm:$0xff]
    %v38 = vld [vmem:[%s1 + $0x88] sm:$0xff]
    %v39 = vld [vmem:[%s1 + $0x90] sm:$0xff]
    %v40 = vld [vmem:[%s1 + $0x98] sm:$0xff]
    %v41 = vld [vmem:[%s1 + $0xa0] sm:$0xff]
    %v42 = vld [vmem:[%s1 + $0xa8] sm:$0xff]
    %v43 = vld [vmem:[%s1 + $0xb0] sm:$0xff]
    %v44 = vld [vmem:[%s1 + $0xb8] sm:$0xff]
    %v45 = vld [vmem:[%s1 + $0xc0] sm:$0xff]
    %v46 = vld [vmem:[%s1 + $0xc8] sm:$0xff]
    %v47 = vld [vmem:[%s1 + $0xd0] sm:$0xff]
    %v48 = vld [vmem:[%s1 + $0xd8] sm:$0xff]
    %v49 = vld [vmem:[%s1 + $0xe0] sm:$0xff]
    %v50 = vld [vmem:[%s1 + $0xe8] sm:$0xff]
    %v51 = vld [vmem:[%s1 + $0xf0] sm:$0xff]
    %v52 = vld [vmem:[%s1 + $0xf8] sm:$0xff]
    %v53 = vld [vmem:[%s2] sm:$0x1]
    %v55 = vlaneseq
    %v56 = vshrl.u32 %v55, 7
    %v57 = vsub.s32 0, %v56
    %v58 = vrot.slane %v53, %v57
    %v62 = vlaneseq
    %v63 = vshrl.u32 %v62, 7
    %v64 = vsub.s32 0, %v63
    %v65 = vrot.slane %v19, %v64
    %v66 = vlaneseq
    %v67 = vshrl.u32 %v66, 7
    %v68 = vsub.s32 2, %v67
    %v69 = vrot.slane %v19, %v68
    %v70 = vlaneseq
    %v71 = vshrl.u32 %v70, 7
    %v72 = vsub.s32 0, %v71
    %v73 = vrot.slane %v20, %v72
    %v74 = vlaneseq
    %v75 = vshrl.u32 %v74, 7
    %v76 = vsub.s32 2, %v75
    %v77 = vrot.slane %v20, %v76
    %vm78 = vcmask 1041409
    %v79 = vsel %vm78, %v73, %v65
    %v80 = vsel %vm78, %v77, %v69
    %83 = vmatprep.subr.mxu0 0.0
    %84 = vmatpush1.msra.mxu0 %v21
    %85 = vmatprep.subr.mxu0 0.0
    %86 = vmatpush1.msra.mxu0 %v22
    %87 = vmatprep.subr.mxu0 0.0
    %88 = vmatpush1.msra.mxu0 %v23
    %89 = vmatprep.subr.mxu0 0.0
    %90 = vmatpush1.msra.mxu0 %v24
    %91 = vmatprep.subr.mxu0 0.0
    %92 = vmatpush1.msra.mxu0 %v25
    %93 = vmatprep.subr.mxu0 0.0
    %94 = vmatpush1.msra.mxu0 %v26
    %95 = vmatprep.subr.mxu0 0.0
    %96 = vmatpush1.msra.mxu0 %v27
    %97 = vmatprep.subr.mxu0 0.0
    %98 = vmatpush1.msra.mxu0 %v28
    %99 = vmatprep.subr.mxu0 0.0
    %100 = vmatpush1.msra.mxu0 %v29
    %101 = vmatprep.subr.mxu0 0.0
    %102 = vmatpush1.msra.mxu0 %v30
    %103 = vmatprep.subr.mxu0 0.0
    %104 = vmatpush1.msra.mxu0 %v31
    %105 = vmatprep.subr.mxu0 0.0
    %106 = vmatpush1.msra.mxu0 %v32
    %107 = vmatprep.subr.mxu0 0.0
    %108 = vmatpush1.msra.mxu0 %v33
    %109 = vmatprep.subr.mxu0 0.0
    %110 = vmatpush1.msra.mxu0 %v34
    %111 = vmatprep.subr.mxu0 0.0
    %112 = vmatpush1.msra.mxu0 %v35
    %113 = vmatprep.subr.mxu0 0.0
    %114 = vmatpush1.msra.mxu0 %v36
    %115 = vmatprep.subr.mxu0 0.0
    %116 = vmatpush1.msra.mxu0 %v37
    %117 = vmatprep.subr.mxu0 0.0
    %118 = vmatpush1.msra.mxu0 %v38
    %119 = vmatprep.subr.mxu0 0.0
    %120 = vmatpush1.msra.mxu0 %v39
    %121 = vmatprep.subr.mxu0 0.0
    %122 = vmatpush1.msra.mxu0 %v40
    %123 = vmatprep.subr.mxu0 0.0
    %124 = vmatpush1.msra.mxu0 %v41
    %125 = vmatprep.subr.mxu0 0.0
    %126 = vmatpush1.msra.mxu0 %v42
    %127 = vmatprep.subr.mxu0 0.0
    %128 = vmatpush1.msra.mxu0 %v43
    %129 = vmatprep.subr.mxu0 0.0
    %130 = vmatpush1.msra.mxu0 %v44
    %131 = vmatprep.subr.mxu0 0.0
    %132 = vmatpush1.msra.mxu0 %v45
    %133 = vmatprep.subr.mxu0 0.0
    %134 = vmatpush1.msra.mxu0 %v46
    %135 = vmatprep.subr.mxu0 0.0
    %136 = vmatpush1.msra.mxu0 %v47
    %137 = vmatprep.subr.mxu0 0.0
    %138 = vmatpush1.msra.mxu0 %v48
    %139 = vmatprep.subr.mxu0 0.0
    %140 = vmatpush1.msra.mxu0 %v49
    %141 = vmatprep.subr.mxu0 0.0
    %142 = vmatpush1.msra.mxu0 %v50
    %143 = vmatprep.subr.mxu0 0.0
    %144 = vmatpush1.msra.mxu0 %v51
    %145 = vmatprep.subr.mxu0 0.0
    %146 = vmatpush1.msra.mxu0 %v52
    %147 = vmatprep.mubr.f32.mxu0 %v80
    %148 = vmatmul.mubr.f32.gmra.mrb[0].mxu0 %v79
    %v149 = vpop.f32.mrb[0].mxu0
    %v150 = vadd.f32 %v58, %v149
    %v151 = vpop.f32.mrb[0].mxu0
    %152 = vdwg.mxu0
    %v153 = vmul.f32 %v150, 0.01
    %154 = vst [vmem:[#allocation2] sm:$0x3] %v153
    // Predicated region
    $region14: #{pose_cnn_forward.15} parent=1 // pred_check
      _
    $region15: #{pose_cnn_forward.15} parent=1 // pred_check_branch
      %156 = sbr.rel (0) target = $region17
    $region16: #{pose_cnn_forward.15} parent=1 // pred_region
      %s158 = ssub.s32 32, 32
      %159 = vsyncadd [#allocation3], %s158
      %s161 = sshll.u32 [#allocation2], 4
      %s162 = int_to_ptr.vmem [resolvable:$true] %s161
      %164 = dma.vmem_to_hbm [thread:$0]  %s162, 32, %s3, [#allocation3]
    $region17: #{pose_cnn_forward.15} parent=1 // pred_fallthru
      _
    // Predicated region
    $region18: #{pose_cnn_forward.15} parent=1 // pred_check
      _
    $region19: #{pose_cnn_forward.15} parent=1 // pred_check_branch
      %166 = sbr.rel (0) target = $region21
    $region20: #{pose_cnn_forward.15} parent=1 // pred_region
      %167 = dma.done [#allocation3], 32
    $region21: #{pose_cnn_forward.15} parent=1 // pred_fallthru
      _
    %168 = vsyncpa [#allocation3], 1

// kernel: pose_cnn_forward.13
$region0: #{pose_cnn_forward.13}
  #allocation0 [shape = 'u32[]', space=smem, size = 0x4, offset = 0x4, fixed_abs, tag = 'smem constant byte address 0x4 - core index']
  #allocation1 [shape = 'u32[144,128]{1,0:T(1,128)}', space=vmem, size = 0x12000, scoped, tag = 'internal scratch']
  %s0 = inlined_call_operand.vmem [shape: bf16[2,2304], index: 0, kind: input, shape index: {}]
  %s1 = inlined_call_operand.vmem [shape: bf16[2304,256], index: 1, kind: input, shape index: {}]
  %s2 = inlined_call_operand.vmem [shape: f32[1,256], index: 2, kind: input, shape index: {}]
  %s3 = inlined_call_operand.vmem [shape: bf16[2,256], index: 3, kind: output, shape index: {}]
  %s4 = sld [smem:[#allocation0]]
  $region86: #{pose_cnn_forward.13} parent=0
    _
  %s6 = ssub.s32 1, %s4
  %s7 = scalar_select 0, %s6, %s4
  $region1: #{pose_cnn_forward.13} parent=0
    #allocation2 [shape = 'u8[1179648]{0}', space=vmem, size = 0x120000, scoped, tag = 'input window, operand 1']
    loop: start=0, step=1, limit=4
    $region2: #{pose_cnn_forward.13} parent=1 // loop_pre_header
      _
    $region3: #{pose_cnn_forward.13} parent=1 // loop_header
      %s9 = sphi 0, %s13
      %p10 = scmp.ge.s32.totalorder %s9, 4
      %s16 = sphi 0, %s28
      %s17 = sphi 0, %s24
      %s18 = sphi 0, %s16
      %s19 = sphi 0, %s17
      %s20 = sphi 0, %s18
      %s21 = sphi 0, %s19
      %s31 = sphi 0, %s33
      %s34 = sphi 0, %s31
      %s35 = sphi 0, %s34
      %s51 = sphi 0, %s35
      %s57 = sphi 0, %s59
      %s60 = sphi 0, %s57
      %s61 = sphi 0, %s60
      %s77 = sphi 0, %s61
      %s83 = sphi 0, %s85
      %s86 = sphi 0, %s83
      %s87 = sphi 0, %s86
      %s103 = sphi 0, %s87
      %s111 = sphi 0, %s113
      %s114 = sphi 0, %s111
      %s115 = sphi 0, %s114
      %s131 = sphi 0, %s115
    $region4: #{pose_cnn_forward.13} parent=1 // loop_header_branch
      %12 = sbr.rel (%p10) target = $region8
    $region5: #{pose_cnn_forward.13} parent=1 // loop_body
      %s14 = ssub.s32 %s9, 1
      %s15 = ssub.s32 %s9, 2
      %s22 = sadd.s32 1, %s17
      %p23 = scmp.ge.s32.totalorder %s22, 2
      %s24 = scalar_select %p23, 0, %s22
      %s25 = sadd.s32 1, %s16
      %s26 = scalar_select %p23, %s25, %s16
      %p27 = scmp.ge.s32.totalorder %s26, 1
      %s28 = scalar_select %p27, 0, %s26
      %s29 = ssub.s32 %s16, %s28
      %p30 = scmp.eq.s32.totalorder %s29, 0
      %s32 = sadd.s32 %s31, 1
      %s33 = scalar_select %p30, %s31, %s32
      %p36 = pneg %p30
      %p37 = scmp.eq.s32.totalorder %s9, 1
      %p38 = por %p36, %p37
      %p39 = scmp.ne.s32.totalorder %s31, %s34
      %p40 = scmp.eq.s32.totalorder %s9, 0
      %p41 = por %p39, %p40
      %p42 = scmp.ne.s32.totalorder %s31, %s34
      %p43 = scmp.eq.s32.totalorder %s14, 1
      %p44 = por %p42, %p43
      %p45 = scmp.ne.s32.totalorder %s34, %s35
      %p46 = scmp.eq.s32.totalorder %s14, 0
      %p47 = por %p45, %p46
      %p48 = scmp.ne.s32.totalorder %s34, %s35
      %p49 = scmp.eq.s32.totalorder %s15, 1
      %p50 = por %p48, %p49
      %p52 = scmp.ne.s32.totalorder %s35, %s51
      %p53 = scmp.eq.s32.totalorder %s15, 0
      %p54 = por %p52, %p53
      %s55 = ssub.s32 %s17, %s24
      %p56 = scmp.eq.s32.totalorder %s55, 0
      %s58 = sadd.s32 %s57, 1
      %s59 = scalar_select %p56, %s57, %s58
      %p62 = pneg %p56
      %p63 = scmp.eq.s32.totalorder %s9, 1
      %p64 = por %p62, %p63
      %p65 = scmp.ne.s32.totalorder %s57, %s60
      %p66 = scmp.eq.s32.totalorder %s9, 0
      %p67 = por %p65, %p66
      %p68 = scmp.ne.s32.totalorder %s57, %s60
      %p69 = scmp.eq.s32.totalorder %s14, 1
      %p70 = por %p68, %p69
      %p71 = scmp.ne.s32.totalorder %s60, %s61
      %p72 = scmp.eq.s32.totalorder %s14, 0
      %p73 = por %p71, %p72
      %p74 = scmp.ne.s32.totalorder %s60, %s61
      %p75 = scmp.eq.s32.totalorder %s15, 1
      %p76 = por %p74, %p75
      %p78 = scmp.ne.s32.totalorder %s61, %s77
      %p79 = scmp.eq.s32.totalorder %s15, 0
      %p80 = por %p78, %p79
      %s81 = ssub.s32 %s17, %s24
      %p82 = scmp.eq.s32.totalorder %s81, 0
      %s84 = sadd.s32 %s83, 1
      %s85 = scalar_select %p82, %s83, %s84
      %p88 = pneg %p82
      %p89 = scmp.eq.s32.totalorder %s9, 1
      %p90 = por %p88, %p89
      %p91 = scmp.ne.s32.totalorder %s83, %s86
      %p92 = scmp.eq.s32.totalorder %s9, 0
      %p93 = por %p91, %p92
      %p94 = scmp.ne.s32.totalorder %s83, %s86
      %p95 = scmp.eq.s32.totalorder %s14, 1
      %p96 = por %p94, %p95
      %p97 = scmp.ne.s32.totalorder %s86, %s87
      %p98 = scmp.eq.s32.totalorder %s14, 0
      %p99 = por %p97, %p98
      %p100 = scmp.ne.s32.totalorder %s86, %s87
      %p101 = scmp.eq.s32.totalorder %s15, 1
      %p102 = por %p100, %p101
      %p104 = scmp.ne.s32.totalorder %s87, %s103
      %p105 = scmp.eq.s32.totalorder %s15, 0
      %p106 = por %p104, %p105
      %s107 = ssub.s32 %s16, %s28
      %s108 = ssub.s32 %s17, %s24
      %s109 = sor.u32 %s107, %s108
      %p110 = scmp.eq.s32.totalorder %s109, 0
      %s112 = sadd.s32 %s111, 1
      %s113 = scalar_select %p110, %s111, %s112
      %p116 = pneg %p110
      %p117 = scmp.eq.s32.totalorder %s9, 1
      %p118 = por %p116, %p117
      %p119 = scmp.ne.s32.totalorder %s111, %s114
      %p120 = scmp.eq.s32.totalorder %s9, 0
      %p121 = por %p119, %p120
      %p122 = scmp.ne.s32.totalorder %s111, %s114
      %p123 = scmp.eq.s32.totalorder %s14, 1
      %p124 = por %p122, %p123
      %p125 = scmp.ne.s32.totalorder %s114, %s115
      %p126 = scmp.eq.s32.totalorder %s14, 0
      %p127 = por %p125, %p126
      %p128 = scmp.ne.s32.totalorder %s114, %s115
      %p129 = scmp.eq.s32.totalorder %s15, 1
      %p130 = por %p128, %p129
      %p132 = scmp.ne.s32.totalorder %s115, %s131
      %p133 = scmp.eq.s32.totalorder %s15, 0
      %p134 = por %p132, %p133
      %p135 = scmp.le.s32.totalorder 1, %s9
      %p136 = scmp.lt.s32.totalorder %s9, 3
      %p137 = pnand %p135, %p136
      %p138 = pneg %p137
      // Predicated region
      $region9: #{pose_cnn_forward.13} parent=5 // pred_check
        _
      $region10: #{pose_cnn_forward.13} parent=5 // pred_check_branch
        %140 = sbr.rel (%p137) target = $region12
      $region11: #{pose_cnn_forward.13} parent=5 // pred_region
        %s141 = ssub.s32 %s9, 1
        // Predicated region
        $region13: #{pose_cnn_forward.13} parent=11 // pred_check
          %p142 = pneg %p47
        $region14: #{pose_cnn_forward.13} parent=11 // pred_check_branch
          %144 = sbr.rel (%p142) target = $region16
        $region15: #{pose_cnn_forward.13} parent=11 // pred_region
          %p145 = scmp.lt.s32.totalorder %s18, 0
          %s146 = scalar_select %p145, %s18, 0
          %s147 = smul.addr %s146, 18
          %s148 = scalar_lea.vmem %s0, %s147
        $region16: #{pose_cnn_forward.13} parent=11 // pred_fallthru
          _
      $region12: #{pose_cnn_forward.13} parent=5 // pred_fallthru
        _
      %p149 = scmp.lt.s32.totalorder %s9, 2
      // Predicated region
      $region17: #{pose_cnn_forward.13} parent=5 // pred_check
        %p150 = pneg %p149
      $region18: #{pose_cnn_forward.13} parent=5 // pred_check_branch
        %152 = sbr.rel (%p150) target = $region20
      $region19: #{pose_cnn_forward.13} parent=5 // pred_region
        // Predicated region
        $region21: #{pose_cnn_forward.13} parent=19 // pred_check
          %p153 = pneg %p67
        $region22: #{pose_cnn_forward.13} parent=19 // pred_check_branch
          %155 = sbr.rel (%p153) target = $region24
        $region23: #{pose_cnn_forward.13} parent=19 // pred_region
          %s156 = sand.u32 %s57, 1
          %s157 = sand.u32 %s57, 1
          %s158 = smul.addr %s157, 1152
          %s159 = scalar_lea.vmem [#allocation2], %s158
          %s160 = smul.addr %s17, 4
          %s161 = scalar_lea.vmem %s1, %s160
          // Predicated region
          $region25: #{pose_cnn_forward.13} parent=23 // pred_check
            _
          $region26: #{pose_cnn_forward.13} parent=23 // pred_check_branch
            %163 = sbr.rel (0) target = $region28
          $region27: #{pose_cnn_forward.13} parent=23 // pred_region
            // Predicated region
            $region29: #{pose_cnn_forward.13} parent=27 // pred_check
              _
            $region30: #{pose_cnn_forward.13} parent=27 // pred_check_branch
              %165 = sbr.rel target = $region32
            $region31: #{pose_cnn_forward.13} parent=27 // pred_region
              // Predicated region
              $region44: #{pose_cnn_forward.13} parent=31 // pred_check
                _
              $region45: #{pose_cnn_forward.13} parent=31 // pred_check_branch
                %754 = sbr.rel (0) target = $region47
              $region46: #{pose_cnn_forward.13} parent=31 // pred_region
                loop: start=0, step=1, limit=1
                $region48: #{pose_cnn_forward.13} parent=46 // loop_pre_header
                  _
                $region49: #{pose_cnn_forward.13} parent=46 // loop_header
                  %s756 = sphi 0, %s760
                  %p757 = scmp.ge.s32.totalorder %s756, 1
                  %s761 = sphi %s161, %s161
                  %s762 = sphi %s159, %s159
                $region50: #{pose_cnn_forward.13} parent=46 // loop_header_branch
                  %759 = sbr.rel (%p757) target = $region54
                $region51: #{pose_cnn_forward.13} parent=46 // loop_body
                  _
                $region52: #{pose_cnn_forward.13} parent=46 // loop_footer
                  %s760 = sadd.s32 1, %s756
                $region53: #{pose_cnn_forward.13} parent=46 // loop_footer_branch
                  %755 = sbr.rel target = $region49
                $region54: #{pose_cnn_forward.13} parent=46 // loop_exit
                  _
                loop: start=0, step=1, limit=1
                $region55: #{pose_cnn_forward.13} parent=46 // loop_pre_header
                  _
                $region56: #{pose_cnn_forward.13} parent=46 // loop_header
                  %s765 = sphi 0, %s769
                  %p766 = scmp.ge.s32.totalorder %s765, 1
                  %s770 = sphi %s161, %s161
                  %s771 = sphi %s159, %s159
                $region57: #{pose_cnn_forward.13} parent=46 // loop_header_branch
                  %768 = sbr.rel (%p766) target = $region61
                $region58: #{pose_cnn_forward.13} parent=46 // loop_body
                  %v772 = vld [vmem:[%s770] sm:$0xf]
                  %773 = vst [vmem:[%s771] sm:$0xf] %v772
                  %v774 = vld [vmem:[%s770 + $0x8] sm:$0xf]
                  %775 = vst [vmem:[%s771 + $0x4] sm:$0xf] %v774
                  %v776 = vld [vmem:[%s770 + $0x10] sm:$0xf]
                  %777 = vst [vmem:[%s771 + $0x8] sm:$0xf] %v776
                  %v778 = vld [vmem:[%s770 + $0x18] sm:$0xf]
                  %779 = vst [vmem:[%s771 + $0xc] sm:$0xf] %v778
                  %v780 = vld [vmem:[%s770 + $0x20] sm:$0xf]
                  %781 = vst [vmem:[%s771 + $0x10] sm:$0xf] %v780
                  %v782 = vld [vmem:[%s770 + $0x28] sm:$0xf]
                  %783 = vst [vmem:[%s771 + $0x14] sm:$0xf] %v782
                  %v784 = vld [vmem:[%s770 + $0x30] sm:$0xf]
                  %785 = vst [vmem:[%s771 + $0x18] sm:$0xf] %v784
                  %v786 = vld [vmem:[%s770 + $0x38] sm:$0xf]
                  %787 = vst [vmem:[%s771 + $0x1c] sm:$0xf] %v786
                  %v788 = vld [vmem:[%s770 + $0x40] sm:$0xf]
                  %789 = vst [vmem:[%s771 + $0x20] sm:$0xf] %v788
                  %v790 = vld [vmem:[%s770 + $0x48] sm:$0xf]
                  %791 = vst [vmem:[%s771 + $0x24] sm:$0xf] %v790
                  %v792 = vld [vmem:[%s770 + $0x50] sm:$0xf]
                  %793 = vst [vmem:[%s771 + $0x28] sm:$0xf] %v792
                  %v794 = vld [vmem:[%s770 + $0x58] sm:$0xf]
                  %795 = vst [vmem:[%s771 + $0x2c] sm:$0xf] %v794
                  %v796 = vld [vmem:[%s770 + $0x60] sm:$0xf]
                  %797 = vst [vmem:[%s771 + $0x30] sm:$0xf] %v796
                  %v798 = vld [vmem:[%s770 + $0x68] sm:$0xf]
                  %799 = vst [vmem:[%s771 + $0x34] sm:$0xf] %v798
                  %v800 = vld [vmem:[%s770 + $0x70] sm:$0xf]
                  %801 = vst [vmem:[%s771 + $0x38] sm:$0xf] %v800
                  %v802 = vld [vmem:[%s770 + $0x78] sm:$0xf]
                  %803 = vst [vmem:[%s771 + $0x3c] sm:$0xf] %v802
                  %v804 = vld [vmem:[%s770 + $0x80] sm:$0xf]
                  %805 = vst [vmem:[%s771 + $0x40] sm:$0xf] %v804
                  %v806 = vld [vmem:[%s770 + $0x88] sm:$0xf]
                  %807 = vst [vmem:[%s771 + $0x44] sm:$0xf] %v806
                  %v808 = vld [vmem:[%s770 + $0x90] sm:$0xf]
                  %809 = vst [vmem:[%s771 + $0x48] sm:$0xf] %v808
                  %v810 = vld [vmem:[%s770 + $0x98] sm:$0xf]
                  %811 = vst [vmem:[%s771 + $0x4c] sm:$0xf] %v810
                  %v812 = vld [vmem:[%s770 + $0xa0] sm:$0xf]
                  %813 = vst [vmem:[%s771 + $0x50] sm:$0xf] %v812
                  %v814 = vld [vmem:[%s770 + $0xa8] sm:$0xf]
                  %815 = vst [vmem:[%s771 + $0x54] sm:$0xf] %v814
                  %v816 = vld [vmem:[%s770 + $0xb0] sm:$0xf]
                  %817 = vst [vmem:[%s771 + $0x58] sm:$0xf] %v816
                  %v818 = vld [vmem:[%s770 + $0xb8] sm:$0xf]
                  %819 = vst [vmem:[%s771 + $0x5c] sm:$0xf] %v818
                  %v820 = vld [vmem:[%s770 + $0xc0] sm:$0xf]
                  %821 = vst [vmem:[%s771 + $0x60] sm:$0xf] %v820
                  %v822 = vld [vmem:[%s770 + $0xc8] sm:$0xf]
                  %823 = vst [vmem:[%s771 + $0x64] sm:$0xf] %v822
                  %v824 = vld [vmem:[%s770 + $0xd0] sm:$0xf]
                  %825 = vst [vmem:[%s771 + $0x68] sm:$0xf] %v824
                  %v826 = vld [vmem:[%s770 + $0xd8] sm:$0xf]
                  %827 = vst [vmem:[%s771 + $0x6c] sm:$0xf] %v826
                  %v828 = vld [vmem:[%s770 + $0xe0] sm:$0xf]
                  %829 = vst [vmem:[%s771 + $0x70] sm:$0xf] %v828
                  %v830 = vld [vmem:[%s770 + $0xe8] sm:$0xf]
                  %831 = vst [vmem:[%s771 + $0x74] sm:$0xf] %v830
                  %v832 = vld [vmem:[%s770 + $0xf0] sm:$0xf]
                  %833 = vst [vmem:[%s771 + $0x78] sm:$0xf] %v832
                  %v834 = vld [vmem:[%s770 + $0xf8] sm:$0xf]
                  %835 = vst [vmem:[%s771 + $0x7c] sm:$0xf] %v834
                  %v836 = vld [vmem:[%s770 + $0x100] sm:$0xf]
                  %837 = vst [vmem:[%s771 + $0x80] sm:$0xf] %v836
                  %v838 = vld [vmem:[%s770 + $0x108] sm:$0xf]
                  %839 = vst [vmem:[%s771 + $0x84] sm:$0xf] %v838
                  %v840 = vld [vmem:[%s770 + $0x110] sm:$0xf]
                  %841 = vst [vmem:[%s771 + $0x88] sm:$0xf] %v840
                  %v842 = vld [vmem:[%s770 + $0x118] sm:$0xf]
                  %843 = vst [vmem:[%s771 + $0x8c] sm:$0xf] %v842
                  %v844 = vld [vmem:[%s770 + $0x120] sm:$0xf]
                  %845 = vst [vmem:[%s771 + $0x90] sm:$0xf] %v844
                  %v846 = vld [vmem:[%s770 + $0x128] sm:$0xf]
                  %847 = vst [vmem:[%s771 + $0x94] sm:$0xf] %v846
                  %v848 = vld [vmem:[%s770 + $0x130] sm:$0xf]
                  %849 = vst [vmem:[%s771 + $0x98] sm:$0xf] %v848
                  %v850 = vld [vmem:[%s770 + $0x138] sm:$0xf]
                  %851 = vst [vmem:[%s771 + $0x9c] sm:$0xf] %v850
                  %v852 = vld [vmem:[%s770 + $0x140] sm:$0xf]
                  %853 = vst [vmem:[%s771 + $0xa0] sm:$0xf] %v852
                  %v854 = vld [vmem:[%s770 + $0x148] sm:$0xf]
                  %855 = vst [vmem:[%s771 + $0xa4] sm:$0xf] %v854
                  %v856 = vld [vmem:[%s770 + $0x150] sm:$0xf]
                  %857 = vst [vmem:[%s771 + $0xa8] sm:$0xf] %v856
                  %v858 = vld [vmem:[%s770 + $0x158] sm:$0xf]
                  %859 = vst [vmem:[%s771 + $0xac] sm:$0xf] %v858
                  %v860 = vld [vmem:[%s770 + $0x160] sm:$0xf]
                  %861 = vst [vmem:[%s771 + $0xb0] sm:$0xf] %v860
                  %v862 = vld [vmem:[%s770 + $0x168] sm:$0xf]
                  %863 = vst [vmem:[%s771 + $0xb4] sm:$0xf] %v862
                  %v864 = vld [vmem:[%s770 + $0x170] sm:$0xf]
                  %865 = vst [vmem:[%s771 + $0xb8] sm:$0xf] %v864
                  %v866 = vld [vmem:[%s770 + $0x178] sm:$0xf]
                  %867 = vst [vmem:[%s771 + $0xbc] sm:$0xf] %v866
                  %v868 = vld [vmem:[%s770 + $0x180] sm:$0xf]
                  %869 = vst [vmem:[%s771 + $0xc0] sm:$0xf] %v868
                  %v870 = vld [vmem:[%s770 + $0x188] sm:$0xf]
                  %871 = vst [vmem:[%s771 + $0xc4] sm:$0xf] %v870
                  %v872 = vld [vmem:[%s770 + $0x190] sm:$0xf]
                  %873 = vst [vmem:[%s771 + $0xc8] sm:$0xf] %v872
                  %v874 = vld [vmem:[%s770 + $0x198] sm:$0xf]
                  %875 = vst [vmem:[%s771 + $0xcc] sm:$0xf] %v874
                  %v876 = vld [vmem:[%s770 + $0x1a0] sm:$0xf]
                  %877 = vst [vmem:[%s771 + $0xd0] sm:$0xf] %v876
                  %v878 = vld [vmem:[%s770 + $0x1a8] sm:$0xf]
                  %879 = vst [vmem:[%s771 + $0xd4] sm:$0xf] %v878
                  %v880 = vld [vmem:[%s770 + $0x1b0] sm:$0xf]
                  %881 = vst [vmem:[%s771 + $0xd8] sm:$0xf] %v880
                  %v882 = vld [vmem:[%s770 + $0x1b8] sm:$0xf]
                  %883 = vst [vmem:[%s771 + $0xdc] sm:$0xf] %v882
                  %v884 = vld [vmem:[%s770 + $0x1c0] sm:$0xf]
                  %885 = vst [vmem:[%s771 + $0xe0] sm:$0xf] %v884
                  %v886 = vld [vmem:[%s770 + $0x1c8] sm:$0xf]
                  %887 = vst [vmem:[%s771 + $0xe4] sm:$0xf] %v886
                  %v888 = vld [vmem:[%s770 + $0x1d0] sm:$0xf]
                  %889 = vst [vmem:[%s771 + $0xe8] sm:$0xf] %v888
                  %v890 = vld [vmem:[%s770 + $0x1d8] sm:$0xf]
                  %891 = vst [vmem:[%s771 + $0xec] sm:$0xf] %v890
                  %v892 = vld [vmem:[%s770 + $0x1e0] sm:$0xf]
                  %893 = vst [vmem:[%s771 + $0xf0] sm:$0xf] %v892
                  %v894 = vld [vmem:[%s770 + $0x1e8] sm:$0xf]
                  %895 = vst [vmem:[%s771 + $0xf4] sm:$0xf] %v894
                  %v896 = vld [vmem:[%s770 + $0x1f0] sm:$0xf]
                  %897 = vst [vmem:[%s771 + $0xf8] sm:$0xf] %v896
                  %v898 = vld [vmem:[%s770 + $0x1f8] sm:$0xf]
                  %899 = vst [vmem:[%s771 + $0xfc] sm:$0xf] %v898
                  %v900 = vld [vmem:[%s770 + $0x200] sm:$0xf]
                  %901 = vst [vmem:[%s771 + $0x100] sm:$0xf] %v900
                  %v902 = vld [vmem:[%s770 + $0x208] sm:$0xf]
                  %903 = vst [vmem:[%s771 + $0x104] sm:$0xf] %v902
                  %v904 = vld [vmem:[%s770 + $0x210] sm:$0xf]
                  %905 = vst [vmem:[%s771 + $0x108] sm:$0xf] %v904
                  %v906 = vld [vmem:[%s770 + $0x218] sm:$0xf]
                  %907 = vst [vmem:[%s771 + $0x10c] sm:$0xf] %v906
                  %v908 = vld [vmem:[%s770 + $0x220] sm:$0xf]
                  %909 = vst [vmem:[%s771 + $0x110] sm:$0xf] %v908
                  %v910 = vld [vmem:[%s770 + $0x228] sm:$0xf]
                  %911 = vst [vmem:[%s771 + $0x114] sm:$0xf] %v910
                  %v912 = vld [vmem:[%s770 + $0x230] sm:$0xf]
                  %913 = vst [vmem:[%s771 + $0x118] sm:$0xf] %v912
                  %v914 = vld [vmem:[%s770 + $0x238] sm:$0xf]
                  %915 = vst [vmem:[%s771 + $0x11c] sm:$0xf] %v914
                  %v916 = vld [vmem:[%s770 + $0x240] sm:$0xf]
                  %917 = vst [vmem:[%s771 + $0x120] sm:$0xf] %v916
                  %v918 = vld [vmem:[%s770 + $0x248] sm:$0xf]
                  %919 = vst [vmem:[%s771 + $0x124] sm:$0xf] %v918
                  %v920 = vld [vmem:[%s770 + $0x250] sm:$0xf]
                  %921 = vst [vmem:[%s771 + $0x128] sm:$0xf] %v920
                  %v922 = vld [vmem:[%s770 + $0x258] sm:$0xf]
                  %923 = vst [vmem:[%s771 + $0x12c] sm:$0xf] %v922
                  %v924 = vld [vmem:[%s770 + $0x260] sm:$0xf]
                  %925 = vst [vmem:[%s771 + $0x130] sm:$0xf] %v924
                  %v926 = vld [vmem:[%s770 + $0x268] sm:$0xf]
                  %927 = vst [vmem:[%s771 + $0x134] sm:$0xf] %v926
                  %v928 = vld [vmem:[%s770 + $0x270] sm:$0xf]
                  %929 = vst [vmem:[%s771 + $0x138] sm:$0xf] %v928
                  %v930 = vld [vmem:[%s770 + $0x278] sm:$0xf]
                  %931 = vst [vmem:[%s771 + $0x13c] sm:$0xf] %v930
                  %v932 = vld [vmem:[%s770 + $0x280] sm:$0xf]
                  %933 = vst [vmem:[%s771 + $0x140] sm:$0xf] %v932
                  %v934 = vld [vmem:[%s770 + $0x288] sm:$0xf]
                  %935 = vst [vmem:[%s771 + $0x144] sm:$0xf] %v934
                  %v936 = vld [vmem:[%s770 + $0x290] sm:$0xf]
                  %937 = vst [vmem:[%s771 + $0x148] sm:$0xf] %v936
                  %v938 = vld [vmem:[%s770 + $0x298] sm:$0xf]
                  %939 = vst [vmem:[%s771 + $0x14c] sm:$0xf] %v938
                  %v940 = vld [vmem:[%s770 + $0x2a0] sm:$0xf]
                  %941 = vst [vmem:[%s771 + $0x150] sm:$0xf] %v940
                  %v942 = vld [vmem:[%s770 + $0x2a8] sm:$0xf]
                  %943 = vst [vmem:[%s771 + $0x154] sm:$0xf] %v942
                  %v944 = vld [vmem:[%s770 + $0x2b0] sm:$0xf]
                  %945 = vst [vmem:[%s771 + $0x158] sm:$0xf] %v944
                  %v946 = vld [vmem:[%s770 + $0x2b8] sm:$0xf]
                  %947 = vst [vmem:[%s771 + $0x15c] sm:$0xf] %v946
                  %v948 = vld [vmem:[%s770 + $0x2c0] sm:$0xf]
                  %949 = vst [vmem:[%s771 + $0x160] sm:$0xf] %v948
                  %v950 = vld [vmem:[%s770 + $0x2c8] sm:$0xf]
                  %951 = vst [vmem:[%s771 + $0x164] sm:$0xf] %v950
                  %v952 = vld [vmem:[%s770 + $0x2d0] sm:$0xf]
                  %953 = vst [vmem:[%s771 + $0x168] sm:$0xf] %v952
                  %v954 = vld [vmem:[%s770 + $0x2d8] sm:$0xf]
                  %955 = vst [vmem:[%s771 + $0x16c] sm:$0xf] %v954
                  %v956 = vld [vmem:[%s770 + $0x2e0] sm:$0xf]
                  %957 = vst [vmem:[%s771 + $0x170] sm:$0xf] %v956
                  %v958 = vld [vmem:[%s770 + $0x2e8] sm:$0xf]
                  %959 = vst [vmem:[%s771 + $0x174] sm:$0xf] %v958
                  %v960 = vld [vmem:[%s770 + $0x2f0] sm:$0xf]
                  %961 = vst [vmem:[%s771 + $0x178] sm:$0xf] %v960
                  %v962 = vld [vmem:[%s770 + $0x2f8] sm:$0xf]
                  %963 = vst [vmem:[%s771 + $0x17c] sm:$0xf] %v962
                  %v964 = vld [vmem:[%s770 + $0x300] sm:$0xf]
                  %965 = vst [vmem:[%s771 + $0x180] sm:$0xf] %v964
                  %v966 = vld [vmem:[%s770 + $0x308] sm:$0xf]
                  %967 = vst [vmem:[%s771 + $0x184] sm:$0xf] %v966
                  %v968 = vld [vmem:[%s770 + $0x310] sm:$0xf]
                  %969 = vst [vmem:[%s771 + $0x188] sm:$0xf] %v968
                  %v970 = vld [vmem:[%s770 + $0x318] sm:$0xf]
                  %971 = vst [vmem:[%s771 + $0x18c] sm:$0xf] %v970
                  %v972 = vld [vmem:[%s770 + $0x320] sm:$0xf]
                  %973 = vst [vmem:[%s771 + $0x190] sm:$0xf] %v972
                  %v974 = vld [vmem:[%s770 + $0x328] sm:$0xf]
                  %975 = vst [vmem:[%s771 + $0x194] sm:$0xf] %v974
                  %v976 = vld [vmem:[%s770 + $0x330] sm:$0xf]
                  %977 = vst [vmem:[%s771 + $0x198] sm:$0xf] %v976
                  %v978 = vld [vmem:[%s770 + $0x338] sm:$0xf]
                  %979 = vst [vmem:[%s771 + $0x19c] sm:$0xf] %v978
                  %v980 = vld [vmem:[%s770 + $0x340] sm:$0xf]
                  %981 = vst [vmem:[%s771 + $0x1a0] sm:$0xf] %v980
                  %v982 = vld [vmem:[%s770 + $0x348] sm:$0xf]
                  %983 = vst [vmem:[%s771 + $0x1a4] sm:$0xf] %v982
                  %v984 = vld [vmem:[%s770 + $0x350] sm:$0xf]
                  %985 = vst [vmem:[%s771 + $0x1a8] sm:$0xf] %v984
                  %v986 = vld [vmem:[%s770 + $0x358] sm:$0xf]
                  %987 = vst [vmem:[%s771 + $0x1ac] sm:$0xf] %v986
                  %v988 = vld [vmem:[%s770 + $0x360] sm:$0xf]
                  %989 = vst [vmem:[%s771 + $0x1b0] sm:$0xf] %v988
                  %v990 = vld [vmem:[%s770 + $0x368] sm:$0xf]
                  %991 = vst [vmem:[%s771 + $0x1b4] sm:$0xf] %v990
                  %v992 = vld [vmem:[%s770 + $0x370] sm:$0xf]
                  %993 = vst [vmem:[%s771 + $0x1b8] sm:$0xf] %v992
                  %v994 = vld [vmem:[%s770 + $0x378] sm:$0xf]
                  %995 = vst [vmem:[%s771 + $0x1bc] sm:$0xf] %v994
                  %v996 = vld [vmem:[%s770 + $0x380] sm:$0xf]
                  %997 = vst [vmem:[%s771 + $0x1c0] sm:$0xf] %v996
                  %v998 = vld [vmem:[%s770 + $0x388] sm:$0xf]
                  %999 = vst [vmem:[%s771 + $0x1c4] sm:$0xf] %v998
                  %v1000 = vld [vmem:[%s770 + $0x390] sm:$0xf]
                  %1001 = vst [vmem:[%s771 + $0x1c8] sm:$0xf] %v1000
                  %v1002 = vld [vmem:[%s770 + $0x398] sm:$0xf]
                  %1003 = vst [vmem:[%s771 + $0x1cc] sm:$0xf] %v1002
                  %v1004 = vld [vmem:[%s770 + $0x3a0] sm:$0xf]
                  %1005 = vst [vmem:[%s771 + $0x1d0] sm:$0xf] %v1004
                  %v1006 = vld [vmem:[%s770 + $0x3a8] sm:$0xf]
                  %1007 = vst [vmem:[%s771 + $0x1d4] sm:$0xf] %v1006
                  %v1008 = vld [vmem:[%s770 + $0x3b0] sm:$0xf]
                  %1009 = vst [vmem:[%s771 + $0x1d8] sm:$0xf] %v1008
                  %v1010 = vld [vmem:[%s770 + $0x3b8] sm:$0xf]
                  %1011 = vst [vmem:[%s771 + $0x1dc] sm:$0xf] %v1010
                  %v1012 = vld [vmem:[%s770 + $0x3c0] sm:$0xf]
                  %1013 = vst [vmem:[%s771 + $0x1e0] sm:$0xf] %v1012
                  %v1014 = vld [vmem:[%s770 + $0x3c8] sm:$0xf]
                  %1015 = vst [vmem:[%s771 + $0x1e4] sm:$0xf] %v1014
                  %v1016 = vld [vmem:[%s770 + $0x3d0] sm:$0xf]
                  %1017 = vst [vmem:[%s771 + $0x1e8] sm:$0xf] %v1016
                  %v1018 = vld [vmem:[%s770 + $0x3d8] sm:$0xf]
                  %1019 = vst [vmem:[%s771 + $0x1ec] sm:$0xf] %v1018
                  %v1020 = vld [vmem:[%s770 + $0x3e0] sm:$0xf]
                  %1021 = vst [vmem:[%s771 + $0x1f0] sm:$0xf] %v1020
                  %v1022 = vld [vmem:[%s770 + $0x3e8] sm:$0xf]
                  %1023 = vst [vmem:[%s771 + $0x1f4] sm:$0xf] %v1022
                  %v1024 = vld [vmem:[%s770 + $0x3f0] sm:$0xf]
                  %1025 = vst [vmem:[%s771 + $0x1f8] sm:$0xf] %v1024
                  %v1026 = vld [vmem:[%s770 + $0x3f8] sm:$0xf]
                  %1027 = vst [vmem:[%s771 + $0x1fc] sm:$0xf] %v1026
                  %v1028 = vld [vmem:[%s770 + $0x400] sm:$0xf]
                  %1029 = vst [vmem:[%s771 + $0x200] sm:$0xf] %v1028
                  %v1030 = vld [vmem:[%s770 + $0x408] sm:$0xf]
                  %1031 = vst [vmem:[%s771 + $0x204] sm:$0xf] %v1030
                  %v1032 = vld [vmem:[%s770 + $0x410] sm:$0xf]
                  %1033 = vst [vmem:[%s771 + $0x208] sm:$0xf] %v1032
                  %v1034 = vld [vmem:[%s770 + $0x418] sm:$0xf]
                  %1035 = vst [vmem:[%s771 + $0x20c] sm:$0xf] %v1034
                  %v1036 = vld [vmem:[%s770 + $0x420] sm:$0xf]
                  %1037 = vst [vmem:[%s771 + $0x210] sm:$0xf] %v1036
                  %v1038 = vld [vmem:[%s770 + $0x428] sm:$0xf]
                  %1039 = vst [vmem:[%s771 + $0x214] sm:$0xf] %v1038
                  %v1040 = vld [vmem:[%s770 + $0x430] sm:$0xf]
                  %1041 = vst [vmem:[%s771 + $0x218] sm:$0xf] %v1040
                  %v1042 = vld [vmem:[%s770 + $0x438] sm:$0xf]
                  %1043 = vst [vmem:[%s771 + $0x21c] sm:$0xf] %v1042
                  %v1044 = vld [vmem:[%s770 + $0x440] sm:$0xf]
                  %1045 = vst [vmem:[%s771 + $0x220] sm:$0xf] %v1044
                  %v1046 = vld [vmem:[%s770 + $0x448] sm:$0xf]
                  %1047 = vst [vmem:[%s771 + $0x224] sm:$0xf] %v1046
                  %v1048 = vld [vmem:[%s770 + $0x450] sm:$0xf]
                  %1049 = vst [vmem:[%s771 + $0x228] sm:$0xf] %v1048
                  %v1050 = vld [vmem:[%s770 + $0x458] sm:$0xf]
                  %1051 = vst [vmem:[%s771 + $0x22c] sm:$0xf] %v1050
                  %v1052 = vld [vmem:[%s770 + $0x460] sm:$0xf]
                  %1053 = vst [vmem:[%s771 + $0x230] sm:$0xf] %v1052
                  %v1054 = vld [vmem:[%s770 + $0x468] sm:$0xf]
                  %1055 = vst [vmem:[%s771 + $0x234] sm:$0xf] %v1054
                  %v1056 = vld [vmem:[%s770 + $0x470] sm:$0xf]
                  %1057 = vst [vmem:[%s771 + $0x238] sm:$0xf] %v1056
                  %v1058 = vld [vmem:[%s770 + $0x478] sm:$0xf]
                  %1059 = vst [vmem:[%s771 + $0x23c] sm:$0xf] %v1058
                  %v1060 = vld [vmem:[%s770 + $0x480] sm:$0xf]
                  %1061 = vst [vmem:[%s771 + $0x240] sm:$0xf] %v1060
                  %v1062 = vld [vmem:[%s770 + $0x488] sm:$0xf]
                  %1063 = vst [vmem:[%s771 + $0x244] sm:$0xf] %v1062
                  %v1064 = vld [vmem:[%s770 + $0x490] sm:$0xf]
                  %1065 = vst [vmem:[%s771 + $0x248] sm:$0xf] %v1064
                  %v1066 = vld [vmem:[%s770 + $0x498] sm:$0xf]
                  %1067 = vst [vmem:[%s771 + $0x24c] sm:$0xf] %v1066
                  %v1068 = vld [vmem:[%s770 + $0x4a0] sm:$0xf]
                  %1069 = vst [vmem:[%s771 + $0x250] sm:$0xf] %v1068
                  %v1070 = vld [vmem:[%s770 + $0x4a8] sm:$0xf]
                  %1071 = vst [vmem:[%s771 + $0x254] sm:$0xf] %v1070
                  %v1072 = vld [vmem:[%s770 + $0x4b0] sm:$0xf]
                  %1073 = vst [vmem:[%s771 + $0x258] sm:$0xf] %v1072
                  %v1074 = vld [vmem:[%s770 + $0x4b8] sm:$0xf]
                  %1075 = vst [vmem:[%s771 + $0x25c] sm:$0xf] %v1074
                  %v1076 = vld [vmem:[%s770 + $0x4c0] sm:$0xf]
                  %1077 = vst [vmem:[%s771 + $0x260] sm:$0xf] %v1076
                  %v1078 = vld [vmem:[%s770 + $0x4c8] sm:$0xf]
                  %1079 = vst [vmem:[%s771 + $0x264] sm:$0xf] %v1078
                  %v1080 = vld [vmem:[%s770 + $0x4d0] sm:$0xf]
                  %1081 = vst [vmem:[%s771 + $0x268] sm:$0xf] %v1080
                  %v1082 = vld [vmem:[%s770 + $0x4d8] sm:$0xf]
                  %1083 = vst [vmem:[%s771 + $0x26c] sm:$0xf] %v1082
                  %v1084 = vld [vmem:[%s770 + $0x4e0] sm:$0xf]
                  %1085 = vst [vmem:[%s771 + $0x270] sm:$0xf] %v1084
                  %v1086 = vld [vmem:[%s770 + $0x4e8] sm:$0xf]
                  %1087 = vst [vmem:[%s771 + $0x274] sm:$0xf] %v1086
                  %v1088 = vld [vmem:[%s770 + $0x4f0] sm:$0xf]
                  %1089 = vst [vmem:[%s771 + $0x278] sm:$0xf] %v1088
                  %v1090 = vld [vmem:[%s770 + $0x4f8] sm:$0xf]
                  %1091 = vst [vmem:[%s771 + $0x27c] sm:$0xf] %v1090
                  %v1092 = vld [vmem:[%s770 + $0x500] sm:$0xf]
                  %1093 = vst [vmem:[%s771 + $0x280] sm:$0xf] %v1092
                  %v1094 = vld [vmem:[%s770 + $0x508] sm:$0xf]
                  %1095 = vst [vmem:[%s771 + $0x284] sm:$0xf] %v1094
                  %v1096 = vld [vmem:[%s770 + $0x510] sm:$0xf]
                  %1097 = vst [vmem:[%s771 + $0x288] sm:$0xf] %v1096
                  %v1098 = vld [vmem:[%s770 + $0x518] sm:$0xf]
                  %1099 = vst [vmem:[%s771 + $0x28c] sm:$0xf] %v1098
                  %v1100 = vld [vmem:[%s770 + $0x520] sm:$0xf]
                  %1101 = vst [vmem:[%s771 + $0x290] sm:$0xf] %v1100
                  %v1102 = vld [vmem:[%s770 + $0x528] sm:$0xf]
                  %1103 = vst [vmem:[%s771 + $0x294] sm:$0xf] %v1102
                  %v1104 = vld [vmem:[%s770 + $0x530] sm:$0xf]
                  %1105 = vst [vmem:[%s771 + $0x298] sm:$0xf] %v1104
                  %v1106 = vld [vmem:[%s770 + $0x538] sm:$0xf]
                  %1107 = vst [vmem:[%s771 + $0x29c] sm:$0xf] %v1106
                  %v1108 = vld [vmem:[%s770 + $0x540] sm:$0xf]
                  %1109 = vst [vmem:[%s771 + $0x2a0] sm:$0xf] %v1108
                  %v1110 = vld [vmem:[%s770 + $0x548] sm:$0xf]
                  %1111 = vst [vmem:[%s771 + $0x2a4] sm:$0xf] %v1110
                  %v1112 = vld [vmem:[%s770 + $0x550] sm:$0xf]
                  %1113 = vst [vmem:[%s771 + $0x2a8] sm:$0xf] %v1112
                  %v1114 = vld [vmem:[%s770 + $0x558] sm:$0xf]
                  %1115 = vst [vmem:[%s771 + $0x2ac] sm:$0xf] %v1114
                  %v1116 = vld [vmem:[%s770 + $0x560] sm:$0xf]
                  %1117 = vst [vmem:[%s771 + $0x2b0] sm:$0xf] %v1116
                  %v1118 = vld [vmem:[%s770 + $0x568] sm:$0xf]
                  %1119 = vst [vmem:[%s771 + $0x2b4] sm:$0xf] %v1118
                  %v1120 = vld [vmem:[%s770 + $0x570] sm:$0xf]
                  %1121 = vst [vmem:[%s771 + $0x2b8] sm:$0xf] %v1120
                  %v1122 = vld [vmem:[%s770 + $0x578] sm:$0xf]
                  %1123 = vst [vmem:[%s771 + $0x2bc] sm:$0xf] %v1122
                  %v1124 = vld [vmem:[%s770 + $0x580] sm:$0xf]
                  %1125 = vst [vmem:[%s771 + $0x2c0] sm:$0xf] %v1124
                  %v1126 = vld [vmem:[%s770 + $0x588] sm:$0xf]
                  %1127 = vst [vmem:[%s771 + $0x2c4] sm:$0xf] %v1126
                  %v1128 = vld [vmem:[%s770 + $0x590] sm:$0xf]
                  %1129 = vst [vmem:[%s771 + $0x2c8] sm:$0xf] %v1128
                  %v1130 = vld [vmem:[%s770 + $0x598] sm:$0xf]
                  %1131 = vst [vmem:[%s771 + $0x2cc] sm:$0xf] %v1130
                  %v1132 = vld [vmem:[%s770 + $0x5a0] sm:$0xf]
                  %1133 = vst [vmem:[%s771 + $0x2d0] sm:$0xf] %v1132
                  %v1134 = vld [vmem:[%s770 + $0x5a8] sm:$0xf]
                  %1135 = vst [vmem:[%s771 + $0x2d4] sm:$0xf] %v1134
                  %v1136 = vld [vmem:[%s770 + $0x5b0] sm:$0xf]
                  %1137 = vst [vmem:[%s771 + $0x2d8] sm:$0xf] %v1136
                  %v1138 = vld [vmem:[%s770 + $0x5b8] sm:$0xf]
                  %1139 = vst [vmem:[%s771 + $0x2dc] sm:$0xf] %v1138
                  %v1140 = vld [vmem:[%s770 + $0x5c0] sm:$0xf]
                  %1141 = vst [vmem:[%s771 + $0x2e0] sm:$0xf] %v1140
                  %v1142 = vld [vmem:[%s770 + $0x5c8] sm:$0xf]
                  %1143 = vst [vmem:[%s771 + $0x2e4] sm:$0xf] %v1142
                  %v1144 = vld [vmem:[%s770 + $0x5d0] sm:$0xf]
                  %1145 = vst [vmem:[%s771 + $0x2e8] sm:$0xf] %v1144
                  %v1146 = vld [vmem:[%s770 + $0x5d8] sm:$0xf]
                  %1147 = vst [vmem:[%s771 + $0x2ec] sm:$0xf] %v1146
                  %v1148 = vld [vmem:[%s770 + $0x5e0] sm:$0xf]
                  %1149 = vst [vmem:[%s771 + $0x2f0] sm:$0xf] %v1148
                  %v1150 = vld [vmem:[%s770 + $0x5e8] sm:$0xf]
                  %1151 = vst [vmem:[%s771 + $0x2f4] sm:$0xf] %v1150
                  %v1152 = vld [vmem:[%s770 + $0x5f0] sm:$0xf]
                  %1153 = vst [vmem:[%s771 + $0x2f8] sm:$0xf] %v1152
                  %v1154 = vld [vmem:[%s770 + $0x5f8] sm:$0xf]
                  %1155 = vst [vmem:[%s771 + $0x2fc] sm:$0xf] %v1154
                  %v1156 = vld [vmem:[%s770 + $0x600] sm:$0xf]
                  %1157 = vst [vmem:[%s771 + $0x300] sm:$0xf] %v1156
                  %v1158 = vld [vmem:[%s770 + $0x608] sm:$0xf]
                  %1159 = vst [vmem:[%s771 + $0x304] sm:$0xf] %v1158
                  %v1160 = vld [vmem:[%s770 + $0x610] sm:$0xf]
                  %1161 = vst [vmem:[%s771 + $0x308] sm:$0xf] %v1160
                  %v1162 = vld [vmem:[%s770 + $0x618] sm:$0xf]
                  %1163 = vst [vmem:[%s771 + $0x30c] sm:$0xf] %v1162
                  %v1164 = vld [vmem:[%s770 + $0x620] sm:$0xf]
                  %1165 = vst [vmem:[%s771 + $0x310] sm:$0xf] %v1164
                  %v1166 = vld [vmem:[%s770 + $0x628] sm:$0xf]
                  %1167 = vst [vmem:[%s771 + $0x314] sm:$0xf] %v1166
                  %v1168 = vld [vmem:[%s770 + $0x630] sm:$0xf]
                  %1169 = vst [vmem:[%s771 + $0x318] sm:$0xf] %v1168
                  %v1170 = vld [vmem:[%s770 + $0x638] sm:$0xf]
                  %1171 = vst [vmem:[%s771 + $0x31c] sm:$0xf] %v1170
                  %v1172 = vld [vmem:[%s770 + $0x640] sm:$0xf]
                  %1173 = vst [vmem:[%s771 + $0x320] sm:$0xf] %v1172
                  %v1174 = vld [vmem:[%s770 + $0x648] sm:$0xf]
                  %1175 = vst [vmem:[%s771 + $0x324] sm:$0xf] %v1174
                  %v1176 = vld [vmem:[%s770 + $0x650] sm:$0xf]
                  %1177 = vst [vmem:[%s771 + $0x328] sm:$0xf] %v1176
                  %v1178 = vld [vmem:[%s770 + $0x658] sm:$0xf]
                  %1179 = vst [vmem:[%s771 + $0x32c] sm:$0xf] %v1178
                  %v1180 = vld [vmem:[%s770 + $0x660] sm:$0xf]
                  %1181 = vst [vmem:[%s771 + $0x330] sm:$0xf] %v1180
                  %v1182 = vld [vmem:[%s770 + $0x668] sm:$0xf]
                  %1183 = vst [vmem:[%s771 + $0x334] sm:$0xf] %v1182
                  %v1184 = vld [vmem:[%s770 + $0x670] sm:$0xf]
                  %1185 = vst [vmem:[%s771 + $0x338] sm:$0xf] %v1184
                  %v1186 = vld [vmem:[%s770 + $0x678] sm:$0xf]
                  %1187 = vst [vmem:[%s771 + $0x33c] sm:$0xf] %v1186
                  %v1188 = vld [vmem:[%s770 + $0x680] sm:$0xf]
                  %1189 = vst [vmem:[%s771 + $0x340] sm:$0xf] %v1188
                  %v1190 = vld [vmem:[%s770 + $0x688] sm:$0xf]
                  %1191 = vst [vmem:[%s771 + $0x344] sm:$0xf] %v1190
                  %v1192 = vld [vmem:[%s770 + $0x690] sm:$0xf]
                  %1193 = vst [vmem:[%s771 + $0x348] sm:$0xf] %v1192
                  %v1194 = vld [vmem:[%s770 + $0x698] sm:$0xf]
                  %1195 = vst [vmem:[%s771 + $0x34c] sm:$0xf] %v1194
                  %v1196 = vld [vmem:[%s770 + $0x6a0] sm:$0xf]
                  %1197 = vst [vmem:[%s771 + $0x350] sm:$0xf] %v1196
                  %v1198 = vld [vmem:[%s770 + $0x6a8] sm:$0xf]
                  %1199 = vst [vmem:[%s771 + $0x354] sm:$0xf] %v1198
                  %v1200 = vld [vmem:[%s770 + $0x6b0] sm:$0xf]
                  %1201 = vst [vmem:[%s771 + $0x358] sm:$0xf] %v1200
                  %v1202 = vld [vmem:[%s770 + $0x6b8] sm:$0xf]
                  %1203 = vst [vmem:[%s771 + $0x35c] sm:$0xf] %v1202
                  %v1204 = vld [vmem:[%s770 + $0x6c0] sm:$0xf]
                  %1205 = vst [vmem:[%s771 + $0x360] sm:$0xf] %v1204
                  %v1206 = vld [vmem:[%s770 + $0x6c8] sm:$0xf]
                  %1207 = vst [vmem:[%s771 + $0x364] sm:$0xf] %v1206
                  %v1208 = vld [vmem:[%s770 + $0x6d0] sm:$0xf]
                  %1209 = vst [vmem:[%s771 + $0x368] sm:$0xf] %v1208
                  %v1210 = vld [vmem:[%s770 + $0x6d8] sm:$0xf]
                  %1211 = vst [vmem:[%s771 + $0x36c] sm:$0xf] %v1210
                  %v1212 = vld [vmem:[%s770 + $0x6e0] sm:$0xf]
                  %1213 = vst [vmem:[%s771 + $0x370] sm:$0xf] %v1212
                  %v1214 = vld [vmem:[%s770 + $0x6e8] sm:$0xf]
                  %1215 = vst [vmem:[%s771 + $0x374] sm:$0xf] %v1214
                  %v1216 = vld [vmem:[%s770 + $0x6f0] sm:$0xf]
                  %1217 = vst [vmem:[%s771 + $0x378] sm:$0xf] %v1216
                  %v1218 = vld [vmem:[%s770 + $0x6f8] sm:$0xf]
                  %1219 = vst [vmem:[%s771 + $0x37c] sm:$0xf] %v1218
                  %v1220 = vld [vmem:[%s770 + $0x700] sm:$0xf]
                  %1221 = vst [vmem:[%s771 + $0x380] sm:$0xf] %v1220
                  %v1222 = vld [vmem:[%s770 + $0x708] sm:$0xf]
                  %1223 = vst [vmem:[%s771 + $0x384] sm:$0xf] %v1222
                  %v1224 = vld [vmem:[%s770 + $0x710] sm:$0xf]
                  %1225 = vst [vmem:[%s771 + $0x388] sm:$0xf] %v1224
                  %v1226 = vld [vmem:[%s770 + $0x718] sm:$0xf]
                  %1227 = vst [vmem:[%s771 + $0x38c] sm:$0xf] %v1226
                  %v1228 = vld [vmem:[%s770 + $0x720] sm:$0xf]
                  %1229 = vst [vmem:[%s771 + $0x390] sm:$0xf] %v1228
                  %v1230 = vld [vmem:[%s770 + $0x728] sm:$0xf]
                  %1231 = vst [vmem:[%s771 + $0x394] sm:$0xf] %v1230
                  %v1232 = vld [vmem:[%s770 + $0x730] sm:$0xf]
                  %1233 = vst [vmem:[%s771 + $0x398] sm:$0xf] %v1232
                  %v1234 = vld [vmem:[%s770 + $0x738] sm:$0xf]
                  %1235 = vst [vmem:[%s771 + $0x39c] sm:$0xf] %v1234
                  %v1236 = vld [vmem:[%s770 + $0x740] sm:$0xf]
                  %1237 = vst [vmem:[%s771 + $0x3a0] sm:$0xf] %v1236
                  %v1238 = vld [vmem:[%s770 + $0x748] sm:$0xf]
                  %1239 = vst [vmem:[%s771 + $0x3a4] sm:$0xf] %v1238
                  %v1240 = vld [vmem:[%s770 + $0x750] sm:$0xf]
                  %1241 = vst [vmem:[%s771 + $0x3a8] sm:$0xf] %v1240
                  %v1242 = vld [vmem:[%s770 + $0x758] sm:$0xf]
                  %1243 = vst [vmem:[%s771 + $0x3ac] sm:$0xf] %v1242
                  %v1244 = vld [vmem:[%s770 + $0x760] sm:$0xf]
                  %1245 = vst [vmem:[%s771 + $0x3b0] sm:$0xf] %v1244
                  %v1246 = vld [vmem:[%s770 + $0x768] sm:$0xf]
                  %1247 = vst [vmem:[%s771 + $0x3b4] sm:$0xf] %v1246
                  %v1248 = vld [vmem:[%s770 + $0x770] sm:$0xf]
                  %1249 = vst [vmem:[%s771 + $0x3b8] sm:$0xf] %v1248
                  %v1250 = vld [vmem:[%s770 + $0x778] sm:$0xf]
                  %1251 = vst [vmem:[%s771 + $0x3bc] sm:$0xf] %v1250
                  %v1252 = vld [vmem:[%s770 + $0x780] sm:$0xf]
                  %1253 = vst [vmem:[%s771 + $0x3c0] sm:$0xf] %v1252
                  %v1254 = vld [vmem:[%s770 + $0x788] sm:$0xf]
                  %1255 = vst [vmem:[%s771 + $0x3c4] sm:$0xf] %v1254
                  %v1256 = vld [vmem:[%s770 + $0x790] sm:$0xf]
                  %1257 = vst [vmem:[%s771 + $0x3c8] sm:$0xf] %v1256
                  %v1258 = vld [vmem:[%s770 + $0x798] sm:$0xf]
                  %1259 = vst [vmem:[%s771 + $0x3cc] sm:$0xf] %v1258
                  %v1260 = vld [vmem:[%s770 + $0x7a0] sm:$0xf]
                  %1261 = vst [vmem:[%s771 + $0x3d0] sm:$0xf] %v1260
                  %v1262 = vld [vmem:[%s770 + $0x7a8] sm:$0xf]
                  %1263 = vst [vmem:[%s771 + $0x3d4] sm:$0xf] %v1262
                  %v1264 = vld [vmem:[%s770 + $0x7b0] sm:$0xf]
                  %1265 = vst [vmem:[%s771 + $0x3d8] sm:$0xf] %v1264
                  %v1266 = vld [vmem:[%s770 + $0x7b8] sm:$0xf]
                  %1267 = vst [vmem:[%s771 + $0x3dc] sm:$0xf] %v1266
                  %v1268 = vld [vmem:[%s770 + $0x7c0] sm:$0xf]
                  %1269 = vst [vmem:[%s771 + $0x3e0] sm:$0xf] %v1268
                  %v1270 = vld [vmem:[%s770 + $0x7c8] sm:$0xf]
                  %1271 = vst [vmem:[%s771 + $0x3e4] sm:$0xf] %v1270
                  %v1272 = vld [vmem:[%s770 + $0x7d0] sm:$0xf]
                  %1273 = vst [vmem:[%s771 + $0x3e8] sm:$0xf] %v1272
                  %v1274 = vld [vmem:[%s770 + $0x7d8] sm:$0xf]
                  %1275 = vst [vmem:[%s771 + $0x3ec] sm:$0xf] %v1274
                  %v1276 = vld [vmem:[%s770 + $0x7e0] sm:$0xf]
                  %1277 = vst [vmem:[%s771 + $0x3f0] sm:$0xf] %v1276
                  %v1278 = vld [vmem:[%s770 + $0x7e8] sm:$0xf]
                  %1279 = vst [vmem:[%s771 + $0x3f4] sm:$0xf] %v1278
                  %v1280 = vld [vmem:[%s770 + $0x7f0] sm:$0xf]
                  %1281 = vst [vmem:[%s771 + $0x3f8] sm:$0xf] %v1280
                  %v1282 = vld [vmem:[%s770 + $0x7f8] sm:$0xf]
                  %1283 = vst [vmem:[%s771 + $0x3fc] sm:$0xf] %v1282
                  %v1284 = vld [vmem:[%s770 + $0x800] sm:$0xf]
                  %1285 = vst [vmem:[%s771 + $0x400] sm:$0xf] %v1284
                  %v1286 = vld [vmem:[%s770 + $0x808] sm:$0xf]
                  %1287 = vst [vmem:[%s771 + $0x404] sm:$0xf] %v1286
                  %v1288 = vld [vmem:[%s770 + $0x810] sm:$0xf]
                  %1289 = vst [vmem:[%s771 + $0x408] sm:$0xf] %v1288
                  %v1290 = vld [vmem:[%s770 + $0x818] sm:$0xf]
                  %1291 = vst [vmem:[%s771 + $0x40c] sm:$0xf] %v1290
                  %v1292 = vld [vmem:[%s770 + $0x820] sm:$0xf]
                  %1293 = vst [vmem:[%s771 + $0x410] sm:$0xf] %v1292
                  %v1294 = vld [vmem:[%s770 + $0x828] sm:$0xf]
                  %1295 = vst [vmem:[%s771 + $0x414] sm:$0xf] %v1294
                  %v1296 = vld [vmem:[%s770 + $0x830] sm:$0xf]
                  %1297 = vst [vmem:[%s771 + $0x418] sm:$0xf] %v1296
                  %v1298 = vld [vmem:[%s770 + $0x838] sm:$0xf]
                  %1299 = vst [vmem:[%s771 + $0x41c] sm:$0xf] %v1298
                  %v1300 = vld [vmem:[%s770 + $0x840] sm:$0xf]
                  %1301 = vst [vmem:[%s771 + $0x420] sm:$0xf] %v1300
                  %v1302 = vld [vmem:[%s770 + $0x848] sm:$0xf]
                  %1303 = vst [vmem:[%s771 + $0x424] sm:$0xf] %v1302
                  %v1304 = vld [vmem:[%s770 + $0x850] sm:$0xf]
                  %1305 = vst [vmem:[%s771 + $0x428] sm:$0xf] %v1304
                  %v1306 = vld [vmem:[%s770 + $0x858] sm:$0xf]
                  %1307 = vst [vmem:[%s771 + $0x42c] sm:$0xf] %v1306
                  %v1308 = vld [vmem:[%s770 + $0x860] sm:$0xf]
                  %1309 = vst [vmem:[%s771 + $0x430] sm:$0xf] %v1308
                  %v1310 = vld [vmem:[%s770 + $0x868] sm:$0xf]
                  %1311 = vst [vmem:[%s771 + $0x434] sm:$0xf] %v1310
                  %v1312 = vld [vmem:[%s770 + $0x870] sm:$0xf]
                  %1313 = vst [vmem:[%s771 + $0x438] sm:$0xf] %v1312
                  %v1314 = vld [vmem:[%s770 + $0x878] sm:$0xf]
                  %1315 = vst [vmem:[%s771 + $0x43c] sm:$0xf] %v1314
                  %v1316 = vld [vmem:[%s770 + $0x880] sm:$0xf]
                  %1317 = vst [vmem:[%s771 + $0x440] sm:$0xf] %v1316
                  %v1318 = vld [vmem:[%s770 + $0x888] sm:$0xf]
                  %1319 = vst [vmem:[%s771 + $0x444] sm:$0xf] %v1318
                  %v1320 = vld [vmem:[%s770 + $0x890] sm:$0xf]
                  %1321 = vst [vmem:[%s771 + $0x448] sm:$0xf] %v1320
                  %v1322 = vld [vmem:[%s770 + $0x898] sm:$0xf]
                  %1323 = vst [vmem:[%s771 + $0x44c] sm:$0xf] %v1322
                  %v1324 = vld [vmem:[%s770 + $0x8a0] sm:$0xf]
                  %1325 = vst [vmem:[%s771 + $0x450] sm:$0xf] %v1324
                  %v1326 = vld [vmem:[%s770 + $0x8a8] sm:$0xf]
                  %1327 = vst [vmem:[%s771 + $0x454] sm:$0xf] %v1326
                  %v1328 = vld [vmem:[%s770 + $0x8b0] sm:$0xf]
                  %1329 = vst [vmem:[%s771 + $0x458] sm:$0xf] %v1328
                  %v1330 = vld [vmem:[%s770 + $0x8b8] sm:$0xf]
                  %1331 = vst [vmem:[%s771 + $0x45c] sm:$0xf] %v1330
                  %v1332 = vld [vmem:[%s770 + $0x8c0] sm:$0xf]
                  %1333 = vst [vmem:[%s771 + $0x460] sm:$0xf] %v1332
                  %v1334 = vld [vmem:[%s770 + $0x8c8] sm:$0xf]
                  %1335 = vst [vmem:[%s771 + $0x464] sm:$0xf] %v1334
                  %v1336 = vld [vmem:[%s770 + $0x8d0] sm:$0xf]
                  %1337 = vst [vmem:[%s771 + $0x468] sm:$0xf] %v1336
                  %v1338 = vld [vmem:[%s770 + $0x8d8] sm:$0xf]
                  %1339 = vst [vmem:[%s771 + $0x46c] sm:$0xf] %v1338
                  %v1340 = vld [vmem:[%s770 + $0x8e0] sm:$0xf]
                  %1341 = vst [vmem:[%s771 + $0x470] sm:$0xf] %v1340
                  %v1342 = vld [vmem:[%s770 + $0x8e8] sm:$0xf]
                  %1343 = vst [vmem:[%s771 + $0x474] sm:$0xf] %v1342
                  %v1344 = vld [vmem:[%s770 + $0x8f0] sm:$0xf]
                  %1345 = vst [vmem:[%s771 + $0x478] sm:$0xf] %v1344
                  %v1346 = vld [vmem:[%s770 + $0x8f8] sm:$0xf]
                  %1347 = vst [vmem:[%s771 + $0x47c] sm:$0xf] %v1346
                $region59: #{pose_cnn_forward.13} parent=46 // loop_footer
                  %s769 = sadd.s32 1, %s765
                $region60: #{pose_cnn_forward.13} parent=46 // loop_footer_branch
                  %764 = sbr.rel target = $region56
                $region61: #{pose_cnn_forward.13} parent=46 // loop_exit
                  _
              $region47: #{pose_cnn_forward.13} parent=31 // pred_fallthru
                _
            $region32: #{pose_cnn_forward.13} parent=27 // pred_fallthru
              _
            // Predicated region
            $region33: #{pose_cnn_forward.13} parent=27 // pred_check
              _
            $region34: #{pose_cnn_forward.13} parent=27 // pred_check_branch
              %167 = sbr.rel (0) target = $region36
            $region35: #{pose_cnn_forward.13} parent=27 // pred_region
              loop: start=0, step=1, limit=1
              $region37: #{pose_cnn_forward.13} parent=35 // loop_pre_header
                _
              $region38: #{pose_cnn_forward.13} parent=35 // loop_header
                %s170 = sphi 0, %s174
                %p171 = scmp.ge.s32.totalorder %s170, 1
                %s175 = sphi %s161, %s161
                %s176 = sphi %s159, %s159
              $region39: #{pose_cnn_forward.13} parent=35 // loop_header_branch
                %173 = sbr.rel (%p171) target = $region43
              $region40: #{pose_cnn_forward.13} parent=35 // loop_body
                %v177 = vld [vmem:[%s175] sm:$0xf]
                %178 = vst [vmem:[%s176] sm:$0xf] %v177
                %v179 = vld [vmem:[%s175 + $0x8] sm:$0xf]
                %180 = vst [vmem:[%s176 + $0x4] sm:$0xf] %v179
                %v181 = vld [vmem:[%s175 + $0x10] sm:$0xf]
                %182 = vst [vmem:[%s176 + $0x8] sm:$0xf] %v181
                %v183 = vld [vmem:[%s175 + $0x18] sm:$0xf]
                %184 = vst [vmem:[%s176 + $0xc] sm:$0xf] %v183
                %v185 = vld [vmem:[%s175 + $0x20] sm:$0xf]
                %186 = vst [vmem:[%s176 + $0x10] sm:$0xf] %v185
                %v187 = vld [vmem:[%s175 + $0x28] sm:$0xf]
                %188 = vst [vmem:[%s176 + $0x14] sm:$0xf] %v187
                %v189 = vld [vmem:[%s175 + $0x30] sm:$0xf]
                %190 = vst [vmem:[%s176 + $0x18] sm:$0xf] %v189
                %v191 = vld [vmem:[%s175 + $0x38] sm:$0xf]
                %192 = vst [vmem:[%s176 + $0x1c] sm:$0xf] %v191
                %v193 = vld [vmem:[%s175 + $0x40] sm:$0xf]
                %194 = vst [vmem:[%s176 + $0x20] sm:$0xf] %v193
                %v195 = vld [vmem:[%s175 + $0x48] sm:$0xf]
                %196 = vst [vmem:[%s176 + $0x24] sm:$0xf] %v195
                %v197 = vld [vmem:[%s175 + $0x50] sm:$0xf]
                %198 = vst [vmem:[%s176 + $0x28] sm:$0xf] %v197
                %v199 = vld [vmem:[%s175 + $0x58] sm:$0xf]
                %200 = vst [vmem:[%s176 + $0x2c] sm:$0xf] %v199
                %v201 = vld [vmem:[%s175 + $0x60] sm:$0xf]
                %202 = vst [vmem:[%s176 + $0x30] sm:$0xf] %v201
                %v203 = vld [vmem:[%s175 + $0x68] sm:$0xf]
                %204 = vst [vmem:[%s176 + $0x34] sm:$0xf] %v203
                %v205 = vld [vmem:[%s175 + $0x70] sm:$0xf]
                %206 = vst [vmem:[%s176 + $0x38] sm:$0xf] %v205
                %v207 = vld [vmem:[%s175 + $0x78] sm:$0xf]
                %208 = vst [vmem:[%s176 + $0x3c] sm:$0xf] %v207
                %v209 = vld [vmem:[%s175 + $0x80] sm:$0xf]
                %210 = vst [vmem:[%s176 + $0x40] sm:$0xf] %v209
                %v211 = vld [vmem:[%s175 + $0x88] sm:$0xf]
                %212 = vst [vmem:[%s176 + $0x44] sm:$0xf] %v211
                %v213 = vld [vmem:[%s175 + $0x90] sm:$0xf]
                %214 = vst [vmem:[%s176 + $0x48] sm:$0xf] %v213
                %v215 = vld [vmem:[%s175 + $0x98] sm:$0xf]
                %216 = vst [vmem:[%s176 + $0x4c] sm:$0xf] %v215
                %v217 = vld [vmem:[%s175 + $0xa0] sm:$0xf]
                %218 = vst [vmem:[%s176 + $0x50] sm:$0xf] %v217
                %v219 = vld [vmem:[%s175 + $0xa8] sm:$0xf]
                %220 = vst [vmem:[%s176 + $0x54] sm:$0xf] %v219
                %v221 = vld [vmem:[%s175 + $0xb0] sm:$0xf]
                %222 = vst [vmem:[%s176 + $0x58] sm:$0xf] %v221
                %v223 = vld [vmem:[%s175 + $0xb8] sm:$0xf]
                %224 = vst [vmem:[%s176 + $0x5c] sm:$0xf] %v223
                %v225 = vld [vmem:[%s175 + $0xc0] sm:$0xf]
                %226 = vst [vmem:[%s176 + $0x60] sm:$0xf] %v225
                %v227 = vld [vmem:[%s175 + $0xc8] sm:$0xf]
                %228 = vst [vmem:[%s176 + $0x64] sm:$0xf] %v227
                %v229 = vld [vmem:[%s175 + $0xd0] sm:$0xf]
                %230 = vst [vmem:[%s176 + $0x68] sm:$0xf] %v229
                %v231 = vld [vmem:[%s175 + $0xd8] sm:$0xf]
                %232 = vst [vmem:[%s176 + $0x6c] sm:$0xf] %v231
                %v233 = vld [vmem:[%s175 + $0xe0] sm:$0xf]
                %234 = vst [vmem:[%s176 + $0x70] sm:$0xf] %v233
                %v235 = vld [vmem:[%s175 + $0xe8] sm:$0xf]
                %236 = vst [vmem:[%s176 + $0x74] sm:$0xf] %v235
                %v237 = vld [vmem:[%s175 + $0xf0] sm:$0xf]
                %238 = vst [vmem:[%s176 + $0x78] sm:$0xf] %v237
                %v239 = vld [vmem:[%s175 + $0xf8] sm:$0xf]
                %240 = vst [vmem:[%s176 + $0x7c] sm:$0xf] %v239
                %v241 = vld [vmem:[%s175 + $0x100] sm:$0xf]
                %242 = vst [vmem:[%s176 + $0x80] sm:$0xf] %v241
                %v243 = vld [vmem:[%s175 + $0x108] sm:$0xf]
                %244 = vst [vmem:[%s176 + $0x84] sm:$0xf] %v243
                %v245 = vld [vmem:[%s175 + $0x110] sm:$0xf]
                %246 = vst [vmem:[%s176 + $0x88] sm:$0xf] %v245
                %v247 = vld [vmem:[%s175 + $0x118] sm:$0xf]
                %248 = vst [vmem:[%s176 + $0x8c] sm:$0xf] %v247
                %v249 = vld [vmem:[%s175 + $0x120] sm:$0xf]
                %250 = vst [vmem:[%s176 + $0x90] sm:$0xf] %v249
                %v251 = vld [vmem:[%s175 + $0x128] sm:$0xf]
                %252 = vst [vmem:[%s176 + $0x94] sm:$0xf] %v251
                %v253 = vld [vmem:[%s175 + $0x130] sm:$0xf]
                %254 = vst [vmem:[%s176 + $0x98] sm:$0xf] %v253
                %v255 = vld [vmem:[%s175 + $0x138] sm:$0xf]
                %256 = vst [vmem:[%s176 + $0x9c] sm:$0xf] %v255
                %v257 = vld [vmem:[%s175 + $0x140] sm:$0xf]
                %258 = vst [vmem:[%s176 + $0xa0] sm:$0xf] %v257
                %v259 = vld [vmem:[%s175 + $0x148] sm:$0xf]
                %260 = vst [vmem:[%s176 + $0xa4] sm:$0xf] %v259
                %v261 = vld [vmem:[%s175 + $0x150] sm:$0xf]
                %262 = vst [vmem:[%s176 + $0xa8] sm:$0xf] %v261
                %v263 = vld [vmem:[%s175 + $0x158] sm:$0xf]
                %264 = vst [vmem:[%s176 + $0xac] sm:$0xf] %v263
                %v265 = vld [vmem:[%s175 + $0x160] sm:$0xf]
                %266 = vst [vmem:[%s176 + $0xb0] sm:$0xf] %v265
                %v267 = vld [vmem:[%s175 + $0x168] sm:$0xf]
                %268 = vst [vmem:[%s176 + $0xb4] sm:$0xf] %v267
                %v269 = vld [vmem:[%s175 + $0x170] sm:$0xf]
                %270 = vst [vmem:[%s176 + $0xb8] sm:$0xf] %v269
                %v271 = vld [vmem:[%s175 + $0x178] sm:$0xf]
                %272 = vst [vmem:[%s176 + $0xbc] sm:$0xf] %v271
                %v273 = vld [vmem:[%s175 + $0x180] sm:$0xf]
                %274 = vst [vmem:[%s176 + $0xc0] sm:$0xf] %v273
                %v275 = vld [vmem:[%s175 + $0x188] sm:$0xf]
                %276 = vst [vmem:[%s176 + $0xc4] sm:$0xf] %v275
                %v277 = vld [vmem:[%s175 + $0x190] sm:$0xf]
                %278 = vst [vmem:[%s176 + $0xc8] sm:$0xf] %v277
                %v279 = vld [vmem:[%s175 + $0x198] sm:$0xf]
                %280 = vst [vmem:[%s176 + $0xcc] sm:$0xf] %v279
                %v281 = vld [vmem:[%s175 + $0x1a0] sm:$0xf]
                %282 = vst [vmem:[%s176 + $0xd0] sm:$0xf] %v281
                %v283 = vld [vmem:[%s175 + $0x1a8] sm:$0xf]
                %284 = vst [vmem:[%s176 + $0xd4] sm:$0xf] %v283
                %v285 = vld [vmem:[%s175 + $0x1b0] sm:$0xf]
                %286 = vst [vmem:[%s176 + $0xd8] sm:$0xf] %v285
                %v287 = vld [vmem:[%s175 + $0x1b8] sm:$0xf]
                %288 = vst [vmem:[%s176 + $0xdc] sm:$0xf] %v287
                %v289 = vld [vmem:[%s175 + $0x1c0] sm:$0xf]
                %290 = vst [vmem:[%s176 + $0xe0] sm:$0xf] %v289
                %v291 = vld [vmem:[%s175 + $0x1c8] sm:$0xf]
                %292 = vst [vmem:[%s176 + $0xe4] sm:$0xf] %v291
                %v293 = vld [vmem:[%s175 + $0x1d0] sm:$0xf]
                %294 = vst [vmem:[%s176 + $0xe8] sm:$0xf] %v293
                %v295 = vld [vmem:[%s175 + $0x1d8] sm:$0xf]
                %296 = vst [vmem:[%s176 + $0xec] sm:$0xf] %v295
                %v297 = vld [vmem:[%s175 + $0x1e0] sm:$0xf]
                %298 = vst [vmem:[%s176 + $0xf0] sm:$0xf] %v297
                %v299 = vld [vmem:[%s175 + $0x1e8] sm:$0xf]
                %300 = vst [vmem:[%s176 + $0xf4] sm:$0xf] %v299
                %v301 = vld [vmem:[%s175 + $0x1f0] sm:$0xf]
                %302 = vst [vmem:[%s176 + $0xf8] sm:$0xf] %v301
                %v303 = vld [vmem:[%s175 + $0x1f8] sm:$0xf]
                %304 = vst [vmem:[%s176 + $0xfc] sm:$0xf] %v303
                %v305 = vld [vmem:[%s175 + $0x200] sm:$0xf]
                %306 = vst [vmem:[%s176 + $0x100] sm:$0xf] %v305
                %v307 = vld [vmem:[%s175 + $0x208] sm:$0xf]
                %308 = vst [vmem:[%s176 + $0x104] sm:$0xf] %v307
                %v309 = vld [vmem:[%s175 + $0x210] sm:$0xf]
                %310 = vst [vmem:[%s176 + $0x108] sm:$0xf] %v309
                %v311 = vld [vmem:[%s175 + $0x218] sm:$0xf]
                %312 = vst [vmem:[%s176 + $0x10c] sm:$0xf] %v311
                %v313 = vld [vmem:[%s175 + $0x220] sm:$0xf]
                %314 = vst [vmem:[%s176 + $0x110] sm:$0xf] %v313
                %v315 = vld [vmem:[%s175 + $0x228] sm:$0xf]
                %316 = vst [vmem:[%s176 + $0x114] sm:$0xf] %v315
                %v317 = vld [vmem:[%s175 + $0x230] sm:$0xf]
                %318 = vst [vmem:[%s176 + $0x118] sm:$0xf] %v317
                %v319 = vld [vmem:[%s175 + $0x238] sm:$0xf]
                %320 = vst [vmem:[%s176 + $0x11c] sm:$0xf] %v319
                %v321 = vld [vmem:[%s175 + $0x240] sm:$0xf]
                %322 = vst [vmem:[%s176 + $0x120] sm:$0xf] %v321
                %v323 = vld [vmem:[%s175 + $0x248] sm:$0xf]
                %324 = vst [vmem:[%s176 + $0x124] sm:$0xf] %v323
                %v325 = vld [vmem:[%s175 + $0x250] sm:$0xf]
                %326 = vst [vmem:[%s176 + $0x128] sm:$0xf] %v325
                %v327 = vld [vmem:[%s175 + $0x258] sm:$0xf]
                %328 = vst [vmem:[%s176 + $0x12c] sm:$0xf] %v327
                %v329 = vld [vmem:[%s175 + $0x260] sm:$0xf]
                %330 = vst [vmem:[%s176 + $0x130] sm:$0xf] %v329
                %v331 = vld [vmem:[%s175 + $0x268] sm:$0xf]
                %332 = vst [vmem:[%s176 + $0x134] sm:$0xf] %v331
                %v333 = vld [vmem:[%s175 + $0x270] sm:$0xf]
                %334 = vst [vmem:[%s176 + $0x138] sm:$0xf] %v333
                %v335 = vld [vmem:[%s175 + $0x278] sm:$0xf]
                %336 = vst [vmem:[%s176 + $0x13c] sm:$0xf] %v335
                %v337 = vld [vmem:[%s175 + $0x280] sm:$0xf]
                %338 = vst [vmem:[%s176 + $0x140] sm:$0xf] %v337
                %v339 = vld [vmem:[%s175 + $0x288] sm:$0xf]
                %340 = vst [vmem:[%s176 + $0x144] sm:$0xf] %v339
                %v341 = vld [vmem:[%s175 + $0x290] sm:$0xf]
                %342 = vst [vmem:[%s176 + $0x148] sm:$0xf] %v341
                %v343 = vld [vmem:[%s175 + $0x298] sm:$0xf]
                %344 = vst [vmem:[%s176 + $0x14c] sm:$0xf] %v343
                %v345 = vld [vmem:[%s175 + $0x2a0] sm:$0xf]
                %346 = vst [vmem:[%s176 + $0x150] sm:$0xf] %v345
                %v347 = vld [vmem:[%s175 + $0x2a8] sm:$0xf]
                %348 = vst [vmem:[%s176 + $0x154] sm:$0xf] %v347
                %v349 = vld [vmem:[%s175 + $0x2b0] sm:$0xf]
                %350 = vst [vmem:[%s176 + $0x158] sm:$0xf] %v349
                %v351 = vld [vmem:[%s175 + $0x2b8] sm:$0xf]
                %352 = vst [vmem:[%s176 + $0x15c] sm:$0xf] %v351
                %v353 = vld [vmem:[%s175 + $0x2c0] sm:$0xf]
                %354 = vst [vmem:[%s176 + $0x160] sm:$0xf] %v353
                %v355 = vld [vmem:[%s175 + $0x2c8] sm:$0xf]
                %356 = vst [vmem:[%s176 + $0x164] sm:$0xf] %v355
                %v357 = vld [vmem:[%s175 + $0x2d0] sm:$0xf]
                %358 = vst [vmem:[%s176 + $0x168] sm:$0xf] %v357
                %v359 = vld [vmem:[%s175 + $0x2d8] sm:$0xf]
                %360 = vst [vmem:[%s176 + $0x16c] sm:$0xf] %v359
                %v361 = vld [vmem:[%s175 + $0x2e0] sm:$0xf]
                %362 = vst [vmem:[%s176 + $0x170] sm:$0xf] %v361
                %v363 = vld [vmem:[%s175 + $0x2e8] sm:$0xf]
                %364 = vst [vmem:[%s176 + $0x174] sm:$0xf] %v363
                %v365 = vld [vmem:[%s175 + $0x2f0] sm:$0xf]
                %366 = vst [vmem:[%s176 + $0x178] sm:$0xf] %v365
                %v367 = vld [vmem:[%s175 + $0x2f8] sm:$0xf]
                %368 = vst [vmem:[%s176 + $0x17c] sm:$0xf] %v367
                %v369 = vld [vmem:[%s175 + $0x300] sm:$0xf]
                %370 = vst [vmem:[%s176 + $0x180] sm:$0xf] %v369
                %v371 = vld [vmem:[%s175 + $0x308] sm:$0xf]
                %372 = vst [vmem:[%s176 + $0x184] sm:$0xf] %v371
                %v373 = vld [vmem:[%s175 + $0x310] sm:$0xf]
                %374 = vst [vmem:[%s176 + $0x188] sm:$0xf] %v373
                %v375 = vld [vmem:[%s175 + $0x318] sm:$0xf]
                %376 = vst [vmem:[%s176 + $0x18c] sm:$0xf] %v375
                %v377 = vld [vmem:[%s175 + $0x320] sm:$0xf]
                %378 = vst [vmem:[%s176 + $0x190] sm:$0xf] %v377
                %v379 = vld [vmem:[%s175 + $0x328] sm:$0xf]
                %380 = vst [vmem:[%s176 + $0x194] sm:$0xf] %v379
                %v381 = vld [vmem:[%s175 + $0x330] sm:$0xf]
                %382 = vst [vmem:[%s176 + $0x198] sm:$0xf] %v381
                %v383 = vld [vmem:[%s175 + $0x338] sm:$0xf]
                %384 = vst [vmem:[%s176 + $0x19c] sm:$0xf] %v383
                %v385 = vld [vmem:[%s175 + $0x340] sm:$0xf]
                %386 = vst [vmem:[%s176 + $0x1a0] sm:$0xf] %v385
                %v387 = vld [vmem:[%s175 + $0x348] sm:$0xf]
                %388 = vst [vmem:[%s176 + $0x1a4] sm:$0xf] %v387
                %v389 = vld [vmem:[%s175 + $0x350] sm:$0xf]
                %390 = vst [vmem:[%s176 + $0x1a8] sm:$0xf] %v389
                %v391 = vld [vmem:[%s175 + $0x358] sm:$0xf]
                %392 = vst [vmem:[%s176 + $0x1ac] sm:$0xf] %v391
                %v393 = vld [vmem:[%s175 + $0x360] sm:$0xf]
                %394 = vst [vmem:[%s176 + $0x1b0] sm:$0xf] %v393
                %v395 = vld [vmem:[%s175 + $0x368] sm:$0xf]
                %396 = vst [vmem:[%s176 + $0x1b4] sm:$0xf] %v395
                %v397 = vld [vmem:[%s175 + $0x370] sm:$0xf]
                %398 = vst [vmem:[%s176 + $0x1b8] sm:$0xf] %v397
                %v399 = vld [vmem:[%s175 + $0x378] sm:$0xf]
                %400 = vst [vmem:[%s176 + $0x1bc] sm:$0xf] %v399
                %v401 = vld [vmem:[%s175 + $0x380] sm:$0xf]
                %402 = vst [vmem:[%s176 + $0x1c0] sm:$0xf] %v401
                %v403 = vld [vmem:[%s175 + $0x388] sm:$0xf]
                %404 = vst [vmem:[%s176 + $0x1c4] sm:$0xf] %v403
                %v405 = vld [vmem:[%s175 + $0x390] sm:$0xf]
                %406 = vst [vmem:[%s176 + $0x1c8] sm:$0xf] %v405
                %v407 = vld [vmem:[%s175 + $0x398] sm:$0xf]
                %408 = vst [vmem:[%s176 + $0x1cc] sm:$0xf] %v407
                %v409 = vld [vmem:[%s175 + $0x3a0] sm:$0xf]
                %410 = vst [vmem:[%s176 + $0x1d0] sm:$0xf] %v409
                %v411 = vld [vmem:[%s175 + $0x3a8] sm:$0xf]
                %412 = vst [vmem:[%s176 + $0x1d4] sm:$0xf] %v411
                %v413 = vld [vmem:[%s175 + $0x3b0] sm:$0xf]
                %414 = vst [vmem:[%s176 + $0x1d8] sm:$0xf] %v413
                %v415 = vld [vmem:[%s175 + $0x3b8] sm:$0xf]
                %416 = vst [vmem:[%s176 + $0x1dc] sm:$0xf] %v415
                %v417 = vld [vmem:[%s175 + $0x3c0] sm:$0xf]
                %418 = vst [vmem:[%s176 + $0x1e0] sm:$0xf] %v417
                %v419 = vld [vmem:[%s175 + $0x3c8] sm:$0xf]
                %420 = vst [vmem:[%s176 + $0x1e4] sm:$0xf] %v419
                %v421 = vld [vmem:[%s175 + $0x3d0] sm:$0xf]
                %422 = vst [vmem:[%s176 + $0x1e8] sm:$0xf] %v421
                %v423 = vld [vmem:[%s175 + $0x3d8] sm:$0xf]
                %424 = vst [vmem:[%s176 + $0x1ec] sm:$0xf] %v423
                %v425 = vld [vmem:[%s175 + $0x3e0] sm:$0xf]
                %426 = vst [vmem:[%s176 + $0x1f0] sm:$0xf] %v425
                %v427 = vld [vmem:[%s175 + $0x3e8] sm:$0xf]
                %428 = vst [vmem:[%s176 + $0x1f4] sm:$0xf] %v427
                %v429 = vld [vmem:[%s175 + $0x3f0] sm:$0xf]
                %430 = vst [vmem:[%s176 + $0x1f8] sm:$0xf] %v429
                %v431 = vld [vmem:[%s175 + $0x3f8] sm:$0xf]
                %432 = vst [vmem:[%s176 + $0x1fc] sm:$0xf] %v431
                %v433 = vld [vmem:[%s175 + $0x400] sm:$0xf]
                %434 = vst [vmem:[%s176 + $0x200] sm:$0xf] %v433
                %v435 = vld [vmem:[%s175 + $0x408] sm:$0xf]
                %436 = vst [vmem:[%s176 + $0x204] sm:$0xf] %v435
                %v437 = vld [vmem:[%s175 + $0x410] sm:$0xf]
                %438 = vst [vmem:[%s176 + $0x208] sm:$0xf] %v437
                %v439 = vld [vmem:[%s175 + $0x418] sm:$0xf]
                %440 = vst [vmem:[%s176 + $0x20c] sm:$0xf] %v439
                %v441 = vld [vmem:[%s175 + $0x420] sm:$0xf]
                %442 = vst [vmem:[%s176 + $0x210] sm:$0xf] %v441
                %v443 = vld [vmem:[%s175 + $0x428] sm:$0xf]
                %444 = vst [vmem:[%s176 + $0x214] sm:$0xf] %v443
                %v445 = vld [vmem:[%s175 + $0x430] sm:$0xf]
                %446 = vst [vmem:[%s176 + $0x218] sm:$0xf] %v445
                %v447 = vld [vmem:[%s175 + $0x438] sm:$0xf]
                %448 = vst [vmem:[%s176 + $0x21c] sm:$0xf] %v447
                %v449 = vld [vmem:[%s175 + $0x440] sm:$0xf]
                %450 = vst [vmem:[%s176 + $0x220] sm:$0xf] %v449
                %v451 = vld [vmem:[%s175 + $0x448] sm:$0xf]
                %452 = vst [vmem:[%s176 + $0x224] sm:$0xf] %v451
                %v453 = vld [vmem:[%s175 + $0x450] sm:$0xf]
                %454 = vst [vmem:[%s176 + $0x228] sm:$0xf] %v453
                %v455 = vld [vmem:[%s175 + $0x458] sm:$0xf]
                %456 = vst [vmem:[%s176 + $0x22c] sm:$0xf] %v455
                %v457 = vld [vmem:[%s175 + $0x460] sm:$0xf]
                %458 = vst [vmem:[%s176 + $0x230] sm:$0xf] %v457
                %v459 = vld [vmem:[%s175 + $0x468] sm:$0xf]
                %460 = vst [vmem:[%s176 + $0x234] sm:$0xf] %v459
                %v461 = vld [vmem:[%s175 + $0x470] sm:$0xf]
                %462 = vst [vmem:[%s176 + $0x238] sm:$0xf] %v461
                %v463 = vld [vmem:[%s175 + $0x478] sm:$0xf]
                %464 = vst [vmem:[%s176 + $0x23c] sm:$0xf] %v463
                %v465 = vld [vmem:[%s175 + $0x480] sm:$0xf]
                %466 = vst [vmem:[%s176 + $0x240] sm:$0xf] %v465
                %v467 = vld [vmem:[%s175 + $0x488] sm:$0xf]
                %468 = vst [vmem:[%s176 + $0x244] sm:$0xf] %v467
                %v469 = vld [vmem:[%s175 + $0x490] sm:$0xf]
                %470 = vst [vmem:[%s176 + $0x248] sm:$0xf] %v469
                %v471 = vld [vmem:[%s175 + $0x498] sm:$0xf]
                %472 = vst [vmem:[%s176 + $0x24c] sm:$0xf] %v471
                %v473 = vld [vmem:[%s175 + $0x4a0] sm:$0xf]
                %474 = vst [vmem:[%s176 + $0x250] sm:$0xf] %v473
                %v475 = vld [vmem:[%s175 + $0x4a8] sm:$0xf]
                %476 = vst [vmem:[%s176 + $0x254] sm:$0xf] %v475
                %v477 = vld [vmem:[%s175 + $0x4b0] sm:$0xf]
                %478 = vst [vmem:[%s176 + $0x258] sm:$0xf] %v477
                %v479 = vld [vmem:[%s175 + $0x4b8] sm:$0xf]
                %480 = vst [vmem:[%s176 + $0x25c] sm:$0xf] %v479
                %v481 = vld [vmem:[%s175 + $0x4c0] sm:$0xf]
                %482 = vst [vmem:[%s176 + $0x260] sm:$0xf] %v481
                %v483 = vld [vmem:[%s175 + $0x4c8] sm:$0xf]
                %484 = vst [vmem:[%s176 + $0x264] sm:$0xf] %v483
                %v485 = vld [vmem:[%s175 + $0x4d0] sm:$0xf]
                %486 = vst [vmem:[%s176 + $0x268] sm:$0xf] %v485
                %v487 = vld [vmem:[%s175 + $0x4d8] sm:$0xf]
                %488 = vst [vmem:[%s176 + $0x26c] sm:$0xf] %v487
                %v489 = vld [vmem:[%s175 + $0x4e0] sm:$0xf]
                %490 = vst [vmem:[%s176 + $0x270] sm:$0xf] %v489
                %v491 = vld [vmem:[%s175 + $0x4e8] sm:$0xf]
                %492 = vst [vmem:[%s176 + $0x274] sm:$0xf] %v491
                %v493 = vld [vmem:[%s175 + $0x4f0] sm:$0xf]
                %494 = vst [vmem:[%s176 + $0x278] sm:$0xf] %v493
                %v495 = vld [vmem:[%s175 + $0x4f8] sm:$0xf]
                %496 = vst [vmem:[%s176 + $0x27c] sm:$0xf] %v495
                %v497 = vld [vmem:[%s175 + $0x500] sm:$0xf]
                %498 = vst [vmem:[%s176 + $0x280] sm:$0xf] %v497
                %v499 = vld [vmem:[%s175 + $0x508] sm:$0xf]
                %500 = vst [vmem:[%s176 + $0x284] sm:$0xf] %v499
                %v501 = vld [vmem:[%s175 + $0x510] sm:$0xf]
                %502 = vst [vmem:[%s176 + $0x288] sm:$0xf] %v501
                %v503 = vld [vmem:[%s175 + $0x518] sm:$0xf]
                %504 = vst [vmem:[%s176 + $0x28c] sm:$0xf] %v503
                %v505 = vld [vmem:[%s175 + $0x520] sm:$0xf]
                %506 = vst [vmem:[%s176 + $0x290] sm:$0xf] %v505
                %v507 = vld [vmem:[%s175 + $0x528] sm:$0xf]
                %508 = vst [vmem:[%s176 + $0x294] sm:$0xf] %v507
                %v509 = vld [vmem:[%s175 + $0x530] sm:$0xf]
                %510 = vst [vmem:[%s176 + $0x298] sm:$0xf] %v509
                %v511 = vld [vmem:[%s175 + $0x538] sm:$0xf]
                %512 = vst [vmem:[%s176 + $0x29c] sm:$0xf] %v511
                %v513 = vld [vmem:[%s175 + $0x540] sm:$0xf]
                %514 = vst [vmem:[%s176 + $0x2a0] sm:$0xf] %v513
                %v515 = vld [vmem:[%s175 + $0x548] sm:$0xf]
                %516 = vst [vmem:[%s176 + $0x2a4] sm:$0xf] %v515
                %v517 = vld [vmem:[%s175 + $0x550] sm:$0xf]
                %518 = vst [vmem:[%s176 + $0x2a8] sm:$0xf] %v517
                %v519 = vld [vmem:[%s175 + $0x558] sm:$0xf]
                %520 = vst [vmem:[%s176 + $0x2ac] sm:$0xf] %v519
                %v521 = vld [vmem:[%s175 + $0x560] sm:$0xf]
                %522 = vst [vmem:[%s176 + $0x2b0] sm:$0xf] %v521
                %v523 = vld [vmem:[%s175 + $0x568] sm:$0xf]
                %524 = vst [vmem:[%s176 + $0x2b4] sm:$0xf] %v523
                %v525 = vld [vmem:[%s175 + $0x570] sm:$0xf]
                %526 = vst [vmem:[%s176 + $0x2b8] sm:$0xf] %v525
                %v527 = vld [vmem:[%s175 + $0x578] sm:$0xf]
                %528 = vst [vmem:[%s176 + $0x2bc] sm:$0xf] %v527
                %v529 = vld [vmem:[%s175 + $0x580] sm:$0xf]
                %530 = vst [vmem:[%s176 + $0x2c0] sm:$0xf] %v529
                %v531 = vld [vmem:[%s175 + $0x588] sm:$0xf]
                %532 = vst [vmem:[%s176 + $0x2c4] sm:$0xf] %v531
                %v533 = vld [vmem:[%s175 + $0x590] sm:$0xf]
                %534 = vst [vmem:[%s176 + $0x2c8] sm:$0xf] %v533
                %v535 = vld [vmem:[%s175 + $0x598] sm:$0xf]
                %536 = vst [vmem:[%s176 + $0x2cc] sm:$0xf] %v535
                %v537 = vld [vmem:[%s175 + $0x5a0] sm:$0xf]
                %538 = vst [vmem:[%s176 + $0x2d0] sm:$0xf] %v537
                %v539 = vld [vmem:[%s175 + $0x5a8] sm:$0xf]
                %540 = vst [vmem:[%s176 + $0x2d4] sm:$0xf] %v539
                %v541 = vld [vmem:[%s175 + $0x5b0] sm:$0xf]
                %542 = vst [vmem:[%s176 + $0x2d8] sm:$0xf] %v541
                %v543 = vld [vmem:[%s175 + $0x5b8] sm:$0xf]
                %544 = vst [vmem:[%s176 + $0x2dc] sm:$0xf] %v543
                %v545 = vld [vmem:[%s175 + $0x5c0] sm:$0xf]
                %546 = vst [vmem:[%s176 + $0x2e0] sm:$0xf] %v545
                %v547 = vld [vmem:[%s175 + $0x5c8] sm:$0xf]
                %548 = vst [vmem:[%s176 + $0x2e4] sm:$0xf] %v547
                %v549 = vld [vmem:[%s175 + $0x5d0] sm:$0xf]
                %550 = vst [vmem:[%s176 + $0x2e8] sm:$0xf] %v549
                %v551 = vld [vmem:[%s175 + $0x5d8] sm:$0xf]
                %552 = vst [vmem:[%s176 + $0x2ec] sm:$0xf] %v551
                %v553 = vld [vmem:[%s175 + $0x5e0] sm:$0xf]
                %554 = vst [vmem:[%s176 + $0x2f0] sm:$0xf] %v553
                %v555 = vld [vmem:[%s175 + $0x5e8] sm:$0xf]
                %556 = vst [vmem:[%s176 + $0x2f4] sm:$0xf] %v555
                %v557 = vld [vmem:[%s175 + $0x5f0] sm:$0xf]
                %558 = vst [vmem:[%s176 + $0x2f8] sm:$0xf] %v557
                %v559 = vld [vmem:[%s175 + $0x5f8] sm:$0xf]
                %560 = vst [vmem:[%s176 + $0x2fc] sm:$0xf] %v559
                %v561 = vld [vmem:[%s175 + $0x600] sm:$0xf]
                %562 = vst [vmem:[%s176 + $0x300] sm:$0xf] %v561
                %v563 = vld [vmem:[%s175 + $0x608] sm:$0xf]
                %564 = vst [vmem:[%s176 + $0x304] sm:$0xf] %v563
                %v565 = vld [vmem:[%s175 + $0x610] sm:$0xf]
                %566 = vst [vmem:[%s176 + $0x308] sm:$0xf] %v565
                %v567 = vld [vmem:[%s175 + $0x618] sm:$0xf]
                %568 = vst [vmem:[%s176 + $0x30c] sm:$0xf] %v567
                %v569 = vld [vmem:[%s175 + $0x620] sm:$0xf]
                %570 = vst [vmem:[%s176 + $0x310] sm:$0xf] %v569
                %v571 = vld [vmem:[%s175 + $0x628] sm:$0xf]
                %572 = vst [vmem:[%s176 + $0x314] sm:$0xf] %v571
                %v573 = vld [vmem:[%s175 + $0x630] sm:$0xf]
                %574 = vst [vmem:[%s176 + $0x318] sm:$0xf] %v573
                %v575 = vld [vmem:[%s175 + $0x638] sm:$0xf]
                %576 = vst [vmem:[%s176 + $0x31c] sm:$0xf] %v575
                %v577 = vld [vmem:[%s175 + $0x640] sm:$0xf]
                %578 = vst [vmem:[%s176 + $0x320] sm:$0xf] %v577
                %v579 = vld [vmem:[%s175 + $0x648] sm:$0xf]
                %580 = vst [vmem:[%s176 + $0x324] sm:$0xf] %v579
                %v581 = vld [vmem:[%s175 + $0x650] sm:$0xf]
                %582 = vst [vmem:[%s176 + $0x328] sm:$0xf] %v581
                %v583 = vld [vmem:[%s175 + $0x658] sm:$0xf]
                %584 = vst [vmem:[%s176 + $0x32c] sm:$0xf] %v583
                %v585 = vld [vmem:[%s175 + $0x660] sm:$0xf]
                %586 = vst [vmem:[%s176 + $0x330] sm:$0xf] %v585
                %v587 = vld [vmem:[%s175 + $0x668] sm:$0xf]
                %588 = vst [vmem:[%s176 + $0x334] sm:$0xf] %v587
                %v589 = vld [vmem:[%s175 + $0x670] sm:$0xf]
                %590 = vst [vmem:[%s176 + $0x338] sm:$0xf] %v589
                %v591 = vld [vmem:[%s175 + $0x678] sm:$0xf]
                %592 = vst [vmem:[%s176 + $0x33c] sm:$0xf] %v591
                %v593 = vld [vmem:[%s175 + $0x680] sm:$0xf]
                %594 = vst [vmem:[%s176 + $0x340] sm:$0xf] %v593
                %v595 = vld [vmem:[%s175 + $0x688] sm:$0xf]
                %596 = vst [vmem:[%s176 + $0x344] sm:$0xf] %v595
                %v597 = vld [vmem:[%s175 + $0x690] sm:$0xf]
                %598 = vst [vmem:[%s176 + $0x348] sm:$0xf] %v597
                %v599 = vld [vmem:[%s175 + $0x698] sm:$0xf]
                %600 = vst [vmem:[%s176 + $0x34c] sm:$0xf] %v599
                %v601 = vld [vmem:[%s175 + $0x6a0] sm:$0xf]
                %602 = vst [vmem:[%s176 + $0x350] sm:$0xf] %v601
                %v603 = vld [vmem:[%s175 + $0x6a8] sm:$0xf]
                %604 = vst [vmem:[%s176 + $0x354] sm:$0xf] %v603
                %v605 = vld [vmem:[%s175 + $0x6b0] sm:$0xf]
                %606 = vst [vmem:[%s176 + $0x358] sm:$0xf] %v605
                %v607 = vld [vmem:[%s175 + $0x6b8] sm:$0xf]
                %608 = vst [vmem:[%s176 + $0x35c] sm:$0xf] %v607
                %v609 = vld [vmem:[%s175 + $0x6c0] sm:$0xf]
                %610 = vst [vmem:[%s176 + $0x360] sm:$0xf] %v609
                %v611 = vld [vmem:[%s175 + $0x6c8] sm:$0xf]
                %612 = vst [vmem:[%s176 + $0x364] sm:$0xf] %v611
                %v613 = vld [vmem:[%s175 + $0x6d0] sm:$0xf]
                %614 = vst [vmem:[%s176 + $0x368] sm:$0xf] %v613
                %v615 = vld [vmem:[%s175 + $0x6d8] sm:$0xf]
                %616 = vst [vmem:[%s176 + $0x36c] sm:$0xf] %v615
                %v617 = vld [vmem:[%s175 + $0x6e0] sm:$0xf]
                %618 = vst [vmem:[%s176 + $0x370] sm:$0xf] %v617
                %v619 = vld [vmem:[%s175 + $0x6e8] sm:$0xf]
                %620 = vst [vmem:[%s176 + $0x374] sm:$0xf] %v619
                %v621 = vld [vmem:[%s175 + $0x6f0] sm:$0xf]
                %622 = vst [vmem:[%s176 + $0x378] sm:$0xf] %v621
                %v623 = vld [vmem:[%s175 + $0x6f8] sm:$0xf]
                %624 = vst [vmem:[%s176 + $0x37c] sm:$0xf] %v623
                %v625 = vld [vmem:[%s175 + $0x700] sm:$0xf]
                %626 = vst [vmem:[%s176 + $0x380] sm:$0xf] %v625
                %v627 = vld [vmem:[%s175 + $0x708] sm:$0xf]
                %628 = vst [vmem:[%s176 + $0x384] sm:$0xf] %v627
                %v629 = vld [vmem:[%s175 + $0x710] sm:$0xf]
                %630 = vst [vmem:[%s176 + $0x388] sm:$0xf] %v629
                %v631 = vld [vmem:[%s175 + $0x718] sm:$0xf]
                %632 = vst [vmem:[%s176 + $0x38c] sm:$0xf] %v631
                %v633 = vld [vmem:[%s175 + $0x720] sm:$0xf]
                %634 = vst [vmem:[%s176 + $0x390] sm:$0xf] %v633
                %v635 = vld [vmem:[%s175 + $0x728] sm:$0xf]
                %636 = vst [vmem:[%s176 + $0x394] sm:$0xf] %v635
                %v637 = vld [vmem:[%s175 + $0x730] sm:$0xf]
                %638 = vst [vmem:[%s176 + $0x398] sm:$0xf] %v637
                %v639 = vld [vmem:[%s175 + $0x738] sm:$0xf]
                %640 = vst [vmem:[%s176 + $0x39c] sm:$0xf] %v639
                %v641 = vld [vmem:[%s175 + $0x740] sm:$0xf]
                %642 = vst [vmem:[%s176 + $0x3a0] sm:$0xf] %v641
                %v643 = vld [vmem:[%s175 + $0x748] sm:$0xf]
                %644 = vst [vmem:[%s176 + $0x3a4] sm:$0xf] %v643
                %v645 = vld [vmem:[%s175 + $0x750] sm:$0xf]
                %646 = vst [vmem:[%s176 + $0x3a8] sm:$0xf] %v645
                %v647 = vld [vmem:[%s175 + $0x758] sm:$0xf]
                %648 = vst [vmem:[%s176 + $0x3ac] sm:$0xf] %v647
                %v649 = vld [vmem:[%s175 + $0x760] sm:$0xf]
                %650 = vst [vmem:[%s176 + $0x3b0] sm:$0xf] %v649
                %v651 = vld [vmem:[%s175 + $0x768] sm:$0xf]
                %652 = vst [vmem:[%s176 + $0x3b4] sm:$0xf] %v651
                %v653 = vld [vmem:[%s175 + $0x770] sm:$0xf]
                %654 = vst [vmem:[%s176 + $0x3b8] sm:$0xf] %v653
                %v655 = vld [vmem:[%s175 + $0x778] sm:$0xf]
                %656 = vst [vmem:[%s176 + $0x3bc] sm:$0xf] %v655
                %v657 = vld [vmem:[%s175 + $0x780] sm:$0xf]
                %658 = vst [vmem:[%s176 + $0x3c0] sm:$0xf] %v657
                %v659 = vld [vmem:[%s175 + $0x788] sm:$0xf]
                %660 = vst [vmem:[%s176 + $0x3c4] sm:$0xf] %v659
                %v661 = vld [vmem:[%s175 + $0x790] sm:$0xf]
                %662 = vst [vmem:[%s176 + $0x3c8] sm:$0xf] %v661
                %v663 = vld [vmem:[%s175 + $0x798] sm:$0xf]
                %664 = vst [vmem:[%s176 + $0x3cc] sm:$0xf] %v663
                %v665 = vld [vmem:[%s175 + $0x7a0] sm:$0xf]
                %666 = vst [vmem:[%s176 + $0x3d0] sm:$0xf] %v665
                %v667 = vld [vmem:[%s175 + $0x7a8] sm:$0xf]
                %668 = vst [vmem:[%s176 + $0x3d4] sm:$0xf] %v667
                %v669 = vld [vmem:[%s175 + $0x7b0] sm:$0xf]
                %670 = vst [vmem:[%s176 + $0x3d8] sm:$0xf] %v669
                %v671 = vld [vmem:[%s175 + $0x7b8] sm:$0xf]
                %672 = vst [vmem:[%s176 + $0x3dc] sm:$0xf] %v671
                %v673 = vld [vmem:[%s175 + $0x7c0] sm:$0xf]
                %674 = vst [vmem:[%s176 + $0x3e0] sm:$0xf] %v673
                %v675 = vld [vmem:[%s175 + $0x7c8] sm:$0xf]
                %676 = vst [vmem:[%s176 + $0x3e4] sm:$0xf] %v675
                %v677 = vld [vmem:[%s175 + $0x7d0] sm:$0xf]
                %678 = vst [vmem:[%s176 + $0x3e8] sm:$0xf] %v677
                %v679 = vld [vmem:[%s175 + $0x7d8] sm:$0xf]
                %680 = vst [vmem:[%s176 + $0x3ec] sm:$0xf] %v679
                %v681 = vld [vmem:[%s175 + $0x7e0] sm:$0xf]
                %682 = vst [vmem:[%s176 + $0x3f0] sm:$0xf] %v681
                %v683 = vld [vmem:[%s175 + $0x7e8] sm:$0xf]
                %684 = vst [vmem:[%s176 + $0x3f4] sm:$0xf] %v683
                %v685 = vld [vmem:[%s175 + $0x7f0] sm:$0xf]
                %686 = vst [vmem:[%s176 + $0x3f8] sm:$0xf] %v685
                %v687 = vld [vmem:[%s175 + $0x7f8] sm:$0xf]
                %688 = vst [vmem:[%s176 + $0x3fc] sm:$0xf] %v687
                %v689 = vld [vmem:[%s175 + $0x800] sm:$0xf]
                %690 = vst [vmem:[%s176 + $0x400] sm:$0xf] %v689
                %v691 = vld [vmem:[%s175 + $0x808] sm:$0xf]
                %692 = vst [vmem:[%s176 + $0x404] sm:$0xf] %v691
                %v693 = vld [vmem:[%s175 + $0x810] sm:$0xf]
                %694 = vst [vmem:[%s176 + $0x408] sm:$0xf] %v693
                %v695 = vld [vmem:[%s175 + $0x818] sm:$0xf]
                %696 = vst [vmem:[%s176 + $0x40c] sm:$0xf] %v695
                %v697 = vld [vmem:[%s175 + $0x820] sm:$0xf]
                %698 = vst [vmem:[%s176 + $0x410] sm:$0xf] %v697
                %v699 = vld [vmem:[%s175 + $0x828] sm:$0xf]
                %700 = vst [vmem:[%s176 + $0x414] sm:$0xf] %v699
                %v701 = vld [vmem:[%s175 + $0x830] sm:$0xf]
                %702 = vst [vmem:[%s176 + $0x418] sm:$0xf] %v701
                %v703 = vld [vmem:[%s175 + $0x838] sm:$0xf]
                %704 = vst [vmem:[%s176 + $0x41c] sm:$0xf] %v703
                %v705 = vld [vmem:[%s175 + $0x840] sm:$0xf]
                %706 = vst [vmem:[%s176 + $0x420] sm:$0xf] %v705
                %v707 = vld [vmem:[%s175 + $0x848] sm:$0xf]
                %708 = vst [vmem:[%s176 + $0x424] sm:$0xf] %v707
                %v709 = vld [vmem:[%s175 + $0x850] sm:$0xf]
                %710 = vst [vmem:[%s176 + $0x428] sm:$0xf] %v709
                %v711 = vld [vmem:[%s175 + $0x858] sm:$0xf]
                %712 = vst [vmem:[%s176 + $0x42c] sm:$0xf] %v711
                %v713 = vld [vmem:[%s175 + $0x860] sm:$0xf]
                %714 = vst [vmem:[%s176 + $0x430] sm:$0xf] %v713
                %v715 = vld [vmem:[%s175 + $0x868] sm:$0xf]
                %716 = vst [vmem:[%s176 + $0x434] sm:$0xf] %v715
                %v717 = vld [vmem:[%s175 + $0x870] sm:$0xf]
                %718 = vst [vmem:[%s176 + $0x438] sm:$0xf] %v717
                %v719 = vld [vmem:[%s175 + $0x878] sm:$0xf]
                %720 = vst [vmem:[%s176 + $0x43c] sm:$0xf] %v719
                %v721 = vld [vmem:[%s175 + $0x880] sm:$0xf]
                %722 = vst [vmem:[%s176 + $0x440] sm:$0xf] %v721
                %v723 = vld [vmem:[%s175 + $0x888] sm:$0xf]
                %724 = vst [vmem:[%s176 + $0x444] sm:$0xf] %v723
                %v725 = vld [vmem:[%s175 + $0x890] sm:$0xf]
                %726 = vst [vmem:[%s176 + $0x448] sm:$0xf] %v725
                %v727 = vld [vmem:[%s175 + $0x898] sm:$0xf]
                %728 = vst [vmem:[%s176 + $0x44c] sm:$0xf] %v727
                %v729 = vld [vmem:[%s175 + $0x8a0] sm:$0xf]
                %730 = vst [vmem:[%s176 + $0x450] sm:$0xf] %v729
                %v731 = vld [vmem:[%s175 + $0x8a8] sm:$0xf]
                %732 = vst [vmem:[%s176 + $0x454] sm:$0xf] %v731
                %v733 = vld [vmem:[%s175 + $0x8b0] sm:$0xf]
                %734 = vst [vmem:[%s176 + $0x458] sm:$0xf] %v733
                %v735 = vld [vmem:[%s175 + $0x8b8] sm:$0xf]
                %736 = vst [vmem:[%s176 + $0x45c] sm:$0xf] %v735
                %v737 = vld [vmem:[%s175 + $0x8c0] sm:$0xf]
                %738 = vst [vmem:[%s176 + $0x460] sm:$0xf] %v737
                %v739 = vld [vmem:[%s175 + $0x8c8] sm:$0xf]
                %740 = vst [vmem:[%s176 + $0x464] sm:$0xf] %v739
                %v741 = vld [vmem:[%s175 + $0x8d0] sm:$0xf]
                %742 = vst [vmem:[%s176 + $0x468] sm:$0xf] %v741
                %v743 = vld [vmem:[%s175 + $0x8d8] sm:$0xf]
                %744 = vst [vmem:[%s176 + $0x46c] sm:$0xf] %v743
                %v745 = vld [vmem:[%s175 + $0x8e0] sm:$0xf]
                %746 = vst [vmem:[%s176 + $0x470] sm:$0xf] %v745
                %v747 = vld [vmem:[%s175 + $0x8e8] sm:$0xf]
                %748 = vst [vmem:[%s176 + $0x474] sm:$0xf] %v747
                %v749 = vld [vmem:[%s175 + $0x8f0] sm:$0xf]
                %750 = vst [vmem:[%s176 + $0x478] sm:$0xf] %v749
                %v751 = vld [vmem:[%s175 + $0x8f8] sm:$0xf]
                %752 = vst [vmem:[%s176 + $0x47c] sm:$0xf] %v751
              $region41: #{pose_cnn_forward.13} parent=35 // loop_footer
                %s174 = sadd.s32 1, %s170
              $region42: #{pose_cnn_forward.13} parent=35 // loop_footer_branch
                %169 = sbr.rel target = $region38
              $region43: #{pose_cnn_forward.13} parent=35 // loop_exit
                _
            $region36: #{pose_cnn_forward.13} parent=27 // pred_fallthru
              _
          $region28: #{pose_cnn_forward.13} parent=23 // pred_fallthru
            _
          %1348 = vnop
        $region24: #{pose_cnn_forward.13} parent=19 // pred_fallthru
          _
        // Predicated region
        $region62: #{pose_cnn_forward.13} parent=19 // pred_check
          %p1349 = pneg %p93
        $region63: #{pose_cnn_forward.13} parent=19 // pred_check_branch
          %1351 = sbr.rel (%p1349) target = $region65
        $region64: #{pose_cnn_forward.13} parent=19 // pred_region
          %p1352 = scmp.lt.s32.totalorder %s17, 1
          %s1353 = scalar_select %p1352, %s17, 1
          %s1354 = scalar_lea.vmem %s2, %s1353
        $region65: #{pose_cnn_forward.13} parent=19 // pred_fallthru
          _
      $region20: #{pose_cnn_forward.13} parent=5 // pred_fallthru
        _
      %p1355 = scmp.le.s32.totalorder 1, %s9
      %p1356 = scmp.lt.s32.totalorder %s9, 3
      %p1357 = pnand %p1355, %p1356
      %p1358 = pneg %p1357
      // Predicated region
      $region66: #{pose_cnn_forward.13} parent=5 // pred_check
        _
      $region67: #{pose_cnn_forward.13} parent=5 // pred_check_branch
        %1360 = sbr.rel (%p1357) target = $region69
      $region68: #{pose_cnn_forward.13} parent=5 // pred_region
        %s1361 = ssub.s32 %s9, 1
        %s1362 = sand.u32 %s60, 1
        %s1363 = sand.u32 %s60, 1
        %s1364 = smul.addr %s1363, 1152
        %s1365 = scalar_lea.vmem [#allocation2], %s1364
        // Predicated region
        $region70: #{pose_cnn_forward.13} parent=68 // pred_check
          %p1366 = pneg %p73
        $region71: #{pose_cnn_forward.13} parent=68 // pred_check_branch
          %1368 = sbr.rel (%p1366) target = $region73
        $region72: #{pose_cnn_forward.13} parent=68 // pred_region
          _
        $region73: #{pose_cnn_forward.13} parent=68 // pred_fallthru
          _
        %p1369 = scmp.lt.s32.totalorder %s18, 0
        %s1370 = scalar_select %p1369, %s18, 0
        %s1371 = smul.addr %s1370, 18
        %s1372 = scalar_lea.vmem %s0, %s1371
        %p1373 = pneg %p47
        %p1374 = pneg %p44
        %s1375 = sand.u32 %s60, 1
        %s1376 = sand.u32 %s60, 1
        %s1377 = smul.addr %s1376, 1152
        %s1378 = scalar_lea.vmem [#allocation2], %s1377
        %p1379 = pneg %p73
        %p1380 = pneg %p70
        %p1381 = scmp.lt.s32.totalorder %s19, 1
        %s1382 = scalar_select %p1381, %s19, 1
        %s1383 = scalar_lea.vmem %s2, %s1382
        %p1384 = pneg %p99
        %p1385 = pneg %p96
        %p1386 = pneg %p127
        %p1387 = pneg %p124
        %p1388 = scmp.lt.s32.totalorder %s18, 0
        %s1389 = scalar_select %p1388, %s18, 0
        %p1390 = scmp.lt.s32.totalorder %s19, 1
        %s1391 = scalar_select %p1390, %s19, 1
        %s1392 = smul.addr %s1389, 2
        %s1393 = sadd.s32 %s1391, %s1392
        %s1394 = scalar_lea.vmem %s3, %s1393
        %p1395 = scmp.lt.s32.totalorder %s18, 0
        %s1396 = scalar_select %p1395, %s18, 0
        %s1397 = smul.addr %s1396, 18
        %s1398 = scalar_lea.vmem %s0, %s1397
        %p1399 = scmp.lt.s32.totalorder %s19, 1
        %s1400 = scalar_select %p1399, %s19, 1
        %s1401 = scalar_lea.vmem %s2, %s1400
        %p1402 = scmp.lt.s32.totalorder %s18, 0
        %s1403 = scalar_select %p1402, %s18, 0
        %p1404 = scmp.lt.s32.totalorder %s19, 1
        %s1405 = scalar_select %p1404, %s19, 1
        %s1406 = smul.addr %s1403, 2
        %s1407 = sadd.s32 %s1405, %s1406
        %s1408 = scalar_lea.vmem %s3, %s1407
        %v1410 = vld [vmem:[%s1398] sm:$0xff]
        %v1411 = vld [vmem:[%s1398 + $0x8] sm:$0xff]
        %v1412 = vld [vmem:[%s1398 + $0x10] sm:$0x3]
        %v1413 = vld [vmem:[%s1365] sm:$0xf]
        %v1414 = vld [vmem:[%s1365 + $0x4] sm:$0xf]
        %v1415 = vld [vmem:[%s1365 + $0x8] sm:$0xf]
        %v1416 = vld [vmem:[%s1365 + $0xc] sm:$0xf]
        %v1417 = vld [vmem:[%s1365 + $0x10] sm:$0xf]
        %v1418 = vld [vmem:[%s1365 + $0x14] sm:$0xf]
        %v1419 = vld [vmem:[%s1365 + $0x18] sm:$0xf]
        %v1420 = vld [vmem:[%s1365 + $0x1c] sm:$0xf]
        %v1421 = vld [vmem:[%s1365 + $0x20] sm:$0xf]
        %v1422 = vld [vmem:[%s1365 + $0x24] sm:$0xf]
        %v1423 = vld [vmem:[%s1365 + $0x28] sm:$0xf]
        %v1424 = vld [vmem:[%s1365 + $0x2c] sm:$0xf]
        %v1425 = vld [vmem:[%s1365 + $0x30] sm:$0xf]
        %v1426 = vld [vmem:[%s1365 + $0x34] sm:$0xf]
        %v1427 = vld [vmem:[%s1365 + $0x38] sm:$0xf]
        %v1428 = vld [vmem:[%s1365 + $0x3c] sm:$0xf]
        %v1429 = vld [vmem:[%s1365 + $0x40] sm:$0xf]
        %v1430 = vld [vmem:[%s1365 + $0x44] sm:$0xf]
        %v1431 = vld [vmem:[%s1365 + $0x48] sm:$0xf]
        %v1432 = vld [vmem:[%s1365 + $0x4c] sm:$0xf]
        %v1433 = vld [vmem:[%s1365 + $0x50] sm:$0xf]
        %v1434 = vld [vmem:[%s1365 + $0x54] sm:$0xf]
        %v1435 = vld [vmem:[%s1365 + $0x58] sm:$0xf]
        %v1436 = vld [vmem:[%s1365 + $0x5c] sm:$0xf]
        %v1437 = vld [vmem:[%s1365 + $0x60] sm:$0xf]
        %v1438 = vld [vmem:[%s1365 + $0x64] sm:$0xf]
        %v1439 = vld [vmem:[%s1365 + $0x68] sm:$0xf]
        %v1440 = vld [vmem:[%s1365 + $0x6c] sm:$0xf]
        %v1441 = vld [vmem:[%s1365 + $0x70] sm:$0xf]
        %v1442 = vld [vmem:[%s1365 + $0x74] sm:$0xf]
        %v1443 = vld [vmem:[%s1365 + $0x78] sm:$0xf]
        %v1444 = vld [vmem:[%s1365 + $0x7c] sm:$0xf]
        %v1445 = vld [vmem:[%s1365 + $0x80] sm:$0xf]
        %v1446 = vld [vmem:[%s1365 + $0x84] sm:$0xf]
        %v1447 = vld [vmem:[%s1365 + $0x88] sm:$0xf]
        %v1448 = vld [vmem:[%s1365 + $0x8c] sm:$0xf]
        %v1449 = vld [vmem:[%s1365 + $0x90] sm:$0xf]
        %v1450 = vld [vmem:[%s1365 + $0x94] sm:$0xf]
        %v1451 = vld [vmem:[%s1365 + $0x98] sm:$0xf]
        %v1452 = vld [vmem:[%s1365 + $0x9c] sm:$0xf]
        %v1453 = vld [vmem:[%s1365 + $0xa0] sm:$0xf]
        %v1454 = vld [vmem:[%s1365 + $0xa4] sm:$0xf]
        %v1455 = vld [vmem:[%s1365 + $0xa8] sm:$0xf]
        %v1456 = vld [vmem:[%s1365 + $0xac] sm:$0xf]
        %v1457 = vld [vmem:[%s1365 + $0xb0] sm:$0xf]
        %v1458 = vld [vmem:[%s1365 + $0xb4] sm:$0xf]
        %v1459 = vld [vmem:[%s1365 + $0xb8] sm:$0xf]
        %v1460 = vld [vmem:[%s1365 + $0xbc] sm:$0xf]
        %v1461 = vld [vmem:[%s1365 + $0xc0] sm:$0xf]
        %v1462 = vld [vmem:[%s1365 + $0xc4] sm:$0xf]
        %v1463 = vld [vmem:[%s1365 + $0xc8] sm:$0xf]
        %v1464 = vld [vmem:[%s1365 + $0xcc] sm:$0xf]
        %v1465 = vld [vmem:[%s1365 + $0xd0] sm:$0xf]
        %v1466 = vld [vmem:[%s1365 + $0xd4] sm:$0xf]
        %v1467 = vld [vmem:[%s1365 + $0xd8] sm:$0xf]
        %v1468 = vld [vmem:[%s1365 + $0xdc] sm:$0xf]
        %v1469 = vld [vmem:[%s1365 + $0xe0] sm:$0xf]
        %v1470 = vld [vmem:[%s1365 + $0xe4] sm:$0xf]
        %v1471 = vld [vmem:[%s1365 + $0xe8] sm:$0xf]
        %v1472 = vld [vmem:[%s1365 + $0xec] sm:$0xf]
        %v1473 = vld [vmem:[%s1365 + $0xf0] sm:$0xf]
        %v1474 = vld [vmem:[%s1365 + $0xf4] sm:$0xf]
        %v1475 = vld [vmem:[%s1365 + $0xf8] sm:$0xf]
        %v1476 = vld [vmem:[%s1365 + $0xfc] sm:$0xf]
        %v1477 = vld [vmem:[%s1365 + $0x100] sm:$0xf]
        %v1478 = vld [vmem:[%s1365 + $0x104] sm:$0xf]
        %v1479 = vld [vmem:[%s1365 + $0x108] sm:$0xf]
        %v1480 = vld [vmem:[%s1365 + $0x10c] sm:$0xf]
        %v1481 = vld [vmem:[%s1365 + $0x110] sm:$0xf]
        %v1482 = vld [vmem:[%s1365 + $0x114] sm:$0xf]
        %v1483 = vld [vmem:[%s1365 + $0x118] sm:$0xf]
        %v1484 = vld [vmem:[%s1365 + $0x11c] sm:$0xf]
        %v1485 = vld [vmem:[%s1365 + $0x120] sm:$0xf]
        %v1486 = vld [vmem:[%s1365 + $0x124] sm:$0xf]
        %v1487 = vld [vmem:[%s1365 + $0x128] sm:$0xf]
        %v1488 = vld [vmem:[%s1365 + $0x12c] sm:$0xf]
        %v1489 = vld [vmem:[%s1365 + $0x130] sm:$0xf]
        %v1490 = vld [vmem:[%s1365 + $0x134] sm:$0xf]
        %v1491 = vld [vmem:[%s1365 + $0x138] sm:$0xf]
        %v1492 = vld [vmem:[%s1365 + $0x13c] sm:$0xf]
        %v1493 = vld [vmem:[%s1365 + $0x140] sm:$0xf]
        %v1494 = vld [vmem:[%s1365 + $0x144] sm:$0xf]
        %v1495 = vld [vmem:[%s1365 + $0x148] sm:$0xf]
        %v1496 = vld [vmem:[%s1365 + $0x14c] sm:$0xf]
        %v1497 = vld [vmem:[%s1365 + $0x150] sm:$0xf]
        %v1498 = vld [vmem:[%s1365 + $0x154] sm:$0xf]
        %v1499 = vld [vmem:[%s1365 + $0x158] sm:$0xf]
        %v1500 = vld [vmem:[%s1365 + $0x15c] sm:$0xf]
        %v1501 = vld [vmem:[%s1365 + $0x160] sm:$0xf]
        %v1502 = vld [vmem:[%s1365 + $0x164] sm:$0xf]
        %v1503 = vld [vmem:[%s1365 + $0x168] sm:$0xf]
        %v1504 = vld [vmem:[%s1365 + $0x16c] sm:$0xf]
        %v1505 = vld [vmem:[%s1365 + $0x170] sm:$0xf]
        %v1506 = vld [vmem:[%s1365 + $0x174] sm:$0xf]
        %v1507 = vld [vmem:[%s1365 + $0x178] sm:$0xf]
        %v1508 = vld [vmem:[%s1365 + $0x17c] sm:$0xf]
        %v1509 = vld [vmem:[%s1365 + $0x180] sm:$0xf]
        %v1510 = vld [vmem:[%s1365 + $0x184] sm:$0xf]
        %v1511 = vld [vmem:[%s1365 + $0x188] sm:$0xf]
        %v1512 = vld [vmem:[%s1365 + $0x18c] sm:$0xf]
        %v1513 = vld [vmem:[%s1365 + $0x190] sm:$0xf]
        %v1514 = vld [vmem:[%s1365 + $0x194] sm:$0xf]
        %v1515 = vld [vmem:[%s1365 + $0x198] sm:$0xf]
        %v1516 = vld [vmem:[%s1365 + $0x19c] sm:$0xf]
        %v1517 = vld [vmem:[%s1365 + $0x1a0] sm:$0xf]
        %v1518 = vld [vmem:[%s1365 + $0x1a4] sm:$0xf]
        %v1519 = vld [vmem:[%s1365 + $0x1a8] sm:$0xf]
        %v1520 = vld [vmem:[%s1365 + $0x1ac] sm:$0xf]
        %v1521 = vld [vmem:[%s1365 + $0x1b0] sm:$0xf]
        %v1522 = vld [vmem:[%s1365 + $0x1b4] sm:$0xf]
        %v1523 = vld [vmem:[%s1365 + $0x1b8] sm:$0xf]
        %v1524 = vld [vmem:[%s1365 + $0x1bc] sm:$0xf]
        %v1525 = vld [vmem:[%s1365 + $0x1c0] sm:$0xf]
        %v1526 = vld [vmem:[%s1365 + $0x1c4] sm:$0xf]
        %v1527 = vld [vmem:[%s1365 + $0x1c8] sm:$0xf]
        %v1528 = vld [vmem:[%s1365 + $0x1cc] sm:$0xf]
        %v1529 = vld [vmem:[%s1365 + $0x1d0] sm:$0xf]
        %v1530 = vld [vmem:[%s1365 + $0x1d4] sm:$0xf]
        %v1531 = vld [vmem:[%s1365 + $0x1d8] sm:$0xf]
        %v1532 = vld [vmem:[%s1365 + $0x1dc] sm:$0xf]
        %v1533 = vld [vmem:[%s1365 + $0x1e0] sm:$0xf]
        %v1534 = vld [vmem:[%s1365 + $0x1e4] sm:$0xf]
        %v1535 = vld [vmem:[%s1365 + $0x1e8] sm:$0xf]
        %v1536 = vld [vmem:[%s1365 + $0x1ec] sm:$0xf]
        %v1537 = vld [vmem:[%s1365 + $0x1f0] sm:$0xf]
        %v1538 = vld [vmem:[%s1365 + $0x1f4] sm:$0xf]
        %v1539 = vld [vmem:[%s1365 + $0x1f8] sm:$0xf]
        %v1540 = vld [vmem:[%s1365 + $0x1fc] sm:$0xf]
        %v1541 = vld [vmem:[%s1365 + $0x200] sm:$0xf]
        %v1542 = vld [vmem:[%s1365 + $0x204] sm:$0xf]
        %v1543 = vld [vmem:[%s1365 + $0x208] sm:$0xf]
        %v1544 = vld [vmem:[%s1365 + $0x20c] sm:$0xf]
        %v1545 = vld [vmem:[%s1365 + $0x210] sm:$0xf]
        %v1546 = vld [vmem:[%s1365 + $0x214] sm:$0xf]
        %v1547 = vld [vmem:[%s1365 + $0x218] sm:$0xf]
        %v1548 = vld [vmem:[%s1365 + $0x21c] sm:$0xf]
        %v1549 = vld [vmem:[%s1365 + $0x220] sm:$0xf]
        %v1550 = vld [vmem:[%s1365 + $0x224] sm:$0xf]
        %v1551 = vld [vmem:[%s1365 + $0x228] sm:$0xf]
        %v1552 = vld [vmem:[%s1365 + $0x22c] sm:$0xf]
        %v1553 = vld [vmem:[%s1365 + $0x230] sm:$0xf]
        %v1554 = vld [vmem:[%s1365 + $0x234] sm:$0xf]
        %v1555 = vld [vmem:[%s1365 + $0x238] sm:$0xf]
        %v1556 = vld [vmem:[%s1365 + $0x23c] sm:$0xf]
        %v1557 = vld [vmem:[%s1365 + $0x240] sm:$0xf]
        %v1558 = vld [vmem:[%s1365 + $0x244] sm:$0xf]
        %v1559 = vld [vmem:[%s1365 + $0x248] sm:$0xf]
        %v1560 = vld [vmem:[%s1365 + $0x24c] sm:$0xf]
        %v1561 = vld [vmem:[%s1365 + $0x250] sm:$0xf]
        %v1562 = vld [vmem:[%s1365 + $0x254] sm:$0xf]
        %v1563 = vld [vmem:[%s1365 + $0x258] sm:$0xf]
        %v1564 = vld [vmem:[%s1365 + $0x25c] sm:$0xf]
        %v1565 = vld [vmem:[%s1365 + $0x260] sm:$0xf]
        %v1566 = vld [vmem:[%s1365 + $0x264] sm:$0xf]
        %v1567 = vld [vmem:[%s1365 + $0x268] sm:$0xf]
        %v1568 = vld [vmem:[%s1365 + $0x26c] sm:$0xf]
        %v1569 = vld [vmem:[%s1365 + $0x270] sm:$0xf]
        %v1570 = vld [vmem:[%s1365 + $0x274] sm:$0xf]
        %v1571 = vld [vmem:[%s1365 + $0x278] sm:$0xf]
        %v1572 = vld [vmem:[%s1365 + $0x27c] sm:$0xf]
        %v1573 = vld [vmem:[%s1365 + $0x280] sm:$0xf]
        %v1574 = vld [vmem:[%s1365 + $0x284] sm:$0xf]
        %v1575 = vld [vmem:[%s1365 + $0x288] sm:$0xf]
        %v1576 = vld [vmem:[%s1365 + $0x28c] sm:$0xf]
        %v1577 = vld [vmem:[%s1365 + $0x290] sm:$0xf]
        %v1578 = vld [vmem:[%s1365 + $0x294] sm:$0xf]
        %v1579 = vld [vmem:[%s1365 + $0x298] sm:$0xf]
        %v1580 = vld [vmem:[%s1365 + $0x29c] sm:$0xf]
        %v1581 = vld [vmem:[%s1365 + $0x2a0] sm:$0xf]
        %v1582 = vld [vmem:[%s1365 + $0x2a4] sm:$0xf]
        %v1583 = vld [vmem:[%s1365 + $0x2a8] sm:$0xf]
        %v1584 = vld [vmem:[%s1365 + $0x2ac] sm:$0xf]
        %v1585 = vld [vmem:[%s1365 + $0x2b0] sm:$0xf]
        %v1586 = vld [vmem:[%s1365 + $0x2b4] sm:$0xf]
        %v1587 = vld [vmem:[%s1365 + $0x2b8] sm:$0xf]
        %v1588 = vld [vmem:[%s1365 + $0x2bc] sm:$0xf]
        %v1589 = vld [vmem:[%s1365 + $0x2c0] sm:$0xf]
        %v1590 = vld [vmem:[%s1365 + $0x2c4] sm:$0xf]
        %v1591 = vld [vmem:[%s1365 + $0x2c8] sm:$0xf]
        %v1592 = vld [vmem:[%s1365 + $0x2cc] sm:$0xf]
        %v1593 = vld [vmem:[%s1365 + $0x2d0] sm:$0xf]
        %v1594 = vld [vmem:[%s1365 + $0x2d4] sm:$0xf]
        %v1595 = vld [vmem:[%s1365 + $0x2d8] sm:$0xf]
        %v1596 = vld [vmem:[%s1365 + $0x2dc] sm:$0xf]
        %v1597 = vld [vmem:[%s1365 + $0x2e0] sm:$0xf]
        %v1598 = vld [vmem:[%s1365 + $0x2e4] sm:$0xf]
        %v1599 = vld [vmem:[%s1365 + $0x2e8] sm:$0xf]
        %v1600 = vld [vmem:[%s1365 + $0x2ec] sm:$0xf]
        %v1601 = vld [vmem:[%s1365 + $0x2f0] sm:$0xf]
        %v1602 = vld [vmem:[%s1365 + $0x2f4] sm:$0xf]
        %v1603 = vld [vmem:[%s1365 + $0x2f8] sm:$0xf]
        %v1604 = vld [vmem:[%s1365 + $0x2fc] sm:$0xf]
        %v1605 = vld [vmem:[%s1365 + $0x300] sm:$0xf]
        %v1606 = vld [vmem:[%s1365 + $0x304] sm:$0xf]
        %v1607 = vld [vmem:[%s1365 + $0x308] sm:$0xf]
        %v1608 = vld [vmem:[%s1365 + $0x30c] sm:$0xf]
        %v1609 = vld [vmem:[%s1365 + $0x310] sm:$0xf]
        %v1610 = vld [vmem:[%s1365 + $0x314] sm:$0xf]
        %v1611 = vld [vmem:[%s1365 + $0x318] sm:$0xf]
        %v1612 = vld [vmem:[%s1365 + $0x31c] sm:$0xf]
        %v1613 = vld [vmem:[%s1365 + $0x320] sm:$0xf]
        %v1614 = vld [vmem:[%s1365 + $0x324] sm:$0xf]
        %v1615 = vld [vmem:[%s1365 + $0x328] sm:$0xf]
        %v1616 = vld [vmem:[%s1365 + $0x32c] sm:$0xf]
        %v1617 = vld [vmem:[%s1365 + $0x330] sm:$0xf]
        %v1618 = vld [vmem:[%s1365 + $0x334] sm:$0xf]
        %v1619 = vld [vmem:[%s1365 + $0x338] sm:$0xf]
        %v1620 = vld [vmem:[%s1365 + $0x33c] sm:$0xf]
        %v1621 = vld [vmem:[%s1365 + $0x340] sm:$0xf]
        %v1622 = vld [vmem:[%s1365 + $0x344] sm:$0xf]
        %v1623 = vld [vmem:[%s1365 + $0x348] sm:$0xf]
        %v1624 = vld [vmem:[%s1365 + $0x34c] sm:$0xf]
        %v1625 = vld [vmem:[%s1365 + $0x350] sm:$0xf]
        %v1626 = vld [vmem:[%s1365 + $0x354] sm:$0xf]
        %v1627 = vld [vmem:[%s1365 + $0x358] sm:$0xf]
        %v1628 = vld [vmem:[%s1365 + $0x35c] sm:$0xf]
        %v1629 = vld [vmem:[%s1365 + $0x360] sm:$0xf]
        %v1630 = vld [vmem:[%s1365 + $0x364] sm:$0xf]
        %v1631 = vld [vmem:[%s1365 + $0x368] sm:$0xf]
        %v1632 = vld [vmem:[%s1365 + $0x36c] sm:$0xf]
        %v1633 = vld [vmem:[%s1365 + $0x370] sm:$0xf]
        %v1634 = vld [vmem:[%s1365 + $0x374] sm:$0xf]
        %v1635 = vld [vmem:[%s1365 + $0x378] sm:$0xf]
        %v1636 = vld [vmem:[%s1365 + $0x37c] sm:$0xf]
        %v1637 = vld [vmem:[%s1365 + $0x380] sm:$0xf]
        %v1638 = vld [vmem:[%s1365 + $0x384] sm:$0xf]
        %v1639 = vld [vmem:[%s1365 + $0x388] sm:$0xf]
        %v1640 = vld [vmem:[%s1365 + $0x38c] sm:$0xf]
        %v1641 = vld [vmem:[%s1365 + $0x390] sm:$0xf]
        %v1642 = vld [vmem:[%s1365 + $0x394] sm:$0xf]
        %v1643 = vld [vmem:[%s1365 + $0x398] sm:$0xf]
        %v1644 = vld [vmem:[%s1365 + $0x39c] sm:$0xf]
        %v1645 = vld [vmem:[%s1365 + $0x3a0] sm:$0xf]
        %v1646 = vld [vmem:[%s1365 + $0x3a4] sm:$0xf]
        %v1647 = vld [vmem:[%s1365 + $0x3a8] sm:$0xf]
        %v1648 = vld [vmem:[%s1365 + $0x3ac] sm:$0xf]
        %v1649 = vld [vmem:[%s1365 + $0x3b0] sm:$0xf]
        %v1650 = vld [vmem:[%s1365 + $0x3b4] sm:$0xf]
        %v1651 = vld [vmem:[%s1365 + $0x3b8] sm:$0xf]
        %v1652 = vld [vmem:[%s1365 + $0x3bc] sm:$0xf]
        %v1653 = vld [vmem:[%s1365 + $0x3c0] sm:$0xf]
        %v1654 = vld [vmem:[%s1365 + $0x3c4] sm:$0xf]
        %v1655 = vld [vmem:[%s1365 + $0x3c8] sm:$0xf]
        %v1656 = vld [vmem:[%s1365 + $0x3cc] sm:$0xf]
        %v1657 = vld [vmem:[%s1365 + $0x3d0] sm:$0xf]
        %v1658 = vld [vmem:[%s1365 + $0x3d4] sm:$0xf]
        %v1659 = vld [vmem:[%s1365 + $0x3d8] sm:$0xf]
        %v1660 = vld [vmem:[%s1365 + $0x3dc] sm:$0xf]
        %v1661 = vld [vmem:[%s1365 + $0x3e0] sm:$0xf]
        %v1662 = vld [vmem:[%s1365 + $0x3e4] sm:$0xf]
        %v1663 = vld [vmem:[%s1365 + $0x3e8] sm:$0xf]
        %v1664 = vld [vmem:[%s1365 + $0x3ec] sm:$0xf]
        %v1665 = vld [vmem:[%s1365 + $0x3f0] sm:$0xf]
        %v1666 = vld [vmem:[%s1365 + $0x3f4] sm:$0xf]
        %v1667 = vld [vmem:[%s1365 + $0x3f8] sm:$0xf]
        %v1668 = vld [vmem:[%s1365 + $0x3fc] sm:$0xf]
        %v1669 = vld [vmem:[%s1365 + $0x400] sm:$0xf]
        %v1670 = vld [vmem:[%s1365 + $0x404] sm:$0xf]
        %v1671 = vld [vmem:[%s1365 + $0x408] sm:$0xf]
        %v1672 = vld [vmem:[%s1365 + $0x40c] sm:$0xf]
        %v1673 = vld [vmem:[%s1365 + $0x410] sm:$0xf]
        %v1674 = vld [vmem:[%s1365 + $0x414] sm:$0xf]
        %v1675 = vld [vmem:[%s1365 + $0x418] sm:$0xf]
        %v1676 = vld [vmem:[%s1365 + $0x41c] sm:$0xf]
        %v1677 = vld [vmem:[%s1365 + $0x420] sm:$0xf]
        %v1678 = vld [vmem:[%s1365 + $0x424] sm:$0xf]
        %v1679 = vld [vmem:[%s1365 + $0x428] sm:$0xf]
        %v1680 = vld [vmem:[%s1365 + $0x42c] sm:$0xf]
        %v1681 = vld [vmem:[%s1365 + $0x430] sm:$0xf]
        %v1682 = vld [vmem:[%s1365 + $0x434] sm:$0xf]
        %v1683 = vld [vmem:[%s1365 + $0x438] sm:$0xf]
        %v1684 = vld [vmem:[%s1365 + $0x43c] sm:$0xf]
        %v1685 = vld [vmem:[%s1365 + $0x440] sm:$0xf]
        %v1686 = vld [vmem:[%s1365 + $0x444] sm:$0xf]
        %v1687 = vld [vmem:[%s1365 + $0x448] sm:$0xf]
        %v1688 = vld [vmem:[%s1365 + $0x44c] sm:$0xf]
        %v1689 = vld [vmem:[%s1365 + $0x450] sm:$0xf]
        %v1690 = vld [vmem:[%s1365 + $0x454] sm:$0xf]
        %v1691 = vld [vmem:[%s1365 + $0x458] sm:$0xf]
        %v1692 = vld [vmem:[%s1365 + $0x45c] sm:$0xf]
        %v1693 = vld [vmem:[%s1365 + $0x460] sm:$0xf]
        %v1694 = vld [vmem:[%s1365 + $0x464] sm:$0xf]
        %v1695 = vld [vmem:[%s1365 + $0x468] sm:$0xf]
        %v1696 = vld [vmem:[%s1365 + $0x46c] sm:$0xf]
        %v1697 = vld [vmem:[%s1365 + $0x470] sm:$0xf]
        %v1698 = vld [vmem:[%s1365 + $0x474] sm:$0xf]
        %v1699 = vld [vmem:[%s1365 + $0x478] sm:$0xf]
        %v1700 = vld [vmem:[%s1365 + $0x47c] sm:$0xf]
        %v1701 = vld [vmem:[%s1401] sm:$0x1]
        %v1703 = vlaneseq
        %v1704 = vshrl.u32 %v1703, 7
        %v1705 = vsub.s32 0, %v1704
        %v1706 = vrot.slane %v1701, %v1705
        %v1711 = vcombine.high %v1410, %v1410
        %v1713 = vunpack.c.l.s4 1966171168
        %v1714 = vunpack.c.0.s8 %v1713
        %v1715 = vlaneseq
        %v1716 = vshrl.u32 %v1715, 7
        %v1717 = vsub.s32 %v1714, %v1716
        %v1718 = vrot.slane %v1410, %v1717
        %v1720 = vunpack.c.l.s4 1966171168
        %v1721 = vunpack.c.0.s8 %v1720
        %v1722 = vlaneseq
        %v1723 = vshrl.u32 %v1722, 7
        %v1724 = vsub.s32 %v1721, %v1723
        %v1725 = vrot.slane %v1711, %v1724
        %v1726 = vcombine.high %v1718, %v1718
        %v1727 = vcombine.high %v1725, %v1725
        %v1729 = vunpack.c.l.s4 1966171168
        %v1730 = vunpack.c.0.s8 %v1729
        %v1731 = vlaneseq
        %v1732 = vshrl.u32 %v1731, 7
        %v1733 = vsub.s32 %v1730, %v1732
        %v1734 = vrot.slane %v1718, %v1733
        %v1736 = vunpack.c.l.s4 1966171168
        %v1737 = vunpack.c.0.s8 %v1736
        %v1738 = vlaneseq
        %v1739 = vshrl.u32 %v1738, 7
        %v1740 = vsub.s32 %v1737, %v1739
        %v1741 = vrot.slane %v1725, %v1740
        %v1743 = vunpack.c.l.s4 1966171168
        %v1744 = vunpack.c.0.s8 %v1743
        %v1745 = vlaneseq
        %v1746 = vshrl.u32 %v1745, 7
        %v1747 = vsub.s32 %v1744, %v1746
        %v1748 = vrot.slane %v1726, %v1747
        %v1750 = vunpack.c.l.s4 1966171168
        %v1751 = vunpack.c.0.s8 %v1750
        %v1752 = vlaneseq
        %v1753 = vshrl.u32 %v1752, 7
        %v1754 = vsub.s32 %v1751, %v1753
        %v1755 = vrot.slane %v1727, %v1754
        %v1756 = vcombine.high %v1734, %v1734
        %v1757 = vcombine.high %v1741, %v1741
        %v1758 = vcombine.high %v1748, %v1748
        %v1759 = vcombine.high %v1755, %v1755
        %v1760 = vcombine.high %v1411, %v1411
        %v1762 = vunpack.c.l.s4 1966171168
        %v1763 = vunpack.c.0.s8 %v1762
        %v1764 = vlaneseq
        %v1765 = vshrl.u32 %v1764, 7
        %v1766 = vsub.s32 %v1763, %v1765
        %v1767 = vrot.slane %v1411, %v1766
        %v1769 = vunpack.c.l.s4 1966171168
        %v1770 = vunpack.c.0.s8 %v1769
        %v1771 = vlaneseq
        %v1772 = vshrl.u32 %v1771, 7
        %v1773 = vsub.s32 %v1770, %v1772
        %v1774 = vrot.slane %v1760, %v1773
        %v1775 = vcombine.high %v1767, %v1767
        %v1776 = vcombine.high %v1774, %v1774
        %v1778 = vunpack.c.l.s4 1966171168
        %v1779 = vunpack.c.0.s8 %v1778
        %v1780 = vlaneseq
        %v1781 = vshrl.u32 %v1780, 7
        %v1782 = vsub.s32 %v1779, %v1781
        %v1783 = vrot.slane %v1767, %v1782
        %v1785 = vunpack.c.l.s4 1966171168
        %v1786 = vunpack.c.0.s8 %v1785
        %v1787 = vlaneseq
        %v1788 = vshrl.u32 %v1787, 7
        %v1789 = vsub.s32 %v1786, %v1788
        %v1790 = vrot.slane %v1774, %v1789
        %v1792 = vunpack.c.l.s4 1966171168
        %v1793 = vunpack.c.0.s8 %v1792
        %v1794 = vlaneseq
        %v1795 = vshrl.u32 %v1794, 7
        %v1796 = vsub.s32 %v1793, %v1795
        %v1797 = vrot.slane %v1775, %v1796
        %v1799 = vunpack.c.l.s4 1966171168
        %v1800 = vunpack.c.0.s8 %v1799
        %v1801 = vlaneseq
        %v1802 = vshrl.u32 %v1801, 7
        %v1803 = vsub.s32 %v1800, %v1802
        %v1804 = vrot.slane %v1776, %v1803
        %v1805 = vcombine.high %v1783, %v1783
        %v1806 = vcombine.high %v1790, %v1790
        %v1807 = vcombine.high %v1797, %v1797
        %v1808 = vcombine.high %v1804, %v1804
        %v1810 = vunpack.c.l.s4 1966171168
        %v1811 = vunpack.c.0.s8 %v1810
        %v1812 = vlaneseq
        %v1813 = vshrl.u32 %v1812, 7
        %v1814 = vsub.s32 %v1811, %v1813
        %v1815 = vrot.slane %v1412, %v1814
        %v1816 = vcombine.high %v1815, %v1815
        %v1818 = vunpack.c.l.s4 1966171168
        %v1819 = vunpack.c.0.s8 %v1818
        %v1820 = vlaneseq
        %v1821 = vshrl.u32 %v1820, 7
        %v1822 = vsub.s32 %v1819, %v1821
        %v1823 = vrot.slane %v1815, %v1822
        %v1825 = vunpack.c.l.s4 1966171168
        %v1826 = vunpack.c.0.s8 %v1825
        %v1827 = vlaneseq
        %v1828 = vshrl.u32 %v1827, 7
        %v1829 = vsub.s32 %v1826, %v1828
        %v1830 = vrot.slane %v1816, %v1829
        %v2137 = vunpack.c.l.b16 %v1413
        %v2138 = vunpack.c.l.b16 %v1414
        %v2139 = vunpack.c.l.b16 %v1415
        %v2140 = vunpack.c.l.b16 %v1416
        %v2141 = vunpack.c.l.b16 %v1417
        %v2142 = vunpack.c.l.b16 %v1418
        %v2143 = vunpack.c.l.b16 %v1419
        %v2144 = vunpack.c.l.b16 %v1420
        %v2145 = vunpack.c.l.b16 %v1421
        %v2146 = vunpack.c.l.b16 %v1422
        %v2147 = vunpack.c.l.b16 %v1423
        %v2148 = vunpack.c.l.b16 %v1424
        %v2149 = vunpack.c.l.b16 %v1425
        %v2150 = vunpack.c.l.b16 %v1426
        %v2151 = vunpack.c.l.b16 %v1427
        %v2152 = vunpack.c.l.b16 %v1428
        %v2153 = vunpack.c.l.b16 %v1429
        %v2154 = vunpack.c.l.b16 %v1430
        %v2155 = vunpack.c.l.b16 %v1431
        %v2156 = vunpack.c.l.b16 %v1432
        %v2157 = vunpack.c.l.b16 %v1433
        %v2158 = vunpack.c.l.b16 %v1434
        %v2159 = vunpack.c.l.b16 %v1435
        %v2160 = vunpack.c.l.b16 %v1436
        %v2161 = vunpack.c.l.b16 %v1437
        %v2162 = vunpack.c.l.b16 %v1438
        %v2163 = vunpack.c.l.b16 %v1439
        %v2164 = vunpack.c.l.b16 %v1440
        %v2165 = vunpack.c.l.b16 %v1441
        %v2166 = vunpack.c.l.b16 %v1442
        %v2167 = vunpack.c.l.b16 %v1443
        %v2168 = vunpack.c.l.b16 %v1444
        %v2169 = vunpack.c.l.b16 %v1445
        %v2170 = vunpack.c.l.b16 %v1446
        %v2171 = vunpack.c.l.b16 %v1447
        %v2172 = vunpack.c.l.b16 %v1448
        %v2173 = vunpack.c.l.b16 %v1449
        %v2174 = vunpack.c.l.b16 %v1450
        %v2175 = vunpack.c.l.b16 %v1451
        %v2176 = vunpack.c.l.b16 %v1452
        %v2177 = vunpack.c.l.b16 %v1453
        %v2178 = vunpack.c.l.b16 %v1454
        %v2179 = vunpack.c.l.b16 %v1455
        %v2180 = vunpack.c.l.b16 %v1456
        %v2181 = vunpack.c.l.b16 %v1457
        %v2182 = vunpack.c.l.b16 %v1458
        %v2183 = vunpack.c.l.b16 %v1459
        %v2184 = vunpack.c.l.b16 %v1460
        %v2185 = vunpack.c.l.b16 %v1461
        %v2186 = vunpack.c.l.b16 %v1462
        %v2187 = vunpack.c.l.b16 %v1463
        %v2188 = vunpack.c.l.b16 %v1464
        %v2189 = vunpack.c.l.b16 %v1465
        %v2190 = vunpack.c.l.b16 %v1466
        %v2191 = vunpack.c.l.b16 %v1467
        %v2192 = vunpack.c.l.b16 %v1468
        %v2193 = vunpack.c.l.b16 %v1469
        %v2194 = vunpack.c.l.b16 %v1470
        %v2195 = vunpack.c.l.b16 %v1471
        %v2196 = vunpack.c.l.b16 %v1472
        %v2197 = vunpack.c.l.b16 %v1473
        %v2198 = vunpack.c.l.b16 %v1474
        %v2199 = vunpack.c.l.b16 %v1475
        %v2200 = vunpack.c.l.b16 %v1476
        %v2201 = vunpack.c.l.b16 %v1477
        %v2202 = vunpack.c.l.b16 %v1478
        %v2203 = vunpack.c.l.b16 %v1479
        %v2204 = vunpack.c.l.b16 %v1480
        %v2205 = vunpack.c.l.b16 %v1481
        %v2206 = vunpack.c.l.b16 %v1482
        %v2207 = vunpack.c.l.b16 %v1483
        %v2208 = vunpack.c.l.b16 %v1484
        %v2209 = vunpack.c.l.b16 %v1485
        %v2210 = vunpack.c.l.b16 %v1486
        %v2211 = vunpack.c.l.b16 %v1487
        %v2212 = vunpack.c.l.b16 %v1488
        %v2213 = vunpack.c.l.b16 %v1489
        %v2214 = vunpack.c.l.b16 %v1490
        %v2215 = vunpack.c.l.b16 %v1491
        %v2216 = vunpack.c.l.b16 %v1492
        %v2217 = vunpack.c.l.b16 %v1493
        %v2218 = vunpack.c.l.b16 %v1494
        %v2219 = vunpack.c.l.b16 %v1495
        %v2220 = vunpack.c.l.b16 %v1496
        %v2221 = vunpack.c.l.b16 %v1497
        %v2222 = vunpack.c.l.b16 %v1498
        %v2223 = vunpack.c.l.b16 %v1499
        %v2224 = vunpack.c.l.b16 %v1500
        %v2225 = vunpack.c.l.b16 %v1501
        %v2226 = vunpack.c.l.b16 %v1502
        %v2227 = vunpack.c.l.b16 %v1503
        %v2228 = vunpack.c.l.b16 %v1504
        %v2229 = vunpack.c.l.b16 %v1505
        %v2230 = vunpack.c.l.b16 %v1506
        %v2231 = vunpack.c.l.b16 %v1507
        %v2232 = vunpack.c.l.b16 %v1508
        %v2233 = vunpack.c.l.b16 %v1509
        %v2234 = vunpack.c.l.b16 %v1510
        %v2235 = vunpack.c.l.b16 %v1511
        %v2236 = vunpack.c.l.b16 %v1512
        %v2237 = vunpack.c.l.b16 %v1513
        %v2238 = vunpack.c.l.b16 %v1514
        %v2239 = vunpack.c.l.b16 %v1515
        %v2240 = vunpack.c.l.b16 %v1516
        %v2241 = vunpack.c.l.b16 %v1517
        %v2242 = vunpack.c.l.b16 %v1518
        %v2243 = vunpack.c.l.b16 %v1519
        %v2244 = vunpack.c.l.b16 %v1520
        %v2245 = vunpack.c.l.b16 %v1521
        %v2246 = vunpack.c.l.b16 %v1522
        %v2247 = vunpack.c.l.b16 %v1523
        %v2248 = vunpack.c.l.b16 %v1524
        %v2249 = vunpack.c.l.b16 %v1525
        %v2250 = vunpack.c.l.b16 %v1526
        %v2251 = vunpack.c.l.b16 %v1527
        %v2252 = vunpack.c.l.b16 %v1528
        %v2253 = vunpack.c.l.b16 %v1529
        %v2254 = vunpack.c.l.b16 %v1530
        %v2255 = vunpack.c.l.b16 %v1531
        %v2256 = vunpack.c.l.b16 %v1532
        %v2257 = vunpack.c.l.b16 %v1533
        %v2258 = vunpack.c.l.b16 %v1534
        %v2259 = vunpack.c.l.b16 %v1535
        %v2260 = vunpack.c.l.b16 %v1536
        %v2261 = vunpack.c.l.b16 %v1537
        %v2262 = vunpack.c.l.b16 %v1538
        %v2263 = vunpack.c.l.b16 %v1539
        %v2264 = vunpack.c.l.b16 %v1540
        %v2265 = vunpack.c.l.b16 %v1541
        %v2266 = vunpack.c.l.b16 %v1542
        %v2267 = vunpack.c.l.b16 %v1543
        %v2268 = vunpack.c.l.b16 %v1544
        %v2269 = vunpack.c.l.b16 %v1545
        %v2270 = vunpack.c.l.b16 %v1546
        %v2271 = vunpack.c.l.b16 %v1547
        %v2272 = vunpack.c.l.b16 %v1548
        %v2273 = vunpack.c.l.b16 %v1549
        %v2274 = vunpack.c.l.b16 %v1550
        %v2275 = vunpack.c.l.b16 %v1551
        %v2276 = vunpack.c.l.b16 %v1552
        %v2277 = vunpack.c.l.b16 %v1553
        %v2278 = vunpack.c.l.b16 %v1554
        %v2279 = vunpack.c.l.b16 %v1555
        %v2280 = vunpack.c.l.b16 %v1556
        %v2281 = vunpack.c.l.b16 %v1557
        %v2282 = vunpack.c.l.b16 %v1558
        %v2283 = vunpack.c.l.b16 %v1559
        %v2284 = vunpack.c.l.b16 %v1560
        %v2285 = vunpack.c.l.b16 %v1561
        %v2286 = vunpack.c.l.b16 %v1562
        %v2287 = vunpack.c.l.b16 %v1563
        %v2288 = vunpack.c.l.b16 %v1564
        %v2289 = vunpack.c.l.b16 %v1565
        %v2290 = vunpack.c.l.b16 %v1566
        %v2291 = vunpack.c.l.b16 %v1567
        %v2292 = vunpack.c.l.b16 %v1568
        %v2293 = vunpack.c.l.b16 %v1569
        %v2294 = vunpack.c.l.b16 %v1570
        %v2295 = vunpack.c.l.b16 %v1571
        %v2296 = vunpack.c.l.b16 %v1572
        %v2297 = vunpack.c.l.b16 %v1573
        %v2298 = vunpack.c.l.b16 %v1574
        %v2299 = vunpack.c.l.b16 %v1575
        %v2300 = vunpack.c.l.b16 %v1576
        %v2301 = vunpack.c.l.b16 %v1577
        %v2302 = vunpack.c.l.b16 %v1578
        %v2303 = vunpack.c.l.b16 %v1579
        %v2304 = vunpack.c.l.b16 %v1580
        %v2305 = vunpack.c.l.b16 %v1581
        %v2306 = vunpack.c.l.b16 %v1582
        %v2307 = vunpack.c.l.b16 %v1583
        %v2308 = vunpack.c.l.b16 %v1584
        %v2309 = vunpack.c.l.b16 %v1585
        %v2310 = vunpack.c.l.b16 %v1586
        %v2311 = vunpack.c.l.b16 %v1587
        %v2312 = vunpack.c.l.b16 %v1588
        %v2313 = vunpack.c.l.b16 %v1589
        %v2314 = vunpack.c.l.b16 %v1590
        %v2315 = vunpack.c.l.b16 %v1591
        %v2316 = vunpack.c.l.b16 %v1592
        %v2317 = vunpack.c.l.b16 %v1593
        %v2318 = vunpack.c.l.b16 %v1594
        %v2319 = vunpack.c.l.b16 %v1595
        %v2320 = vunpack.c.l.b16 %v1596
        %v2321 = vunpack.c.l.b16 %v1597
        %v2322 = vunpack.c.l.b16 %v1598
        %v2323 = vunpack.c.l.b16 %v1599
        %v2324 = vunpack.c.l.b16 %v1600
        %v2325 = vunpack.c.l.b16 %v1601
        %v2326 = vunpack.c.l.b16 %v1602
        %v2327 = vunpack.c.l.b16 %v1603
        %v2328 = vunpack.c.l.b16 %v1604
        %v2329 = vunpack.c.l.b16 %v1605
        %v2330 = vunpack.c.l.b16 %v1606
        %v2331 = vunpack.c.l.b16 %v1607
        %v2332 = vunpack.c.l.b16 %v1608
        %v2333 = vunpack.c.l.b16 %v1609
        %v2334 = vunpack.c.l.b16 %v1610
        %v2335 = vunpack.c.l.b16 %v1611
        %v2336 = vunpack.c.l.b16 %v1612
        %v2337 = vunpack.c.l.b16 %v1613
        %v2338 = vunpack.c.l.b16 %v1614
        %v2339 = vunpack.c.l.b16 %v1615
        %v2340 = vunpack.c.l.b16 %v1616
        %v2341 = vunpack.c.l.b16 %v1617
        %v2342 = vunpack.c.l.b16 %v1618
        %v2343 = vunpack.c.l.b16 %v1619
        %v2344 = vunpack.c.l.b16 %v1620
        %v2345 = vunpack.c.l.b16 %v1621
        %v2346 = vunpack.c.l.b16 %v1622
        %v2347 = vunpack.c.l.b16 %v1623
        %v2348 = vunpack.c.l.b16 %v1624
        %v2349 = vunpack.c.l.b16 %v1625
        %v2350 = vunpack.c.l.b16 %v1626
        %v2351 = vunpack.c.l.b16 %v1627
        %v2352 = vunpack.c.l.b16 %v1628
        %v2353 = vunpack.c.l.b16 %v1629
        %v2354 = vunpack.c.l.b16 %v1630
        %v2355 = vunpack.c.l.b16 %v1631
        %v2356 = vunpack.c.l.b16 %v1632
        %v2357 = vunpack.c.l.b16 %v1633
        %v2358 = vunpack.c.l.b16 %v1634
        %v2359 = vunpack.c.l.b16 %v1635
        %v2360 = vunpack.c.l.b16 %v1636
        %v2361 = vunpack.c.l.b16 %v1637
        %v2362 = vunpack.c.l.b16 %v1638
        %v2363 = vunpack.c.l.b16 %v1639
        %v2364 = vunpack.c.l.b16 %v1640
        %v2365 = vunpack.c.l.b16 %v1641
        %v2366 = vunpack.c.l.b16 %v1642
        %v2367 = vunpack.c.l.b16 %v1643
        %v2368 = vunpack.c.l.b16 %v1644
        %v2369 = vunpack.c.l.b16 %v1645
        %v2370 = vunpack.c.l.b16 %v1646
        %v2371 = vunpack.c.l.b16 %v1647
        %v2372 = vunpack.c.l.b16 %v1648
        %v2373 = vunpack.c.l.b16 %v1649
        %v2374 = vunpack.c.l.b16 %v1650
        %v2375 = vunpack.c.l.b16 %v1651
        %v2376 = vunpack.c.l.b16 %v1652
        %v2377 = vunpack.c.l.b16 %v1653
        %v2378 = vunpack.c.l.b16 %v1654
        %v2379 = vunpack.c.l.b16 %v1655
        %v2380 = vunpack.c.l.b16 %v1656
        %v2381 = vunpack.c.l.b16 %v1657
        %v2382 = vunpack.c.l.b16 %v1658
        %v2383 = vunpack.c.l.b16 %v1659
        %v2384 = vunpack.c.l.b16 %v1660
        %v2385 = vunpack.c.l.b16 %v1661
        %v2386 = vunpack.c.l.b16 %v1662
        %v2387 = vunpack.c.l.b16 %v1663
        %v2388 = vunpack.c.l.b16 %v1664
        %v2389 = vunpack.c.l.b16 %v1665
        %v2390 = vunpack.c.l.b16 %v1666
        %v2391 = vunpack.c.l.b16 %v1667
        %v2392 = vunpack.c.l.b16 %v1668
        %v2393 = vunpack.c.l.b16 %v1669
        %v2394 = vunpack.c.l.b16 %v1670
        %v2395 = vunpack.c.l.b16 %v1671
        %v2396 = vunpack.c.l.b16 %v1672
        %v2397 = vunpack.c.l.b16 %v1673
        %v2398 = vunpack.c.l.b16 %v1674
        %v2399 = vunpack.c.l.b16 %v1675
        %v2400 = vunpack.c.l.b16 %v1676
        %v2401 = vunpack.c.l.b16 %v1677
        %v2402 = vunpack.c.l.b16 %v1678
        %v2403 = vunpack.c.l.b16 %v1679
        %v2404 = vunpack.c.l.b16 %v1680
        %v2405 = vunpack.c.l.b16 %v1681
        %v2406 = vunpack.c.l.b16 %v1682
        %v2407 = vunpack.c.l.b16 %v1683
        %v2408 = vunpack.c.l.b16 %v1684
        %v2409 = vunpack.c.l.b16 %v1685
        %v2410 = vunpack.c.l.b16 %v1686
        %v2411 = vunpack.c.l.b16 %v1687
        %v2412 = vunpack.c.l.b16 %v1688
        %v2413 = vunpack.c.l.b16 %v1689
        %v2414 = vunpack.c.l.b16 %v1690
        %v2415 = vunpack.c.l.b16 %v1691
        %v2416 = vunpack.c.l.b16 %v1692
        %v2417 = vunpack.c.l.b16 %v1693
        %v2418 = vunpack.c.l.b16 %v1694
        %v2419 = vunpack.c.l.b16 %v1695
        %v2420 = vunpack.c.l.b16 %v1696
        %v2421 = vunpack.c.l.b16 %v1697
        %v2422 = vunpack.c.l.b16 %v1698
        %v2423 = vunpack.c.l.b16 %v1699
        %v2424 = vunpack.c.l.b16 %v1700
        %v2425 = vpack.c.b16 %v2138, %v2137
        %v2426 = vpack.c.b16 %v2140, %v2139
        %v2427 = vpack.c.b16 %v2142, %v2141
        %v2428 = vpack.c.b16 %v2144, %v2143
        %v2429 = vpack.c.b16 %v2146, %v2145
        %v2430 = vpack.c.b16 %v2148, %v2147
        %v2431 = vpack.c.b16 %v2150, %v2149
        %v2432 = vpack.c.b16 %v2152, %v2151
        %v2433 = vpack.c.b16 %v2154, %v2153
        %v2434 = vpack.c.b16 %v2156, %v2155
        %v2435 = vpack.c.b16 %v2158, %v2157
        %v2436 = vpack.c.b16 %v2160, %v2159
        %v2437 = vpack.c.b16 %v2162, %v2161
        %v2438 = vpack.c.b16 %v2164, %v2163
        %v2439 = vpack.c.b16 %v2166, %v2165
        %v2440 = vpack.c.b16 %v2168, %v2167
        %v2441 = vpack.c.b16 %v2170, %v2169
        %v2442 = vpack.c.b16 %v2172, %v2171
        %v2443 = vpack.c.b16 %v2174, %v2173
        %v2444 = vpack.c.b16 %v2176, %v2175
        %v2445 = vpack.c.b16 %v2178, %v2177
        %v2446 = vpack.c.b16 %v2180, %v2179
        %v2447 = vpack.c.b16 %v2182, %v2181
        %v2448 = vpack.c.b16 %v2184, %v2183
        %v2449 = vpack.c.b16 %v2186, %v2185
        %v2450 = vpack.c.b16 %v2188, %v2187
        %v2451 = vpack.c.b16 %v2190, %v2189
        %v2452 = vpack.c.b16 %v2192, %v2191
        %v2453 = vpack.c.b16 %v2194, %v2193
        %v2454 = vpack.c.b16 %v2196, %v2195
        %v2455 = vpack.c.b16 %v2198, %v2197
        %v2456 = vpack.c.b16 %v2200, %v2199
        %v2457 = vpack.c.b16 %v2202, %v2201
        %v2458 = vpack.c.b16 %v2204, %v2203
        %v2459 = vpack.c.b16 %v2206, %v2205
        %v2460 = vpack.c.b16 %v2208, %v2207
        %v2461 = vpack.c.b16 %v2210, %v2209
        %v2462 = vpack.c.b16 %v2212, %v2211
        %v2463 = vpack.c.b16 %v2214, %v2213
        %v2464 = vpack.c.b16 %v2216, %v2215
        %v2465 = vpack.c.b16 %v2218, %v2217
        %v2466 = vpack.c.b16 %v2220, %v2219
        %v2467 = vpack.c.b16 %v2222, %v2221
        %v2468 = vpack.c.b16 %v2224, %v2223
        %v2469 = vpack.c.b16 %v2226, %v2225
        %v2470 = vpack.c.b16 %v2228, %v2227
        %v2471 = vpack.c.b16 %v2230, %v2229
        %v2472 = vpack.c.b16 %v2232, %v2231
        %v2473 = vpack.c.b16 %v2234, %v2233
        %v2474 = vpack.c.b16 %v2236, %v2235
        %v2475 = vpack.c.b16 %v2238, %v2237
        %v2476 = vpack.c.b16 %v2240, %v2239
        %v2477 = vpack.c.b16 %v2242, %v2241
        %v2478 = vpack.c.b16 %v2244, %v2243
        %v2479 = vpack.c.b16 %v2246, %v2245
        %v2480 = vpack.c.b16 %v2248, %v2247
        %v2481 = vpack.c.b16 %v2250, %v2249
        %v2482 = vpack.c.b16 %v2252, %v2251
        %v2483 = vpack.c.b16 %v2254, %v2253
        %v2484 = vpack.c.b16 %v2256, %v2255
        %v2485 = vpack.c.b16 %v2258, %v2257
        %v2486 = vpack.c.b16 %v2260, %v2259
        %v2487 = vpack.c.b16 %v2262, %v2261
        %v2488 = vpack.c.b16 %v2264, %v2263
        %v2489 = vpack.c.b16 %v2266, %v2265
        %v2490 = vpack.c.b16 %v2268, %v2267
        %v2491 = vpack.c.b16 %v2270, %v2269
        %v2492 = vpack.c.b16 %v2272, %v2271
        %v2493 = vpack.c.b16 %v2274, %v2273
        %v2494 = vpack.c.b16 %v2276, %v2275
        %v2495 = vpack.c.b16 %v2278, %v2277
        %v2496 = vpack.c.b16 %v2280, %v2279
        %v2497 = vpack.c.b16 %v2282, %v2281
        %v2498 = vpack.c.b16 %v2284, %v2283
        %v2499 = vpack.c.b16 %v2286, %v2285
        %v2500 = vpack.c.b16 %v2288, %v2287
        %v2501 = vpack.c.b16 %v2290, %v2289
        %v2502 = vpack.c.b16 %v2292, %v2291
        %v2503 = vpack.c.b16 %v2294, %v2293
        %v2504 = vpack.c.b16 %v2296, %v2295
        %v2505 = vpack.c.b16 %v2298, %v2297
        %v2506 = vpack.c.b16 %v2300, %v2299
        %v2507 = vpack.c.b16 %v2302, %v2301
        %v2508 = vpack.c.b16 %v2304, %v2303
        %v2509 = vpack.c.b16 %v2306, %v2305
        %v2510 = vpack.c.b16 %v2308, %v2307
        %v2511 = vpack.c.b16 %v2310, %v2309
        %v2512 = vpack.c.b16 %v2312, %v2311
        %v2513 = vpack.c.b16 %v2314, %v2313
        %v2514 = vpack.c.b16 %v2316, %v2315
        %v2515 = vpack.c.b16 %v2318, %v2317
        %v2516 = vpack.c.b16 %v2320, %v2319
        %v2517 = vpack.c.b16 %v2322, %v2321
        %v2518 = vpack.c.b16 %v2324, %v2323
        %v2519 = vpack.c.b16 %v2326, %v2325
        %v2520 = vpack.c.b16 %v2328, %v2327
        %v2521 = vpack.c.b16 %v2330, %v2329
        %v2522 = vpack.c.b16 %v2332, %v2331
        %v2523 = vpack.c.b16 %v2334, %v2333
        %v2524 = vpack.c.b16 %v2336, %v2335
        %v2525 = vpack.c.b16 %v2338, %v2337
        %v2526 = vpack.c.b16 %v2340, %v2339
        %v2527 = vpack.c.b16 %v2342, %v2341
        %v2528 = vpack.c.b16 %v2344, %v2343
        %v2529 = vpack.c.b16 %v2346, %v2345
        %v2530 = vpack.c.b16 %v2348, %v2347
        %v2531 = vpack.c.b16 %v2350, %v2349
        %v2532 = vpack.c.b16 %v2352, %v2351
        %v2533 = vpack.c.b16 %v2354, %v2353
        %v2534 = vpack.c.b16 %v2356, %v2355
        %v2535 = vpack.c.b16 %v2358, %v2357
        %v2536 = vpack.c.b16 %v2360, %v2359
        %v2537 = vpack.c.b16 %v2362, %v2361
        %v2538 = vpack.c.b16 %v2364, %v2363
        %v2539 = vpack.c.b16 %v2366, %v2365
        %v2540 = vpack.c.b16 %v2368, %v2367
        %v2541 = vpack.c.b16 %v2370, %v2369
        %v2542 = vpack.c.b16 %v2372, %v2371
        %v2543 = vpack.c.b16 %v2374, %v2373
        %v2544 = vpack.c.b16 %v2376, %v2375
        %v2545 = vpack.c.b16 %v2378, %v2377
        %v2546 = vpack.c.b16 %v2380, %v2379
        %v2547 = vpack.c.b16 %v2382, %v2381
        %v2548 = vpack.c.b16 %v2384, %v2383
        %v2549 = vpack.c.b16 %v2386, %v2385
        %v2550 = vpack.c.b16 %v2388, %v2387
        %v2551 = vpack.c.b16 %v2390, %v2389
        %v2552 = vpack.c.b16 %v2392, %v2391
        %v2553 = vpack.c.b16 %v2394, %v2393
        %v2554 = vpack.c.b16 %v2396, %v2395
        %v2555 = vpack.c.b16 %v2398, %v2397
        %v2556 = vpack.c.b16 %v2400, %v2399
        %v2557 = vpack.c.b16 %v2402, %v2401
        %v2558 = vpack.c.b16 %v2404, %v2403
        %v2559 = vpack.c.b16 %v2406, %v2405
        %v2560 = vpack.c.b16 %v2408, %v2407
        %v2561 = vpack.c.b16 %v2410, %v2409
        %v2562 = vpack.c.b16 %v2412, %v2411
        %v2563 = vpack.c.b16 %v2414, %v2413
        %v2564 = vpack.c.b16 %v2416, %v2415
        %v2565 = vpack.c.b16 %v2418, %v2417
        %v2566 = vpack.c.b16 %v2420, %v2419
        %v2567 = vpack.c.b16 %v2422, %v2421
        %v2568 = vpack.c.b16 %v2424, %v2423
        %2713 = vmatprep.subr.bf16.mxu0 0
        %2714 = vmatpush1.bf16.msra.mxu0 %v2425
        %2715 = vmatprep.subr.bf16.mxu0 0
        %2716 = vmatpush1.bf16.msra.mxu0 %v2426
        %2717 = vmatprep.subr.bf16.mxu0 0
        %2718 = vmatpush1.bf16.msra.mxu0 %v2427
        %2719 = vmatprep.subr.bf16.mxu0 0
        %2720 = vmatpush1.bf16.msra.mxu0 %v2428
        %2721 = vmatprep.subr.bf16.mxu0 0
        %2722 = vmatpush1.bf16.msra.mxu0 %v2429
        %2723 = vmatprep.subr.bf16.mxu0 0
        %2724 = vmatpush1.bf16.msra.mxu0 %v2430
        %2725 = vmatprep.subr.bf16.mxu0 0
        %2726 = vmatpush1.bf16.msra.mxu0 %v2431
        %2727 = vmatprep.subr.bf16.mxu0 0
        %2728 = vmatpush1.bf16.msra.mxu0 %v2432
        %2729 = vmatprep.subr.bf16.mxu0 0
        %2730 = vmatpush1.bf16.msra.mxu0 %v2433
        %2731 = vmatprep.subr.bf16.mxu0 0
        %2732 = vmatpush1.bf16.msra.mxu0 %v2434
        %2733 = vmatprep.subr.bf16.mxu0 0
        %2734 = vmatpush1.bf16.msra.mxu0 %v2435
        %2735 = vmatprep.subr.bf16.mxu0 0
        %2736 = vmatpush1.bf16.msra.mxu0 %v2436
        %2737 = vmatprep.subr.bf16.mxu0 0
        %2738 = vmatpush1.bf16.msra.mxu0 %v2437
        %2739 = vmatprep.subr.bf16.mxu0 0
        %2740 = vmatpush1.bf16.msra.mxu0 %v2438
        %2741 = vmatprep.subr.bf16.mxu0 0
        %2742 = vmatpush1.bf16.msra.mxu0 %v2439
        %2743 = vmatprep.subr.bf16.mxu0 0
        %2744 = vmatpush1.bf16.msra.mxu0 %v2440
        %2745 = vmatprep.mubr.bf16.mxu0 %v1748
        %2746 = vmatmul.mubr.bf16.gmra.mrb[0].mxu0 %v1734
        %v2747 = vpop.f32.mrb[0].mxu0
        %v2748 = vadd.f32 %v1706, %v2747
        %v2749 = vpop.f32.mrb[0].mxu0
        %v2750 = vpop.f32.mrb[0].mxu0
        %v2751 = vpop.f32.mrb[0].mxu0
        %2752 = vdwg.mxu0
        %2753 = vmatprep.subr.bf16.mxu0 0
        %2754 = vmatpush1.bf16.msra.mxu0 %v2441
        %2755 = vmatprep.subr.bf16.mxu0 0
        %2756 = vmatpush1.bf16.msra.mxu0 %v2442
        %2757 = vmatprep.subr.bf16.mxu0 0
        %2758 = vmatpush1.bf16.msra.mxu0 %v2443
        %2759 = vmatprep.subr.bf16.mxu0 0
        %2760 = vmatpush1.bf16.msra.mxu0 %v2444
        %2761 = vmatprep.subr.bf16.mxu0 0
        %2762 = vmatpush1.bf16.msra.mxu0 %v2445
        %2763 = vmatprep.subr.bf16.mxu0 0
        %2764 = vmatpush1.bf16.msra.mxu0 %v2446
        %2765 = vmatprep.subr.bf16.mxu0 0
        %2766 = vmatpush1.bf16.msra.mxu0 %v2447
        %2767 = vmatprep.subr.bf16.mxu0 0
        %2768 = vmatpush1.bf16.msra.mxu0 %v2448
        %2769 = vmatprep.subr.bf16.mxu0 0
        %2770 = vmatpush1.bf16.msra.mxu0 %v2449
        %2771 = vmatprep.subr.bf16.mxu0 0
        %2772 = vmatpush1.bf16.msra.mxu0 %v2450
        %2773 = vmatprep.subr.bf16.mxu0 0
        %2774 = vmatpush1.bf16.msra.mxu0 %v2451
        %2775 = vmatprep.subr.bf16.mxu0 0
        %2776 = vmatpush1.bf16.msra.mxu0 %v2452
        %2777 = vmatprep.subr.bf16.mxu0 0
        %2778 = vmatpush1.bf16.msra.mxu0 %v2453
        %2779 = vmatprep.subr.bf16.mxu0 0
        %2780 = vmatpush1.bf16.msra.mxu0 %v2454
        %2781 = vmatprep.subr.bf16.mxu0 0
        %2782 = vmatpush1.bf16.msra.mxu0 %v2455
        %2783 = vmatprep.subr.bf16.mxu0 0
        %2784 = vmatpush1.bf16.msra.mxu0 %v2456
        %2785 = vmatprep.mubr.bf16.mxu0 %v1758
        %2786 = vmatmul.mubr.bf16.gmra.mrb[0].mxu0 %v1756
        %v2787 = vpop.f32.mrb[0].mxu0
        %v2788 = vadd.f32 %v2748, %v2787
        %v2789 = vpop.f32.mrb[0].mxu0
        %v2790 = vpop.f32.mrb[0].mxu0
        %v2791 = vpop.f32.mrb[0].mxu0
        %2792 = vdwg.mxu0
        %2793 = vmatprep.subr.bf16.mxu0 0
        %2794 = vmatpush1.bf16.msra.mxu0 %v2457
        %2795 = vmatprep.subr.bf16.mxu0 0
        %2796 = vmatpush1.bf16.msra.mxu0 %v2458
        %2797 = vmatprep.subr.bf16.mxu0 0
        %2798 = vmatpush1.bf16.msra.mxu0 %v2459
        %2799 = vmatprep.subr.bf16.mxu0 0
        %2800 = vmatpush1.bf16.msra.mxu0 %v2460
        %2801 = vmatprep.subr.bf16.mxu0 0
        %2802 = vmatpush1.bf16.msra.mxu0 %v2461
        %2803 = vmatprep.subr.bf16.mxu0 0
        %2804 = vmatpush1.bf16.msra.mxu0 %v2462
        %2805 = vmatprep.subr.bf16.mxu0 0
        %2806 = vmatpush1.bf16.msra.mxu0 %v2463
        %2807 = vmatprep.subr.bf16.mxu0 0
        %2808 = vmatpush1.bf16.msra.mxu0 %v2464
        %2809 = vmatprep.subr.bf16.mxu0 0
        %2810 = vmatpush1.bf16.msra.mxu0 %v2465
        %2811 = vmatprep.subr.bf16.mxu0 0
        %2812 = vmatpush1.bf16.msra.mxu0 %v2466
        %2813 = vmatprep.subr.bf16.mxu0 0
        %2814 = vmatpush1.bf16.msra.mxu0 %v2467
        %2815 = vmatprep.subr.bf16.mxu0 0
        %2816 = vmatpush1.bf16.msra.mxu0 %v2468
        %2817 = vmatprep.subr.bf16.mxu0 0
        %2818 = vmatpush1.bf16.msra.mxu0 %v2469
        %2819 = vmatprep.subr.bf16.mxu0 0
        %2820 = vmatpush1.bf16.msra.mxu0 %v2470
        %2821 = vmatprep.subr.bf16.mxu0 0
        %2822 = vmatpush1.bf16.msra.mxu0 %v2471
        %2823 = vmatprep.subr.bf16.mxu0 0
        %2824 = vmatpush1.bf16.msra.mxu0 %v2472
        %2825 = vmatprep.mubr.bf16.mxu0 %v1755
        %2826 = vmatmul.mubr.bf16.gmra.mrb[0].mxu0 %v1741
        %v2827 = vpop.f32.mrb[0].mxu0
        %v2828 = vadd.f32 %v2788, %v2827
        %v2829 = vpop.f32.mrb[0].mxu0
        %v2830 = vpop.f32.mrb[0].mxu0
        %v2831 = vpop.f32.mrb[0].mxu0
        %2832 = vdwg.mxu0
        %2833 = vmatprep.subr.bf16.mxu0 0
        %2834 = vmatpush1.bf16.msra.mxu0 %v2473
        %2835 = vmatprep.subr.bf16.mxu0 0
        %2836 = vmatpush1.bf16.msra.mxu0 %v2474
        %2837 = vmatprep.subr.bf16.mxu0 0
        %2838 = vmatpush1.bf16.msra.mxu0 %v2475
        %2839 = vmatprep.subr.bf16.mxu0 0
        %2840 = vmatpush1.bf16.msra.mxu0 %v2476
        %2841 = vmatprep.subr.bf16.mxu0 0
        %2842 = vmatpush1.bf16.msra.mxu0 %v2477
        %2843 = vmatprep.subr.bf16.mxu0 0
        %2844 = vmatpush1.bf16.msra.mxu0 %v2478
        %2845 = vmatprep.subr.bf16.mxu0 0
        %2846 = vmatpush1.bf16.msra.mxu0 %v2479
        %2847 = vmatprep.subr.bf16.mxu0 0
        %2848 = vmatpush1.bf16.msra.mxu0 %v2480
        %2849 = vmatprep.subr.bf16.mxu0 0
        %2850 = vmatpush1.bf16.msra.mxu0 %v2481
        %2851 = vmatprep.subr.bf16.mxu0 0
        %2852 = vmatpush1.bf16.msra.mxu0 %v2482
        %2853 = vmatprep.subr.bf16.mxu0 0
        %2854 = vmatpush1.bf16.msra.mxu0 %v2483
        %2855 = vmatprep.subr.bf16.mxu0 0
        %2856 = vmatpush1.bf16.msra.mxu0 %v2484
        %2857 = vmatprep.subr.bf16.mxu0 0
        %2858 = vmatpush1.bf16.msra.mxu0 %v2485
        %2859 = vmatprep.subr.bf16.mxu0 0
        %2860 = vmatpush1.bf16.msra.mxu0 %v2486
        %2861 = vmatprep.subr.bf16.mxu0 0
        %2862 = vmatpush1.bf16.msra.mxu0 %v2487
        %2863 = vmatprep.subr.bf16.mxu0 0
        %2864 = vmatpush1.bf16.msra.mxu0 %v2488
        %2865 = vmatprep.mubr.bf16.mxu0 %v1759
        %2866 = vmatmul.mubr.bf16.gmra.mrb[0].mxu0 %v1757
        %v2867 = vpop.f32.mrb[0].mxu0
        %v2868 = vadd.f32 %v2828, %v2867
        %v2869 = vpop.f32.mrb[0].mxu0
        %v2870 = vpop.f32.mrb[0].mxu0
        %v2871 = vpop.f32.mrb[0].mxu0
        %2872 = vdwg.mxu0
        %2873 = vmatprep.subr.bf16.mxu0 0
        %2874 = vmatpush1.bf16.msra.mxu0 %v2489
        %2875 = vmatprep.subr.bf16.mxu0 0
        %2876 = vmatpush1.bf16.msra.mxu0 %v2490
        %2877 = vmatprep.subr.bf16.mxu0 0
        %2878 = vmatpush1.bf16.msra.mxu0 %v2491
        %2879 = vmatprep.subr.bf16.mxu0 0
        %2880 = vmatpush1.bf16.msra.mxu0 %v2492
        %2881 = vmatprep.subr.bf16.mxu0 0
        %2882 = vmatpush1.bf16.msra.mxu0 %v2493
        %2883 = vmatprep.subr.bf16.mxu0 0
        %2884 = vmatpush1.bf16.msra.mxu0 %v2494
        %2885 = vmatprep.subr.bf16.mxu0 0
        %2886 = vmatpush1.bf16.msra.mxu0 %v2495
        %2887 = vmatprep.subr.bf16.mxu0 0
        %2888 = vmatpush1.bf16.msra.mxu0 %v2496
        %2889 = vmatprep.subr.bf16.mxu0 0
        %2890 = vmatpush1.bf16.msra.mxu0 %v2497
        %2891 = vmatprep.subr.bf16.mxu0 0
        %2892 = vmatpush1.bf16.msra.mxu0 %v2498
        %2893 = vmatprep.subr.bf16.mxu0 0
        %2894 = vmatpush1.bf16.msra.mxu0 %v2499
        %2895 = vmatprep.subr.bf16.mxu0 0
        %2896 = vmatpush1.bf16.msra.mxu0 %v2500
        %2897 = vmatprep.subr.bf16.mxu0 0
        %2898 = vmatpush1.bf16.msra.mxu0 %v2501
        %2899 = vmatprep.subr.bf16.mxu0 0
        %2900 = vmatpush1.bf16.msra.mxu0 %v2502
        %2901 = vmatprep.subr.bf16.mxu0 0
        %2902 = vmatpush1.bf16.msra.mxu0 %v2503
        %2903 = vmatprep.subr.bf16.mxu0 0
        %2904 = vmatpush1.bf16.msra.mxu0 %v2504
        %2905 = vmatprep.mubr.bf16.mxu0 %v1797
        %2906 = vmatmul.mubr.bf16.gmra.mrb[0].mxu0 %v1783
        %v2907 = vpop.f32.mrb[0].mxu0
        %v2908 = vadd.f32 %v2868, %v2907
        %v2909 = vpop.f32.mrb[0].mxu0
        %v2910 = vpop.f32.mrb[0].mxu0
        %v2911 = vpop.f32.mrb[0].mxu0
        %2912 = vdwg.mxu0
        %2913 = vmatprep.subr.bf16.mxu0 0
        %2914 = vmatpush1.bf16.msra.mxu0 %v2505
        %2915 = vmatprep.subr.bf16.mxu0 0
        %2916 = vmatpush1.bf16.msra.mxu0 %v2506
        %2917 = vmatprep.subr.bf16.mxu0 0
        %2918 = vmatpush1.bf16.msra.mxu0 %v2507
        %2919 = vmatprep.subr.bf16.mxu0 0
        %2920 = vmatpush1.bf16.msra.mxu0 %v2508
        %2921 = vmatprep.subr.bf16.mxu0 0
        %2922 = vmatpush1.bf16.msra.mxu0 %v2509
        %2923 = vmatprep.subr.bf16.mxu0 0
        %2924 = vmatpush1.bf16.msra.mxu0 %v2510
        %2925 = vmatprep.subr.bf16.mxu0 0
        %2926 = vmatpush1.bf16.msra.mxu0 %v2511
        %2927 = vmatprep.subr.bf16.mxu0 0
        %2928 = vmatpush1.bf16.msra.mxu0 %v2512
        %2929 = vmatprep.subr.bf16.mxu0 0
        %2930 = vmatpush1.bf16.msra.mxu0 %v2513
        %2931 = vmatprep.subr.bf16.mxu0 0
        %2932 = vmatpush1.bf16.msra.mxu0 %v2514
        %2933 = vmatprep.subr.bf16.mxu0 0
        %2934 = vmatpush1.bf16.msra.mxu0 %v2515
        %2935 = vmatprep.subr.bf16.mxu0 0
        %2936 = vmatpush1.bf16.msra.mxu0 %v2516
        %2937 = vmatprep.subr.bf16.mxu0 0
        %2938 = vmatpush1.bf16.msra.mxu0 %v2517
        %2939 = vmatprep.subr.bf16.mxu0 0
        %2940 = vmatpush1.bf16.msra.mxu0 %v2518
        %2941 = vmatprep.subr.bf16.mxu0 0
        %2942 = vmatpush1.bf16.msra.mxu0 %v2519
        %2943 = vmatprep.subr.bf16.mxu0 0
        %2944 = vmatpush1.bf16.msra.mxu0 %v2520
        %2945 = vmatprep.mubr.bf16.mxu0 %v1807
        %2946 = vmatmul.mubr.bf16.gmra.mrb[0].mxu0 %v1805
        %v2947 = vpop.f32.mrb[0].mxu0
        %v2948 = vadd.f32 %v2908, %v2947
        %v2949 = vpop.f32.mrb[0].mxu0
        %v2950 = vpop.f32.mrb[0].mxu0
        %v2951 = vpop.f32.mrb[0].mxu0
        %2952 = vdwg.mxu0
        %2953 = vmatprep.subr.bf16.mxu0 0
        %2954 = vmatpush1.bf16.msra.mxu0 %v2521
        %2955 = vmatprep.subr.bf16.mxu0 0
        %2956 = vmatpush1.bf16.msra.mxu0 %v2522
        %2957 = vmatprep.subr.bf16.mxu0 0
        %2958 = vmatpush1.bf16.msra.mxu0 %v2523
        %2959 = vmatprep.subr.bf16.mxu0 0
        %2960 = vmatpush1.bf16.msra.mxu0 %v2524
        %2961 = vmatprep.subr.bf16.mxu0 0
        %2962 = vmatpush1.bf16.msra.mxu0 %v2525
        %2963 = vmatprep.subr.bf16.mxu0 0
        %2964 = vmatpush1.bf16.msra.mxu0 %v2526
        %2965 = vmatprep.subr.bf16.mxu0 0
        %2966 = vmatpush1.bf16.msra.mxu0 %v2527
        %2967 = vmatprep.subr.bf16.mxu0 0
        %2968 = vmatpush1.bf16.msra.mxu0 %v2528
        %2969 = vmatprep.subr.bf16.mxu0 0
        %2970 = vmatpush1.bf16.msra.mxu0 %v2529
        %2971 = vmatprep.subr.bf16.mxu0 0
        %2972 = vmatpush1.bf16.msra.mxu0 %v2530
        %2973 = vmatprep.subr.bf16.mxu0 0
        %2974 = vmatpush1.bf16.msra.mxu0 %v2531
        %2975 = vmatprep.subr.bf16.mxu0 0
        %2976 = vmatpush1.bf16.msra.mxu0 %v2532
        %2977 = vmatprep.subr.bf16.mxu0 0
        %2978 = vmatpush1.bf16.msra.mxu0 %v2533
        %2979 = vmatprep.subr.bf16.mxu0 0
        %2980 = vmatpush1.bf16.msra.mxu0 %v2534
        %2981 = vmatprep.subr.bf16.mxu0 0
        %2982 = vmatpush1.bf16.msra.mxu0 %v2535
        %2983 = vmatprep.subr.bf16.mxu0 0
        %2984 = vmatpush1.bf16.msra.mxu0 %v2536
        %2985 = vmatprep.mubr.bf16.mxu0 %v1804
        %2986 = vmatmul.mubr.bf16.gmra.mrb[0].mxu0 %v1790
        %v2987 = vpop.f32.mrb[0].mxu0
        %v2988 = vadd.f32 %v2948, %v2987
        %v2989 = vpop.f32.mrb[0].mxu0
        %v2990 = vpop.f32.mrb[0].mxu0
        %v2991 = vpop.f32.mrb[0].mxu0
        %2992 = vdwg.mxu0
        %2993 = vmatprep.subr.bf16.mxu0 0
        %2994 = vmatpush1.bf16.msra.mxu0 %v2537
        %2995 = vmatprep.subr.bf16.mxu0 0
        %2996 = vmatpush1.bf16.msra.mxu0 %v2538
        %2997 = vmatprep.subr.bf16.mxu0 0
        %2998 = vmatpush1.bf16.msra.mxu0 %v2539
        %2999 = vmatprep.subr.bf16.mxu0 0
        %3000 = vmatpush1.bf16.msra.mxu0 %v2540
        %3001 = vmatprep.subr.bf16.mxu0 0
        %3002 = vmatpush1.bf16.msra.mxu0 %v2541
        %3003 = vmatprep.subr.bf16.mxu0 0
        %3004 = vmatpush1.bf16.msra.mxu0 %v2542
        %3005 = vmatprep.subr.bf16.mxu0 0
        %3006 = vmatpush1.bf16.msra.mxu0 %v2543
        %3007 = vmatprep.subr.bf16.mxu0 0
        %3008 = vmatpush1.bf16.msra.mxu0 %v2544
        %3009 = vmatprep.subr.bf16.mxu0 0
        %3010 = vmatpush1.bf16.msra.mxu0 %v2545
        %3011 = vmatprep.subr.bf16.mxu0 0
        %3012 = vmatpush1.bf16.msra.mxu0 %v2546
        %3013 = vmatprep.subr.bf16.mxu0 0
        %3014 = vmatpush1.bf16.msra.mxu0 %v2547
        %3015 = vmatprep.subr.bf16.mxu0 0
        %3016 = vmatpush1.bf16.msra.mxu0 %v2548
        %3017 = vmatprep.subr.bf16.mxu0 0
        %3018 = vmatpush1.bf16.msra.mxu0 %v2549
        %3019 = vmatprep.subr.bf16.mxu0 0
        %3020 = vmatpush1.bf16.msra.mxu0 %v2550
        %3021 = vmatprep.subr.bf16.mxu0 0
        %3022 = vmatpush1.bf16.msra.mxu0 %v2551
        %3023 = vmatprep.subr.bf16.mxu0 0
        %3024 = vmatpush1.bf16.msra.mxu0 %v2552
        %3025 = vmatprep.mubr.bf16.mxu0 %v1808
        %3026 = vmatmul.mubr.bf16.gmra.mrb[0].mxu0 %v1806
        %v3027 = vpop.f32.mrb[0].mxu0
        %v3028 = vadd.f32 %v2988, %v3027
        %v3029 = vpop.f32.mrb[0].mxu0
        %v3030 = vpop.f32.mrb[0].mxu0
        %v3031 = vpop.f32.mrb[0].mxu0
        %3032 = vdwg.mxu0
        %3033 = vmatprep.subr.bf16.mxu0 0
        %3034 = vmatpush1.bf16.msra.mxu0 %v2553
        %3035 = vmatprep.subr.bf16.mxu0 0
        %3036 = vmatpush1.bf16.msra.mxu0 %v2554
        %3037 = vmatprep.subr.bf16.mxu0 0
        %3038 = vmatpush1.bf16.msra.mxu0 %v2555
        %3039 = vmatprep.subr.bf16.mxu0 0
        %3040 = vmatpush1.bf16.msra.mxu0 %v2556
        %3041 = vmatprep.subr.bf16.mxu0 0
        %3042 = vmatpush1.bf16.msra.mxu0 %v2557
        %3043 = vmatprep.subr.bf16.mxu0 0
        %3044 = vmatpush1.bf16.msra.mxu0 %v2558
        %3045 = vmatprep.subr.bf16.mxu0 0
        %3046 = vmatpush1.bf16.msra.mxu0 %v2559
        %3047 = vmatprep.subr.bf16.mxu0 0
        %3048 = vmatpush1.bf16.msra.mxu0 %v2560
        %3049 = vmatprep.subr.bf16.mxu0 0
        %3050 = vmatpush1.bf16.msra.mxu0 %v2561
        %3051 = vmatprep.subr.bf16.mxu0 0
        %3052 = vmatpush1.bf16.msra.mxu0 %v2562
        %3053 = vmatprep.subr.bf16.mxu0 0
        %3054 = vmatpush1.bf16.msra.mxu0 %v2563
        %3055 = vmatprep.subr.bf16.mxu0 0
        %3056 = vmatpush1.bf16.msra.mxu0 %v2564
        %3057 = vmatprep.subr.bf16.mxu0 0
        %3058 = vmatpush1.bf16.msra.mxu0 %v2565
        %3059 = vmatprep.subr.bf16.mxu0 0
        %3060 = vmatpush1.bf16.msra.mxu0 %v2566
        %3061 = vmatprep.subr.bf16.mxu0 0
        %3062 = vmatpush1.bf16.msra.mxu0 %v2567
        %3063 = vmatprep.subr.bf16.mxu0 0
        %3064 = vmatpush1.bf16.msra.mxu0 %v2568
        %3065 = vmatprep.mubr.bf16.mxu0 %v1830
        %3066 = vmatmul.mubr.bf16.gmra.mrb[0].mxu0 %v1823
        %v3067 = vpop.f32.mrb[0].mxu0
        %v3068 = vadd.f32 %v3028, %v3067
        %v3069 = vpop.f32.mrb[0].mxu0
        %v3070 = vpop.f32.mrb[0].mxu0
        %v3071 = vpop.f32.mrb[0].mxu0
        %3072 = vdwg.mxu0
        %v3073 = vmax.f32 %v3068, 0.0
        %v3074 = vpack.c.bf16 %v3073, %v3073
        %3075 = vst [vmem:[%s1408] sm:$0x1] %v3074
        %p3076 = scmp.lt.s32.totalorder %s18, 0
        %s3077 = scalar_select %p3076, %s18, 0
        %p3078 = scmp.lt.s32.totalorder %s19, 1
        %s3079 = scalar_select %p3078, %s19, 1
        %s3080 = smul.addr %s3077, 2
        %s3081 = sadd.s32 %s3079, %s3080
        %s3082 = scalar_lea.vmem %s3, %s3081
        // Predicated region
        $region74: #{pose_cnn_forward.13} parent=68 // pred_check
          %p3083 = pneg %p124
        $region75: #{pose_cnn_forward.13} parent=68 // pred_check_branch
          %3085 = sbr.rel (%p3083) target = $region77
        $region76: #{pose_cnn_forward.13} parent=68 // pred_region
          _
        $region77: #{pose_cnn_forward.13} parent=68 // pred_fallthru
          _
      $region69: #{pose_cnn_forward.13} parent=5 // pred_fallthru
        _
      %p3086 = scmp.le.s32.totalorder 2, %s9
      // Predicated region
      $region78: #{pose_cnn_forward.13} parent=5 // pred_check
        %p3087 = pneg %p3086
      $region79: #{pose_cnn_forward.13} parent=5 // pred_check_branch
        %3089 = sbr.rel (%p3087) target = $region81
      $region80: #{pose_cnn_forward.13} parent=5 // pred_region
        %s3090 = ssub.s32 %s9, 2
        // Predicated region
        $region82: #{pose_cnn_forward.13} parent=80 // pred_check
          %p3091 = pneg %p130
        $region83: #{pose_cnn_forward.13} parent=80 // pred_check_branch
          %3093 = sbr.rel (%p3091) target = $region85
        $region84: #{pose_cnn_forward.13} parent=80 // pred_region
          %p3094 = scmp.lt.s32.totalorder %s20, 0
          %s3095 = scalar_select %p3094, %s20, 0
          %p3096 = scmp.lt.s32.totalorder %s21, 1
          %s3097 = scalar_select %p3096, %s21, 1
          %s3098 = smul.addr %s3095, 2
          %s3099 = sadd.s32 %s3097, %s3098
          %s3100 = scalar_lea.vmem %s3, %s3099
        $region85: #{pose_cnn_forward.13} parent=80 // pred_fallthru
          _
      $region81: #{pose_cnn_forward.13} parent=5 // pred_fallthru
        _
    $region6: #{pose_cnn_forward.13} parent=1 // loop_footer
      %s13 = sadd.s32 1, %s9
    $region7: #{pose_cnn_forward.13} parent=1 // loop_footer_branch
      %8 = sbr.rel target = $region3
    $region8: #{pose_cnn_forward.13} parent=1 // loop_exit
      _

</llo_original>
